<compile_context>
chip_gen: v7x
topology: tpu7x:2x2x1
jax: 0.10.0
libtpu: 0.0.40
codegen_flags: <defaults>
</compile_context>

<pallas_src>
import jax
import jax.numpy as jnp
from jax.experimental import pallas as pl
from jax.experimental.pallas import tpu as pltpu

# Module hyper-parameters (from nn.Conv2d(4, 20, 3, 1, groups=2, bias=False))
C_IN = 4
C_OUT = 20
KH = KW = 3
GROUPS = 2
CIN_G = C_IN // GROUPS       # 2
COUT_G = C_OUT // GROUPS     # 10
K_IM2COL = C_IN * KH * KW    # 36


def _conv_kernel(x_ref, w_ref, o_ref):
    """Entire grouped conv in one kernel invocation (grid=()).

    x_ref: (N, C_IN, H, W)       f32, VMEM  (NCHW, exactly as PyTorch gives it)
    w_ref: (C_OUT, C_IN*KH*KW)   f32, VMEM  (block-diagonal over the 2 groups)
    o_ref: (N, C_OUT, Ho*Wo)     f32, VMEM  (spatial flattened onto lanes)
    """
    n, c_in, h, w = x_ref.shape
    ho = h - KH + 1
    wo = w - KW + 1

    w_mat = w_ref[...]                                   # (20, 36)

    for b in range(n):                                   # static N=2, unrolled
        x_b = x_ref[b]                                   # (C_IN, H, W)
        # im2col: row index = c*KH*KW + kh*KW + kw, matching the block-diag
        # weight's column ordering (full input-channel index, then tap).
        taps = []
        for c in range(c_in):
            for kh in range(KH):
                for kw in range(KW):
                    win = x_b[c, kh:kh + ho, kw:kw + wo]     # (Ho, Wo)
                    taps.append(win.reshape(1, ho * wo))
        patch = jnp.concatenate(taps, axis=0)            # (36, Ho*Wo)

        # One fused MXU matmul per image: both groups + all 9 taps at once.
        acc = jnp.dot(w_mat, patch,
                      preferred_element_type=jnp.float32)    # (20, Ho*Wo)
        o_ref[b] = acc.astype(o_ref.dtype)


@jax.jit
def net_v2_forward(x_nchw, weight_oihw):
    """Net_v2.forward: grouped 3x3 conv, stride 1, valid padding, no bias.

    x_nchw:      (N, 4, H, W)   float32
    weight_oihw: (20, 2, 3, 3)  float32  (PyTorch layout: O, I/groups, KH, KW)
    returns:     (N, 20, H-2, W-2) float32
    """
    n, c, h, w = x_nchw.shape
    assert c == C_IN
    ho, wo = h - KH + 1, w - KW + 1

    # Tiny glue (20x36 floats): block-diagonal weight so both groups fuse into
    # one matmul.  Row o (group g = o // COUT_G) is nonzero only over that
    # group's input channels, laid out as (c_full, kh, kw) to match im2col rows.
    w_flat = weight_oihw.reshape(C_OUT, CIN_G * KH * KW)       # (20, 18)
    w_bd = jnp.zeros((C_OUT, K_IM2COL), dtype=weight_oihw.dtype)
    for g in range(GROUPS):
        rows = slice(g * COUT_G, (g + 1) * COUT_G)
        cols = slice(g * CIN_G * KH * KW, (g + 1) * CIN_G * KH * KW)
        w_bd = w_bd.at[rows, cols].set(w_flat[rows])

    out_flat = pl.pallas_call(
        _conv_kernel,
        out_shape=jax.ShapeDtypeStruct((n, C_OUT, ho * wo), x_nchw.dtype),
        # grid=() : single invocation, whole arrays resident in VMEM.
        in_specs=[
            pl.BlockSpec(memory_space=pltpu.MemorySpace.VMEM),
            pl.BlockSpec(memory_space=pltpu.MemorySpace.VMEM),
        ],
        out_specs=pl.BlockSpec(memory_space=pltpu.MemorySpace.VMEM),
    )(x_nchw, w_bd)

    # Free reshape back to NCHW (no transpose needed).
    return out_flat.reshape(n, C_OUT, ho, wo)


if __name__ == "__main__":
    key = jax.random.PRNGKey(0)
    k_x, k_w = jax.random.split(key)

    # Small deterministic inputs consistent with the module: (N=2, C=4, H=16, W=16)
    x = jax.random.normal(k_x, (2, C_IN, 16, 16), dtype=jnp.float32)
    # PyTorch OIHW-per-group weight layout: (20, 2, 3, 3)
    weight = 0.1 * jax.random.normal(k_w, (C_OUT, CIN_G, KH, KW), dtype=jnp.float32)

    out = net_v2_forward(x, weight)
    out = jax.block_until_ready(out)

    # Correctness check against XLA's grouped conv (same semantics as PyTorch).
    ref = jax.lax.conv_general_dilated(
        x, weight,
        window_strides=(1, 1),
        padding="VALID",
        dimension_numbers=("NCHW", "OIHW", "NCHW"),
        feature_group_count=GROUPS,
    )
    assert out.shape == (2, C_OUT, 14, 14), out.shape
    assert jnp.allclose(out, ref, atol=1e-4, rtol=1e-4), float(jnp.max(jnp.abs(out - ref)))

    print("KERNEL_OK")
</pallas_src>

<mosaic_0001>
module attributes {stable_mosaic.version = 11 : i64} {
  func.func @_conv_kernel(%arg0: memref<2x4x16x16xf32, #tpu.memory_space<vmem>>, %arg1: memref<20x36xf32, #tpu.memory_space<vmem>>, %arg2: memref<2x20x196xf32, #tpu.memory_space<vmem>>) attributes {dimension_semantics = [], scalar_prefetch = 0 : i64, scratch_operands = 0 : i64, tpu.core_type = #tpu.core_type<tc>} {
    %c0 = arith.constant 0 : index
    %c0_0 = arith.constant 0 : index
    %0 = vector.load %arg1[%c0, %c0_0] : memref<20x36xf32, #tpu.memory_space<vmem>>, vector<20x36xf32>
    %c0_1 = arith.constant 0 : index
    %c0_2 = arith.constant 0 : index
    %c0_3 = arith.constant 0 : index
    %c0_4 = arith.constant 0 : index
    %1 = vector.load %arg0[%c0_1, %c0_2, %c0_3, %c0_4] : memref<2x4x16x16xf32, #tpu.memory_space<vmem>>, vector<1x4x16x16xf32>
    %2 = vector.shape_cast %1 : vector<1x4x16x16xf32> to vector<4x16x16xf32>
    %3 = vector.extract_strided_slice %2 {offsets = [0, 0, 0], sizes = [1, 14, 14], strides = [1, 1, 1]} : vector<4x16x16xf32> to vector<1x14x14xf32>
    %4 = vector.shape_cast %3 : vector<1x14x14xf32> to vector<14x14xf32>
    %5 = vector.shape_cast %4 : vector<14x14xf32> to vector<1x196xf32>
    %6 = vector.extract_strided_slice %2 {offsets = [0, 0, 1], sizes = [1, 14, 14], strides = [1, 1, 1]} : vector<4x16x16xf32> to vector<1x14x14xf32>
    %7 = vector.shape_cast %6 : vector<1x14x14xf32> to vector<14x14xf32>
    %8 = vector.shape_cast %7 : vector<14x14xf32> to vector<1x196xf32>
    %9 = vector.extract_strided_slice %2 {offsets = [0, 0, 2], sizes = [1, 14, 14], strides = [1, 1, 1]} : vector<4x16x16xf32> to vector<1x14x14xf32>
    %10 = vector.shape_cast %9 : vector<1x14x14xf32> to vector<14x14xf32>
    %11 = vector.shape_cast %10 : vector<14x14xf32> to vector<1x196xf32>
    %12 = vector.extract_strided_slice %2 {offsets = [0, 1, 0], sizes = [1, 14, 14], strides = [1, 1, 1]} : vector<4x16x16xf32> to vector<1x14x14xf32>
    %13 = vector.shape_cast %12 : vector<1x14x14xf32> to vector<14x14xf32>
    %14 = vector.shape_cast %13 : vector<14x14xf32> to vector<1x196xf32>
    %15 = vector.extract_strided_slice %2 {offsets = [0, 1, 1], sizes = [1, 14, 14], strides = [1, 1, 1]} : vector<4x16x16xf32> to vector<1x14x14xf32>
    %16 = vector.shape_cast %15 : vector<1x14x14xf32> to vector<14x14xf32>
    %17 = vector.shape_cast %16 : vector<14x14xf32> to vector<1x196xf32>
    %18 = vector.extract_strided_slice %2 {offsets = [0, 1, 2], sizes = [1, 14, 14], strides = [1, 1, 1]} : vector<4x16x16xf32> to vector<1x14x14xf32>
    %19 = vector.shape_cast %18 : vector<1x14x14xf32> to vector<14x14xf32>
    %20 = vector.shape_cast %19 : vector<14x14xf32> to vector<1x196xf32>
    %21 = vector.extract_strided_slice %2 {offsets = [0, 2, 0], sizes = [1, 14, 14], strides = [1, 1, 1]} : vector<4x16x16xf32> to vector<1x14x14xf32>
    %22 = vector.shape_cast %21 : vector<1x14x14xf32> to vector<14x14xf32>
    %23 = vector.shape_cast %22 : vector<14x14xf32> to vector<1x196xf32>
    %24 = vector.extract_strided_slice %2 {offsets = [0, 2, 1], sizes = [1, 14, 14], strides = [1, 1, 1]} : vector<4x16x16xf32> to vector<1x14x14xf32>
    %25 = vector.shape_cast %24 : vector<1x14x14xf32> to vector<14x14xf32>
    %26 = vector.shape_cast %25 : vector<14x14xf32> to vector<1x196xf32>
    %27 = vector.extract_strided_slice %2 {offsets = [0, 2, 2], sizes = [1, 14, 14], strides = [1, 1, 1]} : vector<4x16x16xf32> to vector<1x14x14xf32>
    %28 = vector.shape_cast %27 : vector<1x14x14xf32> to vector<14x14xf32>
    %29 = vector.shape_cast %28 : vector<14x14xf32> to vector<1x196xf32>
    %30 = vector.extract_strided_slice %2 {offsets = [1, 0, 0], sizes = [1, 14, 14], strides = [1, 1, 1]} : vector<4x16x16xf32> to vector<1x14x14xf32>
    %31 = vector.shape_cast %30 : vector<1x14x14xf32> to vector<14x14xf32>
    %32 = vector.shape_cast %31 : vector<14x14xf32> to vector<1x196xf32>
    %33 = vector.extract_strided_slice %2 {offsets = [1, 0, 1], sizes = [1, 14, 14], strides = [1, 1, 1]} : vector<4x16x16xf32> to vector<1x14x14xf32>
    %34 = vector.shape_cast %33 : vector<1x14x14xf32> to vector<14x14xf32>
    %35 = vector.shape_cast %34 : vector<14x14xf32> to vector<1x196xf32>
    %36 = vector.extract_strided_slice %2 {offsets = [1, 0, 2], sizes = [1, 14, 14], strides = [1, 1, 1]} : vector<4x16x16xf32> to vector<1x14x14xf32>
    %37 = vector.shape_cast %36 : vector<1x14x14xf32> to vector<14x14xf32>
    %38 = vector.shape_cast %37 : vector<14x14xf32> to vector<1x196xf32>
    %39 = vector.extract_strided_slice %2 {offsets = [1, 1, 0], sizes = [1, 14, 14], strides = [1, 1, 1]} : vector<4x16x16xf32> to vector<1x14x14xf32>
    %40 = vector.shape_cast %39 : vector<1x14x14xf32> to vector<14x14xf32>
    %41 = vector.shape_cast %40 : vector<14x14xf32> to vector<1x196xf32>
    %42 = vector.extract_strided_slice %2 {offsets = [1, 1, 1], sizes = [1, 14, 14], strides = [1, 1, 1]} : vector<4x16x16xf32> to vector<1x14x14xf32>
    %43 = vector.shape_cast %42 : vector<1x14x14xf32> to vector<14x14xf32>
    %44 = vector.shape_cast %43 : vector<14x14xf32> to vector<1x196xf32>
    %45 = vector.extract_strided_slice %2 {offsets = [1, 1, 2], sizes = [1, 14, 14], strides = [1, 1, 1]} : vector<4x16x16xf32> to vector<1x14x14xf32>
    %46 = vector.shape_cast %45 : vector<1x14x14xf32> to vector<14x14xf32>
    %47 = vector.shape_cast %46 : vector<14x14xf32> to vector<1x196xf32>
    %48 = vector.extract_strided_slice %2 {offsets = [1, 2, 0], sizes = [1, 14, 14], strides = [1, 1, 1]} : vector<4x16x16xf32> to vector<1x14x14xf32>
    %49 = vector.shape_cast %48 : vector<1x14x14xf32> to vector<14x14xf32>
    %50 = vector.shape_cast %49 : vector<14x14xf32> to vector<1x196xf32>
    %51 = vector.extract_strided_slice %2 {offsets = [1, 2, 1], sizes = [1, 14, 14], strides = [1, 1, 1]} : vector<4x16x16xf32> to vector<1x14x14xf32>
    %52 = vector.shape_cast %51 : vector<1x14x14xf32> to vector<14x14xf32>
    %53 = vector.shape_cast %52 : vector<14x14xf32> to vector<1x196xf32>
    %54 = vector.extract_strided_slice %2 {offsets = [1, 2, 2], sizes = [1, 14, 14], strides = [1, 1, 1]} : vector<4x16x16xf32> to vector<1x14x14xf32>
    %55 = vector.shape_cast %54 : vector<1x14x14xf32> to vector<14x14xf32>
    %56 = vector.shape_cast %55 : vector<14x14xf32> to vector<1x196xf32>
    %57 = vector.extract_strided_slice %2 {offsets = [2, 0, 0], sizes = [1, 14, 14], strides = [1, 1, 1]} : vector<4x16x16xf32> to vector<1x14x14xf32>
    %58 = vector.shape_cast %57 : vector<1x14x14xf32> to vector<14x14xf32>
    %59 = vector.shape_cast %58 : vector<14x14xf32> to vector<1x196xf32>
    %60 = vector.extract_strided_slice %2 {offsets = [2, 0, 1], sizes = [1, 14, 14], strides = [1, 1, 1]} : vector<4x16x16xf32> to vector<1x14x14xf32>
    %61 = vector.shape_cast %60 : vector<1x14x14xf32> to vector<14x14xf32>
    %62 = vector.shape_cast %61 : vector<14x14xf32> to vector<1x196xf32>
    %63 = vector.extract_strided_slice %2 {offsets = [2, 0, 2], sizes = [1, 14, 14], strides = [1, 1, 1]} : vector<4x16x16xf32> to vector<1x14x14xf32>
    %64 = vector.shape_cast %63 : vector<1x14x14xf32> to vector<14x14xf32>
    %65 = vector.shape_cast %64 : vector<14x14xf32> to vector<1x196xf32>
    %66 = vector.extract_strided_slice %2 {offsets = [2, 1, 0], sizes = [1, 14, 14], strides = [1, 1, 1]} : vector<4x16x16xf32> to vector<1x14x14xf32>
    %67 = vector.shape_cast %66 : vector<1x14x14xf32> to vector<14x14xf32>
    %68 = vector.shape_cast %67 : vector<14x14xf32> to vector<1x196xf32>
    %69 = vector.extract_strided_slice %2 {offsets = [2, 1, 1], sizes = [1, 14, 14], strides = [1, 1, 1]} : vector<4x16x16xf32> to vector<1x14x14xf32>
    %70 = vector.shape_cast %69 : vector<1x14x14xf32> to vector<14x14xf32>
    %71 = vector.shape_cast %70 : vector<14x14xf32> to vector<1x196xf32>
    %72 = vector.extract_strided_slice %2 {offsets = [2, 1, 2], sizes = [1, 14, 14], strides = [1, 1, 1]} : vector<4x16x16xf32> to vector<1x14x14xf32>
    %73 = vector.shape_cast %72 : vector<1x14x14xf32> to vector<14x14xf32>
    %74 = vector.shape_cast %73 : vector<14x14xf32> to vector<1x196xf32>
    %75 = vector.extract_strided_slice %2 {offsets = [2, 2, 0], sizes = [1, 14, 14], strides = [1, 1, 1]} : vector<4x16x16xf32> to vector<1x14x14xf32>
    %76 = vector.shape_cast %75 : vector<1x14x14xf32> to vector<14x14xf32>
    %77 = vector.shape_cast %76 : vector<14x14xf32> to vector<1x196xf32>
    %78 = vector.extract_strided_slice %2 {offsets = [2, 2, 1], sizes = [1, 14, 14], strides = [1, 1, 1]} : vector<4x16x16xf32> to vector<1x14x14xf32>
    %79 = vector.shape_cast %78 : vector<1x14x14xf32> to vector<14x14xf32>
    %80 = vector.shape_cast %79 : vector<14x14xf32> to vector<1x196xf32>
    %81 = vector.extract_strided_slice %2 {offsets = [2, 2, 2], sizes = [1, 14, 14], strides = [1, 1, 1]} : vector<4x16x16xf32> to vector<1x14x14xf32>
    %82 = vector.shape_cast %81 : vector<1x14x14xf32> to vector<14x14xf32>
    %83 = vector.shape_cast %82 : vector<14x14xf32> to vector<1x196xf32>
    %84 = vector.extract_strided_slice %2 {offsets = [3, 0, 0], sizes = [1, 14, 14], strides = [1, 1, 1]} : vector<4x16x16xf32> to vector<1x14x14xf32>
    %85 = vector.shape_cast %84 : vector<1x14x14xf32> to vector<14x14xf32>
    %86 = vector.shape_cast %85 : vector<14x14xf32> to vector<1x196xf32>
    %87 = vector.extract_strided_slice %2 {offsets = [3, 0, 1], sizes = [1, 14, 14], strides = [1, 1, 1]} : vector<4x16x16xf32> to vector<1x14x14xf32>
    %88 = vector.shape_cast %87 : vector<1x14x14xf32> to vector<14x14xf32>
    %89 = vector.shape_cast %88 : vector<14x14xf32> to vector<1x196xf32>
    %90 = vector.extract_strided_slice %2 {offsets = [3, 0, 2], sizes = [1, 14, 14], strides = [1, 1, 1]} : vector<4x16x16xf32> to vector<1x14x14xf32>
    %91 = vector.shape_cast %90 : vector<1x14x14xf32> to vector<14x14xf32>
    %92 = vector.shape_cast %91 : vector<14x14xf32> to vector<1x196xf32>
    %93 = vector.extract_strided_slice %2 {offsets = [3, 1, 0], sizes = [1, 14, 14], strides = [1, 1, 1]} : vector<4x16x16xf32> to vector<1x14x14xf32>
    %94 = vector.shape_cast %93 : vector<1x14x14xf32> to vector<14x14xf32>
    %95 = vector.shape_cast %94 : vector<14x14xf32> to vector<1x196xf32>
    %96 = vector.extract_strided_slice %2 {offsets = [3, 1, 1], sizes = [1, 14, 14], strides = [1, 1, 1]} : vector<4x16x16xf32> to vector<1x14x14xf32>
    %97 = vector.shape_cast %96 : vector<1x14x14xf32> to vector<14x14xf32>
    %98 = vector.shape_cast %97 : vector<14x14xf32> to vector<1x196xf32>
    %99 = vector.extract_strided_slice %2 {offsets = [3, 1, 2], sizes = [1, 14, 14], strides = [1, 1, 1]} : vector<4x16x16xf32> to vector<1x14x14xf32>
    %100 = vector.shape_cast %99 : vector<1x14x14xf32> to vector<14x14xf32>
    %101 = vector.shape_cast %100 : vector<14x14xf32> to vector<1x196xf32>
    %102 = vector.extract_strided_slice %2 {offsets = [3, 2, 0], sizes = [1, 14, 14], strides = [1, 1, 1]} : vector<4x16x16xf32> to vector<1x14x14xf32>
    %103 = vector.shape_cast %102 : vector<1x14x14xf32> to vector<14x14xf32>
    %104 = vector.shape_cast %103 : vector<14x14xf32> to vector<1x196xf32>
    %105 = vector.extract_strided_slice %2 {offsets = [3, 2, 1], sizes = [1, 14, 14], strides = [1, 1, 1]} : vector<4x16x16xf32> to vector<1x14x14xf32>
    %106 = vector.shape_cast %105 : vector<1x14x14xf32> to vector<14x14xf32>
    %107 = vector.shape_cast %106 : vector<14x14xf32> to vector<1x196xf32>
    %108 = vector.extract_strided_slice %2 {offsets = [3, 2, 2], sizes = [1, 14, 14], strides = [1, 1, 1]} : vector<4x16x16xf32> to vector<1x14x14xf32>
    %109 = vector.shape_cast %108 : vector<1x14x14xf32> to vector<14x14xf32>
    %110 = vector.shape_cast %109 : vector<14x14xf32> to vector<1x196xf32>
    %111 = tpu.concatenate %5, %8, %11, %14, %17, %20, %23, %26, %29, %32, %35, %38, %41, %44, %47, %50 in 0 : vector<1x196xf32>, vector<1x196xf32>, vector<1x196xf32>, vector<1x196xf32>, vector<1x196xf32>, vector<1x196xf32>, vector<1x196xf32>, vector<1x196xf32>, vector<1x196xf32>, vector<1x196xf32>, vector<1x196xf32>, vector<1x196xf32>, vector<1x196xf32>, vector<1x196xf32>, vector<1x196xf32>, vector<1x196xf32> -> vector<16x196xf32>
    %112 = tpu.concatenate %53, %56, %59, %62, %65, %68, %71, %74, %77, %80, %83, %86, %89, %92, %95, %98 in 0 : vector<1x196xf32>, vector<1x196xf32>, vector<1x196xf32>, vector<1x196xf32>, vector<1x196xf32>, vector<1x196xf32>, vector<1x196xf32>, vector<1x196xf32>, vector<1x196xf32>, vector<1x196xf32>, vector<1x196xf32>, vector<1x196xf32>, vector<1x196xf32>, vector<1x196xf32>, vector<1x196xf32>, vector<1x196xf32> -> vector<16x196xf32>
    %113 = tpu.concatenate %101, %104, %107, %110 in 0 : vector<1x196xf32>, vector<1x196xf32>, vector<1x196xf32>, vector<1x196xf32> -> vector<4x196xf32>
    %114 = tpu.concatenate %111, %112, %113 in 0 : vector<16x196xf32>, vector<16x196xf32>, vector<4x196xf32> -> vector<36x196xf32>
    %cst = arith.constant dense<0.000000e+00> : vector<20x196xf32>
    %115 = tpu.matmul %0, %114, %cst {dimension_numbers = #tpu.dot_dimension_numbers<[1], [0], [0], [1], [0, 0, 1, 1], [], []>} : vector<20x36xf32>, vector<36x196xf32>, vector<20x196xf32> -> vector<20x196xf32>
    %c0_5 = arith.constant 0 : index
    %c0_6 = arith.constant 0 : index
    %c0_7 = arith.constant 0 : index
    %116 = vector.load %arg2[%c0_5, %c0_6, %c0_7] : memref<2x20x196xf32, #tpu.memory_space<vmem>>, vector<1x20x196xf32>
    %117 = vector.shape_cast %116 : vector<1x20x196xf32> to vector<20x196xf32>
    %118 = vector.shape_cast %115 : vector<20x196xf32> to vector<1x20x196xf32>
    tpu.vector_store %arg2[%c0_5, %c0_6, %c0_7], %118 {strides = array<i32>} : memref<2x20x196xf32, #tpu.memory_space<vmem>>, vector<1x20x196xf32>,
    %c1 = arith.constant 1 : index
    %c0_8 = arith.constant 0 : index
    %c0_9 = arith.constant 0 : index
    %c0_10 = arith.constant 0 : index
    %119 = vector.load %arg0[%c1, %c0_8, %c0_9, %c0_10] : memref<2x4x16x16xf32, #tpu.memory_space<vmem>>, vector<1x4x16x16xf32>
    %120 = vector.shape_cast %119 : vector<1x4x16x16xf32> to vector<4x16x16xf32>
    %121 = vector.extract_strided_slice %120 {offsets = [0, 0, 0], sizes = [1, 14, 14], strides = [1, 1, 1]} : vector<4x16x16xf32> to vector<1x14x14xf32>
    %122 = vector.shape_cast %121 : vector<1x14x14xf32> to vector<14x14xf32>
    %123 = vector.shape_cast %122 : vector<14x14xf32> to vector<1x196xf32>
    %124 = vector.extract_strided_slice %120 {offsets = [0, 0, 1], sizes = [1, 14, 14], strides = [1, 1, 1]} : vector<4x16x16xf32> to vector<1x14x14xf32>
    %125 = vector.shape_cast %124 : vector<1x14x14xf32> to vector<14x14xf32>
    %126 = vector.shape_cast %125 : vector<14x14xf32> to vector<1x196xf32>
    %127 = vector.extract_strided_slice %120 {offsets = [0, 0, 2], sizes = [1, 14, 14], strides = [1, 1, 1]} : vector<4x16x16xf32> to vector<1x14x14xf32>
    %128 = vector.shape_cast %127 : vector<1x14x14xf32> to vector<14x14xf32>
    %129 = vector.shape_cast %128 : vector<14x14xf32> to vector<1x196xf32>
    %130 = vector.extract_strided_slice %120 {offsets = [0, 1, 0], sizes = [1, 14, 14], strides = [1, 1, 1]} : vector<4x16x16xf32> to vector<1x14x14xf32>
    %131 = vector.shape_cast %130 : vector<1x14x14xf32> to vector<14x14xf32>
    %132 = vector.shape_cast %131 : vector<14x14xf32> to vector<1x196xf32>
    %133 = vector.extract_strided_slice %120 {offsets = [0, 1, 1], sizes = [1, 14, 14], strides = [1, 1, 1]} : vector<4x16x16xf32> to vector<1x14x14xf32>
    %134 = vector.shape_cast %133 : vector<1x14x14xf32> to vector<14x14xf32>
    %135 = vector.shape_cast %134 : vector<14x14xf32> to vector<1x196xf32>
    %136 = vector.extract_strided_slice %120 {offsets = [0, 1, 2], sizes = [1, 14, 14], strides = [1, 1, 1]} : vector<4x16x16xf32> to vector<1x14x14xf32>
    %137 = vector.shape_cast %136 : vector<1x14x14xf32> to vector<14x14xf32>
    %138 = vector.shape_cast %137 : vector<14x14xf32> to vector<1x196xf32>
    %139 = vector.extract_strided_slice %120 {offsets = [0, 2, 0], sizes = [1, 14, 14], strides = [1, 1, 1]} : vector<4x16x16xf32> to vector<1x14x14xf32>
    %140 = vector.shape_cast %139 : vector<1x14x14xf32> to vector<14x14xf32>
    %141 = vector.shape_cast %140 : vector<14x14xf32> to vector<1x196xf32>
    %142 = vector.extract_strided_slice %120 {offsets = [0, 2, 1], sizes = [1, 14, 14], strides = [1, 1, 1]} : vector<4x16x16xf32> to vector<1x14x14xf32>
    %143 = vector.shape_cast %142 : vector<1x14x14xf32> to vector<14x14xf32>
    %144 = vector.shape_cast %143 : vector<14x14xf32> to vector<1x196xf32>
    %145 = vector.extract_strided_slice %120 {offsets = [0, 2, 2], sizes = [1, 14, 14], strides = [1, 1, 1]} : vector<4x16x16xf32> to vector<1x14x14xf32>
    %146 = vector.shape_cast %145 : vector<1x14x14xf32> to vector<14x14xf32>
    %147 = vector.shape_cast %146 : vector<14x14xf32> to vector<1x196xf32>
    %148 = vector.extract_strided_slice %120 {offsets = [1, 0, 0], sizes = [1, 14, 14], strides = [1, 1, 1]} : vector<4x16x16xf32> to vector<1x14x14xf32>
    %149 = vector.shape_cast %148 : vector<1x14x14xf32> to vector<14x14xf32>
    %150 = vector.shape_cast %149 : vector<14x14xf32> to vector<1x196xf32>
    %151 = vector.extract_strided_slice %120 {offsets = [1, 0, 1], sizes = [1, 14, 14], strides = [1, 1, 1]} : vector<4x16x16xf32> to vector<1x14x14xf32>
    %152 = vector.shape_cast %151 : vector<1x14x14xf32> to vector<14x14xf32>
    %153 = vector.shape_cast %152 : vector<14x14xf32> to vector<1x196xf32>
    %154 = vector.extract_strided_slice %120 {offsets = [1, 0, 2], sizes = [1, 14, 14], strides = [1, 1, 1]} : vector<4x16x16xf32> to vector<1x14x14xf32>
    %155 = vector.shape_cast %154 : vector<1x14x14xf32> to vector<14x14xf32>
    %156 = vector.shape_cast %155 : vector<14x14xf32> to vector<1x196xf32>
    %157 = vector.extract_strided_slice %120 {offsets = [1, 1, 0], sizes = [1, 14, 14], strides = [1, 1, 1]} : vector<4x16x16xf32> to vector<1x14x14xf32>
    %158 = vector.shape_cast %157 : vector<1x14x14xf32> to vector<14x14xf32>
    %159 = vector.shape_cast %158 : vector<14x14xf32> to vector<1x196xf32>
    %160 = vector.extract_strided_slice %120 {offsets = [1, 1, 1], sizes = [1, 14, 14], strides = [1, 1, 1]} : vector<4x16x16xf32> to vector<1x14x14xf32>
    %161 = vector.shape_cast %160 : vector<1x14x14xf32> to vector<14x14xf32>
    %162 = vector.shape_cast %161 : vector<14x14xf32> to vector<1x196xf32>
    %163 = vector.extract_strided_slice %120 {offsets = [1, 1, 2], sizes = [1, 14, 14], strides = [1, 1, 1]} : vector<4x16x16xf32> to vector<1x14x14xf32>
    %164 = vector.shape_cast %163 : vector<1x14x14xf32> to vector<14x14xf32>
    %165 = vector.shape_cast %164 : vector<14x14xf32> to vector<1x196xf32>
    %166 = vector.extract_strided_slice %120 {offsets = [1, 2, 0], sizes = [1, 14, 14], strides = [1, 1, 1]} : vector<4x16x16xf32> to vector<1x14x14xf32>
    %167 = vector.shape_cast %166 : vector<1x14x14xf32> to vector<14x14xf32>
    %168 = vector.shape_cast %167 : vector<14x14xf32> to vector<1x196xf32>
    %169 = vector.extract_strided_slice %120 {offsets = [1, 2, 1], sizes = [1, 14, 14], strides = [1, 1, 1]} : vector<4x16x16xf32> to vector<1x14x14xf32>
    %170 = vector.shape_cast %169 : vector<1x14x14xf32> to vector<14x14xf32>
    %171 = vector.shape_cast %170 : vector<14x14xf32> to vector<1x196xf32>
    %172 = vector.extract_strided_slice %120 {offsets = [1, 2, 2], sizes = [1, 14, 14], strides = [1, 1, 1]} : vector<4x16x16xf32> to vector<1x14x14xf32>
    %173 = vector.shape_cast %172 : vector<1x14x14xf32> to vector<14x14xf32>
    %174 = vector.shape_cast %173 : vector<14x14xf32> to vector<1x196xf32>
    %175 = vector.extract_strided_slice %120 {offsets = [2, 0, 0], sizes = [1, 14, 14], strides = [1, 1, 1]} : vector<4x16x16xf32> to vector<1x14x14xf32>
    %176 = vector.shape_cast %175 : vector<1x14x14xf32> to vector<14x14xf32>
    %177 = vector.shape_cast %176 : vector<14x14xf32> to vector<1x196xf32>
    %178 = vector.extract_strided_slice %120 {offsets = [2, 0, 1], sizes = [1, 14, 14], strides = [1, 1, 1]} : vector<4x16x16xf32> to vector<1x14x14xf32>
    %179 = vector.shape_cast %178 : vector<1x14x14xf32> to vector<14x14xf32>
    %180 = vector.shape_cast %179 : vector<14x14xf32> to vector<1x196xf32>
    %181 = vector.extract_strided_slice %120 {offsets = [2, 0, 2], sizes = [1, 14, 14], strides = [1, 1, 1]} : vector<4x16x16xf32> to vector<1x14x14xf32>
    %182 = vector.shape_cast %181 : vector<1x14x14xf32> to vector<14x14xf32>
    %183 = vector.shape_cast %182 : vector<14x14xf32> to vector<1x196xf32>
    %184 = vector.extract_strided_slice %120 {offsets = [2, 1, 0], sizes = [1, 14, 14], strides = [1, 1, 1]} : vector<4x16x16xf32> to vector<1x14x14xf32>
    %185 = vector.shape_cast %184 : vector<1x14x14xf32> to vector<14x14xf32>
    %186 = vector.shape_cast %185 : vector<14x14xf32> to vector<1x196xf32>
    %187 = vector.extract_strided_slice %120 {offsets = [2, 1, 1], sizes = [1, 14, 14], strides = [1, 1, 1]} : vector<4x16x16xf32> to vector<1x14x14xf32>
    %188 = vector.shape_cast %187 : vector<1x14x14xf32> to vector<14x14xf32>
    %189 = vector.shape_cast %188 : vector<14x14xf32> to vector<1x196xf32>
    %190 = vector.extract_strided_slice %120 {offsets = [2, 1, 2], sizes = [1, 14, 14], strides = [1, 1, 1]} : vector<4x16x16xf32> to vector<1x14x14xf32>
    %191 = vector.shape_cast %190 : vector<1x14x14xf32> to vector<14x14xf32>
    %192 = vector.shape_cast %191 : vector<14x14xf32> to vector<1x196xf32>
    %193 = vector.extract_strided_slice %120 {offsets = [2, 2, 0], sizes = [1, 14, 14], strides = [1, 1, 1]} : vector<4x16x16xf32> to vector<1x14x14xf32>
    %194 = vector.shape_cast %193 : vector<1x14x14xf32> to vector<14x14xf32>
    %195 = vector.shape_cast %194 : vector<14x14xf32> to vector<1x196xf32>
    %196 = vector.extract_strided_slice %120 {offsets = [2, 2, 1], sizes = [1, 14, 14], strides = [1, 1, 1]} : vector<4x16x16xf32> to vector<1x14x14xf32>
    %197 = vector.shape_cast %196 : vector<1x14x14xf32> to vector<14x14xf32>
    %198 = vector.shape_cast %197 : vector<14x14xf32> to vector<1x196xf32>
    %199 = vector.extract_strided_slice %120 {offsets = [2, 2, 2], sizes = [1, 14, 14], strides = [1, 1, 1]} : vector<4x16x16xf32> to vector<1x14x14xf32>
    %200 = vector.shape_cast %199 : vector<1x14x14xf32> to vector<14x14xf32>
    %201 = vector.shape_cast %200 : vector<14x14xf32> to vector<1x196xf32>
    %202 = vector.extract_strided_slice %120 {offsets = [3, 0, 0], sizes = [1, 14, 14], strides = [1, 1, 1]} : vector<4x16x16xf32> to vector<1x14x14xf32>
    %203 = vector.shape_cast %202 : vector<1x14x14xf32> to vector<14x14xf32>
    %204 = vector.shape_cast %203 : vector<14x14xf32> to vector<1x196xf32>
    %205 = vector.extract_strided_slice %120 {offsets = [3, 0, 1], sizes = [1, 14, 14], strides = [1, 1, 1]} : vector<4x16x16xf32> to vector<1x14x14xf32>
    %206 = vector.shape_cast %205 : vector<1x14x14xf32> to vector<14x14xf32>
    %207 = vector.shape_cast %206 : vector<14x14xf32> to vector<1x196xf32>
    %208 = vector.extract_strided_slice %120 {offsets = [3, 0, 2], sizes = [1, 14, 14], strides = [1, 1, 1]} : vector<4x16x16xf32> to vector<1x14x14xf32>
    %209 = vector.shape_cast %208 : vector<1x14x14xf32> to vector<14x14xf32>
    %210 = vector.shape_cast %209 : vector<14x14xf32> to vector<1x196xf32>
    %211 = vector.extract_strided_slice %120 {offsets = [3, 1, 0], sizes = [1, 14, 14], strides = [1, 1, 1]} : vector<4x16x16xf32> to vector<1x14x14xf32>
    %212 = vector.shape_cast %211 : vector<1x14x14xf32> to vector<14x14xf32>
    %213 = vector.shape_cast %212 : vector<14x14xf32> to vector<1x196xf32>
    %214 = vector.extract_strided_slice %120 {offsets = [3, 1, 1], sizes = [1, 14, 14], strides = [1, 1, 1]} : vector<4x16x16xf32> to vector<1x14x14xf32>
    %215 = vector.shape_cast %214 : vector<1x14x14xf32> to vector<14x14xf32>
    %216 = vector.shape_cast %215 : vector<14x14xf32> to vector<1x196xf32>
    %217 = vector.extract_strided_slice %120 {offsets = [3, 1, 2], sizes = [1, 14, 14], strides = [1, 1, 1]} : vector<4x16x16xf32> to vector<1x14x14xf32>
    %218 = vector.shape_cast %217 : vector<1x14x14xf32> to vector<14x14xf32>
    %219 = vector.shape_cast %218 : vector<14x14xf32> to vector<1x196xf32>
    %220 = vector.extract_strided_slice %120 {offsets = [3, 2, 0], sizes = [1, 14, 14], strides = [1, 1, 1]} : vector<4x16x16xf32> to vector<1x14x14xf32>
    %221 = vector.shape_cast %220 : vector<1x14x14xf32> to vector<14x14xf32>
    %222 = vector.shape_cast %221 : vector<14x14xf32> to vector<1x196xf32>
    %223 = vector.extract_strided_slice %120 {offsets = [3, 2, 1], sizes = [1, 14, 14], strides = [1, 1, 1]} : vector<4x16x16xf32> to vector<1x14x14xf32>
    %224 = vector.shape_cast %223 : vector<1x14x14xf32> to vector<14x14xf32>
    %225 = vector.shape_cast %224 : vector<14x14xf32> to vector<1x196xf32>
    %226 = vector.extract_strided_slice %120 {offsets = [3, 2, 2], sizes = [1, 14, 14], strides = [1, 1, 1]} : vector<4x16x16xf32> to vector<1x14x14xf32>
    %227 = vector.shape_cast %226 : vector<1x14x14xf32> to vector<14x14xf32>
    %228 = vector.shape_cast %227 : vector<14x14xf32> to vector<1x196xf32>
    %229 = tpu.concatenate %123, %126, %129, %132, %135, %138, %141, %144, %147, %150, %153, %156, %159, %162, %165, %168 in 0 : vector<1x196xf32>, vector<1x196xf32>, vector<1x196xf32>, vector<1x196xf32>, vector<1x196xf32>, vector<1x196xf32>, vector<1x196xf32>, vector<1x196xf32>, vector<1x196xf32>, vector<1x196xf32>, vector<1x196xf32>, vector<1x196xf32>, vector<1x196xf32>, vector<1x196xf32>, vector<1x196xf32>, vector<1x196xf32> -> vector<16x196xf32>
    %230 = tpu.concatenate %171, %174, %177, %180, %183, %186, %189, %192, %195, %198, %201, %204, %207, %210, %213, %216 in 0 : vector<1x196xf32>, vector<1x196xf32>, vector<1x196xf32>, vector<1x196xf32>, vector<1x196xf32>, vector<1x196xf32>, vector<1x196xf32>, vector<1x196xf32>, vector<1x196xf32>, vector<1x196xf32>, vector<1x196xf32>, vector<1x196xf32>, vector<1x196xf32>, vector<1x196xf32>, vector<1x196xf32>, vector<1x196xf32> -> vector<16x196xf32>
    %231 = tpu.concatenate %219, %222, %225, %228 in 0 : vector<1x196xf32>, vector<1x196xf32>, vector<1x196xf32>, vector<1x196xf32> -> vector<4x196xf32>
    %232 = tpu.concatenate %229, %230, %231 in 0 : vector<16x196xf32>, vector<16x196xf32>, vector<4x196xf32> -> vector<36x196xf32>
    %cst_11 = arith.constant dense<0.000000e+00> : vector<20x196xf32>
    %233 = tpu.matmul %0, %232, %cst_11 {dimension_numbers = #tpu.dot_dimension_numbers<[1], [0], [0], [1], [0, 0, 1, 1], [], []>} : vector<20x36xf32>, vector<36x196xf32>, vector<20x196xf32> -> vector<20x196xf32>
    %c1_12 = arith.constant 1 : index
    %c0_13 = arith.constant 0 : index
    %c0_14 = arith.constant 0 : index
    %234 = vector.load %arg2[%c1_12, %c0_13, %c0_14] : memref<2x20x196xf32, #tpu.memory_space<vmem>>, vector<1x20x196xf32>
    %235 = vector.shape_cast %234 : vector<1x20x196xf32> to vector<20x196xf32>
    %236 = vector.shape_cast %233 : vector<20x196xf32> to vector<1x20x196xf32>
    tpu.vector_store %arg2[%c1_12, %c0_13, %c0_14], %236 {strides = array<i32>} : memref<2x20x196xf32, #tpu.memory_space<vmem>>, vector<1x20x196xf32>,
    return
  }
}

</mosaic_0001>

<llo_original>
// kernel: net_v2_forward.1
$region0: #{net_v2_forward.1}
  #allocation0 [shape = 'u32[]', space=smem, size = 0x4, offset = 0x4, fixed_abs, tag = 'smem constant byte address 0x4 - core index']
  #allocation1 [shape = 'u32[144,128]{1,0:T(1,128)}', space=vmem, size = 0x12000, scoped, tag = 'internal scratch']
  %s0 = inlined_call_operand.vmem [shape: f32[2,4,16,16], index: 0, kind: input, shape index: {}]
  %s1 = inlined_call_operand.vmem [shape: f32[20,36], index: 1, kind: input, shape index: {}]
  %s2 = inlined_call_operand.vmem [shape: f32[2,20,196], index: 2, kind: output, shape index: {}]
  %s3 = sld [smem:[#allocation0]]
  $region18: #{net_v2_forward.1} parent=0
    _
  %s5 = ssub.s32 1, %s3
  %s6 = scalar_select 0, %s5, %s3
  // Predicated region
  $region2: #{net_v2_forward.1} parent=0 // pred_check
    _
  $region3: #{net_v2_forward.1} parent=0 // pred_check_branch
    %8 = sbr.rel (0) target = $region5
  $region4: #{net_v2_forward.1} parent=0 // pred_region
    _
  $region5: #{net_v2_forward.1} parent=0 // pred_fallthru
    _
  // Predicated region
  $region6: #{net_v2_forward.1} parent=0 // pred_check
    _
  $region7: #{net_v2_forward.1} parent=0 // pred_check_branch
    %10 = sbr.rel (0) target = $region9
  $region8: #{net_v2_forward.1} parent=0 // pred_region
    _
  $region9: #{net_v2_forward.1} parent=0 // pred_fallthru
    _
  %v11 = vld [vmem:[%s1] sm:$0xff]
  %v12 = vld [vmem:[%s1 + $0x8] sm:$0xff]
  %v13 = vld [vmem:[%s1 + $0x10] sm:$0xf]
  %v14 = vld [vmem:[%s0] sm:$0xff]
  %v15 = vld [vmem:[%s0 + $0x8] sm:$0xff]
  %v16 = vld [vmem:[%s0 + $0x10] sm:$0xff]
  %v17 = vld [vmem:[%s0 + $0x18] sm:$0xff]
  %v18 = vld [vmem:[%s0 + $0x20] sm:$0xff]
  %v19 = vld [vmem:[%s0 + $0x28] sm:$0xff]
  %v20 = vld [vmem:[%s0 + $0x30] sm:$0xff]
  %v21 = vld [vmem:[%s0 + $0x38] sm:$0xff]
  %v22 = vcombine.high %v14, 0.0
  %v24 = vunpack.c.l.s4 1983009808
  %v25 = vunpack.c.0.s8 %v24
  %v26 = vlaneseq
  %v27 = vshrl.u32 %v26, 7
  %v28 = vsub.s32 %v25, %v27
  %v29 = vrot.slane %v14, %v28
  %v31 = vunpack.c.l.s4 1983009808
  %v32 = vunpack.c.0.s8 %v31
  %v33 = vlaneseq
  %v34 = vshrl.u32 %v33, 7
  %v35 = vsub.s32 %v32, %v34
  %v36 = vrot.slane %v22, %v35
  %v37 = vcombine.high %v29, 0.0
  %v39 = vunpack.c.l.s4 1934713408
  %v40 = vunpack.c.0.s8 %v39
  %v41 = vlaneseq
  %v42 = vshrl.u32 %v41, 7
  %v43 = vsub.s32 %v40, %v42
  %v44 = vrot.slane %v29, %v43
  %v46 = vunpack.c.l.s4 1934713408
  %v47 = vunpack.c.0.s8 %v46
  %v48 = vlaneseq
  %v49 = vshrl.u32 %v48, 7
  %v50 = vsub.s32 %v47, %v49
  %v51 = vrot.slane %v37, %v50
  %v52 = vcombine.high %v36, 0.0
  %v54 = vunpack.c.l.s4 1934713408
  %v55 = vunpack.c.0.s8 %v54
  %v56 = vlaneseq
  %v57 = vshrl.u32 %v56, 7
  %v58 = vsub.s32 %v55, %v57
  %v59 = vrot.slane %v36, %v58
  %v61 = vunpack.c.l.s4 1934713408
  %v62 = vunpack.c.0.s8 %v61
  %v63 = vlaneseq
  %v64 = vshrl.u32 %v63, 7
  %v65 = vsub.s32 %v62, %v64
  %v66 = vrot.slane %v52, %v65
  %v67 = vcombine.high %v44, 0.0
  %v68 = vcombine.high %v51, 0.0
  %v69 = vcombine.high %v59, 0.0
  %v70 = vcombine.high %v66, 0.0
  %v72 = vunpack.c.l.s4 1983009808
  %v73 = vunpack.c.0.s8 %v72
  %v74 = vlaneseq
  %v75 = vshrl.u32 %v74, 7
  %v76 = vsub.s32 %v73, %v75
  %v77 = vrot.slane %v15, %v76
  %v78 = vcombine.high %v77, 0.0
  %v80 = vunpack.c.l.s4 1934713408
  %v81 = vunpack.c.0.s8 %v80
  %v82 = vlaneseq
  %v83 = vshrl.u32 %v82, 7
  %v84 = vsub.s32 %v81, %v83
  %v85 = vrot.slane %v77, %v84
  %v87 = vunpack.c.l.s4 1934713408
  %v88 = vunpack.c.0.s8 %v87
  %v89 = vlaneseq
  %v90 = vshrl.u32 %v89, 7
  %v91 = vsub.s32 %v88, %v90
  %v92 = vrot.slane %v78, %v91
  %v93 = vcombine.high %v15, 0.0
  %v95 = vunpack.c.l.s4 1934713408
  %v96 = vunpack.c.0.s8 %v95
  %v97 = vlaneseq
  %v98 = vshrl.u32 %v97, 7
  %v99 = vsub.s32 %v96, %v98
  %v100 = vrot.slane %v93, %v99
  %v101 = vcombine.high %v85, 0.0
  %v102 = vcombine.high %v92, 0.0
  %v103 = vcombine.high %v100, 0.0
  %105 = vrot.lane.b32.xlu0 %v67, 14
  %v106 = vpop.permute.xlu0 %105
  %109 = vrot.lane.b32.xlu0 %v51, 28
  %v110 = vpop.permute.xlu0 %109
  %113 = vrot.lane.b32.xlu0 %v68, 42
  %v114 = vpop.permute.xlu0 %113
  %117 = vrot.lane.b32.xlu0 %v59, 56
  %v118 = vpop.permute.xlu0 %117
  %121 = vrot.lane.b32.xlu0 %v69, 70
  %v122 = vpop.permute.xlu0 %121
  %125 = vrot.lane.b32.xlu0 %v66, 84
  %v126 = vpop.permute.xlu0 %125
  %129 = vrot.lane.b32.xlu0 %v70, 98
  %v130 = vpop.permute.xlu0 %129
  %133 = vrot.lane.b32.xlu0 %v85, 112
  %v134 = vpop.permute.xlu0 %133
  %137 = vrot.lane.b32.xlu0 %v101, 126
  %v138 = vpop.permute.xlu0 %137
  %141 = vrot.lane.b32.xlu0 %v92, 12
  %v142 = vpop.permute.xlu0 %141
  %145 = vrot.lane.b32.xlu0 %v102, 26
  %v146 = vpop.permute.xlu0 %145
  %149 = vrot.lane.b32.xlu0 %v100, 40
  %v150 = vpop.permute.xlu0 %149
  %153 = vrot.lane.b32.xlu0 %v103, 54
  %v154 = vpop.permute.xlu0 %153
  %vm156 = vcmask 113664
  %v157 = vsel %vm156, %v44, %v106
  %vm158 = vcmask 228352
  %v159 = vsel %vm158, %v157, %v110
  %vm160 = vcmask 343040
  %v161 = vsel %vm160, %v159, %v114
  %vm162 = vcmask 457728
  %v163 = vsel %vm162, %v161, %v118
  %vm164 = vcmask 572416
  %v165 = vsel %vm164, %v163, %v122
  %vm166 = vcmask 687104
  %v167 = vsel %vm166, %v165, %v126
  %vm168 = vcmask 801792
  %v169 = vsel %vm168, %v167, %v130
  %vm170 = vcmask 916480
  %v171 = vsel %vm170, %v169, %v134
  %vm172 = vcmask 1031168
  %v173 = vsel %vm172, %v171, %v138
  %vm174 = vcmask 97280
  %v175 = vsel %vm174, %v138, %v142
  %vm176 = vcmask 211968
  %v177 = vsel %vm176, %v175, %v146
  %vm178 = vcmask 326656
  %v179 = vsel %vm178, %v177, %v150
  %vm180 = vcmask 441344
  %v181 = vsel %vm180, %v179, %v154
  %184 = vrot.lane.b32.xlu0 %v14, 127
  %v185 = vpop.permute.xlu0 %184
  %186 = vrot.lane.b32.xlu0 %v15, 127
  %v187 = vpop.permute.xlu0 %186
  %v190 = vcombine.high %v185, 0.0
  %v192 = vunpack.c.l.s4 1983009808
  %v193 = vunpack.c.0.s8 %v192
  %v194 = vlaneseq
  %v195 = vshrl.u32 %v194, 7
  %v196 = vsub.s32 %v193, %v195
  %v197 = vrot.slane %v185, %v196
  %v199 = vunpack.c.l.s4 1983009808
  %v200 = vunpack.c.0.s8 %v199
  %v201 = vlaneseq
  %v202 = vshrl.u32 %v201, 7
  %v203 = vsub.s32 %v200, %v202
  %v204 = vrot.slane %v190, %v203
  %v205 = vcombine.high %v197, 0.0
  %v207 = vunpack.c.l.s4 1934713408
  %v208 = vunpack.c.0.s8 %v207
  %v209 = vlaneseq
  %v210 = vshrl.u32 %v209, 7
  %v211 = vsub.s32 %v208, %v210
  %v212 = vrot.slane %v197, %v211
  %v214 = vunpack.c.l.s4 1934713408
  %v215 = vunpack.c.0.s8 %v214
  %v216 = vlaneseq
  %v217 = vshrl.u32 %v216, 7
  %v218 = vsub.s32 %v215, %v217
  %v219 = vrot.slane %v205, %v218
  %v220 = vcombine.high %v204, 0.0
  %v222 = vunpack.c.l.s4 1934713408
  %v223 = vunpack.c.0.s8 %v222
  %v224 = vlaneseq
  %v225 = vshrl.u32 %v224, 7
  %v226 = vsub.s32 %v223, %v225
  %v227 = vrot.slane %v204, %v226
  %v229 = vunpack.c.l.s4 1934713408
  %v230 = vunpack.c.0.s8 %v229
  %v231 = vlaneseq
  %v232 = vshrl.u32 %v231, 7
  %v233 = vsub.s32 %v230, %v232
  %v234 = vrot.slane %v220, %v233
  %v235 = vcombine.high %v212, 0.0
  %v236 = vcombine.high %v219, 0.0
  %v237 = vcombine.high %v227, 0.0
  %v238 = vcombine.high %v234, 0.0
  %v240 = vunpack.c.l.s4 1983009808
  %v241 = vunpack.c.0.s8 %v240
  %v242 = vlaneseq
  %v243 = vshrl.u32 %v242, 7
  %v244 = vsub.s32 %v241, %v243
  %v245 = vrot.slane %v187, %v244
  %v246 = vcombine.high %v245, 0.0
  %v248 = vunpack.c.l.s4 1934713408
  %v249 = vunpack.c.0.s8 %v248
  %v250 = vlaneseq
  %v251 = vshrl.u32 %v250, 7
  %v252 = vsub.s32 %v249, %v251
  %v253 = vrot.slane %v245, %v252
  %v255 = vunpack.c.l.s4 1934713408
  %v256 = vunpack.c.0.s8 %v255
  %v257 = vlaneseq
  %v258 = vshrl.u32 %v257, 7
  %v259 = vsub.s32 %v256, %v258
  %v260 = vrot.slane %v246, %v259
  %v261 = vcombine.high %v187, 0.0
  %v263 = vunpack.c.l.s4 1934713408
  %v264 = vunpack.c.0.s8 %v263
  %v265 = vlaneseq
  %v266 = vshrl.u32 %v265, 7
  %v267 = vsub.s32 %v264, %v266
  %v268 = vrot.slane %v261, %v267
  %v269 = vcombine.high %v253, 0.0
  %v270 = vcombine.high %v260, 0.0
  %v271 = vcombine.high %v268, 0.0
  %273 = vrot.lane.b32.xlu0 %v235, 14
  %v274 = vpop.permute.xlu0 %273
  %277 = vrot.lane.b32.xlu0 %v219, 28
  %v278 = vpop.permute.xlu0 %277
  %281 = vrot.lane.b32.xlu0 %v236, 42
  %v282 = vpop.permute.xlu0 %281
  %285 = vrot.lane.b32.xlu0 %v227, 56
  %v286 = vpop.permute.xlu0 %285
  %289 = vrot.lane.b32.xlu0 %v237, 70
  %v290 = vpop.permute.xlu0 %289
  %293 = vrot.lane.b32.xlu0 %v234, 84
  %v294 = vpop.permute.xlu0 %293
  %297 = vrot.lane.b32.xlu0 %v238, 98
  %v298 = vpop.permute.xlu0 %297
  %301 = vrot.lane.b32.xlu0 %v253, 112
  %v302 = vpop.permute.xlu0 %301
  %305 = vrot.lane.b32.xlu0 %v269, 126
  %v306 = vpop.permute.xlu0 %305
  %309 = vrot.lane.b32.xlu0 %v260, 12
  %v310 = vpop.permute.xlu0 %309
  %313 = vrot.lane.b32.xlu0 %v270, 26
  %v314 = vpop.permute.xlu0 %313
  %317 = vrot.lane.b32.xlu0 %v268, 40
  %v318 = vpop.permute.xlu0 %317
  %321 = vrot.lane.b32.xlu0 %v271, 54
  %v322 = vpop.permute.xlu0 %321
  %v324 = vsel %vm156, %v212, %v274
  %v325 = vsel %vm158, %v324, %v278
  %v326 = vsel %vm160, %v325, %v282
  %v327 = vsel %vm162, %v326, %v286
  %v328 = vsel %vm164, %v327, %v290
  %v329 = vsel %vm166, %v328, %v294
  %v330 = vsel %vm168, %v329, %v298
  %v331 = vsel %vm170, %v330, %v302
  %v332 = vsel %vm172, %v331, %v306
  %v333 = vsel %vm174, %v306, %v310
  %v334 = vsel %vm176, %v333, %v314
  %v335 = vsel %vm178, %v334, %v318
  %v336 = vsel %vm180, %v335, %v322
  %337 = vrot.lane.b32.xlu0 %v14, 126
  %v338 = vpop.permute.xlu0 %337
  %339 = vrot.lane.b32.xlu0 %v15, 126
  %v340 = vpop.permute.xlu0 %339
  %v343 = vcombine.high %v338, 0.0
  %v345 = vunpack.c.l.s4 1983009808
  %v346 = vunpack.c.0.s8 %v345
  %v347 = vlaneseq
  %v348 = vshrl.u32 %v347, 7
  %v349 = vsub.s32 %v346, %v348
  %v350 = vrot.slane %v338, %v349
  %v352 = vunpack.c.l.s4 1983009808
  %v353 = vunpack.c.0.s8 %v352
  %v354 = vlaneseq
  %v355 = vshrl.u32 %v354, 7
  %v356 = vsub.s32 %v353, %v355
  %v357 = vrot.slane %v343, %v356
  %v358 = vcombine.high %v350, 0.0
  %v360 = vunpack.c.l.s4 1934713408
  %v361 = vunpack.c.0.s8 %v360
  %v362 = vlaneseq
  %v363 = vshrl.u32 %v362, 7
  %v364 = vsub.s32 %v361, %v363
  %v365 = vrot.slane %v350, %v364
  %v367 = vunpack.c.l.s4 1934713408
  %v368 = vunpack.c.0.s8 %v367
  %v369 = vlaneseq
  %v370 = vshrl.u32 %v369, 7
  %v371 = vsub.s32 %v368, %v370
  %v372 = vrot.slane %v358, %v371
  %v373 = vcombine.high %v357, 0.0
  %v375 = vunpack.c.l.s4 1934713408
  %v376 = vunpack.c.0.s8 %v375
  %v377 = vlaneseq
  %v378 = vshrl.u32 %v377, 7
  %v379 = vsub.s32 %v376, %v378
  %v380 = vrot.slane %v357, %v379
  %v382 = vunpack.c.l.s4 1934713408
  %v383 = vunpack.c.0.s8 %v382
  %v384 = vlaneseq
  %v385 = vshrl.u32 %v384, 7
  %v386 = vsub.s32 %v383, %v385
  %v387 = vrot.slane %v373, %v386
  %v388 = vcombine.high %v365, 0.0
  %v389 = vcombine.high %v372, 0.0
  %v390 = vcombine.high %v380, 0.0
  %v391 = vcombine.high %v387, 0.0
  %v393 = vunpack.c.l.s4 1983009808
  %v394 = vunpack.c.0.s8 %v393
  %v395 = vlaneseq
  %v396 = vshrl.u32 %v395, 7
  %v397 = vsub.s32 %v394, %v396
  %v398 = vrot.slane %v340, %v397
  %v399 = vcombine.high %v398, 0.0
  %v401 = vunpack.c.l.s4 1934713408
  %v402 = vunpack.c.0.s8 %v401
  %v403 = vlaneseq
  %v404 = vshrl.u32 %v403, 7
  %v405 = vsub.s32 %v402, %v404
  %v406 = vrot.slane %v398, %v405
  %v408 = vunpack.c.l.s4 1934713408
  %v409 = vunpack.c.0.s8 %v408
  %v410 = vlaneseq
  %v411 = vshrl.u32 %v410, 7
  %v412 = vsub.s32 %v409, %v411
  %v413 = vrot.slane %v399, %v412
  %v414 = vcombine.high %v340, 0.0
  %v416 = vunpack.c.l.s4 1934713408
  %v417 = vunpack.c.0.s8 %v416
  %v418 = vlaneseq
  %v419 = vshrl.u32 %v418, 7
  %v420 = vsub.s32 %v417, %v419
  %v421 = vrot.slane %v414, %v420
  %v422 = vcombine.high %v406, 0.0
  %v423 = vcombine.high %v413, 0.0
  %v424 = vcombine.high %v421, 0.0
  %426 = vrot.lane.b32.xlu0 %v388, 14
  %v427 = vpop.permute.xlu0 %426
  %430 = vrot.lane.b32.xlu0 %v372, 28
  %v431 = vpop.permute.xlu0 %430
  %434 = vrot.lane.b32.xlu0 %v389, 42
  %v435 = vpop.permute.xlu0 %434
  %438 = vrot.lane.b32.xlu0 %v380, 56
  %v439 = vpop.permute.xlu0 %438
  %442 = vrot.lane.b32.xlu0 %v390, 70
  %v443 = vpop.permute.xlu0 %442
  %446 = vrot.lane.b32.xlu0 %v387, 84
  %v447 = vpop.permute.xlu0 %446
  %450 = vrot.lane.b32.xlu0 %v391, 98
  %v451 = vpop.permute.xlu0 %450
  %454 = vrot.lane.b32.xlu0 %v406, 112
  %v455 = vpop.permute.xlu0 %454
  %458 = vrot.lane.b32.xlu0 %v422, 126
  %v459 = vpop.permute.xlu0 %458
  %462 = vrot.lane.b32.xlu0 %v413, 12
  %v463 = vpop.permute.xlu0 %462
  %466 = vrot.lane.b32.xlu0 %v423, 26
  %v467 = vpop.permute.xlu0 %466
  %470 = vrot.lane.b32.xlu0 %v421, 40
  %v471 = vpop.permute.xlu0 %470
  %474 = vrot.lane.b32.xlu0 %v424, 54
  %v475 = vpop.permute.xlu0 %474
  %v477 = vsel %vm156, %v365, %v427
  %v478 = vsel %vm158, %v477, %v431
  %v479 = vsel %vm160, %v478, %v435
  %v480 = vsel %vm162, %v479, %v439
  %v481 = vsel %vm164, %v480, %v443
  %v482 = vsel %vm166, %v481, %v447
  %v483 = vsel %vm168, %v482, %v451
  %v484 = vsel %vm170, %v483, %v455
  %v485 = vsel %vm172, %v484, %v459
  %v486 = vsel %vm174, %v459, %v463
  %v487 = vsel %vm176, %v486, %v467
  %v488 = vsel %vm178, %v487, %v471
  %v489 = vsel %vm180, %v488, %v475
  %vm490 = vcmask 1046528
  %v491 = vrot.slane %v14, 1
  %v492 = vrot.slane %v15, 1
  %v493 = vsel %vm490, %v491, %v492
  %v496 = vcombine.high %v493, 0.0
  %v498 = vunpack.c.l.s4 1983009808
  %v499 = vunpack.c.0.s8 %v498
  %v500 = vlaneseq
  %v501 = vshrl.u32 %v500, 7
  %v502 = vsub.s32 %v499, %v501
  %v503 = vrot.slane %v493, %v502
  %v505 = vunpack.c.l.s4 1983009808
  %v506 = vunpack.c.0.s8 %v505
  %v507 = vlaneseq
  %v508 = vshrl.u32 %v507, 7
  %v509 = vsub.s32 %v506, %v508
  %v510 = vrot.slane %v496, %v509
  %v511 = vcombine.high %v503, 0.0
  %v513 = vunpack.c.l.s4 1934713408
  %v514 = vunpack.c.0.s8 %v513
  %v515 = vlaneseq
  %v516 = vshrl.u32 %v515, 7
  %v517 = vsub.s32 %v514, %v516
  %v518 = vrot.slane %v503, %v517
  %v520 = vunpack.c.l.s4 1934713408
  %v521 = vunpack.c.0.s8 %v520
  %v522 = vlaneseq
  %v523 = vshrl.u32 %v522, 7
  %v524 = vsub.s32 %v521, %v523
  %v525 = vrot.slane %v511, %v524
  %v526 = vcombine.high %v510, 0.0
  %v528 = vunpack.c.l.s4 1934713408
  %v529 = vunpack.c.0.s8 %v528
  %v530 = vlaneseq
  %v531 = vshrl.u32 %v530, 7
  %v532 = vsub.s32 %v529, %v531
  %v533 = vrot.slane %v510, %v532
  %v535 = vunpack.c.l.s4 1934713408
  %v536 = vunpack.c.0.s8 %v535
  %v537 = vlaneseq
  %v538 = vshrl.u32 %v537, 7
  %v539 = vsub.s32 %v536, %v538
  %v540 = vrot.slane %v526, %v539
  %v541 = vcombine.high %v518, 0.0
  %v542 = vcombine.high %v525, 0.0
  %v543 = vcombine.high %v533, 0.0
  %v544 = vcombine.high %v540, 0.0
  %v546 = vunpack.c.l.s4 1983009808
  %v547 = vunpack.c.0.s8 %v546
  %v548 = vlaneseq
  %v549 = vshrl.u32 %v548, 7
  %v550 = vsub.s32 %v547, %v549
  %v551 = vrot.slane %v492, %v550
  %v552 = vcombine.high %v551, 0.0
  %v554 = vunpack.c.l.s4 1934713408
  %v555 = vunpack.c.0.s8 %v554
  %v556 = vlaneseq
  %v557 = vshrl.u32 %v556, 7
  %v558 = vsub.s32 %v555, %v557
  %v559 = vrot.slane %v551, %v558
  %v561 = vunpack.c.l.s4 1934713408
  %v562 = vunpack.c.0.s8 %v561
  %v563 = vlaneseq
  %v564 = vshrl.u32 %v563, 7
  %v565 = vsub.s32 %v562, %v564
  %v566 = vrot.slane %v552, %v565
  %v567 = vcombine.high %v492, 0.0
  %v569 = vunpack.c.l.s4 1934713408
  %v570 = vunpack.c.0.s8 %v569
  %v571 = vlaneseq
  %v572 = vshrl.u32 %v571, 7
  %v573 = vsub.s32 %v570, %v572
  %v574 = vrot.slane %v567, %v573
  %v575 = vcombine.high %v559, 0.0
  %v576 = vcombine.high %v566, 0.0
  %v577 = vcombine.high %v574, 0.0
  %579 = vrot.lane.b32.xlu0 %v541, 14
  %v580 = vpop.permute.xlu0 %579
  %583 = vrot.lane.b32.xlu0 %v525, 28
  %v584 = vpop.permute.xlu0 %583
  %587 = vrot.lane.b32.xlu0 %v542, 42
  %v588 = vpop.permute.xlu0 %587
  %591 = vrot.lane.b32.xlu0 %v533, 56
  %v592 = vpop.permute.xlu0 %591
  %595 = vrot.lane.b32.xlu0 %v543, 70
  %v596 = vpop.permute.xlu0 %595
  %599 = vrot.lane.b32.xlu0 %v540, 84
  %v600 = vpop.permute.xlu0 %599
  %603 = vrot.lane.b32.xlu0 %v544, 98
  %v604 = vpop.permute.xlu0 %603
  %607 = vrot.lane.b32.xlu0 %v559, 112
  %v608 = vpop.permute.xlu0 %607
  %611 = vrot.lane.b32.xlu0 %v575, 126
  %v612 = vpop.permute.xlu0 %611
  %615 = vrot.lane.b32.xlu0 %v566, 12
  %v616 = vpop.permute.xlu0 %615
  %619 = vrot.lane.b32.xlu0 %v576, 26
  %v620 = vpop.permute.xlu0 %619
  %623 = vrot.lane.b32.xlu0 %v574, 40
  %v624 = vpop.permute.xlu0 %623
  %627 = vrot.lane.b32.xlu0 %v577, 54
  %v628 = vpop.permute.xlu0 %627
  %v630 = vsel %vm156, %v518, %v580
  %v631 = vsel %vm158, %v630, %v584
  %v632 = vsel %vm160, %v631, %v588
  %v633 = vsel %vm162, %v632, %v592
  %v634 = vsel %vm164, %v633, %v596
  %v635 = vsel %vm166, %v634, %v600
  %v636 = vsel %vm168, %v635, %v604
  %v637 = vsel %vm170, %v636, %v608
  %v638 = vsel %vm172, %v637, %v612
  %v639 = vsel %vm174, %v612, %v616
  %v640 = vsel %vm176, %v639, %v620
  %v641 = vsel %vm178, %v640, %v624
  %v642 = vsel %vm180, %v641, %v628
  %643 = vrot.lane.b32.xlu0 %v493, 127
  %v644 = vpop.permute.xlu0 %643
  %645 = vrot.lane.b32.xlu0 %v492, 127
  %v646 = vpop.permute.xlu0 %645
  %v649 = vcombine.high %v644, 0.0
  %v651 = vunpack.c.l.s4 1983009808
  %v652 = vunpack.c.0.s8 %v651
  %v653 = vlaneseq
  %v654 = vshrl.u32 %v653, 7
  %v655 = vsub.s32 %v652, %v654
  %v656 = vrot.slane %v644, %v655
  %v658 = vunpack.c.l.s4 1983009808
  %v659 = vunpack.c.0.s8 %v658
  %v660 = vlaneseq
  %v661 = vshrl.u32 %v660, 7
  %v662 = vsub.s32 %v659, %v661
  %v663 = vrot.slane %v649, %v662
  %v664 = vcombine.high %v656, 0.0
  %v666 = vunpack.c.l.s4 1934713408
  %v667 = vunpack.c.0.s8 %v666
  %v668 = vlaneseq
  %v669 = vshrl.u32 %v668, 7
  %v670 = vsub.s32 %v667, %v669
  %v671 = vrot.slane %v656, %v670
  %v673 = vunpack.c.l.s4 1934713408
  %v674 = vunpack.c.0.s8 %v673
  %v675 = vlaneseq
  %v676 = vshrl.u32 %v675, 7
  %v677 = vsub.s32 %v674, %v676
  %v678 = vrot.slane %v664, %v677
  %v679 = vcombine.high %v663, 0.0
  %v681 = vunpack.c.l.s4 1934713408
  %v682 = vunpack.c.0.s8 %v681
  %v683 = vlaneseq
  %v684 = vshrl.u32 %v683, 7
  %v685 = vsub.s32 %v682, %v684
  %v686 = vrot.slane %v663, %v685
  %v688 = vunpack.c.l.s4 1934713408
  %v689 = vunpack.c.0.s8 %v688
  %v690 = vlaneseq
  %v691 = vshrl.u32 %v690, 7
  %v692 = vsub.s32 %v689, %v691
  %v693 = vrot.slane %v679, %v692
  %v694 = vcombine.high %v671, 0.0
  %v695 = vcombine.high %v678, 0.0
  %v696 = vcombine.high %v686, 0.0
  %v697 = vcombine.high %v693, 0.0
  %v699 = vunpack.c.l.s4 1983009808
  %v700 = vunpack.c.0.s8 %v699
  %v701 = vlaneseq
  %v702 = vshrl.u32 %v701, 7
  %v703 = vsub.s32 %v700, %v702
  %v704 = vrot.slane %v646, %v703
  %v705 = vcombine.high %v704, 0.0
  %v707 = vunpack.c.l.s4 1934713408
  %v708 = vunpack.c.0.s8 %v707
  %v709 = vlaneseq
  %v710 = vshrl.u32 %v709, 7
  %v711 = vsub.s32 %v708, %v710
  %v712 = vrot.slane %v704, %v711
  %v714 = vunpack.c.l.s4 1934713408
  %v715 = vunpack.c.0.s8 %v714
  %v716 = vlaneseq
  %v717 = vshrl.u32 %v716, 7
  %v718 = vsub.s32 %v715, %v717
  %v719 = vrot.slane %v705, %v718
  %v720 = vcombine.high %v646, 0.0
  %v722 = vunpack.c.l.s4 1934713408
  %v723 = vunpack.c.0.s8 %v722
  %v724 = vlaneseq
  %v725 = vshrl.u32 %v724, 7
  %v726 = vsub.s32 %v723, %v725
  %v727 = vrot.slane %v720, %v726
  %v728 = vcombine.high %v712, 0.0
  %v729 = vcombine.high %v719, 0.0
  %v730 = vcombine.high %v727, 0.0
  %732 = vrot.lane.b32.xlu0 %v694, 14
  %v733 = vpop.permute.xlu0 %732
  %736 = vrot.lane.b32.xlu0 %v678, 28
  %v737 = vpop.permute.xlu0 %736
  %740 = vrot.lane.b32.xlu0 %v695, 42
  %v741 = vpop.permute.xlu0 %740
  %744 = vrot.lane.b32.xlu0 %v686, 56
  %v745 = vpop.permute.xlu0 %744
  %748 = vrot.lane.b32.xlu0 %v696, 70
  %v749 = vpop.permute.xlu0 %748
  %752 = vrot.lane.b32.xlu0 %v693, 84
  %v753 = vpop.permute.xlu0 %752
  %756 = vrot.lane.b32.xlu0 %v697, 98
  %v757 = vpop.permute.xlu0 %756
  %760 = vrot.lane.b32.xlu0 %v712, 112
  %v761 = vpop.permute.xlu0 %760
  %764 = vrot.lane.b32.xlu0 %v728, 126
  %v765 = vpop.permute.xlu0 %764
  %768 = vrot.lane.b32.xlu0 %v719, 12
  %v769 = vpop.permute.xlu0 %768
  %772 = vrot.lane.b32.xlu0 %v729, 26
  %v773 = vpop.permute.xlu0 %772
  %776 = vrot.lane.b32.xlu0 %v727, 40
  %v777 = vpop.permute.xlu0 %776
  %780 = vrot.lane.b32.xlu0 %v730, 54
  %v781 = vpop.permute.xlu0 %780
  %v783 = vsel %vm156, %v671, %v733
  %v784 = vsel %vm158, %v783, %v737
  %v785 = vsel %vm160, %v784, %v741
  %v786 = vsel %vm162, %v785, %v745
  %v787 = vsel %vm164, %v786, %v749
  %v788 = vsel %vm166, %v787, %v753
  %v789 = vsel %vm168, %v788, %v757
  %v790 = vsel %vm170, %v789, %v761
  %v791 = vsel %vm172, %v790, %v765
  %v792 = vsel %vm174, %v765, %v769
  %v793 = vsel %vm176, %v792, %v773
  %v794 = vsel %vm178, %v793, %v777
  %v795 = vsel %vm180, %v794, %v781
  %796 = vrot.lane.b32.xlu0 %v493, 126
  %v797 = vpop.permute.xlu0 %796
  %798 = vrot.lane.b32.xlu0 %v492, 126
  %v799 = vpop.permute.xlu0 %798
  %v802 = vcombine.high %v797, 0.0
  %v804 = vunpack.c.l.s4 1983009808
  %v805 = vunpack.c.0.s8 %v804
  %v806 = vlaneseq
  %v807 = vshrl.u32 %v806, 7
  %v808 = vsub.s32 %v805, %v807
  %v809 = vrot.slane %v797, %v808
  %v811 = vunpack.c.l.s4 1983009808
  %v812 = vunpack.c.0.s8 %v811
  %v813 = vlaneseq
  %v814 = vshrl.u32 %v813, 7
  %v815 = vsub.s32 %v812, %v814
  %v816 = vrot.slane %v802, %v815
  %v817 = vcombine.high %v809, 0.0
  %v819 = vunpack.c.l.s4 1934713408
  %v820 = vunpack.c.0.s8 %v819
  %v821 = vlaneseq
  %v822 = vshrl.u32 %v821, 7
  %v823 = vsub.s32 %v820, %v822
  %v824 = vrot.slane %v809, %v823
  %v826 = vunpack.c.l.s4 1934713408
  %v827 = vunpack.c.0.s8 %v826
  %v828 = vlaneseq
  %v829 = vshrl.u32 %v828, 7
  %v830 = vsub.s32 %v827, %v829
  %v831 = vrot.slane %v817, %v830
  %v832 = vcombine.high %v816, 0.0
  %v834 = vunpack.c.l.s4 1934713408
  %v835 = vunpack.c.0.s8 %v834
  %v836 = vlaneseq
  %v837 = vshrl.u32 %v836, 7
  %v838 = vsub.s32 %v835, %v837
  %v839 = vrot.slane %v816, %v838
  %v841 = vunpack.c.l.s4 1934713408
  %v842 = vunpack.c.0.s8 %v841
  %v843 = vlaneseq
  %v844 = vshrl.u32 %v843, 7
  %v845 = vsub.s32 %v842, %v844
  %v846 = vrot.slane %v832, %v845
  %v847 = vcombine.high %v824, 0.0
  %v848 = vcombine.high %v831, 0.0
  %v849 = vcombine.high %v839, 0.0
  %v850 = vcombine.high %v846, 0.0
  %v852 = vunpack.c.l.s4 1983009808
  %v853 = vunpack.c.0.s8 %v852
  %v854 = vlaneseq
  %v855 = vshrl.u32 %v854, 7
  %v856 = vsub.s32 %v853, %v855
  %v857 = vrot.slane %v799, %v856
  %v858 = vcombine.high %v857, 0.0
  %v860 = vunpack.c.l.s4 1934713408
  %v861 = vunpack.c.0.s8 %v860
  %v862 = vlaneseq
  %v863 = vshrl.u32 %v862, 7
  %v864 = vsub.s32 %v861, %v863
  %v865 = vrot.slane %v857, %v864
  %v867 = vunpack.c.l.s4 1934713408
  %v868 = vunpack.c.0.s8 %v867
  %v869 = vlaneseq
  %v870 = vshrl.u32 %v869, 7
  %v871 = vsub.s32 %v868, %v870
  %v872 = vrot.slane %v858, %v871
  %v873 = vcombine.high %v799, 0.0
  %v875 = vunpack.c.l.s4 1934713408
  %v876 = vunpack.c.0.s8 %v875
  %v877 = vlaneseq
  %v878 = vshrl.u32 %v877, 7
  %v879 = vsub.s32 %v876, %v878
  %v880 = vrot.slane %v873, %v879
  %v881 = vcombine.high %v865, 0.0
  %v882 = vcombine.high %v872, 0.0
  %v883 = vcombine.high %v880, 0.0
  %885 = vrot.lane.b32.xlu0 %v847, 14
  %v886 = vpop.permute.xlu0 %885
  %889 = vrot.lane.b32.xlu0 %v831, 28
  %v890 = vpop.permute.xlu0 %889
  %893 = vrot.lane.b32.xlu0 %v848, 42
  %v894 = vpop.permute.xlu0 %893
  %897 = vrot.lane.b32.xlu0 %v839, 56
  %v898 = vpop.permute.xlu0 %897
  %901 = vrot.lane.b32.xlu0 %v849, 70
  %v902 = vpop.permute.xlu0 %901
  %905 = vrot.lane.b32.xlu0 %v846, 84
  %v906 = vpop.permute.xlu0 %905
  %909 = vrot.lane.b32.xlu0 %v850, 98
  %v910 = vpop.permute.xlu0 %909
  %913 = vrot.lane.b32.xlu0 %v865, 112
  %v914 = vpop.permute.xlu0 %913
  %917 = vrot.lane.b32.xlu0 %v881, 126
  %v918 = vpop.permute.xlu0 %917
  %921 = vrot.lane.b32.xlu0 %v872, 12
  %v922 = vpop.permute.xlu0 %921
  %925 = vrot.lane.b32.xlu0 %v882, 26
  %v926 = vpop.permute.xlu0 %925
  %929 = vrot.lane.b32.xlu0 %v880, 40
  %v930 = vpop.permute.xlu0 %929
  %933 = vrot.lane.b32.xlu0 %v883, 54
  %v934 = vpop.permute.xlu0 %933
  %v936 = vsel %vm156, %v824, %v886
  %v937 = vsel %vm158, %v936, %v890
  %v938 = vsel %vm160, %v937, %v894
  %v939 = vsel %vm162, %v938, %v898
  %v940 = vsel %vm164, %v939, %v902
  %v941 = vsel %vm166, %v940, %v906
  %v942 = vsel %vm168, %v941, %v910
  %v943 = vsel %vm170, %v942, %v914
  %v944 = vsel %vm172, %v943, %v918
  %v945 = vsel %vm174, %v918, %v922
  %v946 = vsel %vm176, %v945, %v926
  %v947 = vsel %vm178, %v946, %v930
  %v948 = vsel %vm180, %v947, %v934
  %vm949 = vcmask 1045504
  %v950 = vrot.slane %v14, 2
  %v951 = vrot.slane %v15, 2
  %v952 = vsel %vm949, %v950, %v951
  %v955 = vcombine.high %v952, 0.0
  %v957 = vunpack.c.l.s4 1983009808
  %v958 = vunpack.c.0.s8 %v957
  %v959 = vlaneseq
  %v960 = vshrl.u32 %v959, 7
  %v961 = vsub.s32 %v958, %v960
  %v962 = vrot.slane %v952, %v961
  %v964 = vunpack.c.l.s4 1983009808
  %v965 = vunpack.c.0.s8 %v964
  %v966 = vlaneseq
  %v967 = vshrl.u32 %v966, 7
  %v968 = vsub.s32 %v965, %v967
  %v969 = vrot.slane %v955, %v968
  %v970 = vcombine.high %v962, 0.0
  %v972 = vunpack.c.l.s4 1934713408
  %v973 = vunpack.c.0.s8 %v972
  %v974 = vlaneseq
  %v975 = vshrl.u32 %v974, 7
  %v976 = vsub.s32 %v973, %v975
  %v977 = vrot.slane %v962, %v976
  %v979 = vunpack.c.l.s4 1934713408
  %v980 = vunpack.c.0.s8 %v979
  %v981 = vlaneseq
  %v982 = vshrl.u32 %v981, 7
  %v983 = vsub.s32 %v980, %v982
  %v984 = vrot.slane %v970, %v983
  %v985 = vcombine.high %v969, 0.0
  %v987 = vunpack.c.l.s4 1934713408
  %v988 = vunpack.c.0.s8 %v987
  %v989 = vlaneseq
  %v990 = vshrl.u32 %v989, 7
  %v991 = vsub.s32 %v988, %v990
  %v992 = vrot.slane %v969, %v991
  %v994 = vunpack.c.l.s4 1934713408
  %v995 = vunpack.c.0.s8 %v994
  %v996 = vlaneseq
  %v997 = vshrl.u32 %v996, 7
  %v998 = vsub.s32 %v995, %v997
  %v999 = vrot.slane %v985, %v998
  %v1000 = vcombine.high %v977, 0.0
  %v1001 = vcombine.high %v984, 0.0
  %v1002 = vcombine.high %v992, 0.0
  %v1003 = vcombine.high %v999, 0.0
  %v1005 = vunpack.c.l.s4 1983009808
  %v1006 = vunpack.c.0.s8 %v1005
  %v1007 = vlaneseq
  %v1008 = vshrl.u32 %v1007, 7
  %v1009 = vsub.s32 %v1006, %v1008
  %v1010 = vrot.slane %v951, %v1009
  %v1011 = vcombine.high %v1010, 0.0
  %v1013 = vunpack.c.l.s4 1934713408
  %v1014 = vunpack.c.0.s8 %v1013
  %v1015 = vlaneseq
  %v1016 = vshrl.u32 %v1015, 7
  %v1017 = vsub.s32 %v1014, %v1016
  %v1018 = vrot.slane %v1010, %v1017
  %v1020 = vunpack.c.l.s4 1934713408
  %v1021 = vunpack.c.0.s8 %v1020
  %v1022 = vlaneseq
  %v1023 = vshrl.u32 %v1022, 7
  %v1024 = vsub.s32 %v1021, %v1023
  %v1025 = vrot.slane %v1011, %v1024
  %v1026 = vcombine.high %v951, 0.0
  %v1028 = vunpack.c.l.s4 1934713408
  %v1029 = vunpack.c.0.s8 %v1028
  %v1030 = vlaneseq
  %v1031 = vshrl.u32 %v1030, 7
  %v1032 = vsub.s32 %v1029, %v1031
  %v1033 = vrot.slane %v1026, %v1032
  %v1034 = vcombine.high %v1018, 0.0
  %v1035 = vcombine.high %v1025, 0.0
  %v1036 = vcombine.high %v1033, 0.0
  %1038 = vrot.lane.b32.xlu0 %v1000, 14
  %v1039 = vpop.permute.xlu0 %1038
  %1042 = vrot.lane.b32.xlu0 %v984, 28
  %v1043 = vpop.permute.xlu0 %1042
  %1046 = vrot.lane.b32.xlu0 %v1001, 42
  %v1047 = vpop.permute.xlu0 %1046
  %1050 = vrot.lane.b32.xlu0 %v992, 56
  %v1051 = vpop.permute.xlu0 %1050
  %1054 = vrot.lane.b32.xlu0 %v1002, 70
  %v1055 = vpop.permute.xlu0 %1054
  %1058 = vrot.lane.b32.xlu0 %v999, 84
  %v1059 = vpop.permute.xlu0 %1058
  %1062 = vrot.lane.b32.xlu0 %v1003, 98
  %v1063 = vpop.permute.xlu0 %1062
  %1066 = vrot.lane.b32.xlu0 %v1018, 112
  %v1067 = vpop.permute.xlu0 %1066
  %1070 = vrot.lane.b32.xlu0 %v1034, 126
  %v1071 = vpop.permute.xlu0 %1070
  %1074 = vrot.lane.b32.xlu0 %v1025, 12
  %v1075 = vpop.permute.xlu0 %1074
  %1078 = vrot.lane.b32.xlu0 %v1035, 26
  %v1079 = vpop.permute.xlu0 %1078
  %1082 = vrot.lane.b32.xlu0 %v1033, 40
  %v1083 = vpop.permute.xlu0 %1082
  %1086 = vrot.lane.b32.xlu0 %v1036, 54
  %v1087 = vpop.permute.xlu0 %1086
  %v1089 = vsel %vm156, %v977, %v1039
  %v1090 = vsel %vm158, %v1089, %v1043
  %v1091 = vsel %vm160, %v1090, %v1047
  %v1092 = vsel %vm162, %v1091, %v1051
  %v1093 = vsel %vm164, %v1092, %v1055
  %v1094 = vsel %vm166, %v1093, %v1059
  %v1095 = vsel %vm168, %v1094, %v1063
  %v1096 = vsel %vm170, %v1095, %v1067
  %v1097 = vsel %vm172, %v1096, %v1071
  %v1098 = vsel %vm174, %v1071, %v1075
  %v1099 = vsel %vm176, %v1098, %v1079
  %v1100 = vsel %vm178, %v1099, %v1083
  %v1101 = vsel %vm180, %v1100, %v1087
  %1102 = vrot.lane.b32.xlu0 %v952, 127
  %v1103 = vpop.permute.xlu0 %1102
  %1104 = vrot.lane.b32.xlu0 %v951, 127
  %v1105 = vpop.permute.xlu0 %1104
  %v1108 = vcombine.high %v1103, 0.0
  %v1110 = vunpack.c.l.s4 1983009808
  %v1111 = vunpack.c.0.s8 %v1110
  %v1112 = vlaneseq
  %v1113 = vshrl.u32 %v1112, 7
  %v1114 = vsub.s32 %v1111, %v1113
  %v1115 = vrot.slane %v1103, %v1114
  %v1117 = vunpack.c.l.s4 1983009808
  %v1118 = vunpack.c.0.s8 %v1117
  %v1119 = vlaneseq
  %v1120 = vshrl.u32 %v1119, 7
  %v1121 = vsub.s32 %v1118, %v1120
  %v1122 = vrot.slane %v1108, %v1121
  %v1123 = vcombine.high %v1115, 0.0
  %v1125 = vunpack.c.l.s4 1934713408
  %v1126 = vunpack.c.0.s8 %v1125
  %v1127 = vlaneseq
  %v1128 = vshrl.u32 %v1127, 7
  %v1129 = vsub.s32 %v1126, %v1128
  %v1130 = vrot.slane %v1115, %v1129
  %v1132 = vunpack.c.l.s4 1934713408
  %v1133 = vunpack.c.0.s8 %v1132
  %v1134 = vlaneseq
  %v1135 = vshrl.u32 %v1134, 7
  %v1136 = vsub.s32 %v1133, %v1135
  %v1137 = vrot.slane %v1123, %v1136
  %v1138 = vcombine.high %v1122, 0.0
  %v1140 = vunpack.c.l.s4 1934713408
  %v1141 = vunpack.c.0.s8 %v1140
  %v1142 = vlaneseq
  %v1143 = vshrl.u32 %v1142, 7
  %v1144 = vsub.s32 %v1141, %v1143
  %v1145 = vrot.slane %v1122, %v1144
  %v1147 = vunpack.c.l.s4 1934713408
  %v1148 = vunpack.c.0.s8 %v1147
  %v1149 = vlaneseq
  %v1150 = vshrl.u32 %v1149, 7
  %v1151 = vsub.s32 %v1148, %v1150
  %v1152 = vrot.slane %v1138, %v1151
  %v1153 = vcombine.high %v1130, 0.0
  %v1154 = vcombine.high %v1137, 0.0
  %v1155 = vcombine.high %v1145, 0.0
  %v1156 = vcombine.high %v1152, 0.0
  %v1158 = vunpack.c.l.s4 1983009808
  %v1159 = vunpack.c.0.s8 %v1158
  %v1160 = vlaneseq
  %v1161 = vshrl.u32 %v1160, 7
  %v1162 = vsub.s32 %v1159, %v1161
  %v1163 = vrot.slane %v1105, %v1162
  %v1164 = vcombine.high %v1163, 0.0
  %v1166 = vunpack.c.l.s4 1934713408
  %v1167 = vunpack.c.0.s8 %v1166
  %v1168 = vlaneseq
  %v1169 = vshrl.u32 %v1168, 7
  %v1170 = vsub.s32 %v1167, %v1169
  %v1171 = vrot.slane %v1163, %v1170
  %v1173 = vunpack.c.l.s4 1934713408
  %v1174 = vunpack.c.0.s8 %v1173
  %v1175 = vlaneseq
  %v1176 = vshrl.u32 %v1175, 7
  %v1177 = vsub.s32 %v1174, %v1176
  %v1178 = vrot.slane %v1164, %v1177
  %v1179 = vcombine.high %v1105, 0.0
  %v1181 = vunpack.c.l.s4 1934713408
  %v1182 = vunpack.c.0.s8 %v1181
  %v1183 = vlaneseq
  %v1184 = vshrl.u32 %v1183, 7
  %v1185 = vsub.s32 %v1182, %v1184
  %v1186 = vrot.slane %v1179, %v1185
  %v1187 = vcombine.high %v1171, 0.0
  %v1188 = vcombine.high %v1178, 0.0
  %v1189 = vcombine.high %v1186, 0.0
  %1191 = vrot.lane.b32.xlu0 %v1153, 14
  %v1192 = vpop.permute.xlu0 %1191
  %1195 = vrot.lane.b32.xlu0 %v1137, 28
  %v1196 = vpop.permute.xlu0 %1195
  %1199 = vrot.lane.b32.xlu0 %v1154, 42
  %v1200 = vpop.permute.xlu0 %1199
  %1203 = vrot.lane.b32.xlu0 %v1145, 56
  %v1204 = vpop.permute.xlu0 %1203
  %1207 = vrot.lane.b32.xlu0 %v1155, 70
  %v1208 = vpop.permute.xlu0 %1207
  %1211 = vrot.lane.b32.xlu0 %v1152, 84
  %v1212 = vpop.permute.xlu0 %1211
  %1215 = vrot.lane.b32.xlu0 %v1156, 98
  %v1216 = vpop.permute.xlu0 %1215
  %1219 = vrot.lane.b32.xlu0 %v1171, 112
  %v1220 = vpop.permute.xlu0 %1219
  %1223 = vrot.lane.b32.xlu0 %v1187, 126
  %v1224 = vpop.permute.xlu0 %1223
  %1227 = vrot.lane.b32.xlu0 %v1178, 12
  %v1228 = vpop.permute.xlu0 %1227
  %1231 = vrot.lane.b32.xlu0 %v1188, 26
  %v1232 = vpop.permute.xlu0 %1231
  %1235 = vrot.lane.b32.xlu0 %v1186, 40
  %v1236 = vpop.permute.xlu0 %1235
  %1239 = vrot.lane.b32.xlu0 %v1189, 54
  %v1240 = vpop.permute.xlu0 %1239
  %v1242 = vsel %vm156, %v1130, %v1192
  %v1243 = vsel %vm158, %v1242, %v1196
  %v1244 = vsel %vm160, %v1243, %v1200
  %v1245 = vsel %vm162, %v1244, %v1204
  %v1246 = vsel %vm164, %v1245, %v1208
  %v1247 = vsel %vm166, %v1246, %v1212
  %v1248 = vsel %vm168, %v1247, %v1216
  %v1249 = vsel %vm170, %v1248, %v1220
  %v1250 = vsel %vm172, %v1249, %v1224
  %v1251 = vsel %vm174, %v1224, %v1228
  %v1252 = vsel %vm176, %v1251, %v1232
  %v1253 = vsel %vm178, %v1252, %v1236
  %v1254 = vsel %vm180, %v1253, %v1240
  %1255 = vrot.lane.b32.xlu0 %v952, 126
  %v1256 = vpop.permute.xlu0 %1255
  %1257 = vrot.lane.b32.xlu0 %v951, 126
  %v1258 = vpop.permute.xlu0 %1257
  %v1261 = vcombine.high %v1256, 0.0
  %v1263 = vunpack.c.l.s4 1983009808
  %v1264 = vunpack.c.0.s8 %v1263
  %v1265 = vlaneseq
  %v1266 = vshrl.u32 %v1265, 7
  %v1267 = vsub.s32 %v1264, %v1266
  %v1268 = vrot.slane %v1256, %v1267
  %v1270 = vunpack.c.l.s4 1983009808
  %v1271 = vunpack.c.0.s8 %v1270
  %v1272 = vlaneseq
  %v1273 = vshrl.u32 %v1272, 7
  %v1274 = vsub.s32 %v1271, %v1273
  %v1275 = vrot.slane %v1261, %v1274
  %v1276 = vcombine.high %v1268, 0.0
  %v1278 = vunpack.c.l.s4 1934713408
  %v1279 = vunpack.c.0.s8 %v1278
  %v1280 = vlaneseq
  %v1281 = vshrl.u32 %v1280, 7
  %v1282 = vsub.s32 %v1279, %v1281
  %v1283 = vrot.slane %v1268, %v1282
  %v1285 = vunpack.c.l.s4 1934713408
  %v1286 = vunpack.c.0.s8 %v1285
  %v1287 = vlaneseq
  %v1288 = vshrl.u32 %v1287, 7
  %v1289 = vsub.s32 %v1286, %v1288
  %v1290 = vrot.slane %v1276, %v1289
  %v1291 = vcombine.high %v1275, 0.0
  %v1293 = vunpack.c.l.s4 1934713408
  %v1294 = vunpack.c.0.s8 %v1293
  %v1295 = vlaneseq
  %v1296 = vshrl.u32 %v1295, 7
  %v1297 = vsub.s32 %v1294, %v1296
  %v1298 = vrot.slane %v1275, %v1297
  %v1300 = vunpack.c.l.s4 1934713408
  %v1301 = vunpack.c.0.s8 %v1300
  %v1302 = vlaneseq
  %v1303 = vshrl.u32 %v1302, 7
  %v1304 = vsub.s32 %v1301, %v1303
  %v1305 = vrot.slane %v1291, %v1304
  %v1306 = vcombine.high %v1283, 0.0
  %v1307 = vcombine.high %v1290, 0.0
  %v1308 = vcombine.high %v1298, 0.0
  %v1309 = vcombine.high %v1305, 0.0
  %v1311 = vunpack.c.l.s4 1983009808
  %v1312 = vunpack.c.0.s8 %v1311
  %v1313 = vlaneseq
  %v1314 = vshrl.u32 %v1313, 7
  %v1315 = vsub.s32 %v1312, %v1314
  %v1316 = vrot.slane %v1258, %v1315
  %v1317 = vcombine.high %v1316, 0.0
  %v1319 = vunpack.c.l.s4 1934713408
  %v1320 = vunpack.c.0.s8 %v1319
  %v1321 = vlaneseq
  %v1322 = vshrl.u32 %v1321, 7
  %v1323 = vsub.s32 %v1320, %v1322
  %v1324 = vrot.slane %v1316, %v1323
  %v1326 = vunpack.c.l.s4 1934713408
  %v1327 = vunpack.c.0.s8 %v1326
  %v1328 = vlaneseq
  %v1329 = vshrl.u32 %v1328, 7
  %v1330 = vsub.s32 %v1327, %v1329
  %v1331 = vrot.slane %v1317, %v1330
  %v1332 = vcombine.high %v1258, 0.0
  %v1334 = vunpack.c.l.s4 1934713408
  %v1335 = vunpack.c.0.s8 %v1334
  %v1336 = vlaneseq
  %v1337 = vshrl.u32 %v1336, 7
  %v1338 = vsub.s32 %v1335, %v1337
  %v1339 = vrot.slane %v1332, %v1338
  %v1340 = vcombine.high %v1324, 0.0
  %v1341 = vcombine.high %v1331, 0.0
  %v1342 = vcombine.high %v1339, 0.0
  %1344 = vrot.lane.b32.xlu0 %v1306, 14
  %v1345 = vpop.permute.xlu0 %1344
  %1348 = vrot.lane.b32.xlu0 %v1290, 28
  %v1349 = vpop.permute.xlu0 %1348
  %1352 = vrot.lane.b32.xlu0 %v1307, 42
  %v1353 = vpop.permute.xlu0 %1352
  %1356 = vrot.lane.b32.xlu0 %v1298, 56
  %v1357 = vpop.permute.xlu0 %1356
  %1360 = vrot.lane.b32.xlu0 %v1308, 70
  %v1361 = vpop.permute.xlu0 %1360
  %1364 = vrot.lane.b32.xlu0 %v1305, 84
  %v1365 = vpop.permute.xlu0 %1364
  %1368 = vrot.lane.b32.xlu0 %v1309, 98
  %v1369 = vpop.permute.xlu0 %1368
  %1372 = vrot.lane.b32.xlu0 %v1324, 112
  %v1373 = vpop.permute.xlu0 %1372
  %1376 = vrot.lane.b32.xlu0 %v1340, 126
  %v1377 = vpop.permute.xlu0 %1376
  %1380 = vrot.lane.b32.xlu0 %v1331, 12
  %v1381 = vpop.permute.xlu0 %1380
  %1384 = vrot.lane.b32.xlu0 %v1341, 26
  %v1385 = vpop.permute.xlu0 %1384
  %1388 = vrot.lane.b32.xlu0 %v1339, 40
  %v1389 = vpop.permute.xlu0 %1388
  %1392 = vrot.lane.b32.xlu0 %v1342, 54
  %v1393 = vpop.permute.xlu0 %1392
  %v1395 = vsel %vm156, %v1283, %v1345
  %v1396 = vsel %vm158, %v1395, %v1349
  %v1397 = vsel %vm160, %v1396, %v1353
  %v1398 = vsel %vm162, %v1397, %v1357
  %v1399 = vsel %vm164, %v1398, %v1361
  %v1400 = vsel %vm166, %v1399, %v1365
  %v1401 = vsel %vm168, %v1400, %v1369
  %v1402 = vsel %vm170, %v1401, %v1373
  %v1403 = vsel %vm172, %v1402, %v1377
  %v1404 = vsel %vm174, %v1377, %v1381
  %v1405 = vsel %vm176, %v1404, %v1385
  %v1406 = vsel %vm178, %v1405, %v1389
  %v1407 = vsel %vm180, %v1406, %v1393
  %v1408 = vcombine.high %v16, 0.0
  %v1410 = vunpack.c.l.s4 1983009808
  %v1411 = vunpack.c.0.s8 %v1410
  %v1412 = vlaneseq
  %v1413 = vshrl.u32 %v1412, 7
  %v1414 = vsub.s32 %v1411, %v1413
  %v1415 = vrot.slane %v16, %v1414
  %v1417 = vunpack.c.l.s4 1983009808
  %v1418 = vunpack.c.0.s8 %v1417
  %v1419 = vlaneseq
  %v1420 = vshrl.u32 %v1419, 7
  %v1421 = vsub.s32 %v1418, %v1420
  %v1422 = vrot.slane %v1408, %v1421
  %v1423 = vcombine.high %v1415, 0.0
  %v1425 = vunpack.c.l.s4 1934713408
  %v1426 = vunpack.c.0.s8 %v1425
  %v1427 = vlaneseq
  %v1428 = vshrl.u32 %v1427, 7
  %v1429 = vsub.s32 %v1426, %v1428
  %v1430 = vrot.slane %v1415, %v1429
  %v1432 = vunpack.c.l.s4 1934713408
  %v1433 = vunpack.c.0.s8 %v1432
  %v1434 = vlaneseq
  %v1435 = vshrl.u32 %v1434, 7
  %v1436 = vsub.s32 %v1433, %v1435
  %v1437 = vrot.slane %v1423, %v1436
  %v1438 = vcombine.high %v1422, 0.0
  %v1440 = vunpack.c.l.s4 1934713408
  %v1441 = vunpack.c.0.s8 %v1440
  %v1442 = vlaneseq
  %v1443 = vshrl.u32 %v1442, 7
  %v1444 = vsub.s32 %v1441, %v1443
  %v1445 = vrot.slane %v1422, %v1444
  %v1447 = vunpack.c.l.s4 1934713408
  %v1448 = vunpack.c.0.s8 %v1447
  %v1449 = vlaneseq
  %v1450 = vshrl.u32 %v1449, 7
  %v1451 = vsub.s32 %v1448, %v1450
  %v1452 = vrot.slane %v1438, %v1451
  %v1453 = vcombine.high %v1430, 0.0
  %v1454 = vcombine.high %v1437, 0.0
  %v1455 = vcombine.high %v1445, 0.0
  %v1456 = vcombine.high %v1452, 0.0
  %v1458 = vunpack.c.l.s4 1983009808
  %v1459 = vunpack.c.0.s8 %v1458
  %v1460 = vlaneseq
  %v1461 = vshrl.u32 %v1460, 7
  %v1462 = vsub.s32 %v1459, %v1461
  %v1463 = vrot.slane %v17, %v1462
  %v1464 = vcombine.high %v1463, 0.0
  %v1466 = vunpack.c.l.s4 1934713408
  %v1467 = vunpack.c.0.s8 %v1466
  %v1468 = vlaneseq
  %v1469 = vshrl.u32 %v1468, 7
  %v1470 = vsub.s32 %v1467, %v1469
  %v1471 = vrot.slane %v1463, %v1470
  %v1473 = vunpack.c.l.s4 1934713408
  %v1474 = vunpack.c.0.s8 %v1473
  %v1475 = vlaneseq
  %v1476 = vshrl.u32 %v1475, 7
  %v1477 = vsub.s32 %v1474, %v1476
  %v1478 = vrot.slane %v1464, %v1477
  %v1479 = vcombine.high %v17, 0.0
  %v1481 = vunpack.c.l.s4 1934713408
  %v1482 = vunpack.c.0.s8 %v1481
  %v1483 = vlaneseq
  %v1484 = vshrl.u32 %v1483, 7
  %v1485 = vsub.s32 %v1482, %v1484
  %v1486 = vrot.slane %v1479, %v1485
  %v1487 = vcombine.high %v1471, 0.0
  %v1488 = vcombine.high %v1478, 0.0
  %v1489 = vcombine.high %v1486, 0.0
  %1491 = vrot.lane.b32.xlu0 %v1453, 14
  %v1492 = vpop.permute.xlu0 %1491
  %1495 = vrot.lane.b32.xlu0 %v1437, 28
  %v1496 = vpop.permute.xlu0 %1495
  %1499 = vrot.lane.b32.xlu0 %v1454, 42
  %v1500 = vpop.permute.xlu0 %1499
  %1503 = vrot.lane.b32.xlu0 %v1445, 56
  %v1504 = vpop.permute.xlu0 %1503
  %1507 = vrot.lane.b32.xlu0 %v1455, 70
  %v1508 = vpop.permute.xlu0 %1507
  %1511 = vrot.lane.b32.xlu0 %v1452, 84
  %v1512 = vpop.permute.xlu0 %1511
  %1515 = vrot.lane.b32.xlu0 %v1456, 98
  %v1516 = vpop.permute.xlu0 %1515
  %1519 = vrot.lane.b32.xlu0 %v1471, 112
  %v1520 = vpop.permute.xlu0 %1519
  %1523 = vrot.lane.b32.xlu0 %v1487, 126
  %v1524 = vpop.permute.xlu0 %1523
  %1527 = vrot.lane.b32.xlu0 %v1478, 12
  %v1528 = vpop.permute.xlu0 %1527
  %1531 = vrot.lane.b32.xlu0 %v1488, 26
  %v1532 = vpop.permute.xlu0 %1531
  %1535 = vrot.lane.b32.xlu0 %v1486, 40
  %v1536 = vpop.permute.xlu0 %1535
  %1539 = vrot.lane.b32.xlu0 %v1489, 54
  %v1540 = vpop.permute.xlu0 %1539
  %v1542 = vsel %vm156, %v1430, %v1492
  %v1543 = vsel %vm158, %v1542, %v1496
  %v1544 = vsel %vm160, %v1543, %v1500
  %v1545 = vsel %vm162, %v1544, %v1504
  %v1546 = vsel %vm164, %v1545, %v1508
  %v1547 = vsel %vm166, %v1546, %v1512
  %v1548 = vsel %vm168, %v1547, %v1516
  %v1549 = vsel %vm170, %v1548, %v1520
  %v1550 = vsel %vm172, %v1549, %v1524
  %v1551 = vsel %vm174, %v1524, %v1528
  %v1552 = vsel %vm176, %v1551, %v1532
  %v1553 = vsel %vm178, %v1552, %v1536
  %v1554 = vsel %vm180, %v1553, %v1540
  %1557 = vrot.lane.b32.xlu0 %v16, 127
  %v1558 = vpop.permute.xlu0 %1557
  %1559 = vrot.lane.b32.xlu0 %v17, 127
  %v1560 = vpop.permute.xlu0 %1559
  %v1563 = vcombine.high %v1558, 0.0
  %v1565 = vunpack.c.l.s4 1983009808
  %v1566 = vunpack.c.0.s8 %v1565
  %v1567 = vlaneseq
  %v1568 = vshrl.u32 %v1567, 7
  %v1569 = vsub.s32 %v1566, %v1568
  %v1570 = vrot.slane %v1558, %v1569
  %v1572 = vunpack.c.l.s4 1983009808
  %v1573 = vunpack.c.0.s8 %v1572
  %v1574 = vlaneseq
  %v1575 = vshrl.u32 %v1574, 7
  %v1576 = vsub.s32 %v1573, %v1575
  %v1577 = vrot.slane %v1563, %v1576
  %v1578 = vcombine.high %v1570, 0.0
  %v1580 = vunpack.c.l.s4 1934713408
  %v1581 = vunpack.c.0.s8 %v1580
  %v1582 = vlaneseq
  %v1583 = vshrl.u32 %v1582, 7
  %v1584 = vsub.s32 %v1581, %v1583
  %v1585 = vrot.slane %v1570, %v1584
  %v1587 = vunpack.c.l.s4 1934713408
  %v1588 = vunpack.c.0.s8 %v1587
  %v1589 = vlaneseq
  %v1590 = vshrl.u32 %v1589, 7
  %v1591 = vsub.s32 %v1588, %v1590
  %v1592 = vrot.slane %v1578, %v1591
  %v1593 = vcombine.high %v1577, 0.0
  %v1595 = vunpack.c.l.s4 1934713408
  %v1596 = vunpack.c.0.s8 %v1595
  %v1597 = vlaneseq
  %v1598 = vshrl.u32 %v1597, 7
  %v1599 = vsub.s32 %v1596, %v1598
  %v1600 = vrot.slane %v1577, %v1599
  %v1602 = vunpack.c.l.s4 1934713408
  %v1603 = vunpack.c.0.s8 %v1602
  %v1604 = vlaneseq
  %v1605 = vshrl.u32 %v1604, 7
  %v1606 = vsub.s32 %v1603, %v1605
  %v1607 = vrot.slane %v1593, %v1606
  %v1608 = vcombine.high %v1585, 0.0
  %v1609 = vcombine.high %v1592, 0.0
  %v1610 = vcombine.high %v1600, 0.0
  %v1611 = vcombine.high %v1607, 0.0
  %v1613 = vunpack.c.l.s4 1983009808
  %v1614 = vunpack.c.0.s8 %v1613
  %v1615 = vlaneseq
  %v1616 = vshrl.u32 %v1615, 7
  %v1617 = vsub.s32 %v1614, %v1616
  %v1618 = vrot.slane %v1560, %v1617
  %v1619 = vcombine.high %v1618, 0.0
  %v1621 = vunpack.c.l.s4 1934713408
  %v1622 = vunpack.c.0.s8 %v1621
  %v1623 = vlaneseq
  %v1624 = vshrl.u32 %v1623, 7
  %v1625 = vsub.s32 %v1622, %v1624
  %v1626 = vrot.slane %v1618, %v1625
  %v1628 = vunpack.c.l.s4 1934713408
  %v1629 = vunpack.c.0.s8 %v1628
  %v1630 = vlaneseq
  %v1631 = vshrl.u32 %v1630, 7
  %v1632 = vsub.s32 %v1629, %v1631
  %v1633 = vrot.slane %v1619, %v1632
  %v1634 = vcombine.high %v1560, 0.0
  %v1636 = vunpack.c.l.s4 1934713408
  %v1637 = vunpack.c.0.s8 %v1636
  %v1638 = vlaneseq
  %v1639 = vshrl.u32 %v1638, 7
  %v1640 = vsub.s32 %v1637, %v1639
  %v1641 = vrot.slane %v1634, %v1640
  %v1642 = vcombine.high %v1626, 0.0
  %v1643 = vcombine.high %v1633, 0.0
  %v1644 = vcombine.high %v1641, 0.0
  %1646 = vrot.lane.b32.xlu0 %v1608, 14
  %v1647 = vpop.permute.xlu0 %1646
  %1650 = vrot.lane.b32.xlu0 %v1592, 28
  %v1651 = vpop.permute.xlu0 %1650
  %1654 = vrot.lane.b32.xlu0 %v1609, 42
  %v1655 = vpop.permute.xlu0 %1654
  %1658 = vrot.lane.b32.xlu0 %v1600, 56
  %v1659 = vpop.permute.xlu0 %1658
  %1662 = vrot.lane.b32.xlu0 %v1610, 70
  %v1663 = vpop.permute.xlu0 %1662
  %1666 = vrot.lane.b32.xlu0 %v1607, 84
  %v1667 = vpop.permute.xlu0 %1666
  %1670 = vrot.lane.b32.xlu0 %v1611, 98
  %v1671 = vpop.permute.xlu0 %1670
  %1674 = vrot.lane.b32.xlu0 %v1626, 112
  %v1675 = vpop.permute.xlu0 %1674
  %1678 = vrot.lane.b32.xlu0 %v1642, 126
  %v1679 = vpop.permute.xlu0 %1678
  %1682 = vrot.lane.b32.xlu0 %v1633, 12
  %v1683 = vpop.permute.xlu0 %1682
  %1686 = vrot.lane.b32.xlu0 %v1643, 26
  %v1687 = vpop.permute.xlu0 %1686
  %1690 = vrot.lane.b32.xlu0 %v1641, 40
  %v1691 = vpop.permute.xlu0 %1690
  %1694 = vrot.lane.b32.xlu0 %v1644, 54
  %v1695 = vpop.permute.xlu0 %1694
  %v1697 = vsel %vm156, %v1585, %v1647
  %v1698 = vsel %vm158, %v1697, %v1651
  %v1699 = vsel %vm160, %v1698, %v1655
  %v1700 = vsel %vm162, %v1699, %v1659
  %v1701 = vsel %vm164, %v1700, %v1663
  %v1702 = vsel %vm166, %v1701, %v1667
  %v1703 = vsel %vm168, %v1702, %v1671
  %v1704 = vsel %vm170, %v1703, %v1675
  %v1705 = vsel %vm172, %v1704, %v1679
  %v1706 = vsel %vm174, %v1679, %v1683
  %v1707 = vsel %vm176, %v1706, %v1687
  %v1708 = vsel %vm178, %v1707, %v1691
  %v1709 = vsel %vm180, %v1708, %v1695
  %1710 = vrot.lane.b32.xlu0 %v16, 126
  %v1711 = vpop.permute.xlu0 %1710
  %1712 = vrot.lane.b32.xlu0 %v17, 126
  %v1713 = vpop.permute.xlu0 %1712
  %v1716 = vcombine.high %v1711, 0.0
  %v1718 = vunpack.c.l.s4 1983009808
  %v1719 = vunpack.c.0.s8 %v1718
  %v1720 = vlaneseq
  %v1721 = vshrl.u32 %v1720, 7
  %v1722 = vsub.s32 %v1719, %v1721
  %v1723 = vrot.slane %v1711, %v1722
  %v1725 = vunpack.c.l.s4 1983009808
  %v1726 = vunpack.c.0.s8 %v1725
  %v1727 = vlaneseq
  %v1728 = vshrl.u32 %v1727, 7
  %v1729 = vsub.s32 %v1726, %v1728
  %v1730 = vrot.slane %v1716, %v1729
  %v1731 = vcombine.high %v1723, 0.0
  %v1733 = vunpack.c.l.s4 1934713408
  %v1734 = vunpack.c.0.s8 %v1733
  %v1735 = vlaneseq
  %v1736 = vshrl.u32 %v1735, 7
  %v1737 = vsub.s32 %v1734, %v1736
  %v1738 = vrot.slane %v1723, %v1737
  %v1740 = vunpack.c.l.s4 1934713408
  %v1741 = vunpack.c.0.s8 %v1740
  %v1742 = vlaneseq
  %v1743 = vshrl.u32 %v1742, 7
  %v1744 = vsub.s32 %v1741, %v1743
  %v1745 = vrot.slane %v1731, %v1744
  %v1746 = vcombine.high %v1730, 0.0
  %v1748 = vunpack.c.l.s4 1934713408
  %v1749 = vunpack.c.0.s8 %v1748
  %v1750 = vlaneseq
  %v1751 = vshrl.u32 %v1750, 7
  %v1752 = vsub.s32 %v1749, %v1751
  %v1753 = vrot.slane %v1730, %v1752
  %v1755 = vunpack.c.l.s4 1934713408
  %v1756 = vunpack.c.0.s8 %v1755
  %v1757 = vlaneseq
  %v1758 = vshrl.u32 %v1757, 7
  %v1759 = vsub.s32 %v1756, %v1758
  %v1760 = vrot.slane %v1746, %v1759
  %v1761 = vcombine.high %v1738, 0.0
  %v1762 = vcombine.high %v1745, 0.0
  %v1763 = vcombine.high %v1753, 0.0
  %v1764 = vcombine.high %v1760, 0.0
  %v1766 = vunpack.c.l.s4 1983009808
  %v1767 = vunpack.c.0.s8 %v1766
  %v1768 = vlaneseq
  %v1769 = vshrl.u32 %v1768, 7
  %v1770 = vsub.s32 %v1767, %v1769
  %v1771 = vrot.slane %v1713, %v1770
  %v1772 = vcombine.high %v1771, 0.0
  %v1774 = vunpack.c.l.s4 1934713408
  %v1775 = vunpack.c.0.s8 %v1774
  %v1776 = vlaneseq
  %v1777 = vshrl.u32 %v1776, 7
  %v1778 = vsub.s32 %v1775, %v1777
  %v1779 = vrot.slane %v1771, %v1778
  %v1781 = vunpack.c.l.s4 1934713408
  %v1782 = vunpack.c.0.s8 %v1781
  %v1783 = vlaneseq
  %v1784 = vshrl.u32 %v1783, 7
  %v1785 = vsub.s32 %v1782, %v1784
  %v1786 = vrot.slane %v1772, %v1785
  %v1787 = vcombine.high %v1713, 0.0
  %v1789 = vunpack.c.l.s4 1934713408
  %v1790 = vunpack.c.0.s8 %v1789
  %v1791 = vlaneseq
  %v1792 = vshrl.u32 %v1791, 7
  %v1793 = vsub.s32 %v1790, %v1792
  %v1794 = vrot.slane %v1787, %v1793
  %v1795 = vcombine.high %v1779, 0.0
  %v1796 = vcombine.high %v1786, 0.0
  %v1797 = vcombine.high %v1794, 0.0
  %1799 = vrot.lane.b32.xlu0 %v1761, 14
  %v1800 = vpop.permute.xlu0 %1799
  %1803 = vrot.lane.b32.xlu0 %v1745, 28
  %v1804 = vpop.permute.xlu0 %1803
  %1807 = vrot.lane.b32.xlu0 %v1762, 42
  %v1808 = vpop.permute.xlu0 %1807
  %1811 = vrot.lane.b32.xlu0 %v1753, 56
  %v1812 = vpop.permute.xlu0 %1811
  %1815 = vrot.lane.b32.xlu0 %v1763, 70
  %v1816 = vpop.permute.xlu0 %1815
  %1819 = vrot.lane.b32.xlu0 %v1760, 84
  %v1820 = vpop.permute.xlu0 %1819
  %1823 = vrot.lane.b32.xlu0 %v1764, 98
  %v1824 = vpop.permute.xlu0 %1823
  %1827 = vrot.lane.b32.xlu0 %v1779, 112
  %v1828 = vpop.permute.xlu0 %1827
  %1831 = vrot.lane.b32.xlu0 %v1795, 126
  %v1832 = vpop.permute.xlu0 %1831
  %1835 = vrot.lane.b32.xlu0 %v1786, 12
  %v1836 = vpop.permute.xlu0 %1835
  %1839 = vrot.lane.b32.xlu0 %v1796, 26
  %v1840 = vpop.permute.xlu0 %1839
  %1843 = vrot.lane.b32.xlu0 %v1794, 40
  %v1844 = vpop.permute.xlu0 %1843
  %1847 = vrot.lane.b32.xlu0 %v1797, 54
  %v1848 = vpop.permute.xlu0 %1847
  %v1850 = vsel %vm156, %v1738, %v1800
  %v1851 = vsel %vm158, %v1850, %v1804
  %v1852 = vsel %vm160, %v1851, %v1808
  %v1853 = vsel %vm162, %v1852, %v1812
  %v1854 = vsel %vm164, %v1853, %v1816
  %v1855 = vsel %vm166, %v1854, %v1820
  %v1856 = vsel %vm168, %v1855, %v1824
  %v1857 = vsel %vm170, %v1856, %v1828
  %v1858 = vsel %vm172, %v1857, %v1832
  %v1859 = vsel %vm174, %v1832, %v1836
  %v1860 = vsel %vm176, %v1859, %v1840
  %v1861 = vsel %vm178, %v1860, %v1844
  %v1862 = vsel %vm180, %v1861, %v1848
  %v1863 = vrot.slane %v16, 1
  %v1864 = vrot.slane %v17, 1
  %v1865 = vsel %vm490, %v1863, %v1864
  %v1868 = vcombine.high %v1865, 0.0
  %v1870 = vunpack.c.l.s4 1983009808
  %v1871 = vunpack.c.0.s8 %v1870
  %v1872 = vlaneseq
  %v1873 = vshrl.u32 %v1872, 7
  %v1874 = vsub.s32 %v1871, %v1873
  %v1875 = vrot.slane %v1865, %v1874
  %v1877 = vunpack.c.l.s4 1983009808
  %v1878 = vunpack.c.0.s8 %v1877
  %v1879 = vlaneseq
  %v1880 = vshrl.u32 %v1879, 7
  %v1881 = vsub.s32 %v1878, %v1880
  %v1882 = vrot.slane %v1868, %v1881
  %v1883 = vcombine.high %v1875, 0.0
  %v1885 = vunpack.c.l.s4 1934713408
  %v1886 = vunpack.c.0.s8 %v1885
  %v1887 = vlaneseq
  %v1888 = vshrl.u32 %v1887, 7
  %v1889 = vsub.s32 %v1886, %v1888
  %v1890 = vrot.slane %v1875, %v1889
  %v1892 = vunpack.c.l.s4 1934713408
  %v1893 = vunpack.c.0.s8 %v1892
  %v1894 = vlaneseq
  %v1895 = vshrl.u32 %v1894, 7
  %v1896 = vsub.s32 %v1893, %v1895
  %v1897 = vrot.slane %v1883, %v1896
  %v1898 = vcombine.high %v1882, 0.0
  %v1900 = vunpack.c.l.s4 1934713408
  %v1901 = vunpack.c.0.s8 %v1900
  %v1902 = vlaneseq
  %v1903 = vshrl.u32 %v1902, 7
  %v1904 = vsub.s32 %v1901, %v1903
  %v1905 = vrot.slane %v1882, %v1904
  %v1907 = vunpack.c.l.s4 1934713408
  %v1908 = vunpack.c.0.s8 %v1907
  %v1909 = vlaneseq
  %v1910 = vshrl.u32 %v1909, 7
  %v1911 = vsub.s32 %v1908, %v1910
  %v1912 = vrot.slane %v1898, %v1911
  %v1913 = vcombine.high %v1890, 0.0
  %v1914 = vcombine.high %v1897, 0.0
  %v1915 = vcombine.high %v1905, 0.0
  %v1916 = vcombine.high %v1912, 0.0
  %v1918 = vunpack.c.l.s4 1983009808
  %v1919 = vunpack.c.0.s8 %v1918
  %v1920 = vlaneseq
  %v1921 = vshrl.u32 %v1920, 7
  %v1922 = vsub.s32 %v1919, %v1921
  %v1923 = vrot.slane %v1864, %v1922
  %v1924 = vcombine.high %v1923, 0.0
  %v1926 = vunpack.c.l.s4 1934713408
  %v1927 = vunpack.c.0.s8 %v1926
  %v1928 = vlaneseq
  %v1929 = vshrl.u32 %v1928, 7
  %v1930 = vsub.s32 %v1927, %v1929
  %v1931 = vrot.slane %v1923, %v1930
  %v1933 = vunpack.c.l.s4 1934713408
  %v1934 = vunpack.c.0.s8 %v1933
  %v1935 = vlaneseq
  %v1936 = vshrl.u32 %v1935, 7
  %v1937 = vsub.s32 %v1934, %v1936
  %v1938 = vrot.slane %v1924, %v1937
  %v1939 = vcombine.high %v1864, 0.0
  %v1941 = vunpack.c.l.s4 1934713408
  %v1942 = vunpack.c.0.s8 %v1941
  %v1943 = vlaneseq
  %v1944 = vshrl.u32 %v1943, 7
  %v1945 = vsub.s32 %v1942, %v1944
  %v1946 = vrot.slane %v1939, %v1945
  %v1947 = vcombine.high %v1931, 0.0
  %v1948 = vcombine.high %v1938, 0.0
  %v1949 = vcombine.high %v1946, 0.0
  %1951 = vrot.lane.b32.xlu0 %v1913, 14
  %v1952 = vpop.permute.xlu0 %1951
  %1955 = vrot.lane.b32.xlu0 %v1897, 28
  %v1956 = vpop.permute.xlu0 %1955
  %1959 = vrot.lane.b32.xlu0 %v1914, 42
  %v1960 = vpop.permute.xlu0 %1959
  %1963 = vrot.lane.b32.xlu0 %v1905, 56
  %v1964 = vpop.permute.xlu0 %1963
  %1967 = vrot.lane.b32.xlu0 %v1915, 70
  %v1968 = vpop.permute.xlu0 %1967
  %1971 = vrot.lane.b32.xlu0 %v1912, 84
  %v1972 = vpop.permute.xlu0 %1971
  %1975 = vrot.lane.b32.xlu0 %v1916, 98
  %v1976 = vpop.permute.xlu0 %1975
  %1979 = vrot.lane.b32.xlu0 %v1931, 112
  %v1980 = vpop.permute.xlu0 %1979
  %1983 = vrot.lane.b32.xlu0 %v1947, 126
  %v1984 = vpop.permute.xlu0 %1983
  %1987 = vrot.lane.b32.xlu0 %v1938, 12
  %v1988 = vpop.permute.xlu0 %1987
  %1991 = vrot.lane.b32.xlu0 %v1948, 26
  %v1992 = vpop.permute.xlu0 %1991
  %1995 = vrot.lane.b32.xlu0 %v1946, 40
  %v1996 = vpop.permute.xlu0 %1995
  %1999 = vrot.lane.b32.xlu0 %v1949, 54
  %v2000 = vpop.permute.xlu0 %1999
  %v2002 = vsel %vm156, %v1890, %v1952
  %v2003 = vsel %vm158, %v2002, %v1956
  %v2004 = vsel %vm160, %v2003, %v1960
  %v2005 = vsel %vm162, %v2004, %v1964
  %v2006 = vsel %vm164, %v2005, %v1968
  %v2007 = vsel %vm166, %v2006, %v1972
  %v2008 = vsel %vm168, %v2007, %v1976
  %v2009 = vsel %vm170, %v2008, %v1980
  %v2010 = vsel %vm172, %v2009, %v1984
  %v2011 = vsel %vm174, %v1984, %v1988
  %v2012 = vsel %vm176, %v2011, %v1992
  %v2013 = vsel %vm178, %v2012, %v1996
  %v2014 = vsel %vm180, %v2013, %v2000
  %2015 = vrot.lane.b32.xlu0 %v1865, 127
  %v2016 = vpop.permute.xlu0 %2015
  %2017 = vrot.lane.b32.xlu0 %v1864, 127
  %v2018 = vpop.permute.xlu0 %2017
  %v2021 = vcombine.high %v2016, 0.0
  %v2023 = vunpack.c.l.s4 1983009808
  %v2024 = vunpack.c.0.s8 %v2023
  %v2025 = vlaneseq
  %v2026 = vshrl.u32 %v2025, 7
  %v2027 = vsub.s32 %v2024, %v2026
  %v2028 = vrot.slane %v2016, %v2027
  %v2030 = vunpack.c.l.s4 1983009808
  %v2031 = vunpack.c.0.s8 %v2030
  %v2032 = vlaneseq
  %v2033 = vshrl.u32 %v2032, 7
  %v2034 = vsub.s32 %v2031, %v2033
  %v2035 = vrot.slane %v2021, %v2034
  %v2036 = vcombine.high %v2028, 0.0
  %v2038 = vunpack.c.l.s4 1934713408
  %v2039 = vunpack.c.0.s8 %v2038
  %v2040 = vlaneseq
  %v2041 = vshrl.u32 %v2040, 7
  %v2042 = vsub.s32 %v2039, %v2041
  %v2043 = vrot.slane %v2028, %v2042
  %v2045 = vunpack.c.l.s4 1934713408
  %v2046 = vunpack.c.0.s8 %v2045
  %v2047 = vlaneseq
  %v2048 = vshrl.u32 %v2047, 7
  %v2049 = vsub.s32 %v2046, %v2048
  %v2050 = vrot.slane %v2036, %v2049
  %v2051 = vcombine.high %v2035, 0.0
  %v2053 = vunpack.c.l.s4 1934713408
  %v2054 = vunpack.c.0.s8 %v2053
  %v2055 = vlaneseq
  %v2056 = vshrl.u32 %v2055, 7
  %v2057 = vsub.s32 %v2054, %v2056
  %v2058 = vrot.slane %v2035, %v2057
  %v2060 = vunpack.c.l.s4 1934713408
  %v2061 = vunpack.c.0.s8 %v2060
  %v2062 = vlaneseq
  %v2063 = vshrl.u32 %v2062, 7
  %v2064 = vsub.s32 %v2061, %v2063
  %v2065 = vrot.slane %v2051, %v2064
  %v2066 = vcombine.high %v2043, 0.0
  %v2067 = vcombine.high %v2050, 0.0
  %v2068 = vcombine.high %v2058, 0.0
  %v2069 = vcombine.high %v2065, 0.0
  %v2071 = vunpack.c.l.s4 1983009808
  %v2072 = vunpack.c.0.s8 %v2071
  %v2073 = vlaneseq
  %v2074 = vshrl.u32 %v2073, 7
  %v2075 = vsub.s32 %v2072, %v2074
  %v2076 = vrot.slane %v2018, %v2075
  %v2077 = vcombine.high %v2076, 0.0
  %v2079 = vunpack.c.l.s4 1934713408
  %v2080 = vunpack.c.0.s8 %v2079
  %v2081 = vlaneseq
  %v2082 = vshrl.u32 %v2081, 7
  %v2083 = vsub.s32 %v2080, %v2082
  %v2084 = vrot.slane %v2076, %v2083
  %v2086 = vunpack.c.l.s4 1934713408
  %v2087 = vunpack.c.0.s8 %v2086
  %v2088 = vlaneseq
  %v2089 = vshrl.u32 %v2088, 7
  %v2090 = vsub.s32 %v2087, %v2089
  %v2091 = vrot.slane %v2077, %v2090
  %v2092 = vcombine.high %v2018, 0.0
  %v2094 = vunpack.c.l.s4 1934713408
  %v2095 = vunpack.c.0.s8 %v2094
  %v2096 = vlaneseq
  %v2097 = vshrl.u32 %v2096, 7
  %v2098 = vsub.s32 %v2095, %v2097
  %v2099 = vrot.slane %v2092, %v2098
  %v2100 = vcombine.high %v2084, 0.0
  %v2101 = vcombine.high %v2091, 0.0
  %v2102 = vcombine.high %v2099, 0.0
  %2104 = vrot.lane.b32.xlu0 %v2066, 14
  %v2105 = vpop.permute.xlu0 %2104
  %2108 = vrot.lane.b32.xlu0 %v2050, 28
  %v2109 = vpop.permute.xlu0 %2108
  %2112 = vrot.lane.b32.xlu0 %v2067, 42
  %v2113 = vpop.permute.xlu0 %2112
  %2116 = vrot.lane.b32.xlu0 %v2058, 56
  %v2117 = vpop.permute.xlu0 %2116
  %2120 = vrot.lane.b32.xlu0 %v2068, 70
  %v2121 = vpop.permute.xlu0 %2120
  %2124 = vrot.lane.b32.xlu0 %v2065, 84
  %v2125 = vpop.permute.xlu0 %2124
  %2128 = vrot.lane.b32.xlu0 %v2069, 98
  %v2129 = vpop.permute.xlu0 %2128
  %2132 = vrot.lane.b32.xlu0 %v2084, 112
  %v2133 = vpop.permute.xlu0 %2132
  %2136 = vrot.lane.b32.xlu0 %v2100, 126
  %v2137 = vpop.permute.xlu0 %2136
  %2140 = vrot.lane.b32.xlu0 %v2091, 12
  %v2141 = vpop.permute.xlu0 %2140
  %2144 = vrot.lane.b32.xlu0 %v2101, 26
  %v2145 = vpop.permute.xlu0 %2144
  %2148 = vrot.lane.b32.xlu0 %v2099, 40
  %v2149 = vpop.permute.xlu0 %2148
  %2152 = vrot.lane.b32.xlu0 %v2102, 54
  %v2153 = vpop.permute.xlu0 %2152
  %v2155 = vsel %vm156, %v2043, %v2105
  %v2156 = vsel %vm158, %v2155, %v2109
  %v2157 = vsel %vm160, %v2156, %v2113
  %v2158 = vsel %vm162, %v2157, %v2117
  %v2159 = vsel %vm164, %v2158, %v2121
  %v2160 = vsel %vm166, %v2159, %v2125
  %v2161 = vsel %vm168, %v2160, %v2129
  %v2162 = vsel %vm170, %v2161, %v2133
  %v2163 = vsel %vm172, %v2162, %v2137
  %v2164 = vsel %vm174, %v2137, %v2141
  %v2165 = vsel %vm176, %v2164, %v2145
  %v2166 = vsel %vm178, %v2165, %v2149
  %v2167 = vsel %vm180, %v2166, %v2153
  %2168 = vrot.lane.b32.xlu0 %v1865, 126
  %v2169 = vpop.permute.xlu0 %2168
  %2170 = vrot.lane.b32.xlu0 %v1864, 126
  %v2171 = vpop.permute.xlu0 %2170
  %v2174 = vcombine.high %v2169, 0.0
  %v2176 = vunpack.c.l.s4 1983009808
  %v2177 = vunpack.c.0.s8 %v2176
  %v2178 = vlaneseq
  %v2179 = vshrl.u32 %v2178, 7
  %v2180 = vsub.s32 %v2177, %v2179
  %v2181 = vrot.slane %v2169, %v2180
  %v2183 = vunpack.c.l.s4 1983009808
  %v2184 = vunpack.c.0.s8 %v2183
  %v2185 = vlaneseq
  %v2186 = vshrl.u32 %v2185, 7
  %v2187 = vsub.s32 %v2184, %v2186
  %v2188 = vrot.slane %v2174, %v2187
  %v2189 = vcombine.high %v2181, 0.0
  %v2191 = vunpack.c.l.s4 1934713408
  %v2192 = vunpack.c.0.s8 %v2191
  %v2193 = vlaneseq
  %v2194 = vshrl.u32 %v2193, 7
  %v2195 = vsub.s32 %v2192, %v2194
  %v2196 = vrot.slane %v2181, %v2195
  %v2198 = vunpack.c.l.s4 1934713408
  %v2199 = vunpack.c.0.s8 %v2198
  %v2200 = vlaneseq
  %v2201 = vshrl.u32 %v2200, 7
  %v2202 = vsub.s32 %v2199, %v2201
  %v2203 = vrot.slane %v2189, %v2202
  %v2204 = vcombine.high %v2188, 0.0
  %v2206 = vunpack.c.l.s4 1934713408
  %v2207 = vunpack.c.0.s8 %v2206
  %v2208 = vlaneseq
  %v2209 = vshrl.u32 %v2208, 7
  %v2210 = vsub.s32 %v2207, %v2209
  %v2211 = vrot.slane %v2188, %v2210
  %v2213 = vunpack.c.l.s4 1934713408
  %v2214 = vunpack.c.0.s8 %v2213
  %v2215 = vlaneseq
  %v2216 = vshrl.u32 %v2215, 7
  %v2217 = vsub.s32 %v2214, %v2216
  %v2218 = vrot.slane %v2204, %v2217
  %v2219 = vcombine.high %v2196, 0.0
  %v2220 = vcombine.high %v2203, 0.0
  %v2221 = vcombine.high %v2211, 0.0
  %v2222 = vcombine.high %v2218, 0.0
  %v2224 = vunpack.c.l.s4 1983009808
  %v2225 = vunpack.c.0.s8 %v2224
  %v2226 = vlaneseq
  %v2227 = vshrl.u32 %v2226, 7
  %v2228 = vsub.s32 %v2225, %v2227
  %v2229 = vrot.slane %v2171, %v2228
  %v2230 = vcombine.high %v2229, 0.0
  %v2232 = vunpack.c.l.s4 1934713408
  %v2233 = vunpack.c.0.s8 %v2232
  %v2234 = vlaneseq
  %v2235 = vshrl.u32 %v2234, 7
  %v2236 = vsub.s32 %v2233, %v2235
  %v2237 = vrot.slane %v2229, %v2236
  %v2239 = vunpack.c.l.s4 1934713408
  %v2240 = vunpack.c.0.s8 %v2239
  %v2241 = vlaneseq
  %v2242 = vshrl.u32 %v2241, 7
  %v2243 = vsub.s32 %v2240, %v2242
  %v2244 = vrot.slane %v2230, %v2243
  %v2245 = vcombine.high %v2171, 0.0
  %v2247 = vunpack.c.l.s4 1934713408
  %v2248 = vunpack.c.0.s8 %v2247
  %v2249 = vlaneseq
  %v2250 = vshrl.u32 %v2249, 7
  %v2251 = vsub.s32 %v2248, %v2250
  %v2252 = vrot.slane %v2245, %v2251
  %v2253 = vcombine.high %v2237, 0.0
  %v2254 = vcombine.high %v2244, 0.0
  %v2255 = vcombine.high %v2252, 0.0
  %2257 = vrot.lane.b32.xlu0 %v2219, 14
  %v2258 = vpop.permute.xlu0 %2257
  %2261 = vrot.lane.b32.xlu0 %v2203, 28
  %v2262 = vpop.permute.xlu0 %2261
  %2265 = vrot.lane.b32.xlu0 %v2220, 42
  %v2266 = vpop.permute.xlu0 %2265
  %2269 = vrot.lane.b32.xlu0 %v2211, 56
  %v2270 = vpop.permute.xlu0 %2269
  %2273 = vrot.lane.b32.xlu0 %v2221, 70
  %v2274 = vpop.permute.xlu0 %2273
  %2277 = vrot.lane.b32.xlu0 %v2218, 84
  %v2278 = vpop.permute.xlu0 %2277
  %2281 = vrot.lane.b32.xlu0 %v2222, 98
  %v2282 = vpop.permute.xlu0 %2281
  %2285 = vrot.lane.b32.xlu0 %v2237, 112
  %v2286 = vpop.permute.xlu0 %2285
  %2289 = vrot.lane.b32.xlu0 %v2253, 126
  %v2290 = vpop.permute.xlu0 %2289
  %2293 = vrot.lane.b32.xlu0 %v2244, 12
  %v2294 = vpop.permute.xlu0 %2293
  %2297 = vrot.lane.b32.xlu0 %v2254, 26
  %v2298 = vpop.permute.xlu0 %2297
  %2301 = vrot.lane.b32.xlu0 %v2252, 40
  %v2302 = vpop.permute.xlu0 %2301
  %2305 = vrot.lane.b32.xlu0 %v2255, 54
  %v2306 = vpop.permute.xlu0 %2305
  %v2308 = vsel %vm156, %v2196, %v2258
  %v2309 = vsel %vm158, %v2308, %v2262
  %v2310 = vsel %vm160, %v2309, %v2266
  %v2311 = vsel %vm162, %v2310, %v2270
  %v2312 = vsel %vm164, %v2311, %v2274
  %v2313 = vsel %vm166, %v2312, %v2278
  %v2314 = vsel %vm168, %v2313, %v2282
  %v2315 = vsel %vm170, %v2314, %v2286
  %v2316 = vsel %vm172, %v2315, %v2290
  %v2317 = vsel %vm174, %v2290, %v2294
  %v2318 = vsel %vm176, %v2317, %v2298
  %v2319 = vsel %vm178, %v2318, %v2302
  %v2320 = vsel %vm180, %v2319, %v2306
  %v2321 = vrot.slane %v16, 2
  %v2322 = vrot.slane %v17, 2
  %v2323 = vsel %vm949, %v2321, %v2322
  %v2326 = vcombine.high %v2323, 0.0
  %v2328 = vunpack.c.l.s4 1983009808
  %v2329 = vunpack.c.0.s8 %v2328
  %v2330 = vlaneseq
  %v2331 = vshrl.u32 %v2330, 7
  %v2332 = vsub.s32 %v2329, %v2331
  %v2333 = vrot.slane %v2323, %v2332
  %v2335 = vunpack.c.l.s4 1983009808
  %v2336 = vunpack.c.0.s8 %v2335
  %v2337 = vlaneseq
  %v2338 = vshrl.u32 %v2337, 7
  %v2339 = vsub.s32 %v2336, %v2338
  %v2340 = vrot.slane %v2326, %v2339
  %v2341 = vcombine.high %v2333, 0.0
  %v2343 = vunpack.c.l.s4 1934713408
  %v2344 = vunpack.c.0.s8 %v2343
  %v2345 = vlaneseq
  %v2346 = vshrl.u32 %v2345, 7
  %v2347 = vsub.s32 %v2344, %v2346
  %v2348 = vrot.slane %v2333, %v2347
  %v2350 = vunpack.c.l.s4 1934713408
  %v2351 = vunpack.c.0.s8 %v2350
  %v2352 = vlaneseq
  %v2353 = vshrl.u32 %v2352, 7
  %v2354 = vsub.s32 %v2351, %v2353
  %v2355 = vrot.slane %v2341, %v2354
  %v2356 = vcombine.high %v2340, 0.0
  %v2358 = vunpack.c.l.s4 1934713408
  %v2359 = vunpack.c.0.s8 %v2358
  %v2360 = vlaneseq
  %v2361 = vshrl.u32 %v2360, 7
  %v2362 = vsub.s32 %v2359, %v2361
  %v2363 = vrot.slane %v2340, %v2362
  %v2365 = vunpack.c.l.s4 1934713408
  %v2366 = vunpack.c.0.s8 %v2365
  %v2367 = vlaneseq
  %v2368 = vshrl.u32 %v2367, 7
  %v2369 = vsub.s32 %v2366, %v2368
  %v2370 = vrot.slane %v2356, %v2369
  %v2371 = vcombine.high %v2348, 0.0
  %v2372 = vcombine.high %v2355, 0.0
  %v2373 = vcombine.high %v2363, 0.0
  %v2374 = vcombine.high %v2370, 0.0
  %v2376 = vunpack.c.l.s4 1983009808
  %v2377 = vunpack.c.0.s8 %v2376
  %v2378 = vlaneseq
  %v2379 = vshrl.u32 %v2378, 7
  %v2380 = vsub.s32 %v2377, %v2379
  %v2381 = vrot.slane %v2322, %v2380
  %v2382 = vcombine.high %v2381, 0.0
  %v2384 = vunpack.c.l.s4 1934713408
  %v2385 = vunpack.c.0.s8 %v2384
  %v2386 = vlaneseq
  %v2387 = vshrl.u32 %v2386, 7
  %v2388 = vsub.s32 %v2385, %v2387
  %v2389 = vrot.slane %v2381, %v2388
  %v2391 = vunpack.c.l.s4 1934713408
  %v2392 = vunpack.c.0.s8 %v2391
  %v2393 = vlaneseq
  %v2394 = vshrl.u32 %v2393, 7
  %v2395 = vsub.s32 %v2392, %v2394
  %v2396 = vrot.slane %v2382, %v2395
  %v2397 = vcombine.high %v2322, 0.0
  %v2399 = vunpack.c.l.s4 1934713408
  %v2400 = vunpack.c.0.s8 %v2399
  %v2401 = vlaneseq
  %v2402 = vshrl.u32 %v2401, 7
  %v2403 = vsub.s32 %v2400, %v2402
  %v2404 = vrot.slane %v2397, %v2403
  %v2405 = vcombine.high %v2389, 0.0
  %v2406 = vcombine.high %v2396, 0.0
  %v2407 = vcombine.high %v2404, 0.0
  %2409 = vrot.lane.b32.xlu0 %v2371, 14
  %v2410 = vpop.permute.xlu0 %2409
  %2413 = vrot.lane.b32.xlu0 %v2355, 28
  %v2414 = vpop.permute.xlu0 %2413
  %2417 = vrot.lane.b32.xlu0 %v2372, 42
  %v2418 = vpop.permute.xlu0 %2417
  %2421 = vrot.lane.b32.xlu0 %v2363, 56
  %v2422 = vpop.permute.xlu0 %2421
  %2425 = vrot.lane.b32.xlu0 %v2373, 70
  %v2426 = vpop.permute.xlu0 %2425
  %2429 = vrot.lane.b32.xlu0 %v2370, 84
  %v2430 = vpop.permute.xlu0 %2429
  %2433 = vrot.lane.b32.xlu0 %v2374, 98
  %v2434 = vpop.permute.xlu0 %2433
  %2437 = vrot.lane.b32.xlu0 %v2389, 112
  %v2438 = vpop.permute.xlu0 %2437
  %2441 = vrot.lane.b32.xlu0 %v2405, 126
  %v2442 = vpop.permute.xlu0 %2441
  %2445 = vrot.lane.b32.xlu0 %v2396, 12
  %v2446 = vpop.permute.xlu0 %2445
  %2449 = vrot.lane.b32.xlu0 %v2406, 26
  %v2450 = vpop.permute.xlu0 %2449
  %2453 = vrot.lane.b32.xlu0 %v2404, 40
  %v2454 = vpop.permute.xlu0 %2453
  %2457 = vrot.lane.b32.xlu0 %v2407, 54
  %v2458 = vpop.permute.xlu0 %2457
  %v2460 = vsel %vm156, %v2348, %v2410
  %v2461 = vsel %vm158, %v2460, %v2414
  %v2462 = vsel %vm160, %v2461, %v2418
  %v2463 = vsel %vm162, %v2462, %v2422
  %v2464 = vsel %vm164, %v2463, %v2426
  %v2465 = vsel %vm166, %v2464, %v2430
  %v2466 = vsel %vm168, %v2465, %v2434
  %v2467 = vsel %vm170, %v2466, %v2438
  %v2468 = vsel %vm172, %v2467, %v2442
  %v2469 = vsel %vm174, %v2442, %v2446
  %v2470 = vsel %vm176, %v2469, %v2450
  %v2471 = vsel %vm178, %v2470, %v2454
  %v2472 = vsel %vm180, %v2471, %v2458
  %2473 = vrot.lane.b32.xlu0 %v2323, 127
  %v2474 = vpop.permute.xlu0 %2473
  %2475 = vrot.lane.b32.xlu0 %v2322, 127
  %v2476 = vpop.permute.xlu0 %2475
  %v2479 = vcombine.high %v2474, 0.0
  %v2481 = vunpack.c.l.s4 1983009808
  %v2482 = vunpack.c.0.s8 %v2481
  %v2483 = vlaneseq
  %v2484 = vshrl.u32 %v2483, 7
  %v2485 = vsub.s32 %v2482, %v2484
  %v2486 = vrot.slane %v2474, %v2485
  %v2488 = vunpack.c.l.s4 1983009808
  %v2489 = vunpack.c.0.s8 %v2488
  %v2490 = vlaneseq
  %v2491 = vshrl.u32 %v2490, 7
  %v2492 = vsub.s32 %v2489, %v2491
  %v2493 = vrot.slane %v2479, %v2492
  %v2494 = vcombine.high %v2486, 0.0
  %v2496 = vunpack.c.l.s4 1934713408
  %v2497 = vunpack.c.0.s8 %v2496
  %v2498 = vlaneseq
  %v2499 = vshrl.u32 %v2498, 7
  %v2500 = vsub.s32 %v2497, %v2499
  %v2501 = vrot.slane %v2486, %v2500
  %v2503 = vunpack.c.l.s4 1934713408
  %v2504 = vunpack.c.0.s8 %v2503
  %v2505 = vlaneseq
  %v2506 = vshrl.u32 %v2505, 7
  %v2507 = vsub.s32 %v2504, %v2506
  %v2508 = vrot.slane %v2494, %v2507
  %v2509 = vcombine.high %v2493, 0.0
  %v2511 = vunpack.c.l.s4 1934713408
  %v2512 = vunpack.c.0.s8 %v2511
  %v2513 = vlaneseq
  %v2514 = vshrl.u32 %v2513, 7
  %v2515 = vsub.s32 %v2512, %v2514
  %v2516 = vrot.slane %v2493, %v2515
  %v2518 = vunpack.c.l.s4 1934713408
  %v2519 = vunpack.c.0.s8 %v2518
  %v2520 = vlaneseq
  %v2521 = vshrl.u32 %v2520, 7
  %v2522 = vsub.s32 %v2519, %v2521
  %v2523 = vrot.slane %v2509, %v2522
  %v2524 = vcombine.high %v2501, 0.0
  %v2525 = vcombine.high %v2508, 0.0
  %v2526 = vcombine.high %v2516, 0.0
  %v2527 = vcombine.high %v2523, 0.0
  %v2529 = vunpack.c.l.s4 1983009808
  %v2530 = vunpack.c.0.s8 %v2529
  %v2531 = vlaneseq
  %v2532 = vshrl.u32 %v2531, 7
  %v2533 = vsub.s32 %v2530, %v2532
  %v2534 = vrot.slane %v2476, %v2533
  %v2535 = vcombine.high %v2534, 0.0
  %v2537 = vunpack.c.l.s4 1934713408
  %v2538 = vunpack.c.0.s8 %v2537
  %v2539 = vlaneseq
  %v2540 = vshrl.u32 %v2539, 7
  %v2541 = vsub.s32 %v2538, %v2540
  %v2542 = vrot.slane %v2534, %v2541
  %v2544 = vunpack.c.l.s4 1934713408
  %v2545 = vunpack.c.0.s8 %v2544
  %v2546 = vlaneseq
  %v2547 = vshrl.u32 %v2546, 7
  %v2548 = vsub.s32 %v2545, %v2547
  %v2549 = vrot.slane %v2535, %v2548
  %v2550 = vcombine.high %v2476, 0.0
  %v2552 = vunpack.c.l.s4 1934713408
  %v2553 = vunpack.c.0.s8 %v2552
  %v2554 = vlaneseq
  %v2555 = vshrl.u32 %v2554, 7
  %v2556 = vsub.s32 %v2553, %v2555
  %v2557 = vrot.slane %v2550, %v2556
  %v2558 = vcombine.high %v2542, 0.0
  %v2559 = vcombine.high %v2549, 0.0
  %v2560 = vcombine.high %v2557, 0.0
  %2562 = vrot.lane.b32.xlu0 %v2524, 14
  %v2563 = vpop.permute.xlu0 %2562
  %2566 = vrot.lane.b32.xlu0 %v2508, 28
  %v2567 = vpop.permute.xlu0 %2566
  %2570 = vrot.lane.b32.xlu0 %v2525, 42
  %v2571 = vpop.permute.xlu0 %2570
  %2574 = vrot.lane.b32.xlu0 %v2516, 56
  %v2575 = vpop.permute.xlu0 %2574
  %2578 = vrot.lane.b32.xlu0 %v2526, 70
  %v2579 = vpop.permute.xlu0 %2578
  %2582 = vrot.lane.b32.xlu0 %v2523, 84
  %v2583 = vpop.permute.xlu0 %2582
  %2586 = vrot.lane.b32.xlu0 %v2527, 98
  %v2587 = vpop.permute.xlu0 %2586
  %2590 = vrot.lane.b32.xlu0 %v2542, 112
  %v2591 = vpop.permute.xlu0 %2590
  %2594 = vrot.lane.b32.xlu0 %v2558, 126
  %v2595 = vpop.permute.xlu0 %2594
  %2598 = vrot.lane.b32.xlu0 %v2549, 12
  %v2599 = vpop.permute.xlu0 %2598
  %2602 = vrot.lane.b32.xlu0 %v2559, 26
  %v2603 = vpop.permute.xlu0 %2602
  %2606 = vrot.lane.b32.xlu0 %v2557, 40
  %v2607 = vpop.permute.xlu0 %2606
  %2610 = vrot.lane.b32.xlu0 %v2560, 54
  %v2611 = vpop.permute.xlu0 %2610
  %v2613 = vsel %vm156, %v2501, %v2563
  %v2614 = vsel %vm158, %v2613, %v2567
  %v2615 = vsel %vm160, %v2614, %v2571
  %v2616 = vsel %vm162, %v2615, %v2575
  %v2617 = vsel %vm164, %v2616, %v2579
  %v2618 = vsel %vm166, %v2617, %v2583
  %v2619 = vsel %vm168, %v2618, %v2587
  %v2620 = vsel %vm170, %v2619, %v2591
  %v2621 = vsel %vm172, %v2620, %v2595
  %v2622 = vsel %vm174, %v2595, %v2599
  %v2623 = vsel %vm176, %v2622, %v2603
  %v2624 = vsel %vm178, %v2623, %v2607
  %v2625 = vsel %vm180, %v2624, %v2611
  %2626 = vrot.lane.b32.xlu0 %v2323, 126
  %v2627 = vpop.permute.xlu0 %2626
  %2628 = vrot.lane.b32.xlu0 %v2322, 126
  %v2629 = vpop.permute.xlu0 %2628
  %v2632 = vcombine.high %v2627, 0.0
  %v2634 = vunpack.c.l.s4 1983009808
  %v2635 = vunpack.c.0.s8 %v2634
  %v2636 = vlaneseq
  %v2637 = vshrl.u32 %v2636, 7
  %v2638 = vsub.s32 %v2635, %v2637
  %v2639 = vrot.slane %v2627, %v2638
  %v2641 = vunpack.c.l.s4 1983009808
  %v2642 = vunpack.c.0.s8 %v2641
  %v2643 = vlaneseq
  %v2644 = vshrl.u32 %v2643, 7
  %v2645 = vsub.s32 %v2642, %v2644
  %v2646 = vrot.slane %v2632, %v2645
  %v2647 = vcombine.high %v2639, 0.0
  %v2649 = vunpack.c.l.s4 1934713408
  %v2650 = vunpack.c.0.s8 %v2649
  %v2651 = vlaneseq
  %v2652 = vshrl.u32 %v2651, 7
  %v2653 = vsub.s32 %v2650, %v2652
  %v2654 = vrot.slane %v2639, %v2653
  %v2656 = vunpack.c.l.s4 1934713408
  %v2657 = vunpack.c.0.s8 %v2656
  %v2658 = vlaneseq
  %v2659 = vshrl.u32 %v2658, 7
  %v2660 = vsub.s32 %v2657, %v2659
  %v2661 = vrot.slane %v2647, %v2660
  %v2662 = vcombine.high %v2646, 0.0
  %v2664 = vunpack.c.l.s4 1934713408
  %v2665 = vunpack.c.0.s8 %v2664
  %v2666 = vlaneseq
  %v2667 = vshrl.u32 %v2666, 7
  %v2668 = vsub.s32 %v2665, %v2667
  %v2669 = vrot.slane %v2646, %v2668
  %v2671 = vunpack.c.l.s4 1934713408
  %v2672 = vunpack.c.0.s8 %v2671
  %v2673 = vlaneseq
  %v2674 = vshrl.u32 %v2673, 7
  %v2675 = vsub.s32 %v2672, %v2674
  %v2676 = vrot.slane %v2662, %v2675
  %v2677 = vcombine.high %v2654, 0.0
  %v2678 = vcombine.high %v2661, 0.0
  %v2679 = vcombine.high %v2669, 0.0
  %v2680 = vcombine.high %v2676, 0.0
  %v2682 = vunpack.c.l.s4 1983009808
  %v2683 = vunpack.c.0.s8 %v2682
  %v2684 = vlaneseq
  %v2685 = vshrl.u32 %v2684, 7
  %v2686 = vsub.s32 %v2683, %v2685
  %v2687 = vrot.slane %v2629, %v2686
  %v2688 = vcombine.high %v2687, 0.0
  %v2690 = vunpack.c.l.s4 1934713408
  %v2691 = vunpack.c.0.s8 %v2690
  %v2692 = vlaneseq
  %v2693 = vshrl.u32 %v2692, 7
  %v2694 = vsub.s32 %v2691, %v2693
  %v2695 = vrot.slane %v2687, %v2694
  %v2697 = vunpack.c.l.s4 1934713408
  %v2698 = vunpack.c.0.s8 %v2697
  %v2699 = vlaneseq
  %v2700 = vshrl.u32 %v2699, 7
  %v2701 = vsub.s32 %v2698, %v2700
  %v2702 = vrot.slane %v2688, %v2701
  %v2703 = vcombine.high %v2629, 0.0
  %v2705 = vunpack.c.l.s4 1934713408
  %v2706 = vunpack.c.0.s8 %v2705
  %v2707 = vlaneseq
  %v2708 = vshrl.u32 %v2707, 7
  %v2709 = vsub.s32 %v2706, %v2708
  %v2710 = vrot.slane %v2703, %v2709
  %v2711 = vcombine.high %v2695, 0.0
  %v2712 = vcombine.high %v2702, 0.0
  %v2713 = vcombine.high %v2710, 0.0
  %2715 = vrot.lane.b32.xlu0 %v2677, 14
  %v2716 = vpop.permute.xlu0 %2715
  %2719 = vrot.lane.b32.xlu0 %v2661, 28
  %v2720 = vpop.permute.xlu0 %2719
  %2723 = vrot.lane.b32.xlu0 %v2678, 42
  %v2724 = vpop.permute.xlu0 %2723
  %2727 = vrot.lane.b32.xlu0 %v2669, 56
  %v2728 = vpop.permute.xlu0 %2727
  %2731 = vrot.lane.b32.xlu0 %v2679, 70
  %v2732 = vpop.permute.xlu0 %2731
  %2735 = vrot.lane.b32.xlu0 %v2676, 84
  %v2736 = vpop.permute.xlu0 %2735
  %2739 = vrot.lane.b32.xlu0 %v2680, 98
  %v2740 = vpop.permute.xlu0 %2739
  %2743 = vrot.lane.b32.xlu0 %v2695, 112
  %v2744 = vpop.permute.xlu0 %2743
  %2747 = vrot.lane.b32.xlu0 %v2711, 126
  %v2748 = vpop.permute.xlu0 %2747
  %2751 = vrot.lane.b32.xlu0 %v2702, 12
  %v2752 = vpop.permute.xlu0 %2751
  %2755 = vrot.lane.b32.xlu0 %v2712, 26
  %v2756 = vpop.permute.xlu0 %2755
  %2759 = vrot.lane.b32.xlu0 %v2710, 40
  %v2760 = vpop.permute.xlu0 %2759
  %2763 = vrot.lane.b32.xlu0 %v2713, 54
  %v2764 = vpop.permute.xlu0 %2763
  %v2766 = vsel %vm156, %v2654, %v2716
  %v2767 = vsel %vm158, %v2766, %v2720
  %v2768 = vsel %vm160, %v2767, %v2724
  %v2769 = vsel %vm162, %v2768, %v2728
  %v2770 = vsel %vm164, %v2769, %v2732
  %v2771 = vsel %vm166, %v2770, %v2736
  %v2772 = vsel %vm168, %v2771, %v2740
  %v2773 = vsel %vm170, %v2772, %v2744
  %v2774 = vsel %vm172, %v2773, %v2748
  %v2775 = vsel %vm174, %v2748, %v2752
  %v2776 = vsel %vm176, %v2775, %v2756
  %v2777 = vsel %vm178, %v2776, %v2760
  %v2778 = vsel %vm180, %v2777, %v2764
  %v2779 = vcombine.high %v18, 0.0
  %v2781 = vunpack.c.l.s4 1983009808
  %v2782 = vunpack.c.0.s8 %v2781
  %v2783 = vlaneseq
  %v2784 = vshrl.u32 %v2783, 7
  %v2785 = vsub.s32 %v2782, %v2784
  %v2786 = vrot.slane %v18, %v2785
  %v2788 = vunpack.c.l.s4 1983009808
  %v2789 = vunpack.c.0.s8 %v2788
  %v2790 = vlaneseq
  %v2791 = vshrl.u32 %v2790, 7
  %v2792 = vsub.s32 %v2789, %v2791
  %v2793 = vrot.slane %v2779, %v2792
  %v2794 = vcombine.high %v2786, 0.0
  %v2796 = vunpack.c.l.s4 1934713408
  %v2797 = vunpack.c.0.s8 %v2796
  %v2798 = vlaneseq
  %v2799 = vshrl.u32 %v2798, 7
  %v2800 = vsub.s32 %v2797, %v2799
  %v2801 = vrot.slane %v2786, %v2800
  %v2803 = vunpack.c.l.s4 1934713408
  %v2804 = vunpack.c.0.s8 %v2803
  %v2805 = vlaneseq
  %v2806 = vshrl.u32 %v2805, 7
  %v2807 = vsub.s32 %v2804, %v2806
  %v2808 = vrot.slane %v2794, %v2807
  %v2809 = vcombine.high %v2793, 0.0
  %v2811 = vunpack.c.l.s4 1934713408
  %v2812 = vunpack.c.0.s8 %v2811
  %v2813 = vlaneseq
  %v2814 = vshrl.u32 %v2813, 7
  %v2815 = vsub.s32 %v2812, %v2814
  %v2816 = vrot.slane %v2793, %v2815
  %v2818 = vunpack.c.l.s4 1934713408
  %v2819 = vunpack.c.0.s8 %v2818
  %v2820 = vlaneseq
  %v2821 = vshrl.u32 %v2820, 7
  %v2822 = vsub.s32 %v2819, %v2821
  %v2823 = vrot.slane %v2809, %v2822
  %v2824 = vcombine.high %v2801, 0.0
  %v2825 = vcombine.high %v2808, 0.0
  %v2826 = vcombine.high %v2816, 0.0
  %v2827 = vcombine.high %v2823, 0.0
  %v2829 = vunpack.c.l.s4 1983009808
  %v2830 = vunpack.c.0.s8 %v2829
  %v2831 = vlaneseq
  %v2832 = vshrl.u32 %v2831, 7
  %v2833 = vsub.s32 %v2830, %v2832
  %v2834 = vrot.slane %v19, %v2833
  %v2835 = vcombine.high %v2834, 0.0
  %v2837 = vunpack.c.l.s4 1934713408
  %v2838 = vunpack.c.0.s8 %v2837
  %v2839 = vlaneseq
  %v2840 = vshrl.u32 %v2839, 7
  %v2841 = vsub.s32 %v2838, %v2840
  %v2842 = vrot.slane %v2834, %v2841
  %v2844 = vunpack.c.l.s4 1934713408
  %v2845 = vunpack.c.0.s8 %v2844
  %v2846 = vlaneseq
  %v2847 = vshrl.u32 %v2846, 7
  %v2848 = vsub.s32 %v2845, %v2847
  %v2849 = vrot.slane %v2835, %v2848
  %v2850 = vcombine.high %v19, 0.0
  %v2852 = vunpack.c.l.s4 1934713408
  %v2853 = vunpack.c.0.s8 %v2852
  %v2854 = vlaneseq
  %v2855 = vshrl.u32 %v2854, 7
  %v2856 = vsub.s32 %v2853, %v2855
  %v2857 = vrot.slane %v2850, %v2856
  %v2858 = vcombine.high %v2842, 0.0
  %v2859 = vcombine.high %v2849, 0.0
  %v2860 = vcombine.high %v2857, 0.0
  %2862 = vrot.lane.b32.xlu0 %v2824, 14
  %v2863 = vpop.permute.xlu0 %2862
  %2866 = vrot.lane.b32.xlu0 %v2808, 28
  %v2867 = vpop.permute.xlu0 %2866
  %2870 = vrot.lane.b32.xlu0 %v2825, 42
  %v2871 = vpop.permute.xlu0 %2870
  %2874 = vrot.lane.b32.xlu0 %v2816, 56
  %v2875 = vpop.permute.xlu0 %2874
  %2878 = vrot.lane.b32.xlu0 %v2826, 70
  %v2879 = vpop.permute.xlu0 %2878
  %2882 = vrot.lane.b32.xlu0 %v2823, 84
  %v2883 = vpop.permute.xlu0 %2882
  %2886 = vrot.lane.b32.xlu0 %v2827, 98
  %v2887 = vpop.permute.xlu0 %2886
  %2890 = vrot.lane.b32.xlu0 %v2842, 112
  %v2891 = vpop.permute.xlu0 %2890
  %2894 = vrot.lane.b32.xlu0 %v2858, 126
  %v2895 = vpop.permute.xlu0 %2894
  %2898 = vrot.lane.b32.xlu0 %v2849, 12
  %v2899 = vpop.permute.xlu0 %2898
  %2902 = vrot.lane.b32.xlu0 %v2859, 26
  %v2903 = vpop.permute.xlu0 %2902
  %2906 = vrot.lane.b32.xlu0 %v2857, 40
  %v2907 = vpop.permute.xlu0 %2906
  %2910 = vrot.lane.b32.xlu0 %v2860, 54
  %v2911 = vpop.permute.xlu0 %2910
  %v2913 = vsel %vm156, %v2801, %v2863
  %v2914 = vsel %vm158, %v2913, %v2867
  %v2915 = vsel %vm160, %v2914, %v2871
  %v2916 = vsel %vm162, %v2915, %v2875
  %v2917 = vsel %vm164, %v2916, %v2879
  %v2918 = vsel %vm166, %v2917, %v2883
  %v2919 = vsel %vm168, %v2918, %v2887
  %v2920 = vsel %vm170, %v2919, %v2891
  %v2921 = vsel %vm172, %v2920, %v2895
  %v2922 = vsel %vm174, %v2895, %v2899
  %v2923 = vsel %vm176, %v2922, %v2903
  %v2924 = vsel %vm178, %v2923, %v2907
  %v2925 = vsel %vm180, %v2924, %v2911
  %2928 = vrot.lane.b32.xlu0 %v18, 127
  %v2929 = vpop.permute.xlu0 %2928
  %2930 = vrot.lane.b32.xlu0 %v19, 127
  %v2931 = vpop.permute.xlu0 %2930
  %v2934 = vcombine.high %v2929, 0.0
  %v2936 = vunpack.c.l.s4 1983009808
  %v2937 = vunpack.c.0.s8 %v2936
  %v2938 = vlaneseq
  %v2939 = vshrl.u32 %v2938, 7
  %v2940 = vsub.s32 %v2937, %v2939
  %v2941 = vrot.slane %v2929, %v2940
  %v2943 = vunpack.c.l.s4 1983009808
  %v2944 = vunpack.c.0.s8 %v2943
  %v2945 = vlaneseq
  %v2946 = vshrl.u32 %v2945, 7
  %v2947 = vsub.s32 %v2944, %v2946
  %v2948 = vrot.slane %v2934, %v2947
  %v2949 = vcombine.high %v2941, 0.0
  %v2951 = vunpack.c.l.s4 1934713408
  %v2952 = vunpack.c.0.s8 %v2951
  %v2953 = vlaneseq
  %v2954 = vshrl.u32 %v2953, 7
  %v2955 = vsub.s32 %v2952, %v2954
  %v2956 = vrot.slane %v2941, %v2955
  %v2958 = vunpack.c.l.s4 1934713408
  %v2959 = vunpack.c.0.s8 %v2958
  %v2960 = vlaneseq
  %v2961 = vshrl.u32 %v2960, 7
  %v2962 = vsub.s32 %v2959, %v2961
  %v2963 = vrot.slane %v2949, %v2962
  %v2964 = vcombine.high %v2948, 0.0
  %v2966 = vunpack.c.l.s4 1934713408
  %v2967 = vunpack.c.0.s8 %v2966
  %v2968 = vlaneseq
  %v2969 = vshrl.u32 %v2968, 7
  %v2970 = vsub.s32 %v2967, %v2969
  %v2971 = vrot.slane %v2948, %v2970
  %v2973 = vunpack.c.l.s4 1934713408
  %v2974 = vunpack.c.0.s8 %v2973
  %v2975 = vlaneseq
  %v2976 = vshrl.u32 %v2975, 7
  %v2977 = vsub.s32 %v2974, %v2976
  %v2978 = vrot.slane %v2964, %v2977
  %v2979 = vcombine.high %v2956, 0.0
  %v2980 = vcombine.high %v2963, 0.0
  %v2981 = vcombine.high %v2971, 0.0
  %v2982 = vcombine.high %v2978, 0.0
  %v2984 = vunpack.c.l.s4 1983009808
  %v2985 = vunpack.c.0.s8 %v2984
  %v2986 = vlaneseq
  %v2987 = vshrl.u32 %v2986, 7
  %v2988 = vsub.s32 %v2985, %v2987
  %v2989 = vrot.slane %v2931, %v2988
  %v2990 = vcombine.high %v2989, 0.0
  %v2992 = vunpack.c.l.s4 1934713408
  %v2993 = vunpack.c.0.s8 %v2992
  %v2994 = vlaneseq
  %v2995 = vshrl.u32 %v2994, 7
  %v2996 = vsub.s32 %v2993, %v2995
  %v2997 = vrot.slane %v2989, %v2996
  %v2999 = vunpack.c.l.s4 1934713408
  %v3000 = vunpack.c.0.s8 %v2999
  %v3001 = vlaneseq
  %v3002 = vshrl.u32 %v3001, 7
  %v3003 = vsub.s32 %v3000, %v3002
  %v3004 = vrot.slane %v2990, %v3003
  %v3005 = vcombine.high %v2931, 0.0
  %v3007 = vunpack.c.l.s4 1934713408
  %v3008 = vunpack.c.0.s8 %v3007
  %v3009 = vlaneseq
  %v3010 = vshrl.u32 %v3009, 7
  %v3011 = vsub.s32 %v3008, %v3010
  %v3012 = vrot.slane %v3005, %v3011
  %v3013 = vcombine.high %v2997, 0.0
  %v3014 = vcombine.high %v3004, 0.0
  %v3015 = vcombine.high %v3012, 0.0
  %3017 = vrot.lane.b32.xlu0 %v2979, 14
  %v3018 = vpop.permute.xlu0 %3017
  %3021 = vrot.lane.b32.xlu0 %v2963, 28
  %v3022 = vpop.permute.xlu0 %3021
  %3025 = vrot.lane.b32.xlu0 %v2980, 42
  %v3026 = vpop.permute.xlu0 %3025
  %3029 = vrot.lane.b32.xlu0 %v2971, 56
  %v3030 = vpop.permute.xlu0 %3029
  %3033 = vrot.lane.b32.xlu0 %v2981, 70
  %v3034 = vpop.permute.xlu0 %3033
  %3037 = vrot.lane.b32.xlu0 %v2978, 84
  %v3038 = vpop.permute.xlu0 %3037
  %3041 = vrot.lane.b32.xlu0 %v2982, 98
  %v3042 = vpop.permute.xlu0 %3041
  %3045 = vrot.lane.b32.xlu0 %v2997, 112
  %v3046 = vpop.permute.xlu0 %3045
  %3049 = vrot.lane.b32.xlu0 %v3013, 126
  %v3050 = vpop.permute.xlu0 %3049
  %3053 = vrot.lane.b32.xlu0 %v3004, 12
  %v3054 = vpop.permute.xlu0 %3053
  %3057 = vrot.lane.b32.xlu0 %v3014, 26
  %v3058 = vpop.permute.xlu0 %3057
  %3061 = vrot.lane.b32.xlu0 %v3012, 40
  %v3062 = vpop.permute.xlu0 %3061
  %3065 = vrot.lane.b32.xlu0 %v3015, 54
  %v3066 = vpop.permute.xlu0 %3065
  %v3068 = vsel %vm156, %v2956, %v3018
  %v3069 = vsel %vm158, %v3068, %v3022
  %v3070 = vsel %vm160, %v3069, %v3026
  %v3071 = vsel %vm162, %v3070, %v3030
  %v3072 = vsel %vm164, %v3071, %v3034
  %v3073 = vsel %vm166, %v3072, %v3038
  %v3074 = vsel %vm168, %v3073, %v3042
  %v3075 = vsel %vm170, %v3074, %v3046
  %v3076 = vsel %vm172, %v3075, %v3050
  %v3077 = vsel %vm174, %v3050, %v3054
  %v3078 = vsel %vm176, %v3077, %v3058
  %v3079 = vsel %vm178, %v3078, %v3062
  %v3080 = vsel %vm180, %v3079, %v3066
  %3081 = vrot.lane.b32.xlu0 %v18, 126
  %v3082 = vpop.permute.xlu0 %3081
  %3083 = vrot.lane.b32.xlu0 %v19, 126
  %v3084 = vpop.permute.xlu0 %3083
  %v3087 = vcombine.high %v3082, 0.0
  %v3089 = vunpack.c.l.s4 1983009808
  %v3090 = vunpack.c.0.s8 %v3089
  %v3091 = vlaneseq
  %v3092 = vshrl.u32 %v3091, 7
  %v3093 = vsub.s32 %v3090, %v3092
  %v3094 = vrot.slane %v3082, %v3093
  %v3096 = vunpack.c.l.s4 1983009808
  %v3097 = vunpack.c.0.s8 %v3096
  %v3098 = vlaneseq
  %v3099 = vshrl.u32 %v3098, 7
  %v3100 = vsub.s32 %v3097, %v3099
  %v3101 = vrot.slane %v3087, %v3100
  %v3102 = vcombine.high %v3094, 0.0
  %v3104 = vunpack.c.l.s4 1934713408
  %v3105 = vunpack.c.0.s8 %v3104
  %v3106 = vlaneseq
  %v3107 = vshrl.u32 %v3106, 7
  %v3108 = vsub.s32 %v3105, %v3107
  %v3109 = vrot.slane %v3094, %v3108
  %v3111 = vunpack.c.l.s4 1934713408
  %v3112 = vunpack.c.0.s8 %v3111
  %v3113 = vlaneseq
  %v3114 = vshrl.u32 %v3113, 7
  %v3115 = vsub.s32 %v3112, %v3114
  %v3116 = vrot.slane %v3102, %v3115
  %v3117 = vcombine.high %v3101, 0.0
  %v3119 = vunpack.c.l.s4 1934713408
  %v3120 = vunpack.c.0.s8 %v3119
  %v3121 = vlaneseq
  %v3122 = vshrl.u32 %v3121, 7
  %v3123 = vsub.s32 %v3120, %v3122
  %v3124 = vrot.slane %v3101, %v3123
  %v3126 = vunpack.c.l.s4 1934713408
  %v3127 = vunpack.c.0.s8 %v3126
  %v3128 = vlaneseq
  %v3129 = vshrl.u32 %v3128, 7
  %v3130 = vsub.s32 %v3127, %v3129
  %v3131 = vrot.slane %v3117, %v3130
  %v3132 = vcombine.high %v3109, 0.0
  %v3133 = vcombine.high %v3116, 0.0
  %v3134 = vcombine.high %v3124, 0.0
  %v3135 = vcombine.high %v3131, 0.0
  %v3137 = vunpack.c.l.s4 1983009808
  %v3138 = vunpack.c.0.s8 %v3137
  %v3139 = vlaneseq
  %v3140 = vshrl.u32 %v3139, 7
  %v3141 = vsub.s32 %v3138, %v3140
  %v3142 = vrot.slane %v3084, %v3141
  %v3143 = vcombine.high %v3142, 0.0
  %v3145 = vunpack.c.l.s4 1934713408
  %v3146 = vunpack.c.0.s8 %v3145
  %v3147 = vlaneseq
  %v3148 = vshrl.u32 %v3147, 7
  %v3149 = vsub.s32 %v3146, %v3148
  %v3150 = vrot.slane %v3142, %v3149
  %v3152 = vunpack.c.l.s4 1934713408
  %v3153 = vunpack.c.0.s8 %v3152
  %v3154 = vlaneseq
  %v3155 = vshrl.u32 %v3154, 7
  %v3156 = vsub.s32 %v3153, %v3155
  %v3157 = vrot.slane %v3143, %v3156
  %v3158 = vcombine.high %v3084, 0.0
  %v3160 = vunpack.c.l.s4 1934713408
  %v3161 = vunpack.c.0.s8 %v3160
  %v3162 = vlaneseq
  %v3163 = vshrl.u32 %v3162, 7
  %v3164 = vsub.s32 %v3161, %v3163
  %v3165 = vrot.slane %v3158, %v3164
  %v3166 = vcombine.high %v3150, 0.0
  %v3167 = vcombine.high %v3157, 0.0
  %v3168 = vcombine.high %v3165, 0.0
  %3170 = vrot.lane.b32.xlu0 %v3132, 14
  %v3171 = vpop.permute.xlu0 %3170
  %3174 = vrot.lane.b32.xlu0 %v3116, 28
  %v3175 = vpop.permute.xlu0 %3174
  %3178 = vrot.lane.b32.xlu0 %v3133, 42
  %v3179 = vpop.permute.xlu0 %3178
  %3182 = vrot.lane.b32.xlu0 %v3124, 56
  %v3183 = vpop.permute.xlu0 %3182
  %3186 = vrot.lane.b32.xlu0 %v3134, 70
  %v3187 = vpop.permute.xlu0 %3186
  %3190 = vrot.lane.b32.xlu0 %v3131, 84
  %v3191 = vpop.permute.xlu0 %3190
  %3194 = vrot.lane.b32.xlu0 %v3135, 98
  %v3195 = vpop.permute.xlu0 %3194
  %3198 = vrot.lane.b32.xlu0 %v3150, 112
  %v3199 = vpop.permute.xlu0 %3198
  %3202 = vrot.lane.b32.xlu0 %v3166, 126
  %v3203 = vpop.permute.xlu0 %3202
  %3206 = vrot.lane.b32.xlu0 %v3157, 12
  %v3207 = vpop.permute.xlu0 %3206
  %3210 = vrot.lane.b32.xlu0 %v3167, 26
  %v3211 = vpop.permute.xlu0 %3210
  %3214 = vrot.lane.b32.xlu0 %v3165, 40
  %v3215 = vpop.permute.xlu0 %3214
  %3218 = vrot.lane.b32.xlu0 %v3168, 54
  %v3219 = vpop.permute.xlu0 %3218
  %v3221 = vsel %vm156, %v3109, %v3171
  %v3222 = vsel %vm158, %v3221, %v3175
  %v3223 = vsel %vm160, %v3222, %v3179
  %v3224 = vsel %vm162, %v3223, %v3183
  %v3225 = vsel %vm164, %v3224, %v3187
  %v3226 = vsel %vm166, %v3225, %v3191
  %v3227 = vsel %vm168, %v3226, %v3195
  %v3228 = vsel %vm170, %v3227, %v3199
  %v3229 = vsel %vm172, %v3228, %v3203
  %v3230 = vsel %vm174, %v3203, %v3207
  %v3231 = vsel %vm176, %v3230, %v3211
  %v3232 = vsel %vm178, %v3231, %v3215
  %v3233 = vsel %vm180, %v3232, %v3219
  %v3234 = vrot.slane %v18, 1
  %v3235 = vrot.slane %v19, 1
  %v3236 = vsel %vm490, %v3234, %v3235
  %v3239 = vcombine.high %v3236, 0.0
  %v3241 = vunpack.c.l.s4 1983009808
  %v3242 = vunpack.c.0.s8 %v3241
  %v3243 = vlaneseq
  %v3244 = vshrl.u32 %v3243, 7
  %v3245 = vsub.s32 %v3242, %v3244
  %v3246 = vrot.slane %v3236, %v3245
  %v3248 = vunpack.c.l.s4 1983009808
  %v3249 = vunpack.c.0.s8 %v3248
  %v3250 = vlaneseq
  %v3251 = vshrl.u32 %v3250, 7
  %v3252 = vsub.s32 %v3249, %v3251
  %v3253 = vrot.slane %v3239, %v3252
  %v3254 = vcombine.high %v3246, 0.0
  %v3256 = vunpack.c.l.s4 1934713408
  %v3257 = vunpack.c.0.s8 %v3256
  %v3258 = vlaneseq
  %v3259 = vshrl.u32 %v3258, 7
  %v3260 = vsub.s32 %v3257, %v3259
  %v3261 = vrot.slane %v3246, %v3260
  %v3263 = vunpack.c.l.s4 1934713408
  %v3264 = vunpack.c.0.s8 %v3263
  %v3265 = vlaneseq
  %v3266 = vshrl.u32 %v3265, 7
  %v3267 = vsub.s32 %v3264, %v3266
  %v3268 = vrot.slane %v3254, %v3267
  %v3269 = vcombine.high %v3253, 0.0
  %v3271 = vunpack.c.l.s4 1934713408
  %v3272 = vunpack.c.0.s8 %v3271
  %v3273 = vlaneseq
  %v3274 = vshrl.u32 %v3273, 7
  %v3275 = vsub.s32 %v3272, %v3274
  %v3276 = vrot.slane %v3253, %v3275
  %v3278 = vunpack.c.l.s4 1934713408
  %v3279 = vunpack.c.0.s8 %v3278
  %v3280 = vlaneseq
  %v3281 = vshrl.u32 %v3280, 7
  %v3282 = vsub.s32 %v3279, %v3281
  %v3283 = vrot.slane %v3269, %v3282
  %v3284 = vcombine.high %v3261, 0.0
  %v3285 = vcombine.high %v3268, 0.0
  %v3286 = vcombine.high %v3276, 0.0
  %v3287 = vcombine.high %v3283, 0.0
  %v3289 = vunpack.c.l.s4 1983009808
  %v3290 = vunpack.c.0.s8 %v3289
  %v3291 = vlaneseq
  %v3292 = vshrl.u32 %v3291, 7
  %v3293 = vsub.s32 %v3290, %v3292
  %v3294 = vrot.slane %v3235, %v3293
  %v3295 = vcombine.high %v3294, 0.0
  %v3297 = vunpack.c.l.s4 1934713408
  %v3298 = vunpack.c.0.s8 %v3297
  %v3299 = vlaneseq
  %v3300 = vshrl.u32 %v3299, 7
  %v3301 = vsub.s32 %v3298, %v3300
  %v3302 = vrot.slane %v3294, %v3301
  %v3304 = vunpack.c.l.s4 1934713408
  %v3305 = vunpack.c.0.s8 %v3304
  %v3306 = vlaneseq
  %v3307 = vshrl.u32 %v3306, 7
  %v3308 = vsub.s32 %v3305, %v3307
  %v3309 = vrot.slane %v3295, %v3308
  %v3310 = vcombine.high %v3235, 0.0
  %v3312 = vunpack.c.l.s4 1934713408
  %v3313 = vunpack.c.0.s8 %v3312
  %v3314 = vlaneseq
  %v3315 = vshrl.u32 %v3314, 7
  %v3316 = vsub.s32 %v3313, %v3315
  %v3317 = vrot.slane %v3310, %v3316
  %v3318 = vcombine.high %v3302, 0.0
  %v3319 = vcombine.high %v3309, 0.0
  %v3320 = vcombine.high %v3317, 0.0
  %3322 = vrot.lane.b32.xlu0 %v3284, 14
  %v3323 = vpop.permute.xlu0 %3322
  %3326 = vrot.lane.b32.xlu0 %v3268, 28
  %v3327 = vpop.permute.xlu0 %3326
  %3330 = vrot.lane.b32.xlu0 %v3285, 42
  %v3331 = vpop.permute.xlu0 %3330
  %3334 = vrot.lane.b32.xlu0 %v3276, 56
  %v3335 = vpop.permute.xlu0 %3334
  %3338 = vrot.lane.b32.xlu0 %v3286, 70
  %v3339 = vpop.permute.xlu0 %3338
  %3342 = vrot.lane.b32.xlu0 %v3283, 84
  %v3343 = vpop.permute.xlu0 %3342
  %3346 = vrot.lane.b32.xlu0 %v3287, 98
  %v3347 = vpop.permute.xlu0 %3346
  %3350 = vrot.lane.b32.xlu0 %v3302, 112
  %v3351 = vpop.permute.xlu0 %3350
  %3354 = vrot.lane.b32.xlu0 %v3318, 126
  %v3355 = vpop.permute.xlu0 %3354
  %3358 = vrot.lane.b32.xlu0 %v3309, 12
  %v3359 = vpop.permute.xlu0 %3358
  %3362 = vrot.lane.b32.xlu0 %v3319, 26
  %v3363 = vpop.permute.xlu0 %3362
  %3366 = vrot.lane.b32.xlu0 %v3317, 40
  %v3367 = vpop.permute.xlu0 %3366
  %3370 = vrot.lane.b32.xlu0 %v3320, 54
  %v3371 = vpop.permute.xlu0 %3370
  %v3373 = vsel %vm156, %v3261, %v3323
  %v3374 = vsel %vm158, %v3373, %v3327
  %v3375 = vsel %vm160, %v3374, %v3331
  %v3376 = vsel %vm162, %v3375, %v3335
  %v3377 = vsel %vm164, %v3376, %v3339
  %v3378 = vsel %vm166, %v3377, %v3343
  %v3379 = vsel %vm168, %v3378, %v3347
  %v3380 = vsel %vm170, %v3379, %v3351
  %v3381 = vsel %vm172, %v3380, %v3355
  %v3382 = vsel %vm174, %v3355, %v3359
  %v3383 = vsel %vm176, %v3382, %v3363
  %v3384 = vsel %vm178, %v3383, %v3367
  %v3385 = vsel %vm180, %v3384, %v3371
  %3386 = vrot.lane.b32.xlu0 %v3236, 127
  %v3387 = vpop.permute.xlu0 %3386
  %3388 = vrot.lane.b32.xlu0 %v3235, 127
  %v3389 = vpop.permute.xlu0 %3388
  %v3392 = vcombine.high %v3387, 0.0
  %v3394 = vunpack.c.l.s4 1983009808
  %v3395 = vunpack.c.0.s8 %v3394
  %v3396 = vlaneseq
  %v3397 = vshrl.u32 %v3396, 7
  %v3398 = vsub.s32 %v3395, %v3397
  %v3399 = vrot.slane %v3387, %v3398
  %v3401 = vunpack.c.l.s4 1983009808
  %v3402 = vunpack.c.0.s8 %v3401
  %v3403 = vlaneseq
  %v3404 = vshrl.u32 %v3403, 7
  %v3405 = vsub.s32 %v3402, %v3404
  %v3406 = vrot.slane %v3392, %v3405
  %v3407 = vcombine.high %v3399, 0.0
  %v3409 = vunpack.c.l.s4 1934713408
  %v3410 = vunpack.c.0.s8 %v3409
  %v3411 = vlaneseq
  %v3412 = vshrl.u32 %v3411, 7
  %v3413 = vsub.s32 %v3410, %v3412
  %v3414 = vrot.slane %v3399, %v3413
  %v3416 = vunpack.c.l.s4 1934713408
  %v3417 = vunpack.c.0.s8 %v3416
  %v3418 = vlaneseq
  %v3419 = vshrl.u32 %v3418, 7
  %v3420 = vsub.s32 %v3417, %v3419
  %v3421 = vrot.slane %v3407, %v3420
  %v3422 = vcombine.high %v3406, 0.0
  %v3424 = vunpack.c.l.s4 1934713408
  %v3425 = vunpack.c.0.s8 %v3424
  %v3426 = vlaneseq
  %v3427 = vshrl.u32 %v3426, 7
  %v3428 = vsub.s32 %v3425, %v3427
  %v3429 = vrot.slane %v3406, %v3428
  %v3431 = vunpack.c.l.s4 1934713408
  %v3432 = vunpack.c.0.s8 %v3431
  %v3433 = vlaneseq
  %v3434 = vshrl.u32 %v3433, 7
  %v3435 = vsub.s32 %v3432, %v3434
  %v3436 = vrot.slane %v3422, %v3435
  %v3437 = vcombine.high %v3414, 0.0
  %v3438 = vcombine.high %v3421, 0.0
  %v3439 = vcombine.high %v3429, 0.0
  %v3440 = vcombine.high %v3436, 0.0
  %v3442 = vunpack.c.l.s4 1983009808
  %v3443 = vunpack.c.0.s8 %v3442
  %v3444 = vlaneseq
  %v3445 = vshrl.u32 %v3444, 7
  %v3446 = vsub.s32 %v3443, %v3445
  %v3447 = vrot.slane %v3389, %v3446
  %v3448 = vcombine.high %v3447, 0.0
  %v3450 = vunpack.c.l.s4 1934713408
  %v3451 = vunpack.c.0.s8 %v3450
  %v3452 = vlaneseq
  %v3453 = vshrl.u32 %v3452, 7
  %v3454 = vsub.s32 %v3451, %v3453
  %v3455 = vrot.slane %v3447, %v3454
  %v3457 = vunpack.c.l.s4 1934713408
  %v3458 = vunpack.c.0.s8 %v3457
  %v3459 = vlaneseq
  %v3460 = vshrl.u32 %v3459, 7
  %v3461 = vsub.s32 %v3458, %v3460
  %v3462 = vrot.slane %v3448, %v3461
  %v3463 = vcombine.high %v3389, 0.0
  %v3465 = vunpack.c.l.s4 1934713408
  %v3466 = vunpack.c.0.s8 %v3465
  %v3467 = vlaneseq
  %v3468 = vshrl.u32 %v3467, 7
  %v3469 = vsub.s32 %v3466, %v3468
  %v3470 = vrot.slane %v3463, %v3469
  %v3471 = vcombine.high %v3455, 0.0
  %v3472 = vcombine.high %v3462, 0.0
  %v3473 = vcombine.high %v3470, 0.0
  %3475 = vrot.lane.b32.xlu0 %v3437, 14
  %v3476 = vpop.permute.xlu0 %3475
  %3479 = vrot.lane.b32.xlu0 %v3421, 28
  %v3480 = vpop.permute.xlu0 %3479
  %3483 = vrot.lane.b32.xlu0 %v3438, 42
  %v3484 = vpop.permute.xlu0 %3483
  %3487 = vrot.lane.b32.xlu0 %v3429, 56
  %v3488 = vpop.permute.xlu0 %3487
  %3491 = vrot.lane.b32.xlu0 %v3439, 70
  %v3492 = vpop.permute.xlu0 %3491
  %3495 = vrot.lane.b32.xlu0 %v3436, 84
  %v3496 = vpop.permute.xlu0 %3495
  %3499 = vrot.lane.b32.xlu0 %v3440, 98
  %v3500 = vpop.permute.xlu0 %3499
  %3503 = vrot.lane.b32.xlu0 %v3455, 112
  %v3504 = vpop.permute.xlu0 %3503
  %3507 = vrot.lane.b32.xlu0 %v3471, 126
  %v3508 = vpop.permute.xlu0 %3507
  %3511 = vrot.lane.b32.xlu0 %v3462, 12
  %v3512 = vpop.permute.xlu0 %3511
  %3515 = vrot.lane.b32.xlu0 %v3472, 26
  %v3516 = vpop.permute.xlu0 %3515
  %3519 = vrot.lane.b32.xlu0 %v3470, 40
  %v3520 = vpop.permute.xlu0 %3519
  %3523 = vrot.lane.b32.xlu0 %v3473, 54
  %v3524 = vpop.permute.xlu0 %3523
  %v3526 = vsel %vm156, %v3414, %v3476
  %v3527 = vsel %vm158, %v3526, %v3480
  %v3528 = vsel %vm160, %v3527, %v3484
  %v3529 = vsel %vm162, %v3528, %v3488
  %v3530 = vsel %vm164, %v3529, %v3492
  %v3531 = vsel %vm166, %v3530, %v3496
  %v3532 = vsel %vm168, %v3531, %v3500
  %v3533 = vsel %vm170, %v3532, %v3504
  %v3534 = vsel %vm172, %v3533, %v3508
  %v3535 = vsel %vm174, %v3508, %v3512
  %v3536 = vsel %vm176, %v3535, %v3516
  %v3537 = vsel %vm178, %v3536, %v3520
  %v3538 = vsel %vm180, %v3537, %v3524
  %3539 = vrot.lane.b32.xlu0 %v3236, 126
  %v3540 = vpop.permute.xlu0 %3539
  %3541 = vrot.lane.b32.xlu0 %v3235, 126
  %v3542 = vpop.permute.xlu0 %3541
  %v3545 = vcombine.high %v3540, 0.0
  %v3547 = vunpack.c.l.s4 1983009808
  %v3548 = vunpack.c.0.s8 %v3547
  %v3549 = vlaneseq
  %v3550 = vshrl.u32 %v3549, 7
  %v3551 = vsub.s32 %v3548, %v3550
  %v3552 = vrot.slane %v3540, %v3551
  %v3554 = vunpack.c.l.s4 1983009808
  %v3555 = vunpack.c.0.s8 %v3554
  %v3556 = vlaneseq
  %v3557 = vshrl.u32 %v3556, 7
  %v3558 = vsub.s32 %v3555, %v3557
  %v3559 = vrot.slane %v3545, %v3558
  %v3560 = vcombine.high %v3552, 0.0
  %v3562 = vunpack.c.l.s4 1934713408
  %v3563 = vunpack.c.0.s8 %v3562
  %v3564 = vlaneseq
  %v3565 = vshrl.u32 %v3564, 7
  %v3566 = vsub.s32 %v3563, %v3565
  %v3567 = vrot.slane %v3552, %v3566
  %v3569 = vunpack.c.l.s4 1934713408
  %v3570 = vunpack.c.0.s8 %v3569
  %v3571 = vlaneseq
  %v3572 = vshrl.u32 %v3571, 7
  %v3573 = vsub.s32 %v3570, %v3572
  %v3574 = vrot.slane %v3560, %v3573
  %v3575 = vcombine.high %v3559, 0.0
  %v3577 = vunpack.c.l.s4 1934713408
  %v3578 = vunpack.c.0.s8 %v3577
  %v3579 = vlaneseq
  %v3580 = vshrl.u32 %v3579, 7
  %v3581 = vsub.s32 %v3578, %v3580
  %v3582 = vrot.slane %v3559, %v3581
  %v3584 = vunpack.c.l.s4 1934713408
  %v3585 = vunpack.c.0.s8 %v3584
  %v3586 = vlaneseq
  %v3587 = vshrl.u32 %v3586, 7
  %v3588 = vsub.s32 %v3585, %v3587
  %v3589 = vrot.slane %v3575, %v3588
  %v3590 = vcombine.high %v3567, 0.0
  %v3591 = vcombine.high %v3574, 0.0
  %v3592 = vcombine.high %v3582, 0.0
  %v3593 = vcombine.high %v3589, 0.0
  %v3595 = vunpack.c.l.s4 1983009808
  %v3596 = vunpack.c.0.s8 %v3595
  %v3597 = vlaneseq
  %v3598 = vshrl.u32 %v3597, 7
  %v3599 = vsub.s32 %v3596, %v3598
  %v3600 = vrot.slane %v3542, %v3599
  %v3601 = vcombine.high %v3600, 0.0
  %v3603 = vunpack.c.l.s4 1934713408
  %v3604 = vunpack.c.0.s8 %v3603
  %v3605 = vlaneseq
  %v3606 = vshrl.u32 %v3605, 7
  %v3607 = vsub.s32 %v3604, %v3606
  %v3608 = vrot.slane %v3600, %v3607
  %v3610 = vunpack.c.l.s4 1934713408
  %v3611 = vunpack.c.0.s8 %v3610
  %v3612 = vlaneseq
  %v3613 = vshrl.u32 %v3612, 7
  %v3614 = vsub.s32 %v3611, %v3613
  %v3615 = vrot.slane %v3601, %v3614
  %v3616 = vcombine.high %v3542, 0.0
  %v3618 = vunpack.c.l.s4 1934713408
  %v3619 = vunpack.c.0.s8 %v3618
  %v3620 = vlaneseq
  %v3621 = vshrl.u32 %v3620, 7
  %v3622 = vsub.s32 %v3619, %v3621
  %v3623 = vrot.slane %v3616, %v3622
  %v3624 = vcombine.high %v3608, 0.0
  %v3625 = vcombine.high %v3615, 0.0
  %v3626 = vcombine.high %v3623, 0.0
  %3628 = vrot.lane.b32.xlu0 %v3590, 14
  %v3629 = vpop.permute.xlu0 %3628
  %3632 = vrot.lane.b32.xlu0 %v3574, 28
  %v3633 = vpop.permute.xlu0 %3632
  %3636 = vrot.lane.b32.xlu0 %v3591, 42
  %v3637 = vpop.permute.xlu0 %3636
  %3640 = vrot.lane.b32.xlu0 %v3582, 56
  %v3641 = vpop.permute.xlu0 %3640
  %3644 = vrot.lane.b32.xlu0 %v3592, 70
  %v3645 = vpop.permute.xlu0 %3644
  %3648 = vrot.lane.b32.xlu0 %v3589, 84
  %v3649 = vpop.permute.xlu0 %3648
  %3652 = vrot.lane.b32.xlu0 %v3593, 98
  %v3653 = vpop.permute.xlu0 %3652
  %3656 = vrot.lane.b32.xlu0 %v3608, 112
  %v3657 = vpop.permute.xlu0 %3656
  %3660 = vrot.lane.b32.xlu0 %v3624, 126
  %v3661 = vpop.permute.xlu0 %3660
  %3664 = vrot.lane.b32.xlu0 %v3615, 12
  %v3665 = vpop.permute.xlu0 %3664
  %3668 = vrot.lane.b32.xlu0 %v3625, 26
  %v3669 = vpop.permute.xlu0 %3668
  %3672 = vrot.lane.b32.xlu0 %v3623, 40
  %v3673 = vpop.permute.xlu0 %3672
  %3676 = vrot.lane.b32.xlu0 %v3626, 54
  %v3677 = vpop.permute.xlu0 %3676
  %v3679 = vsel %vm156, %v3567, %v3629
  %v3680 = vsel %vm158, %v3679, %v3633
  %v3681 = vsel %vm160, %v3680, %v3637
  %v3682 = vsel %vm162, %v3681, %v3641
  %v3683 = vsel %vm164, %v3682, %v3645
  %v3684 = vsel %vm166, %v3683, %v3649
  %v3685 = vsel %vm168, %v3684, %v3653
  %v3686 = vsel %vm170, %v3685, %v3657
  %v3687 = vsel %vm172, %v3686, %v3661
  %v3688 = vsel %vm174, %v3661, %v3665
  %v3689 = vsel %vm176, %v3688, %v3669
  %v3690 = vsel %vm178, %v3689, %v3673
  %v3691 = vsel %vm180, %v3690, %v3677
  %v3692 = vrot.slane %v18, 2
  %v3693 = vrot.slane %v19, 2
  %v3694 = vsel %vm949, %v3692, %v3693
  %v3697 = vcombine.high %v3694, 0.0
  %v3699 = vunpack.c.l.s4 1983009808
  %v3700 = vunpack.c.0.s8 %v3699
  %v3701 = vlaneseq
  %v3702 = vshrl.u32 %v3701, 7
  %v3703 = vsub.s32 %v3700, %v3702
  %v3704 = vrot.slane %v3694, %v3703
  %v3706 = vunpack.c.l.s4 1983009808
  %v3707 = vunpack.c.0.s8 %v3706
  %v3708 = vlaneseq
  %v3709 = vshrl.u32 %v3708, 7
  %v3710 = vsub.s32 %v3707, %v3709
  %v3711 = vrot.slane %v3697, %v3710
  %v3712 = vcombine.high %v3704, 0.0
  %v3714 = vunpack.c.l.s4 1934713408
  %v3715 = vunpack.c.0.s8 %v3714
  %v3716 = vlaneseq
  %v3717 = vshrl.u32 %v3716, 7
  %v3718 = vsub.s32 %v3715, %v3717
  %v3719 = vrot.slane %v3704, %v3718
  %v3721 = vunpack.c.l.s4 1934713408
  %v3722 = vunpack.c.0.s8 %v3721
  %v3723 = vlaneseq
  %v3724 = vshrl.u32 %v3723, 7
  %v3725 = vsub.s32 %v3722, %v3724
  %v3726 = vrot.slane %v3712, %v3725
  %v3727 = vcombine.high %v3711, 0.0
  %v3729 = vunpack.c.l.s4 1934713408
  %v3730 = vunpack.c.0.s8 %v3729
  %v3731 = vlaneseq
  %v3732 = vshrl.u32 %v3731, 7
  %v3733 = vsub.s32 %v3730, %v3732
  %v3734 = vrot.slane %v3711, %v3733
  %v3736 = vunpack.c.l.s4 1934713408
  %v3737 = vunpack.c.0.s8 %v3736
  %v3738 = vlaneseq
  %v3739 = vshrl.u32 %v3738, 7
  %v3740 = vsub.s32 %v3737, %v3739
  %v3741 = vrot.slane %v3727, %v3740
  %v3742 = vcombine.high %v3719, 0.0
  %v3743 = vcombine.high %v3726, 0.0
  %v3744 = vcombine.high %v3734, 0.0
  %v3745 = vcombine.high %v3741, 0.0
  %v3747 = vunpack.c.l.s4 1983009808
  %v3748 = vunpack.c.0.s8 %v3747
  %v3749 = vlaneseq
  %v3750 = vshrl.u32 %v3749, 7
  %v3751 = vsub.s32 %v3748, %v3750
  %v3752 = vrot.slane %v3693, %v3751
  %v3753 = vcombine.high %v3752, 0.0
  %v3755 = vunpack.c.l.s4 1934713408
  %v3756 = vunpack.c.0.s8 %v3755
  %v3757 = vlaneseq
  %v3758 = vshrl.u32 %v3757, 7
  %v3759 = vsub.s32 %v3756, %v3758
  %v3760 = vrot.slane %v3752, %v3759
  %v3762 = vunpack.c.l.s4 1934713408
  %v3763 = vunpack.c.0.s8 %v3762
  %v3764 = vlaneseq
  %v3765 = vshrl.u32 %v3764, 7
  %v3766 = vsub.s32 %v3763, %v3765
  %v3767 = vrot.slane %v3753, %v3766
  %v3768 = vcombine.high %v3693, 0.0
  %v3770 = vunpack.c.l.s4 1934713408
  %v3771 = vunpack.c.0.s8 %v3770
  %v3772 = vlaneseq
  %v3773 = vshrl.u32 %v3772, 7
  %v3774 = vsub.s32 %v3771, %v3773
  %v3775 = vrot.slane %v3768, %v3774
  %v3776 = vcombine.high %v3760, 0.0
  %v3777 = vcombine.high %v3767, 0.0
  %v3778 = vcombine.high %v3775, 0.0
  %3780 = vrot.lane.b32.xlu0 %v3742, 14
  %v3781 = vpop.permute.xlu0 %3780
  %3784 = vrot.lane.b32.xlu0 %v3726, 28
  %v3785 = vpop.permute.xlu0 %3784
  %3788 = vrot.lane.b32.xlu0 %v3743, 42
  %v3789 = vpop.permute.xlu0 %3788
  %3792 = vrot.lane.b32.xlu0 %v3734, 56
  %v3793 = vpop.permute.xlu0 %3792
  %3796 = vrot.lane.b32.xlu0 %v3744, 70
  %v3797 = vpop.permute.xlu0 %3796
  %3800 = vrot.lane.b32.xlu0 %v3741, 84
  %v3801 = vpop.permute.xlu0 %3800
  %3804 = vrot.lane.b32.xlu0 %v3745, 98
  %v3805 = vpop.permute.xlu0 %3804
  %3808 = vrot.lane.b32.xlu0 %v3760, 112
  %v3809 = vpop.permute.xlu0 %3808
  %3812 = vrot.lane.b32.xlu0 %v3776, 126
  %v3813 = vpop.permute.xlu0 %3812
  %3816 = vrot.lane.b32.xlu0 %v3767, 12
  %v3817 = vpop.permute.xlu0 %3816
  %3820 = vrot.lane.b32.xlu0 %v3777, 26
  %v3821 = vpop.permute.xlu0 %3820
  %3824 = vrot.lane.b32.xlu0 %v3775, 40
  %v3825 = vpop.permute.xlu0 %3824
  %3828 = vrot.lane.b32.xlu0 %v3778, 54
  %v3829 = vpop.permute.xlu0 %3828
  %v3831 = vsel %vm156, %v3719, %v3781
  %v3832 = vsel %vm158, %v3831, %v3785
  %v3833 = vsel %vm160, %v3832, %v3789
  %v3834 = vsel %vm162, %v3833, %v3793
  %v3835 = vsel %vm164, %v3834, %v3797
  %v3836 = vsel %vm166, %v3835, %v3801
  %v3837 = vsel %vm168, %v3836, %v3805
  %v3838 = vsel %vm170, %v3837, %v3809
  %v3839 = vsel %vm172, %v3838, %v3813
  %v3840 = vsel %vm174, %v3813, %v3817
  %v3841 = vsel %vm176, %v3840, %v3821
  %v3842 = vsel %vm178, %v3841, %v3825
  %v3843 = vsel %vm180, %v3842, %v3829
  %3844 = vrot.lane.b32.xlu0 %v3694, 127
  %v3845 = vpop.permute.xlu0 %3844
  %3846 = vrot.lane.b32.xlu0 %v3693, 127
  %v3847 = vpop.permute.xlu0 %3846
  %v3850 = vcombine.high %v3845, 0.0
  %v3852 = vunpack.c.l.s4 1983009808
  %v3853 = vunpack.c.0.s8 %v3852
  %v3854 = vlaneseq
  %v3855 = vshrl.u32 %v3854, 7
  %v3856 = vsub.s32 %v3853, %v3855
  %v3857 = vrot.slane %v3845, %v3856
  %v3859 = vunpack.c.l.s4 1983009808
  %v3860 = vunpack.c.0.s8 %v3859
  %v3861 = vlaneseq
  %v3862 = vshrl.u32 %v3861, 7
  %v3863 = vsub.s32 %v3860, %v3862
  %v3864 = vrot.slane %v3850, %v3863
  %v3865 = vcombine.high %v3857, 0.0
  %v3867 = vunpack.c.l.s4 1934713408
  %v3868 = vunpack.c.0.s8 %v3867
  %v3869 = vlaneseq
  %v3870 = vshrl.u32 %v3869, 7
  %v3871 = vsub.s32 %v3868, %v3870
  %v3872 = vrot.slane %v3857, %v3871
  %v3874 = vunpack.c.l.s4 1934713408
  %v3875 = vunpack.c.0.s8 %v3874
  %v3876 = vlaneseq
  %v3877 = vshrl.u32 %v3876, 7
  %v3878 = vsub.s32 %v3875, %v3877
  %v3879 = vrot.slane %v3865, %v3878
  %v3880 = vcombine.high %v3864, 0.0
  %v3882 = vunpack.c.l.s4 1934713408
  %v3883 = vunpack.c.0.s8 %v3882
  %v3884 = vlaneseq
  %v3885 = vshrl.u32 %v3884, 7
  %v3886 = vsub.s32 %v3883, %v3885
  %v3887 = vrot.slane %v3864, %v3886
  %v3889 = vunpack.c.l.s4 1934713408
  %v3890 = vunpack.c.0.s8 %v3889
  %v3891 = vlaneseq
  %v3892 = vshrl.u32 %v3891, 7
  %v3893 = vsub.s32 %v3890, %v3892
  %v3894 = vrot.slane %v3880, %v3893
  %v3895 = vcombine.high %v3872, 0.0
  %v3896 = vcombine.high %v3879, 0.0
  %v3897 = vcombine.high %v3887, 0.0
  %v3898 = vcombine.high %v3894, 0.0
  %v3900 = vunpack.c.l.s4 1983009808
  %v3901 = vunpack.c.0.s8 %v3900
  %v3902 = vlaneseq
  %v3903 = vshrl.u32 %v3902, 7
  %v3904 = vsub.s32 %v3901, %v3903
  %v3905 = vrot.slane %v3847, %v3904
  %v3906 = vcombine.high %v3905, 0.0
  %v3908 = vunpack.c.l.s4 1934713408
  %v3909 = vunpack.c.0.s8 %v3908
  %v3910 = vlaneseq
  %v3911 = vshrl.u32 %v3910, 7
  %v3912 = vsub.s32 %v3909, %v3911
  %v3913 = vrot.slane %v3905, %v3912
  %v3915 = vunpack.c.l.s4 1934713408
  %v3916 = vunpack.c.0.s8 %v3915
  %v3917 = vlaneseq
  %v3918 = vshrl.u32 %v3917, 7
  %v3919 = vsub.s32 %v3916, %v3918
  %v3920 = vrot.slane %v3906, %v3919
  %v3921 = vcombine.high %v3847, 0.0
  %v3923 = vunpack.c.l.s4 1934713408
  %v3924 = vunpack.c.0.s8 %v3923
  %v3925 = vlaneseq
  %v3926 = vshrl.u32 %v3925, 7
  %v3927 = vsub.s32 %v3924, %v3926
  %v3928 = vrot.slane %v3921, %v3927
  %v3929 = vcombine.high %v3913, 0.0
  %v3930 = vcombine.high %v3920, 0.0
  %v3931 = vcombine.high %v3928, 0.0
  %3933 = vrot.lane.b32.xlu0 %v3895, 14
  %v3934 = vpop.permute.xlu0 %3933
  %3937 = vrot.lane.b32.xlu0 %v3879, 28
  %v3938 = vpop.permute.xlu0 %3937
  %3941 = vrot.lane.b32.xlu0 %v3896, 42
  %v3942 = vpop.permute.xlu0 %3941
  %3945 = vrot.lane.b32.xlu0 %v3887, 56
  %v3946 = vpop.permute.xlu0 %3945
  %3949 = vrot.lane.b32.xlu0 %v3897, 70
  %v3950 = vpop.permute.xlu0 %3949
  %3953 = vrot.lane.b32.xlu0 %v3894, 84
  %v3954 = vpop.permute.xlu0 %3953
  %3957 = vrot.lane.b32.xlu0 %v3898, 98
  %v3958 = vpop.permute.xlu0 %3957
  %3961 = vrot.lane.b32.xlu0 %v3913, 112
  %v3962 = vpop.permute.xlu0 %3961
  %3965 = vrot.lane.b32.xlu0 %v3929, 126
  %v3966 = vpop.permute.xlu0 %3965
  %3969 = vrot.lane.b32.xlu0 %v3920, 12
  %v3970 = vpop.permute.xlu0 %3969
  %3973 = vrot.lane.b32.xlu0 %v3930, 26
  %v3974 = vpop.permute.xlu0 %3973
  %3977 = vrot.lane.b32.xlu0 %v3928, 40
  %v3978 = vpop.permute.xlu0 %3977
  %3981 = vrot.lane.b32.xlu0 %v3931, 54
  %v3982 = vpop.permute.xlu0 %3981
  %v3984 = vsel %vm156, %v3872, %v3934
  %v3985 = vsel %vm158, %v3984, %v3938
  %v3986 = vsel %vm160, %v3985, %v3942
  %v3987 = vsel %vm162, %v3986, %v3946
  %v3988 = vsel %vm164, %v3987, %v3950
  %v3989 = vsel %vm166, %v3988, %v3954
  %v3990 = vsel %vm168, %v3989, %v3958
  %v3991 = vsel %vm170, %v3990, %v3962
  %v3992 = vsel %vm172, %v3991, %v3966
  %v3993 = vsel %vm174, %v3966, %v3970
  %v3994 = vsel %vm176, %v3993, %v3974
  %v3995 = vsel %vm178, %v3994, %v3978
  %v3996 = vsel %vm180, %v3995, %v3982
  %3997 = vrot.lane.b32.xlu0 %v3694, 126
  %v3998 = vpop.permute.xlu0 %3997
  %3999 = vrot.lane.b32.xlu0 %v3693, 126
  %v4000 = vpop.permute.xlu0 %3999
  %v4003 = vcombine.high %v3998, 0.0
  %v4005 = vunpack.c.l.s4 1983009808
  %v4006 = vunpack.c.0.s8 %v4005
  %v4007 = vlaneseq
  %v4008 = vshrl.u32 %v4007, 7
  %v4009 = vsub.s32 %v4006, %v4008
  %v4010 = vrot.slane %v3998, %v4009
  %v4012 = vunpack.c.l.s4 1983009808
  %v4013 = vunpack.c.0.s8 %v4012
  %v4014 = vlaneseq
  %v4015 = vshrl.u32 %v4014, 7
  %v4016 = vsub.s32 %v4013, %v4015
  %v4017 = vrot.slane %v4003, %v4016
  %v4018 = vcombine.high %v4010, 0.0
  %v4020 = vunpack.c.l.s4 1934713408
  %v4021 = vunpack.c.0.s8 %v4020
  %v4022 = vlaneseq
  %v4023 = vshrl.u32 %v4022, 7
  %v4024 = vsub.s32 %v4021, %v4023
  %v4025 = vrot.slane %v4010, %v4024
  %v4027 = vunpack.c.l.s4 1934713408
  %v4028 = vunpack.c.0.s8 %v4027
  %v4029 = vlaneseq
  %v4030 = vshrl.u32 %v4029, 7
  %v4031 = vsub.s32 %v4028, %v4030
  %v4032 = vrot.slane %v4018, %v4031
  %v4033 = vcombine.high %v4017, 0.0
  %v4035 = vunpack.c.l.s4 1934713408
  %v4036 = vunpack.c.0.s8 %v4035
  %v4037 = vlaneseq
  %v4038 = vshrl.u32 %v4037, 7
  %v4039 = vsub.s32 %v4036, %v4038
  %v4040 = vrot.slane %v4017, %v4039
  %v4042 = vunpack.c.l.s4 1934713408
  %v4043 = vunpack.c.0.s8 %v4042
  %v4044 = vlaneseq
  %v4045 = vshrl.u32 %v4044, 7
  %v4046 = vsub.s32 %v4043, %v4045
  %v4047 = vrot.slane %v4033, %v4046
  %v4048 = vcombine.high %v4025, 0.0
  %v4049 = vcombine.high %v4032, 0.0
  %v4050 = vcombine.high %v4040, 0.0
  %v4051 = vcombine.high %v4047, 0.0
  %v4053 = vunpack.c.l.s4 1983009808
  %v4054 = vunpack.c.0.s8 %v4053
  %v4055 = vlaneseq
  %v4056 = vshrl.u32 %v4055, 7
  %v4057 = vsub.s32 %v4054, %v4056
  %v4058 = vrot.slane %v4000, %v4057
  %v4059 = vcombine.high %v4058, 0.0
  %v4061 = vunpack.c.l.s4 1934713408
  %v4062 = vunpack.c.0.s8 %v4061
  %v4063 = vlaneseq
  %v4064 = vshrl.u32 %v4063, 7
  %v4065 = vsub.s32 %v4062, %v4064
  %v4066 = vrot.slane %v4058, %v4065
  %v4068 = vunpack.c.l.s4 1934713408
  %v4069 = vunpack.c.0.s8 %v4068
  %v4070 = vlaneseq
  %v4071 = vshrl.u32 %v4070, 7
  %v4072 = vsub.s32 %v4069, %v4071
  %v4073 = vrot.slane %v4059, %v4072
  %v4074 = vcombine.high %v4000, 0.0
  %v4076 = vunpack.c.l.s4 1934713408
  %v4077 = vunpack.c.0.s8 %v4076
  %v4078 = vlaneseq
  %v4079 = vshrl.u32 %v4078, 7
  %v4080 = vsub.s32 %v4077, %v4079
  %v4081 = vrot.slane %v4074, %v4080
  %v4082 = vcombine.high %v4066, 0.0
  %v4083 = vcombine.high %v4073, 0.0
  %v4084 = vcombine.high %v4081, 0.0
  %4086 = vrot.lane.b32.xlu0 %v4048, 14
  %v4087 = vpop.permute.xlu0 %4086
  %4090 = vrot.lane.b32.xlu0 %v4032, 28
  %v4091 = vpop.permute.xlu0 %4090
  %4094 = vrot.lane.b32.xlu0 %v4049, 42
  %v4095 = vpop.permute.xlu0 %4094
  %4098 = vrot.lane.b32.xlu0 %v4040, 56
  %v4099 = vpop.permute.xlu0 %4098
  %4102 = vrot.lane.b32.xlu0 %v4050, 70
  %v4103 = vpop.permute.xlu0 %4102
  %4106 = vrot.lane.b32.xlu0 %v4047, 84
  %v4107 = vpop.permute.xlu0 %4106
  %4110 = vrot.lane.b32.xlu0 %v4051, 98
  %v4111 = vpop.permute.xlu0 %4110
  %4114 = vrot.lane.b32.xlu0 %v4066, 112
  %v4115 = vpop.permute.xlu0 %4114
  %4118 = vrot.lane.b32.xlu0 %v4082, 126
  %v4119 = vpop.permute.xlu0 %4118
  %4122 = vrot.lane.b32.xlu0 %v4073, 12
  %v4123 = vpop.permute.xlu0 %4122
  %4126 = vrot.lane.b32.xlu0 %v4083, 26
  %v4127 = vpop.permute.xlu0 %4126
  %4130 = vrot.lane.b32.xlu0 %v4081, 40
  %v4131 = vpop.permute.xlu0 %4130
  %4134 = vrot.lane.b32.xlu0 %v4084, 54
  %v4135 = vpop.permute.xlu0 %4134
  %v4137 = vsel %vm156, %v4025, %v4087
  %v4138 = vsel %vm158, %v4137, %v4091
  %v4139 = vsel %vm160, %v4138, %v4095
  %v4140 = vsel %vm162, %v4139, %v4099
  %v4141 = vsel %vm164, %v4140, %v4103
  %v4142 = vsel %vm166, %v4141, %v4107
  %v4143 = vsel %vm168, %v4142, %v4111
  %v4144 = vsel %vm170, %v4143, %v4115
  %v4145 = vsel %vm172, %v4144, %v4119
  %v4146 = vsel %vm174, %v4119, %v4123
  %v4147 = vsel %vm176, %v4146, %v4127
  %v4148 = vsel %vm178, %v4147, %v4131
  %v4149 = vsel %vm180, %v4148, %v4135
  %v4150 = vcombine.high %v20, 0.0
  %v4152 = vunpack.c.l.s4 1983009808
  %v4153 = vunpack.c.0.s8 %v4152
  %v4154 = vlaneseq
  %v4155 = vshrl.u32 %v4154, 7
  %v4156 = vsub.s32 %v4153, %v4155
  %v4157 = vrot.slane %v20, %v4156
  %v4159 = vunpack.c.l.s4 1983009808
  %v4160 = vunpack.c.0.s8 %v4159
  %v4161 = vlaneseq
  %v4162 = vshrl.u32 %v4161, 7
  %v4163 = vsub.s32 %v4160, %v4162
  %v4164 = vrot.slane %v4150, %v4163
  %v4165 = vcombine.high %v4157, 0.0
  %v4167 = vunpack.c.l.s4 1934713408
  %v4168 = vunpack.c.0.s8 %v4167
  %v4169 = vlaneseq
  %v4170 = vshrl.u32 %v4169, 7
  %v4171 = vsub.s32 %v4168, %v4170
  %v4172 = vrot.slane %v4157, %v4171
  %v4174 = vunpack.c.l.s4 1934713408
  %v4175 = vunpack.c.0.s8 %v4174
  %v4176 = vlaneseq
  %v4177 = vshrl.u32 %v4176, 7
  %v4178 = vsub.s32 %v4175, %v4177
  %v4179 = vrot.slane %v4165, %v4178
  %v4180 = vcombine.high %v4164, 0.0
  %v4182 = vunpack.c.l.s4 1934713408
  %v4183 = vunpack.c.0.s8 %v4182
  %v4184 = vlaneseq
  %v4185 = vshrl.u32 %v4184, 7
  %v4186 = vsub.s32 %v4183, %v4185
  %v4187 = vrot.slane %v4164, %v4186
  %v4189 = vunpack.c.l.s4 1934713408
  %v4190 = vunpack.c.0.s8 %v4189
  %v4191 = vlaneseq
  %v4192 = vshrl.u32 %v4191, 7
  %v4193 = vsub.s32 %v4190, %v4192
  %v4194 = vrot.slane %v4180, %v4193
  %v4195 = vcombine.high %v4172, 0.0
  %v4196 = vcombine.high %v4179, 0.0
  %v4197 = vcombine.high %v4187, 0.0
  %v4198 = vcombine.high %v4194, 0.0
  %v4200 = vunpack.c.l.s4 1983009808
  %v4201 = vunpack.c.0.s8 %v4200
  %v4202 = vlaneseq
  %v4203 = vshrl.u32 %v4202, 7
  %v4204 = vsub.s32 %v4201, %v4203
  %v4205 = vrot.slane %v21, %v4204
  %v4206 = vcombine.high %v4205, 0.0
  %v4208 = vunpack.c.l.s4 1934713408
  %v4209 = vunpack.c.0.s8 %v4208
  %v4210 = vlaneseq
  %v4211 = vshrl.u32 %v4210, 7
  %v4212 = vsub.s32 %v4209, %v4211
  %v4213 = vrot.slane %v4205, %v4212
  %v4215 = vunpack.c.l.s4 1934713408
  %v4216 = vunpack.c.0.s8 %v4215
  %v4217 = vlaneseq
  %v4218 = vshrl.u32 %v4217, 7
  %v4219 = vsub.s32 %v4216, %v4218
  %v4220 = vrot.slane %v4206, %v4219
  %v4221 = vcombine.high %v21, 0.0
  %v4223 = vunpack.c.l.s4 1934713408
  %v4224 = vunpack.c.0.s8 %v4223
  %v4225 = vlaneseq
  %v4226 = vshrl.u32 %v4225, 7
  %v4227 = vsub.s32 %v4224, %v4226
  %v4228 = vrot.slane %v4221, %v4227
  %v4229 = vcombine.high %v4213, 0.0
  %v4230 = vcombine.high %v4220, 0.0
  %v4231 = vcombine.high %v4228, 0.0
  %4233 = vrot.lane.b32.xlu0 %v4195, 14
  %v4234 = vpop.permute.xlu0 %4233
  %4237 = vrot.lane.b32.xlu0 %v4179, 28
  %v4238 = vpop.permute.xlu0 %4237
  %4241 = vrot.lane.b32.xlu0 %v4196, 42
  %v4242 = vpop.permute.xlu0 %4241
  %4245 = vrot.lane.b32.xlu0 %v4187, 56
  %v4246 = vpop.permute.xlu0 %4245
  %4249 = vrot.lane.b32.xlu0 %v4197, 70
  %v4250 = vpop.permute.xlu0 %4249
  %4253 = vrot.lane.b32.xlu0 %v4194, 84
  %v4254 = vpop.permute.xlu0 %4253
  %4257 = vrot.lane.b32.xlu0 %v4198, 98
  %v4258 = vpop.permute.xlu0 %4257
  %4261 = vrot.lane.b32.xlu0 %v4213, 112
  %v4262 = vpop.permute.xlu0 %4261
  %4265 = vrot.lane.b32.xlu0 %v4229, 126
  %v4266 = vpop.permute.xlu0 %4265
  %4269 = vrot.lane.b32.xlu0 %v4220, 12
  %v4270 = vpop.permute.xlu0 %4269
  %4273 = vrot.lane.b32.xlu0 %v4230, 26
  %v4274 = vpop.permute.xlu0 %4273
  %4277 = vrot.lane.b32.xlu0 %v4228, 40
  %v4278 = vpop.permute.xlu0 %4277
  %4281 = vrot.lane.b32.xlu0 %v4231, 54
  %v4282 = vpop.permute.xlu0 %4281
  %v4284 = vsel %vm156, %v4172, %v4234
  %v4285 = vsel %vm158, %v4284, %v4238
  %v4286 = vsel %vm160, %v4285, %v4242
  %v4287 = vsel %vm162, %v4286, %v4246
  %v4288 = vsel %vm164, %v4287, %v4250
  %v4289 = vsel %vm166, %v4288, %v4254
  %v4290 = vsel %vm168, %v4289, %v4258
  %v4291 = vsel %vm170, %v4290, %v4262
  %v4292 = vsel %vm172, %v4291, %v4266
  %v4293 = vsel %vm174, %v4266, %v4270
  %v4294 = vsel %vm176, %v4293, %v4274
  %v4295 = vsel %vm178, %v4294, %v4278
  %v4296 = vsel %vm180, %v4295, %v4282
  %4299 = vrot.lane.b32.xlu0 %v20, 127
  %v4300 = vpop.permute.xlu0 %4299
  %4301 = vrot.lane.b32.xlu0 %v21, 127
  %v4302 = vpop.permute.xlu0 %4301
  %v4305 = vcombine.high %v4300, 0.0
  %v4307 = vunpack.c.l.s4 1983009808
  %v4308 = vunpack.c.0.s8 %v4307
  %v4309 = vlaneseq
  %v4310 = vshrl.u32 %v4309, 7
  %v4311 = vsub.s32 %v4308, %v4310
  %v4312 = vrot.slane %v4300, %v4311
  %v4314 = vunpack.c.l.s4 1983009808
  %v4315 = vunpack.c.0.s8 %v4314
  %v4316 = vlaneseq
  %v4317 = vshrl.u32 %v4316, 7
  %v4318 = vsub.s32 %v4315, %v4317
  %v4319 = vrot.slane %v4305, %v4318
  %v4320 = vcombine.high %v4312, 0.0
  %v4322 = vunpack.c.l.s4 1934713408
  %v4323 = vunpack.c.0.s8 %v4322
  %v4324 = vlaneseq
  %v4325 = vshrl.u32 %v4324, 7
  %v4326 = vsub.s32 %v4323, %v4325
  %v4327 = vrot.slane %v4312, %v4326
  %v4329 = vunpack.c.l.s4 1934713408
  %v4330 = vunpack.c.0.s8 %v4329
  %v4331 = vlaneseq
  %v4332 = vshrl.u32 %v4331, 7
  %v4333 = vsub.s32 %v4330, %v4332
  %v4334 = vrot.slane %v4320, %v4333
  %v4335 = vcombine.high %v4319, 0.0
  %v4337 = vunpack.c.l.s4 1934713408
  %v4338 = vunpack.c.0.s8 %v4337
  %v4339 = vlaneseq
  %v4340 = vshrl.u32 %v4339, 7
  %v4341 = vsub.s32 %v4338, %v4340
  %v4342 = vrot.slane %v4319, %v4341
  %v4344 = vunpack.c.l.s4 1934713408
  %v4345 = vunpack.c.0.s8 %v4344
  %v4346 = vlaneseq
  %v4347 = vshrl.u32 %v4346, 7
  %v4348 = vsub.s32 %v4345, %v4347
  %v4349 = vrot.slane %v4335, %v4348
  %v4350 = vcombine.high %v4327, 0.0
  %v4351 = vcombine.high %v4334, 0.0
  %v4352 = vcombine.high %v4342, 0.0
  %v4353 = vcombine.high %v4349, 0.0
  %v4355 = vunpack.c.l.s4 1983009808
  %v4356 = vunpack.c.0.s8 %v4355
  %v4357 = vlaneseq
  %v4358 = vshrl.u32 %v4357, 7
  %v4359 = vsub.s32 %v4356, %v4358
  %v4360 = vrot.slane %v4302, %v4359
  %v4361 = vcombine.high %v4360, 0.0
  %v4363 = vunpack.c.l.s4 1934713408
  %v4364 = vunpack.c.0.s8 %v4363
  %v4365 = vlaneseq
  %v4366 = vshrl.u32 %v4365, 7
  %v4367 = vsub.s32 %v4364, %v4366
  %v4368 = vrot.slane %v4360, %v4367
  %v4370 = vunpack.c.l.s4 1934713408
  %v4371 = vunpack.c.0.s8 %v4370
  %v4372 = vlaneseq
  %v4373 = vshrl.u32 %v4372, 7
  %v4374 = vsub.s32 %v4371, %v4373
  %v4375 = vrot.slane %v4361, %v4374
  %v4376 = vcombine.high %v4302, 0.0
  %v4378 = vunpack.c.l.s4 1934713408
  %v4379 = vunpack.c.0.s8 %v4378
  %v4380 = vlaneseq
  %v4381 = vshrl.u32 %v4380, 7
  %v4382 = vsub.s32 %v4379, %v4381
  %v4383 = vrot.slane %v4376, %v4382
  %v4384 = vcombine.high %v4368, 0.0
  %v4385 = vcombine.high %v4375, 0.0
  %v4386 = vcombine.high %v4383, 0.0
  %4388 = vrot.lane.b32.xlu0 %v4350, 14
  %v4389 = vpop.permute.xlu0 %4388
  %4392 = vrot.lane.b32.xlu0 %v4334, 28
  %v4393 = vpop.permute.xlu0 %4392
  %4396 = vrot.lane.b32.xlu0 %v4351, 42
  %v4397 = vpop.permute.xlu0 %4396
  %4400 = vrot.lane.b32.xlu0 %v4342, 56
  %v4401 = vpop.permute.xlu0 %4400
  %4404 = vrot.lane.b32.xlu0 %v4352, 70
  %v4405 = vpop.permute.xlu0 %4404
  %4408 = vrot.lane.b32.xlu0 %v4349, 84
  %v4409 = vpop.permute.xlu0 %4408
  %4412 = vrot.lane.b32.xlu0 %v4353, 98
  %v4413 = vpop.permute.xlu0 %4412
  %4416 = vrot.lane.b32.xlu0 %v4368, 112
  %v4417 = vpop.permute.xlu0 %4416
  %4420 = vrot.lane.b32.xlu0 %v4384, 126
  %v4421 = vpop.permute.xlu0 %4420
  %4424 = vrot.lane.b32.xlu0 %v4375, 12
  %v4425 = vpop.permute.xlu0 %4424
  %4428 = vrot.lane.b32.xlu0 %v4385, 26
  %v4429 = vpop.permute.xlu0 %4428
  %4432 = vrot.lane.b32.xlu0 %v4383, 40
  %v4433 = vpop.permute.xlu0 %4432
  %4436 = vrot.lane.b32.xlu0 %v4386, 54
  %v4437 = vpop.permute.xlu0 %4436
  %v4439 = vsel %vm156, %v4327, %v4389
  %v4440 = vsel %vm158, %v4439, %v4393
  %v4441 = vsel %vm160, %v4440, %v4397
  %v4442 = vsel %vm162, %v4441, %v4401
  %v4443 = vsel %vm164, %v4442, %v4405
  %v4444 = vsel %vm166, %v4443, %v4409
  %v4445 = vsel %vm168, %v4444, %v4413
  %v4446 = vsel %vm170, %v4445, %v4417
  %v4447 = vsel %vm172, %v4446, %v4421
  %v4448 = vsel %vm174, %v4421, %v4425
  %v4449 = vsel %vm176, %v4448, %v4429
  %v4450 = vsel %vm178, %v4449, %v4433
  %v4451 = vsel %vm180, %v4450, %v4437
  %4452 = vrot.lane.b32.xlu0 %v20, 126
  %v4453 = vpop.permute.xlu0 %4452
  %4454 = vrot.lane.b32.xlu0 %v21, 126
  %v4455 = vpop.permute.xlu0 %4454
  %v4458 = vcombine.high %v4453, 0.0
  %v4460 = vunpack.c.l.s4 1983009808
  %v4461 = vunpack.c.0.s8 %v4460
  %v4462 = vlaneseq
  %v4463 = vshrl.u32 %v4462, 7
  %v4464 = vsub.s32 %v4461, %v4463
  %v4465 = vrot.slane %v4453, %v4464
  %v4467 = vunpack.c.l.s4 1983009808
  %v4468 = vunpack.c.0.s8 %v4467
  %v4469 = vlaneseq
  %v4470 = vshrl.u32 %v4469, 7
  %v4471 = vsub.s32 %v4468, %v4470
  %v4472 = vrot.slane %v4458, %v4471
  %v4473 = vcombine.high %v4465, 0.0
  %v4475 = vunpack.c.l.s4 1934713408
  %v4476 = vunpack.c.0.s8 %v4475
  %v4477 = vlaneseq
  %v4478 = vshrl.u32 %v4477, 7
  %v4479 = vsub.s32 %v4476, %v4478
  %v4480 = vrot.slane %v4465, %v4479
  %v4482 = vunpack.c.l.s4 1934713408
  %v4483 = vunpack.c.0.s8 %v4482
  %v4484 = vlaneseq
  %v4485 = vshrl.u32 %v4484, 7
  %v4486 = vsub.s32 %v4483, %v4485
  %v4487 = vrot.slane %v4473, %v4486
  %v4488 = vcombine.high %v4472, 0.0
  %v4490 = vunpack.c.l.s4 1934713408
  %v4491 = vunpack.c.0.s8 %v4490
  %v4492 = vlaneseq
  %v4493 = vshrl.u32 %v4492, 7
  %v4494 = vsub.s32 %v4491, %v4493
  %v4495 = vrot.slane %v4472, %v4494
  %v4497 = vunpack.c.l.s4 1934713408
  %v4498 = vunpack.c.0.s8 %v4497
  %v4499 = vlaneseq
  %v4500 = vshrl.u32 %v4499, 7
  %v4501 = vsub.s32 %v4498, %v4500
  %v4502 = vrot.slane %v4488, %v4501
  %v4503 = vcombine.high %v4480, 0.0
  %v4504 = vcombine.high %v4487, 0.0
  %v4505 = vcombine.high %v4495, 0.0
  %v4506 = vcombine.high %v4502, 0.0
  %v4508 = vunpack.c.l.s4 1983009808
  %v4509 = vunpack.c.0.s8 %v4508
  %v4510 = vlaneseq
  %v4511 = vshrl.u32 %v4510, 7
  %v4512 = vsub.s32 %v4509, %v4511
  %v4513 = vrot.slane %v4455, %v4512
  %v4514 = vcombine.high %v4513, 0.0
  %v4516 = vunpack.c.l.s4 1934713408
  %v4517 = vunpack.c.0.s8 %v4516
  %v4518 = vlaneseq
  %v4519 = vshrl.u32 %v4518, 7
  %v4520 = vsub.s32 %v4517, %v4519
  %v4521 = vrot.slane %v4513, %v4520
  %v4523 = vunpack.c.l.s4 1934713408
  %v4524 = vunpack.c.0.s8 %v4523
  %v4525 = vlaneseq
  %v4526 = vshrl.u32 %v4525, 7
  %v4527 = vsub.s32 %v4524, %v4526
  %v4528 = vrot.slane %v4514, %v4527
  %v4529 = vcombine.high %v4455, 0.0
  %v4531 = vunpack.c.l.s4 1934713408
  %v4532 = vunpack.c.0.s8 %v4531
  %v4533 = vlaneseq
  %v4534 = vshrl.u32 %v4533, 7
  %v4535 = vsub.s32 %v4532, %v4534
  %v4536 = vrot.slane %v4529, %v4535
  %v4537 = vcombine.high %v4521, 0.0
  %v4538 = vcombine.high %v4528, 0.0
  %v4539 = vcombine.high %v4536, 0.0
  %4541 = vrot.lane.b32.xlu0 %v4503, 14
  %v4542 = vpop.permute.xlu0 %4541
  %4545 = vrot.lane.b32.xlu0 %v4487, 28
  %v4546 = vpop.permute.xlu0 %4545
  %4549 = vrot.lane.b32.xlu0 %v4504, 42
  %v4550 = vpop.permute.xlu0 %4549
  %4553 = vrot.lane.b32.xlu0 %v4495, 56
  %v4554 = vpop.permute.xlu0 %4553
  %4557 = vrot.lane.b32.xlu0 %v4505, 70
  %v4558 = vpop.permute.xlu0 %4557
  %4561 = vrot.lane.b32.xlu0 %v4502, 84
  %v4562 = vpop.permute.xlu0 %4561
  %4565 = vrot.lane.b32.xlu0 %v4506, 98
  %v4566 = vpop.permute.xlu0 %4565
  %4569 = vrot.lane.b32.xlu0 %v4521, 112
  %v4570 = vpop.permute.xlu0 %4569
  %4573 = vrot.lane.b32.xlu0 %v4537, 126
  %v4574 = vpop.permute.xlu0 %4573
  %4577 = vrot.lane.b32.xlu0 %v4528, 12
  %v4578 = vpop.permute.xlu0 %4577
  %4581 = vrot.lane.b32.xlu0 %v4538, 26
  %v4582 = vpop.permute.xlu0 %4581
  %4585 = vrot.lane.b32.xlu0 %v4536, 40
  %v4586 = vpop.permute.xlu0 %4585
  %4589 = vrot.lane.b32.xlu0 %v4539, 54
  %v4590 = vpop.permute.xlu0 %4589
  %v4592 = vsel %vm156, %v4480, %v4542
  %v4593 = vsel %vm158, %v4592, %v4546
  %v4594 = vsel %vm160, %v4593, %v4550
  %v4595 = vsel %vm162, %v4594, %v4554
  %v4596 = vsel %vm164, %v4595, %v4558
  %v4597 = vsel %vm166, %v4596, %v4562
  %v4598 = vsel %vm168, %v4597, %v4566
  %v4599 = vsel %vm170, %v4598, %v4570
  %v4600 = vsel %vm172, %v4599, %v4574
  %v4601 = vsel %vm174, %v4574, %v4578
  %v4602 = vsel %vm176, %v4601, %v4582
  %v4603 = vsel %vm178, %v4602, %v4586
  %v4604 = vsel %vm180, %v4603, %v4590
  %v4605 = vrot.slane %v20, 1
  %v4606 = vrot.slane %v21, 1
  %v4607 = vsel %vm490, %v4605, %v4606
  %v4610 = vcombine.high %v4607, 0.0
  %v4612 = vunpack.c.l.s4 1983009808
  %v4613 = vunpack.c.0.s8 %v4612
  %v4614 = vlaneseq
  %v4615 = vshrl.u32 %v4614, 7
  %v4616 = vsub.s32 %v4613, %v4615
  %v4617 = vrot.slane %v4607, %v4616
  %v4619 = vunpack.c.l.s4 1983009808
  %v4620 = vunpack.c.0.s8 %v4619
  %v4621 = vlaneseq
  %v4622 = vshrl.u32 %v4621, 7
  %v4623 = vsub.s32 %v4620, %v4622
  %v4624 = vrot.slane %v4610, %v4623
  %v4625 = vcombine.high %v4617, 0.0
  %v4627 = vunpack.c.l.s4 1934713408
  %v4628 = vunpack.c.0.s8 %v4627
  %v4629 = vlaneseq
  %v4630 = vshrl.u32 %v4629, 7
  %v4631 = vsub.s32 %v4628, %v4630
  %v4632 = vrot.slane %v4617, %v4631
  %v4634 = vunpack.c.l.s4 1934713408
  %v4635 = vunpack.c.0.s8 %v4634
  %v4636 = vlaneseq
  %v4637 = vshrl.u32 %v4636, 7
  %v4638 = vsub.s32 %v4635, %v4637
  %v4639 = vrot.slane %v4625, %v4638
  %v4640 = vcombine.high %v4624, 0.0
  %v4642 = vunpack.c.l.s4 1934713408
  %v4643 = vunpack.c.0.s8 %v4642
  %v4644 = vlaneseq
  %v4645 = vshrl.u32 %v4644, 7
  %v4646 = vsub.s32 %v4643, %v4645
  %v4647 = vrot.slane %v4624, %v4646
  %v4649 = vunpack.c.l.s4 1934713408
  %v4650 = vunpack.c.0.s8 %v4649
  %v4651 = vlaneseq
  %v4652 = vshrl.u32 %v4651, 7
  %v4653 = vsub.s32 %v4650, %v4652
  %v4654 = vrot.slane %v4640, %v4653
  %v4655 = vcombine.high %v4632, 0.0
  %v4656 = vcombine.high %v4639, 0.0
  %v4657 = vcombine.high %v4647, 0.0
  %v4658 = vcombine.high %v4654, 0.0
  %v4660 = vunpack.c.l.s4 1983009808
  %v4661 = vunpack.c.0.s8 %v4660
  %v4662 = vlaneseq
  %v4663 = vshrl.u32 %v4662, 7
  %v4664 = vsub.s32 %v4661, %v4663
  %v4665 = vrot.slane %v4606, %v4664
  %v4666 = vcombine.high %v4665, 0.0
  %v4668 = vunpack.c.l.s4 1934713408
  %v4669 = vunpack.c.0.s8 %v4668
  %v4670 = vlaneseq
  %v4671 = vshrl.u32 %v4670, 7
  %v4672 = vsub.s32 %v4669, %v4671
  %v4673 = vrot.slane %v4665, %v4672
  %v4675 = vunpack.c.l.s4 1934713408
  %v4676 = vunpack.c.0.s8 %v4675
  %v4677 = vlaneseq
  %v4678 = vshrl.u32 %v4677, 7
  %v4679 = vsub.s32 %v4676, %v4678
  %v4680 = vrot.slane %v4666, %v4679
  %v4681 = vcombine.high %v4606, 0.0
  %v4683 = vunpack.c.l.s4 1934713408
  %v4684 = vunpack.c.0.s8 %v4683
  %v4685 = vlaneseq
  %v4686 = vshrl.u32 %v4685, 7
  %v4687 = vsub.s32 %v4684, %v4686
  %v4688 = vrot.slane %v4681, %v4687
  %v4689 = vcombine.high %v4673, 0.0
  %v4690 = vcombine.high %v4680, 0.0
  %v4691 = vcombine.high %v4688, 0.0
  %4693 = vrot.lane.b32.xlu0 %v4655, 14
  %v4694 = vpop.permute.xlu0 %4693
  %4697 = vrot.lane.b32.xlu0 %v4639, 28
  %v4698 = vpop.permute.xlu0 %4697
  %4701 = vrot.lane.b32.xlu0 %v4656, 42
  %v4702 = vpop.permute.xlu0 %4701
  %4705 = vrot.lane.b32.xlu0 %v4647, 56
  %v4706 = vpop.permute.xlu0 %4705
  %4709 = vrot.lane.b32.xlu0 %v4657, 70
  %v4710 = vpop.permute.xlu0 %4709
  %4713 = vrot.lane.b32.xlu0 %v4654, 84
  %v4714 = vpop.permute.xlu0 %4713
  %4717 = vrot.lane.b32.xlu0 %v4658, 98
  %v4718 = vpop.permute.xlu0 %4717
  %4721 = vrot.lane.b32.xlu0 %v4673, 112
  %v4722 = vpop.permute.xlu0 %4721
  %4725 = vrot.lane.b32.xlu0 %v4689, 126
  %v4726 = vpop.permute.xlu0 %4725
  %4729 = vrot.lane.b32.xlu0 %v4680, 12
  %v4730 = vpop.permute.xlu0 %4729
  %4733 = vrot.lane.b32.xlu0 %v4690, 26
  %v4734 = vpop.permute.xlu0 %4733
  %4737 = vrot.lane.b32.xlu0 %v4688, 40
  %v4738 = vpop.permute.xlu0 %4737
  %4741 = vrot.lane.b32.xlu0 %v4691, 54
  %v4742 = vpop.permute.xlu0 %4741
  %v4744 = vsel %vm156, %v4632, %v4694
  %v4745 = vsel %vm158, %v4744, %v4698
  %v4746 = vsel %vm160, %v4745, %v4702
  %v4747 = vsel %vm162, %v4746, %v4706
  %v4748 = vsel %vm164, %v4747, %v4710
  %v4749 = vsel %vm166, %v4748, %v4714
  %v4750 = vsel %vm168, %v4749, %v4718
  %v4751 = vsel %vm170, %v4750, %v4722
  %v4752 = vsel %vm172, %v4751, %v4726
  %v4753 = vsel %vm174, %v4726, %v4730
  %v4754 = vsel %vm176, %v4753, %v4734
  %v4755 = vsel %vm178, %v4754, %v4738
  %v4756 = vsel %vm180, %v4755, %v4742
  %4757 = vrot.lane.b32.xlu0 %v4607, 127
  %v4758 = vpop.permute.xlu0 %4757
  %4759 = vrot.lane.b32.xlu0 %v4606, 127
  %v4760 = vpop.permute.xlu0 %4759
  %v4763 = vcombine.high %v4758, 0.0
  %v4765 = vunpack.c.l.s4 1983009808
  %v4766 = vunpack.c.0.s8 %v4765
  %v4767 = vlaneseq
  %v4768 = vshrl.u32 %v4767, 7
  %v4769 = vsub.s32 %v4766, %v4768
  %v4770 = vrot.slane %v4758, %v4769
  %v4772 = vunpack.c.l.s4 1983009808
  %v4773 = vunpack.c.0.s8 %v4772
  %v4774 = vlaneseq
  %v4775 = vshrl.u32 %v4774, 7
  %v4776 = vsub.s32 %v4773, %v4775
  %v4777 = vrot.slane %v4763, %v4776
  %v4778 = vcombine.high %v4770, 0.0
  %v4780 = vunpack.c.l.s4 1934713408
  %v4781 = vunpack.c.0.s8 %v4780
  %v4782 = vlaneseq
  %v4783 = vshrl.u32 %v4782, 7
  %v4784 = vsub.s32 %v4781, %v4783
  %v4785 = vrot.slane %v4770, %v4784
  %v4787 = vunpack.c.l.s4 1934713408
  %v4788 = vunpack.c.0.s8 %v4787
  %v4789 = vlaneseq
  %v4790 = vshrl.u32 %v4789, 7
  %v4791 = vsub.s32 %v4788, %v4790
  %v4792 = vrot.slane %v4778, %v4791
  %v4793 = vcombine.high %v4777, 0.0
  %v4795 = vunpack.c.l.s4 1934713408
  %v4796 = vunpack.c.0.s8 %v4795
  %v4797 = vlaneseq
  %v4798 = vshrl.u32 %v4797, 7
  %v4799 = vsub.s32 %v4796, %v4798
  %v4800 = vrot.slane %v4777, %v4799
  %v4802 = vunpack.c.l.s4 1934713408
  %v4803 = vunpack.c.0.s8 %v4802
  %v4804 = vlaneseq
  %v4805 = vshrl.u32 %v4804, 7
  %v4806 = vsub.s32 %v4803, %v4805
  %v4807 = vrot.slane %v4793, %v4806
  %v4808 = vcombine.high %v4785, 0.0
  %v4809 = vcombine.high %v4792, 0.0
  %v4810 = vcombine.high %v4800, 0.0
  %v4811 = vcombine.high %v4807, 0.0
  %v4813 = vunpack.c.l.s4 1983009808
  %v4814 = vunpack.c.0.s8 %v4813
  %v4815 = vlaneseq
  %v4816 = vshrl.u32 %v4815, 7
  %v4817 = vsub.s32 %v4814, %v4816
  %v4818 = vrot.slane %v4760, %v4817
  %v4819 = vcombine.high %v4818, 0.0
  %v4821 = vunpack.c.l.s4 1934713408
  %v4822 = vunpack.c.0.s8 %v4821
  %v4823 = vlaneseq
  %v4824 = vshrl.u32 %v4823, 7
  %v4825 = vsub.s32 %v4822, %v4824
  %v4826 = vrot.slane %v4818, %v4825
  %v4828 = vunpack.c.l.s4 1934713408
  %v4829 = vunpack.c.0.s8 %v4828
  %v4830 = vlaneseq
  %v4831 = vshrl.u32 %v4830, 7
  %v4832 = vsub.s32 %v4829, %v4831
  %v4833 = vrot.slane %v4819, %v4832
  %v4834 = vcombine.high %v4760, 0.0
  %v4836 = vunpack.c.l.s4 1934713408
  %v4837 = vunpack.c.0.s8 %v4836
  %v4838 = vlaneseq
  %v4839 = vshrl.u32 %v4838, 7
  %v4840 = vsub.s32 %v4837, %v4839
  %v4841 = vrot.slane %v4834, %v4840
  %v4842 = vcombine.high %v4826, 0.0
  %v4843 = vcombine.high %v4833, 0.0
  %v4844 = vcombine.high %v4841, 0.0
  %4846 = vrot.lane.b32.xlu0 %v4808, 14
  %v4847 = vpop.permute.xlu0 %4846
  %4850 = vrot.lane.b32.xlu0 %v4792, 28
  %v4851 = vpop.permute.xlu0 %4850
  %4854 = vrot.lane.b32.xlu0 %v4809, 42
  %v4855 = vpop.permute.xlu0 %4854
  %4858 = vrot.lane.b32.xlu0 %v4800, 56
  %v4859 = vpop.permute.xlu0 %4858
  %4862 = vrot.lane.b32.xlu0 %v4810, 70
  %v4863 = vpop.permute.xlu0 %4862
  %4866 = vrot.lane.b32.xlu0 %v4807, 84
  %v4867 = vpop.permute.xlu0 %4866
  %4870 = vrot.lane.b32.xlu0 %v4811, 98
  %v4871 = vpop.permute.xlu0 %4870
  %4874 = vrot.lane.b32.xlu0 %v4826, 112
  %v4875 = vpop.permute.xlu0 %4874
  %4878 = vrot.lane.b32.xlu0 %v4842, 126
  %v4879 = vpop.permute.xlu0 %4878
  %4882 = vrot.lane.b32.xlu0 %v4833, 12
  %v4883 = vpop.permute.xlu0 %4882
  %4886 = vrot.lane.b32.xlu0 %v4843, 26
  %v4887 = vpop.permute.xlu0 %4886
  %4890 = vrot.lane.b32.xlu0 %v4841, 40
  %v4891 = vpop.permute.xlu0 %4890
  %4894 = vrot.lane.b32.xlu0 %v4844, 54
  %v4895 = vpop.permute.xlu0 %4894
  %v4897 = vsel %vm156, %v4785, %v4847
  %v4898 = vsel %vm158, %v4897, %v4851
  %v4899 = vsel %vm160, %v4898, %v4855
  %v4900 = vsel %vm162, %v4899, %v4859
  %v4901 = vsel %vm164, %v4900, %v4863
  %v4902 = vsel %vm166, %v4901, %v4867
  %v4903 = vsel %vm168, %v4902, %v4871
  %v4904 = vsel %vm170, %v4903, %v4875
  %v4905 = vsel %vm172, %v4904, %v4879
  %v4906 = vsel %vm174, %v4879, %v4883
  %v4907 = vsel %vm176, %v4906, %v4887
  %v4908 = vsel %vm178, %v4907, %v4891
  %v4909 = vsel %vm180, %v4908, %v4895
  %4910 = vrot.lane.b32.xlu0 %v4607, 126
  %v4911 = vpop.permute.xlu0 %4910
  %4912 = vrot.lane.b32.xlu0 %v4606, 126
  %v4913 = vpop.permute.xlu0 %4912
  %v4916 = vcombine.high %v4911, 0.0
  %v4918 = vunpack.c.l.s4 1983009808
  %v4919 = vunpack.c.0.s8 %v4918
  %v4920 = vlaneseq
  %v4921 = vshrl.u32 %v4920, 7
  %v4922 = vsub.s32 %v4919, %v4921
  %v4923 = vrot.slane %v4911, %v4922
  %v4925 = vunpack.c.l.s4 1983009808
  %v4926 = vunpack.c.0.s8 %v4925
  %v4927 = vlaneseq
  %v4928 = vshrl.u32 %v4927, 7
  %v4929 = vsub.s32 %v4926, %v4928
  %v4930 = vrot.slane %v4916, %v4929
  %v4931 = vcombine.high %v4923, 0.0
  %v4933 = vunpack.c.l.s4 1934713408
  %v4934 = vunpack.c.0.s8 %v4933
  %v4935 = vlaneseq
  %v4936 = vshrl.u32 %v4935, 7
  %v4937 = vsub.s32 %v4934, %v4936
  %v4938 = vrot.slane %v4923, %v4937
  %v4940 = vunpack.c.l.s4 1934713408
  %v4941 = vunpack.c.0.s8 %v4940
  %v4942 = vlaneseq
  %v4943 = vshrl.u32 %v4942, 7
  %v4944 = vsub.s32 %v4941, %v4943
  %v4945 = vrot.slane %v4931, %v4944
  %v4946 = vcombine.high %v4930, 0.0
  %v4948 = vunpack.c.l.s4 1934713408
  %v4949 = vunpack.c.0.s8 %v4948
  %v4950 = vlaneseq
  %v4951 = vshrl.u32 %v4950, 7
  %v4952 = vsub.s32 %v4949, %v4951
  %v4953 = vrot.slane %v4930, %v4952
  %v4955 = vunpack.c.l.s4 1934713408
  %v4956 = vunpack.c.0.s8 %v4955
  %v4957 = vlaneseq
  %v4958 = vshrl.u32 %v4957, 7
  %v4959 = vsub.s32 %v4956, %v4958
  %v4960 = vrot.slane %v4946, %v4959
  %v4961 = vcombine.high %v4938, 0.0
  %v4962 = vcombine.high %v4945, 0.0
  %v4963 = vcombine.high %v4953, 0.0
  %v4964 = vcombine.high %v4960, 0.0
  %v4966 = vunpack.c.l.s4 1983009808
  %v4967 = vunpack.c.0.s8 %v4966
  %v4968 = vlaneseq
  %v4969 = vshrl.u32 %v4968, 7
  %v4970 = vsub.s32 %v4967, %v4969
  %v4971 = vrot.slane %v4913, %v4970
  %v4972 = vcombine.high %v4971, 0.0
  %v4974 = vunpack.c.l.s4 1934713408
  %v4975 = vunpack.c.0.s8 %v4974
  %v4976 = vlaneseq
  %v4977 = vshrl.u32 %v4976, 7
  %v4978 = vsub.s32 %v4975, %v4977
  %v4979 = vrot.slane %v4971, %v4978
  %v4981 = vunpack.c.l.s4 1934713408
  %v4982 = vunpack.c.0.s8 %v4981
  %v4983 = vlaneseq
  %v4984 = vshrl.u32 %v4983, 7
  %v4985 = vsub.s32 %v4982, %v4984
  %v4986 = vrot.slane %v4972, %v4985
  %v4987 = vcombine.high %v4913, 0.0
  %v4989 = vunpack.c.l.s4 1934713408
  %v4990 = vunpack.c.0.s8 %v4989
  %v4991 = vlaneseq
  %v4992 = vshrl.u32 %v4991, 7
  %v4993 = vsub.s32 %v4990, %v4992
  %v4994 = vrot.slane %v4987, %v4993
  %v4995 = vcombine.high %v4979, 0.0
  %v4996 = vcombine.high %v4986, 0.0
  %v4997 = vcombine.high %v4994, 0.0
  %4999 = vrot.lane.b32.xlu0 %v4961, 14
  %v5000 = vpop.permute.xlu0 %4999
  %5003 = vrot.lane.b32.xlu0 %v4945, 28
  %v5004 = vpop.permute.xlu0 %5003
  %5007 = vrot.lane.b32.xlu0 %v4962, 42
  %v5008 = vpop.permute.xlu0 %5007
  %5011 = vrot.lane.b32.xlu0 %v4953, 56
  %v5012 = vpop.permute.xlu0 %5011
  %5015 = vrot.lane.b32.xlu0 %v4963, 70
  %v5016 = vpop.permute.xlu0 %5015
  %5019 = vrot.lane.b32.xlu0 %v4960, 84
  %v5020 = vpop.permute.xlu0 %5019
  %5023 = vrot.lane.b32.xlu0 %v4964, 98
  %v5024 = vpop.permute.xlu0 %5023
  %5027 = vrot.lane.b32.xlu0 %v4979, 112
  %v5028 = vpop.permute.xlu0 %5027
  %5031 = vrot.lane.b32.xlu0 %v4995, 126
  %v5032 = vpop.permute.xlu0 %5031
  %5035 = vrot.lane.b32.xlu0 %v4986, 12
  %v5036 = vpop.permute.xlu0 %5035
  %5039 = vrot.lane.b32.xlu0 %v4996, 26
  %v5040 = vpop.permute.xlu0 %5039
  %5043 = vrot.lane.b32.xlu0 %v4994, 40
  %v5044 = vpop.permute.xlu0 %5043
  %5047 = vrot.lane.b32.xlu0 %v4997, 54
  %v5048 = vpop.permute.xlu0 %5047
  %v5050 = vsel %vm156, %v4938, %v5000
  %v5051 = vsel %vm158, %v5050, %v5004
  %v5052 = vsel %vm160, %v5051, %v5008
  %v5053 = vsel %vm162, %v5052, %v5012
  %v5054 = vsel %vm164, %v5053, %v5016
  %v5055 = vsel %vm166, %v5054, %v5020
  %v5056 = vsel %vm168, %v5055, %v5024
  %v5057 = vsel %vm170, %v5056, %v5028
  %v5058 = vsel %vm172, %v5057, %v5032
  %v5059 = vsel %vm174, %v5032, %v5036
  %v5060 = vsel %vm176, %v5059, %v5040
  %v5061 = vsel %vm178, %v5060, %v5044
  %v5062 = vsel %vm180, %v5061, %v5048
  %v5063 = vrot.slane %v20, 2
  %v5064 = vrot.slane %v21, 2
  %v5065 = vsel %vm949, %v5063, %v5064
  %v5068 = vcombine.high %v5065, 0.0
  %v5070 = vunpack.c.l.s4 1983009808
  %v5071 = vunpack.c.0.s8 %v5070
  %v5072 = vlaneseq
  %v5073 = vshrl.u32 %v5072, 7
  %v5074 = vsub.s32 %v5071, %v5073
  %v5075 = vrot.slane %v5065, %v5074
  %v5077 = vunpack.c.l.s4 1983009808
  %v5078 = vunpack.c.0.s8 %v5077
  %v5079 = vlaneseq
  %v5080 = vshrl.u32 %v5079, 7
  %v5081 = vsub.s32 %v5078, %v5080
  %v5082 = vrot.slane %v5068, %v5081
  %v5083 = vcombine.high %v5075, 0.0
  %v5085 = vunpack.c.l.s4 1934713408
  %v5086 = vunpack.c.0.s8 %v5085
  %v5087 = vlaneseq
  %v5088 = vshrl.u32 %v5087, 7
  %v5089 = vsub.s32 %v5086, %v5088
  %v5090 = vrot.slane %v5075, %v5089
  %v5092 = vunpack.c.l.s4 1934713408
  %v5093 = vunpack.c.0.s8 %v5092
  %v5094 = vlaneseq
  %v5095 = vshrl.u32 %v5094, 7
  %v5096 = vsub.s32 %v5093, %v5095
  %v5097 = vrot.slane %v5083, %v5096
  %v5098 = vcombine.high %v5082, 0.0
  %v5100 = vunpack.c.l.s4 1934713408
  %v5101 = vunpack.c.0.s8 %v5100
  %v5102 = vlaneseq
  %v5103 = vshrl.u32 %v5102, 7
  %v5104 = vsub.s32 %v5101, %v5103
  %v5105 = vrot.slane %v5082, %v5104
  %v5107 = vunpack.c.l.s4 1934713408
  %v5108 = vunpack.c.0.s8 %v5107
  %v5109 = vlaneseq
  %v5110 = vshrl.u32 %v5109, 7
  %v5111 = vsub.s32 %v5108, %v5110
  %v5112 = vrot.slane %v5098, %v5111
  %v5113 = vcombine.high %v5090, 0.0
  %v5114 = vcombine.high %v5097, 0.0
  %v5115 = vcombine.high %v5105, 0.0
  %v5116 = vcombine.high %v5112, 0.0
  %v5118 = vunpack.c.l.s4 1983009808
  %v5119 = vunpack.c.0.s8 %v5118
  %v5120 = vlaneseq
  %v5121 = vshrl.u32 %v5120, 7
  %v5122 = vsub.s32 %v5119, %v5121
  %v5123 = vrot.slane %v5064, %v5122
  %v5124 = vcombine.high %v5123, 0.0
  %v5126 = vunpack.c.l.s4 1934713408
  %v5127 = vunpack.c.0.s8 %v5126
  %v5128 = vlaneseq
  %v5129 = vshrl.u32 %v5128, 7
  %v5130 = vsub.s32 %v5127, %v5129
  %v5131 = vrot.slane %v5123, %v5130
  %v5133 = vunpack.c.l.s4 1934713408
  %v5134 = vunpack.c.0.s8 %v5133
  %v5135 = vlaneseq
  %v5136 = vshrl.u32 %v5135, 7
  %v5137 = vsub.s32 %v5134, %v5136
  %v5138 = vrot.slane %v5124, %v5137
  %v5139 = vcombine.high %v5064, 0.0
  %v5141 = vunpack.c.l.s4 1934713408
  %v5142 = vunpack.c.0.s8 %v5141
  %v5143 = vlaneseq
  %v5144 = vshrl.u32 %v5143, 7
  %v5145 = vsub.s32 %v5142, %v5144
  %v5146 = vrot.slane %v5139, %v5145
  %v5147 = vcombine.high %v5131, 0.0
  %v5148 = vcombine.high %v5138, 0.0
  %v5149 = vcombine.high %v5146, 0.0
  %5151 = vrot.lane.b32.xlu0 %v5113, 14
  %v5152 = vpop.permute.xlu0 %5151
  %5155 = vrot.lane.b32.xlu0 %v5097, 28
  %v5156 = vpop.permute.xlu0 %5155
  %5159 = vrot.lane.b32.xlu0 %v5114, 42
  %v5160 = vpop.permute.xlu0 %5159
  %5163 = vrot.lane.b32.xlu0 %v5105, 56
  %v5164 = vpop.permute.xlu0 %5163
  %5167 = vrot.lane.b32.xlu0 %v5115, 70
  %v5168 = vpop.permute.xlu0 %5167
  %5171 = vrot.lane.b32.xlu0 %v5112, 84
  %v5172 = vpop.permute.xlu0 %5171
  %5175 = vrot.lane.b32.xlu0 %v5116, 98
  %v5176 = vpop.permute.xlu0 %5175
  %5179 = vrot.lane.b32.xlu0 %v5131, 112
  %v5180 = vpop.permute.xlu0 %5179
  %5183 = vrot.lane.b32.xlu0 %v5147, 126
  %v5184 = vpop.permute.xlu0 %5183
  %5187 = vrot.lane.b32.xlu0 %v5138, 12
  %v5188 = vpop.permute.xlu0 %5187
  %5191 = vrot.lane.b32.xlu0 %v5148, 26
  %v5192 = vpop.permute.xlu0 %5191
  %5195 = vrot.lane.b32.xlu0 %v5146, 40
  %v5196 = vpop.permute.xlu0 %5195
  %5199 = vrot.lane.b32.xlu0 %v5149, 54
  %v5200 = vpop.permute.xlu0 %5199
  %v5202 = vsel %vm156, %v5090, %v5152
  %v5203 = vsel %vm158, %v5202, %v5156
  %v5204 = vsel %vm160, %v5203, %v5160
  %v5205 = vsel %vm162, %v5204, %v5164
  %v5206 = vsel %vm164, %v5205, %v5168
  %v5207 = vsel %vm166, %v5206, %v5172
  %v5208 = vsel %vm168, %v5207, %v5176
  %v5209 = vsel %vm170, %v5208, %v5180
  %v5210 = vsel %vm172, %v5209, %v5184
  %v5211 = vsel %vm174, %v5184, %v5188
  %v5212 = vsel %vm176, %v5211, %v5192
  %v5213 = vsel %vm178, %v5212, %v5196
  %v5214 = vsel %vm180, %v5213, %v5200
  %5215 = vrot.lane.b32.xlu0 %v5065, 127
  %v5216 = vpop.permute.xlu0 %5215
  %5217 = vrot.lane.b32.xlu0 %v5064, 127
  %v5218 = vpop.permute.xlu0 %5217
  %v5221 = vcombine.high %v5216, 0.0
  %v5223 = vunpack.c.l.s4 1983009808
  %v5224 = vunpack.c.0.s8 %v5223
  %v5225 = vlaneseq
  %v5226 = vshrl.u32 %v5225, 7
  %v5227 = vsub.s32 %v5224, %v5226
  %v5228 = vrot.slane %v5216, %v5227
  %v5230 = vunpack.c.l.s4 1983009808
  %v5231 = vunpack.c.0.s8 %v5230
  %v5232 = vlaneseq
  %v5233 = vshrl.u32 %v5232, 7
  %v5234 = vsub.s32 %v5231, %v5233
  %v5235 = vrot.slane %v5221, %v5234
  %v5236 = vcombine.high %v5228, 0.0
  %v5238 = vunpack.c.l.s4 1934713408
  %v5239 = vunpack.c.0.s8 %v5238
  %v5240 = vlaneseq
  %v5241 = vshrl.u32 %v5240, 7
  %v5242 = vsub.s32 %v5239, %v5241
  %v5243 = vrot.slane %v5228, %v5242
  %v5245 = vunpack.c.l.s4 1934713408
  %v5246 = vunpack.c.0.s8 %v5245
  %v5247 = vlaneseq
  %v5248 = vshrl.u32 %v5247, 7
  %v5249 = vsub.s32 %v5246, %v5248
  %v5250 = vrot.slane %v5236, %v5249
  %v5251 = vcombine.high %v5235, 0.0
  %v5253 = vunpack.c.l.s4 1934713408
  %v5254 = vunpack.c.0.s8 %v5253
  %v5255 = vlaneseq
  %v5256 = vshrl.u32 %v5255, 7
  %v5257 = vsub.s32 %v5254, %v5256
  %v5258 = vrot.slane %v5235, %v5257
  %v5260 = vunpack.c.l.s4 1934713408
  %v5261 = vunpack.c.0.s8 %v5260
  %v5262 = vlaneseq
  %v5263 = vshrl.u32 %v5262, 7
  %v5264 = vsub.s32 %v5261, %v5263
  %v5265 = vrot.slane %v5251, %v5264
  %v5266 = vcombine.high %v5243, 0.0
  %v5267 = vcombine.high %v5250, 0.0
  %v5268 = vcombine.high %v5258, 0.0
  %v5269 = vcombine.high %v5265, 0.0
  %v5271 = vunpack.c.l.s4 1983009808
  %v5272 = vunpack.c.0.s8 %v5271
  %v5273 = vlaneseq
  %v5274 = vshrl.u32 %v5273, 7
  %v5275 = vsub.s32 %v5272, %v5274
  %v5276 = vrot.slane %v5218, %v5275
  %v5277 = vcombine.high %v5276, 0.0
  %v5279 = vunpack.c.l.s4 1934713408
  %v5280 = vunpack.c.0.s8 %v5279
  %v5281 = vlaneseq
  %v5282 = vshrl.u32 %v5281, 7
  %v5283 = vsub.s32 %v5280, %v5282
  %v5284 = vrot.slane %v5276, %v5283
  %v5286 = vunpack.c.l.s4 1934713408
  %v5287 = vunpack.c.0.s8 %v5286
  %v5288 = vlaneseq
  %v5289 = vshrl.u32 %v5288, 7
  %v5290 = vsub.s32 %v5287, %v5289
  %v5291 = vrot.slane %v5277, %v5290
  %v5292 = vcombine.high %v5218, 0.0
  %v5294 = vunpack.c.l.s4 1934713408
  %v5295 = vunpack.c.0.s8 %v5294
  %v5296 = vlaneseq
  %v5297 = vshrl.u32 %v5296, 7
  %v5298 = vsub.s32 %v5295, %v5297
  %v5299 = vrot.slane %v5292, %v5298
  %v5300 = vcombine.high %v5284, 0.0
  %v5301 = vcombine.high %v5291, 0.0
  %v5302 = vcombine.high %v5299, 0.0
  %5304 = vrot.lane.b32.xlu0 %v5266, 14
  %v5305 = vpop.permute.xlu0 %5304
  %5308 = vrot.lane.b32.xlu0 %v5250, 28
  %v5309 = vpop.permute.xlu0 %5308
  %5312 = vrot.lane.b32.xlu0 %v5267, 42
  %v5313 = vpop.permute.xlu0 %5312
  %5316 = vrot.lane.b32.xlu0 %v5258, 56
  %v5317 = vpop.permute.xlu0 %5316
  %5320 = vrot.lane.b32.xlu0 %v5268, 70
  %v5321 = vpop.permute.xlu0 %5320
  %5324 = vrot.lane.b32.xlu0 %v5265, 84
  %v5325 = vpop.permute.xlu0 %5324
  %5328 = vrot.lane.b32.xlu0 %v5269, 98
  %v5329 = vpop.permute.xlu0 %5328
  %5332 = vrot.lane.b32.xlu0 %v5284, 112
  %v5333 = vpop.permute.xlu0 %5332
  %5336 = vrot.lane.b32.xlu0 %v5300, 126
  %v5337 = vpop.permute.xlu0 %5336
  %5340 = vrot.lane.b32.xlu0 %v5291, 12
  %v5341 = vpop.permute.xlu0 %5340
  %5344 = vrot.lane.b32.xlu0 %v5301, 26
  %v5345 = vpop.permute.xlu0 %5344
  %5348 = vrot.lane.b32.xlu0 %v5299, 40
  %v5349 = vpop.permute.xlu0 %5348
  %5352 = vrot.lane.b32.xlu0 %v5302, 54
  %v5353 = vpop.permute.xlu0 %5352
  %v5355 = vsel %vm156, %v5243, %v5305
  %v5356 = vsel %vm158, %v5355, %v5309
  %v5357 = vsel %vm160, %v5356, %v5313
  %v5358 = vsel %vm162, %v5357, %v5317
  %v5359 = vsel %vm164, %v5358, %v5321
  %v5360 = vsel %vm166, %v5359, %v5325
  %v5361 = vsel %vm168, %v5360, %v5329
  %v5362 = vsel %vm170, %v5361, %v5333
  %v5363 = vsel %vm172, %v5362, %v5337
  %v5364 = vsel %vm174, %v5337, %v5341
  %v5365 = vsel %vm176, %v5364, %v5345
  %v5366 = vsel %vm178, %v5365, %v5349
  %v5367 = vsel %vm180, %v5366, %v5353
  %5368 = vrot.lane.b32.xlu0 %v5065, 126
  %v5369 = vpop.permute.xlu0 %5368
  %5370 = vrot.lane.b32.xlu0 %v5064, 126
  %v5371 = vpop.permute.xlu0 %5370
  %v5374 = vcombine.high %v5369, 0.0
  %v5376 = vunpack.c.l.s4 1983009808
  %v5377 = vunpack.c.0.s8 %v5376
  %v5378 = vlaneseq
  %v5379 = vshrl.u32 %v5378, 7
  %v5380 = vsub.s32 %v5377, %v5379
  %v5381 = vrot.slane %v5369, %v5380
  %v5383 = vunpack.c.l.s4 1983009808
  %v5384 = vunpack.c.0.s8 %v5383
  %v5385 = vlaneseq
  %v5386 = vshrl.u32 %v5385, 7
  %v5387 = vsub.s32 %v5384, %v5386
  %v5388 = vrot.slane %v5374, %v5387
  %v5389 = vcombine.high %v5381, 0.0
  %v5391 = vunpack.c.l.s4 1934713408
  %v5392 = vunpack.c.0.s8 %v5391
  %v5393 = vlaneseq
  %v5394 = vshrl.u32 %v5393, 7
  %v5395 = vsub.s32 %v5392, %v5394
  %v5396 = vrot.slane %v5381, %v5395
  %v5398 = vunpack.c.l.s4 1934713408
  %v5399 = vunpack.c.0.s8 %v5398
  %v5400 = vlaneseq
  %v5401 = vshrl.u32 %v5400, 7
  %v5402 = vsub.s32 %v5399, %v5401
  %v5403 = vrot.slane %v5389, %v5402
  %v5404 = vcombine.high %v5388, 0.0
  %v5406 = vunpack.c.l.s4 1934713408
  %v5407 = vunpack.c.0.s8 %v5406
  %v5408 = vlaneseq
  %v5409 = vshrl.u32 %v5408, 7
  %v5410 = vsub.s32 %v5407, %v5409
  %v5411 = vrot.slane %v5388, %v5410
  %v5413 = vunpack.c.l.s4 1934713408
  %v5414 = vunpack.c.0.s8 %v5413
  %v5415 = vlaneseq
  %v5416 = vshrl.u32 %v5415, 7
  %v5417 = vsub.s32 %v5414, %v5416
  %v5418 = vrot.slane %v5404, %v5417
  %v5419 = vcombine.high %v5396, 0.0
  %v5420 = vcombine.high %v5403, 0.0
  %v5421 = vcombine.high %v5411, 0.0
  %v5422 = vcombine.high %v5418, 0.0
  %v5424 = vunpack.c.l.s4 1983009808
  %v5425 = vunpack.c.0.s8 %v5424
  %v5426 = vlaneseq
  %v5427 = vshrl.u32 %v5426, 7
  %v5428 = vsub.s32 %v5425, %v5427
  %v5429 = vrot.slane %v5371, %v5428
  %v5430 = vcombine.high %v5429, 0.0
  %v5432 = vunpack.c.l.s4 1934713408
  %v5433 = vunpack.c.0.s8 %v5432
  %v5434 = vlaneseq
  %v5435 = vshrl.u32 %v5434, 7
  %v5436 = vsub.s32 %v5433, %v5435
  %v5437 = vrot.slane %v5429, %v5436
  %v5439 = vunpack.c.l.s4 1934713408
  %v5440 = vunpack.c.0.s8 %v5439
  %v5441 = vlaneseq
  %v5442 = vshrl.u32 %v5441, 7
  %v5443 = vsub.s32 %v5440, %v5442
  %v5444 = vrot.slane %v5430, %v5443
  %v5445 = vcombine.high %v5371, 0.0
  %v5447 = vunpack.c.l.s4 1934713408
  %v5448 = vunpack.c.0.s8 %v5447
  %v5449 = vlaneseq
  %v5450 = vshrl.u32 %v5449, 7
  %v5451 = vsub.s32 %v5448, %v5450
  %v5452 = vrot.slane %v5445, %v5451
  %v5453 = vcombine.high %v5437, 0.0
  %v5454 = vcombine.high %v5444, 0.0
  %v5455 = vcombine.high %v5452, 0.0
  %5457 = vrot.lane.b32.xlu0 %v5419, 14
  %v5458 = vpop.permute.xlu0 %5457
  %5461 = vrot.lane.b32.xlu0 %v5403, 28
  %v5462 = vpop.permute.xlu0 %5461
  %5465 = vrot.lane.b32.xlu0 %v5420, 42
  %v5466 = vpop.permute.xlu0 %5465
  %5469 = vrot.lane.b32.xlu0 %v5411, 56
  %v5470 = vpop.permute.xlu0 %5469
  %5473 = vrot.lane.b32.xlu0 %v5421, 70
  %v5474 = vpop.permute.xlu0 %5473
  %5477 = vrot.lane.b32.xlu0 %v5418, 84
  %v5478 = vpop.permute.xlu0 %5477
  %5481 = vrot.lane.b32.xlu0 %v5422, 98
  %v5482 = vpop.permute.xlu0 %5481
  %5485 = vrot.lane.b32.xlu0 %v5437, 112
  %v5486 = vpop.permute.xlu0 %5485
  %5489 = vrot.lane.b32.xlu0 %v5453, 126
  %v5490 = vpop.permute.xlu0 %5489
  %5493 = vrot.lane.b32.xlu0 %v5444, 12
  %v5494 = vpop.permute.xlu0 %5493
  %5497 = vrot.lane.b32.xlu0 %v5454, 26
  %v5498 = vpop.permute.xlu0 %5497
  %5501 = vrot.lane.b32.xlu0 %v5452, 40
  %v5502 = vpop.permute.xlu0 %5501
  %5505 = vrot.lane.b32.xlu0 %v5455, 54
  %v5506 = vpop.permute.xlu0 %5505
  %v5508 = vsel %vm156, %v5396, %v5458
  %v5509 = vsel %vm158, %v5508, %v5462
  %v5510 = vsel %vm160, %v5509, %v5466
  %v5511 = vsel %vm162, %v5510, %v5470
  %v5512 = vsel %vm164, %v5511, %v5474
  %v5513 = vsel %vm166, %v5512, %v5478
  %v5514 = vsel %vm168, %v5513, %v5482
  %v5515 = vsel %vm170, %v5514, %v5486
  %v5516 = vsel %vm172, %v5515, %v5490
  %v5517 = vsel %vm174, %v5490, %v5494
  %v5518 = vsel %vm176, %v5517, %v5498
  %v5519 = vsel %vm178, %v5518, %v5502
  %v5520 = vsel %vm180, %v5519, %v5506
  %v5523 = vrot.slane %v332, 7
  %v5524 = vrot.slane %v336, 7
  %v5529 = vrot.slane %v485, 6
  %v5530 = vrot.slane %v489, 6
  %v5535 = vrot.slane %v638, 5
  %v5536 = vrot.slane %v642, 5
  %v5541 = vrot.slane %v791, 4
  %v5542 = vrot.slane %v795, 4
  %v5547 = vrot.slane %v944, 3
  %v5548 = vrot.slane %v948, 3
  %v5553 = vrot.slane %v1097, 2
  %v5554 = vrot.slane %v1101, 2
  %v5559 = vrot.slane %v1250, 1
  %v5560 = vrot.slane %v1254, 1
  %v5565 = vrot.slane %v1550, 7
  %v5566 = vrot.slane %v1554, 7
  %v5571 = vrot.slane %v1705, 6
  %v5572 = vrot.slane %v1709, 6
  %v5577 = vrot.slane %v1858, 5
  %v5578 = vrot.slane %v1862, 5
  %v5583 = vrot.slane %v2010, 4
  %v5584 = vrot.slane %v2014, 4
  %v5589 = vrot.slane %v2163, 3
  %v5590 = vrot.slane %v2167, 3
  %v5595 = vrot.slane %v2316, 2
  %v5596 = vrot.slane %v2320, 2
  %v5601 = vrot.slane %v2468, 1
  %v5602 = vrot.slane %v2472, 1
  %vm5605 = vcmask 1040384
  %v5606 = vsel %vm5605, %v173, %v5523
  %v5607 = vsel %vm5605, %v181, %v5524
  %vm5608 = vcmask 1041408
  %v5609 = vsel %vm5608, %v5606, %v5529
  %v5610 = vsel %vm5608, %v5607, %v5530
  %vm5611 = vcmask 1042432
  %v5612 = vsel %vm5611, %v5609, %v5535
  %v5613 = vsel %vm5611, %v5610, %v5536
  %vm5614 = vcmask 1043456
  %v5615 = vsel %vm5614, %v5612, %v5541
  %v5616 = vsel %vm5614, %v5613, %v5542
  %vm5617 = vcmask 1044480
  %v5618 = vsel %vm5617, %v5615, %v5547
  %v5619 = vsel %vm5617, %v5616, %v5548
  %v5620 = vsel %vm949, %v5618, %v5553
  %v5621 = vsel %vm949, %v5619, %v5554
  %v5622 = vsel %vm490, %v5620, %v5559
  %v5623 = vsel %vm490, %v5621, %v5560
  %v5624 = vsel %vm5605, %v1403, %v5565
  %v5625 = vsel %vm5605, %v1407, %v5566
  %v5626 = vsel %vm5608, %v5624, %v5571
  %v5627 = vsel %vm5608, %v5625, %v5572
  %v5628 = vsel %vm5611, %v5626, %v5577
  %v5629 = vsel %vm5611, %v5627, %v5578
  %v5630 = vsel %vm5614, %v5628, %v5583
  %v5631 = vsel %vm5614, %v5629, %v5584
  %v5632 = vsel %vm5617, %v5630, %v5589
  %v5633 = vsel %vm5617, %v5631, %v5590
  %v5634 = vsel %vm949, %v5632, %v5595
  %v5635 = vsel %vm949, %v5633, %v5596
  %v5636 = vsel %vm490, %v5634, %v5601
  %v5637 = vsel %vm490, %v5635, %v5602
  %v5640 = vrot.slane %v2774, 7
  %v5641 = vrot.slane %v2778, 7
  %v5646 = vrot.slane %v2921, 6
  %v5647 = vrot.slane %v2925, 6
  %v5652 = vrot.slane %v3076, 5
  %v5653 = vrot.slane %v3080, 5
  %v5658 = vrot.slane %v3229, 4
  %v5659 = vrot.slane %v3233, 4
  %v5664 = vrot.slane %v3381, 3
  %v5665 = vrot.slane %v3385, 3
  %v5670 = vrot.slane %v3534, 2
  %v5671 = vrot.slane %v3538, 2
  %v5676 = vrot.slane %v3687, 1
  %v5677 = vrot.slane %v3691, 1
  %v5682 = vrot.slane %v3992, 7
  %v5683 = vrot.slane %v3996, 7
  %v5688 = vrot.slane %v4145, 6
  %v5689 = vrot.slane %v4149, 6
  %v5694 = vrot.slane %v4292, 5
  %v5695 = vrot.slane %v4296, 5
  %v5700 = vrot.slane %v4447, 4
  %v5701 = vrot.slane %v4451, 4
  %v5706 = vrot.slane %v4600, 3
  %v5707 = vrot.slane %v4604, 3
  %v5712 = vrot.slane %v4752, 2
  %v5713 = vrot.slane %v4756, 2
  %v5718 = vrot.slane %v4905, 1
  %v5719 = vrot.slane %v4909, 1
  %v5722 = vsel %vm5605, %v2621, %v5640
  %v5723 = vsel %vm5605, %v2625, %v5641
  %v5724 = vsel %vm5608, %v5722, %v5646
  %v5725 = vsel %vm5608, %v5723, %v5647
  %v5726 = vsel %vm5611, %v5724, %v5652
  %v5727 = vsel %vm5611, %v5725, %v5653
  %v5728 = vsel %vm5614, %v5726, %v5658
  %v5729 = vsel %vm5614, %v5727, %v5659
  %v5730 = vsel %vm5617, %v5728, %v5664
  %v5731 = vsel %vm5617, %v5729, %v5665
  %v5732 = vsel %vm949, %v5730, %v5670
  %v5733 = vsel %vm949, %v5731, %v5671
  %v5734 = vsel %vm490, %v5732, %v5676
  %v5735 = vsel %vm490, %v5733, %v5677
  %v5736 = vsel %vm5605, %v3839, %v5682
  %v5737 = vsel %vm5605, %v3843, %v5683
  %v5738 = vsel %vm5608, %v5736, %v5688
  %v5739 = vsel %vm5608, %v5737, %v5689
  %v5740 = vsel %vm5611, %v5738, %v5694
  %v5741 = vsel %vm5611, %v5739, %v5695
  %v5742 = vsel %vm5614, %v5740, %v5700
  %v5743 = vsel %vm5614, %v5741, %v5701
  %v5744 = vsel %vm5617, %v5742, %v5706
  %v5745 = vsel %vm5617, %v5743, %v5707
  %v5746 = vsel %vm949, %v5744, %v5712
  %v5747 = vsel %vm949, %v5745, %v5713
  %v5748 = vsel %vm490, %v5746, %v5718
  %v5749 = vsel %vm490, %v5747, %v5719
  %v5752 = vrot.slane %v5210, 7
  %v5753 = vrot.slane %v5214, 7
  %v5758 = vrot.slane %v5363, 6
  %v5759 = vrot.slane %v5367, 6
  %v5764 = vrot.slane %v5516, 5
  %v5765 = vrot.slane %v5520, 5
  %v5768 = vsel %vm5605, %v5058, %v5752
  %v5769 = vsel %vm5605, %v5062, %v5753
  %v5770 = vsel %vm5608, %v5768, %v5758
  %v5771 = vsel %vm5608, %v5769, %v5759
  %v5772 = vsel %vm5611, %v5770, %v5764
  %v5773 = vsel %vm5611, %v5771, %v5765
  %vm5774 = vcmask 293888
  %v5776 = vsel %vm5774, %v11, 0
  %v5779 = vsel %vm5774, %v12, 0
  %v5782 = vsel %vm5774, %v13, 0
  %v5785 = vsel %vm5614, %v5772, 0
  %v5788 = vsel %vm5614, %v5773, 0
  %5790 = vmatprep.subr.mxu0 %v5623
  %5791 = vmatpush1.msra.mxu0 %v5622
  %5792 = vmatprep.subr.mxu0 %v5637
  %5793 = vmatpush1.msra.mxu0 %v5636
  %5794 = vmatprep.subr.mxu0 %v5735
  %5795 = vmatpush1.msra.mxu0 %v5734
  %5796 = vmatprep.subr.mxu0 %v5749
  %5797 = vmatpush1.msra.mxu0 %v5748
  %5798 = vmatprep.subr.mxu0 %v5788
  %5799 = vmatpush1.msra.mxu0 %v5785
  %5800 = vmatprep.subr.mxu0 0.0
  %5801 = vmatpush1.msra.mxu0 0.0
  %5802 = vmatprep.subr.mxu0 0.0
  %5803 = vmatpush1.msra.mxu0 0.0
  %5804 = vmatprep.subr.mxu0 0.0
  %5805 = vmatpush1.msra.mxu0 0.0
  %5806 = vmatprep.subr.mxu0 0.0
  %5807 = vmatpush1.msra.mxu0 0.0
  %5808 = vmatprep.subr.mxu0 0.0
  %5809 = vmatpush1.msra.mxu0 0.0
  %5810 = vmatprep.subr.mxu0 0.0
  %5811 = vmatpush1.msra.mxu0 0.0
  %5812 = vmatprep.subr.mxu0 0.0
  %5813 = vmatpush1.msra.mxu0 0.0
  %5814 = vmatprep.subr.mxu0 0.0
  %5815 = vmatpush1.msra.mxu0 0.0
  %5816 = vmatprep.subr.mxu0 0.0
  %5817 = vmatpush1.msra.mxu0 0.0
  %5818 = vmatprep.subr.mxu0 0.0
  %5819 = vmatpush1.msra.mxu0 0.0
  %5820 = vmatprep.subr.mxu0 0.0
  %5821 = vmatpush1.msra.mxu0 0.0
  %5822 = vmatprep.subr.mxu0 0.0
  %5823 = vmatpush1.msra.mxu0 0.0
  %5824 = vmatprep.subr.mxu0 0.0
  %5825 = vmatpush1.msra.mxu0 0.0
  %5826 = vmatprep.subr.mxu0 0.0
  %5827 = vmatpush1.msra.mxu0 0.0
  %5828 = vmatprep.subr.mxu0 0.0
  %5829 = vmatpush1.msra.mxu0 0.0
  %5830 = vmatprep.subr.mxu0 0.0
  %5831 = vmatpush1.msra.mxu0 0.0
  %5832 = vmatprep.subr.mxu0 0.0
  %5833 = vmatpush1.msra.mxu0 0.0
  %5834 = vmatprep.subr.mxu0 0.0
  %5835 = vmatpush1.msra.mxu0 0.0
  %5836 = vmatprep.subr.mxu0 0.0
  %5837 = vmatpush1.msra.mxu0 0.0
  %5838 = vmatprep.subr.mxu0 0.0
  %5839 = vmatpush1.msra.mxu0 0.0
  %5840 = vmatprep.subr.mxu0 0.0
  %5841 = vmatpush1.msra.mxu0 0.0
  %5842 = vmatprep.subr.mxu0 0.0
  %5843 = vmatpush1.msra.mxu0 0.0
  %5844 = vmatprep.subr.mxu0 0.0
  %5845 = vmatpush1.msra.mxu0 0.0
  %5846 = vmatprep.subr.mxu0 0.0
  %5847 = vmatpush1.msra.mxu0 0.0
  %5848 = vmatprep.subr.mxu0 0.0
  %5849 = vmatpush1.msra.mxu0 0.0
  %5850 = vmatprep.subr.mxu0 0.0
  %5851 = vmatpush1.msra.mxu0 0.0
  %5852 = vmatprep.subr.mxu0 0.0
  %5853 = vmatpush1.msra.mxu0 0.0
  %5854 = vmatprep.mubr.f32.mxu0 0.0
  %5855 = vmatmul.mubr.f32.gmra.mrb[0].mxu0 %v5776
  %v5856 = vpop.f32.mrb[0].mxu0
  %v5857 = vadd.f32 0.0, %v5856
  %v5858 = vpop.f32.mrb[0].mxu0
  %v5859 = vadd.f32 0.0, %v5858
  %5860 = vmatprep.mubr.f32.mxu0 0.0
  %5861 = vmatmul.mubr.f32.gmra.mrb[0].mxu0 %v5779
  %v5862 = vpop.f32.mrb[0].mxu0
  %v5863 = vadd.f32 0.0, %v5862
  %v5864 = vpop.f32.mrb[0].mxu0
  %v5865 = vadd.f32 0.0, %v5864
  %5866 = vmatprep.mubr.f32.mxu0 0.0
  %5867 = vmatmul.mubr.f32.gmra.mrb[0].mxu0 %v5782
  %v5868 = vpop.f32.mrb[0].mxu0
  %v5869 = vadd.f32 0.0, %v5868
  %v5870 = vpop.f32.mrb[0].mxu0
  %v5871 = vadd.f32 0.0, %v5870
  %5872 = vdwg.mxu0
  %5873 = vst [vmem:[%s2] sm:$0xff] %v5857
  %vm5874 = vcmask 556032
  %5875 = vst.msk [vmem:[%s2 + $0x8] sm:$0xff] %vm5874, %v5859
  %5876 = vst [vmem:[%s2 + $0x10] sm:$0xff] %v5863
  %5877 = vst.msk [vmem:[%s2 + $0x18] sm:$0xff] %vm5874, %v5865
  %5878 = vst [vmem:[%s2 + $0x20] sm:$0xf] %v5869
  %vm5879 = vcmask 551936
  %5880 = vst.msk [vmem:[%s2 + $0x28] sm:$0xf] %vm5879, %v5871
  %s5881 = scalar_lea.vmem %s0, 64
  %v5882 = vld [vmem:[%s5881] sm:$0xff]
  %v5883 = vld [vmem:[%s5881 + $0x8] sm:$0xff]
  %v5884 = vld [vmem:[%s5881 + $0x10] sm:$0xff]
  %v5885 = vld [vmem:[%s5881 + $0x18] sm:$0xff]
  %v5886 = vld [vmem:[%s5881 + $0x20] sm:$0xff]
  %v5887 = vld [vmem:[%s5881 + $0x28] sm:$0xff]
  %v5888 = vld [vmem:[%s5881 + $0x30] sm:$0xff]
  %v5889 = vld [vmem:[%s5881 + $0x38] sm:$0xff]
  %v5890 = vcombine.high %v5882, 0.0
  %v5892 = vunpack.c.l.s4 1983009808
  %v5893 = vunpack.c.0.s8 %v5892
  %v5894 = vlaneseq
  %v5895 = vshrl.u32 %v5894, 7
  %v5896 = vsub.s32 %v5893, %v5895
  %v5897 = vrot.slane %v5882, %v5896
  %v5899 = vunpack.c.l.s4 1983009808
  %v5900 = vunpack.c.0.s8 %v5899
  %v5901 = vlaneseq
  %v5902 = vshrl.u32 %v5901, 7
  %v5903 = vsub.s32 %v5900, %v5902
  %v5904 = vrot.slane %v5890, %v5903
  %v5905 = vcombine.high %v5897, 0.0
  %v5907 = vunpack.c.l.s4 1934713408
  %v5908 = vunpack.c.0.s8 %v5907
  %v5909 = vlaneseq
  %v5910 = vshrl.u32 %v5909, 7
  %v5911 = vsub.s32 %v5908, %v5910
  %v5912 = vrot.slane %v5897, %v5911
  %v5914 = vunpack.c.l.s4 1934713408
  %v5915 = vunpack.c.0.s8 %v5914
  %v5916 = vlaneseq
  %v5917 = vshrl.u32 %v5916, 7
  %v5918 = vsub.s32 %v5915, %v5917
  %v5919 = vrot.slane %v5905, %v5918
  %v5920 = vcombine.high %v5904, 0.0
  %v5922 = vunpack.c.l.s4 1934713408
  %v5923 = vunpack.c.0.s8 %v5922
  %v5924 = vlaneseq
  %v5925 = vshrl.u32 %v5924, 7
  %v5926 = vsub.s32 %v5923, %v5925
  %v5927 = vrot.slane %v5904, %v5926
  %v5929 = vunpack.c.l.s4 1934713408
  %v5930 = vunpack.c.0.s8 %v5929
  %v5931 = vlaneseq
  %v5932 = vshrl.u32 %v5931, 7
  %v5933 = vsub.s32 %v5930, %v5932
  %v5934 = vrot.slane %v5920, %v5933
  %v5935 = vcombine.high %v5912, 0.0
  %v5936 = vcombine.high %v5919, 0.0
  %v5937 = vcombine.high %v5927, 0.0
  %v5938 = vcombine.high %v5934, 0.0
  %v5940 = vunpack.c.l.s4 1983009808
  %v5941 = vunpack.c.0.s8 %v5940
  %v5942 = vlaneseq
  %v5943 = vshrl.u32 %v5942, 7
  %v5944 = vsub.s32 %v5941, %v5943
  %v5945 = vrot.slane %v5883, %v5944
  %v5946 = vcombine.high %v5945, 0.0
  %v5948 = vunpack.c.l.s4 1934713408
  %v5949 = vunpack.c.0.s8 %v5948
  %v5950 = vlaneseq
  %v5951 = vshrl.u32 %v5950, 7
  %v5952 = vsub.s32 %v5949, %v5951
  %v5953 = vrot.slane %v5945, %v5952
  %v5955 = vunpack.c.l.s4 1934713408
  %v5956 = vunpack.c.0.s8 %v5955
  %v5957 = vlaneseq
  %v5958 = vshrl.u32 %v5957, 7
  %v5959 = vsub.s32 %v5956, %v5958
  %v5960 = vrot.slane %v5946, %v5959
  %v5961 = vcombine.high %v5883, 0.0
  %v5963 = vunpack.c.l.s4 1934713408
  %v5964 = vunpack.c.0.s8 %v5963
  %v5965 = vlaneseq
  %v5966 = vshrl.u32 %v5965, 7
  %v5967 = vsub.s32 %v5964, %v5966
  %v5968 = vrot.slane %v5961, %v5967
  %v5969 = vcombine.high %v5953, 0.0
  %v5970 = vcombine.high %v5960, 0.0
  %v5971 = vcombine.high %v5968, 0.0
  %5973 = vrot.lane.b32.xlu0 %v5935, 14
  %v5974 = vpop.permute.xlu0 %5973
  %5977 = vrot.lane.b32.xlu0 %v5919, 28
  %v5978 = vpop.permute.xlu0 %5977
  %5981 = vrot.lane.b32.xlu0 %v5936, 42
  %v5982 = vpop.permute.xlu0 %5981
  %5985 = vrot.lane.b32.xlu0 %v5927, 56
  %v5986 = vpop.permute.xlu0 %5985
  %5989 = vrot.lane.b32.xlu0 %v5937, 70
  %v5990 = vpop.permute.xlu0 %5989
  %5993 = vrot.lane.b32.xlu0 %v5934, 84
  %v5994 = vpop.permute.xlu0 %5993
  %5997 = vrot.lane.b32.xlu0 %v5938, 98
  %v5998 = vpop.permute.xlu0 %5997
  %6001 = vrot.lane.b32.xlu0 %v5953, 112
  %v6002 = vpop.permute.xlu0 %6001
  %6005 = vrot.lane.b32.xlu0 %v5969, 126
  %v6006 = vpop.permute.xlu0 %6005
  %6009 = vrot.lane.b32.xlu0 %v5960, 12
  %v6010 = vpop.permute.xlu0 %6009
  %6013 = vrot.lane.b32.xlu0 %v5970, 26
  %v6014 = vpop.permute.xlu0 %6013
  %6017 = vrot.lane.b32.xlu0 %v5968, 40
  %v6018 = vpop.permute.xlu0 %6017
  %6021 = vrot.lane.b32.xlu0 %v5971, 54
  %v6022 = vpop.permute.xlu0 %6021
  %v6024 = vsel %vm156, %v5912, %v5974
  %v6025 = vsel %vm158, %v6024, %v5978
  %v6026 = vsel %vm160, %v6025, %v5982
  %v6027 = vsel %vm162, %v6026, %v5986
  %v6028 = vsel %vm164, %v6027, %v5990
  %v6029 = vsel %vm166, %v6028, %v5994
  %v6030 = vsel %vm168, %v6029, %v5998
  %v6031 = vsel %vm170, %v6030, %v6002
  %v6032 = vsel %vm172, %v6031, %v6006
  %v6033 = vsel %vm174, %v6006, %v6010
  %v6034 = vsel %vm176, %v6033, %v6014
  %v6035 = vsel %vm178, %v6034, %v6018
  %v6036 = vsel %vm180, %v6035, %v6022
  %6039 = vrot.lane.b32.xlu0 %v5882, 127
  %v6040 = vpop.permute.xlu0 %6039
  %6041 = vrot.lane.b32.xlu0 %v5883, 127
  %v6042 = vpop.permute.xlu0 %6041
  %v6045 = vcombine.high %v6040, 0.0
  %v6047 = vunpack.c.l.s4 1983009808
  %v6048 = vunpack.c.0.s8 %v6047
  %v6049 = vlaneseq
  %v6050 = vshrl.u32 %v6049, 7
  %v6051 = vsub.s32 %v6048, %v6050
  %v6052 = vrot.slane %v6040, %v6051
  %v6054 = vunpack.c.l.s4 1983009808
  %v6055 = vunpack.c.0.s8 %v6054
  %v6056 = vlaneseq
  %v6057 = vshrl.u32 %v6056, 7
  %v6058 = vsub.s32 %v6055, %v6057
  %v6059 = vrot.slane %v6045, %v6058
  %v6060 = vcombine.high %v6052, 0.0
  %v6062 = vunpack.c.l.s4 1934713408
  %v6063 = vunpack.c.0.s8 %v6062
  %v6064 = vlaneseq
  %v6065 = vshrl.u32 %v6064, 7
  %v6066 = vsub.s32 %v6063, %v6065
  %v6067 = vrot.slane %v6052, %v6066
  %v6069 = vunpack.c.l.s4 1934713408
  %v6070 = vunpack.c.0.s8 %v6069
  %v6071 = vlaneseq
  %v6072 = vshrl.u32 %v6071, 7
  %v6073 = vsub.s32 %v6070, %v6072
  %v6074 = vrot.slane %v6060, %v6073
  %v6075 = vcombine.high %v6059, 0.0
  %v6077 = vunpack.c.l.s4 1934713408
  %v6078 = vunpack.c.0.s8 %v6077
  %v6079 = vlaneseq
  %v6080 = vshrl.u32 %v6079, 7
  %v6081 = vsub.s32 %v6078, %v6080
  %v6082 = vrot.slane %v6059, %v6081
  %v6084 = vunpack.c.l.s4 1934713408
  %v6085 = vunpack.c.0.s8 %v6084
  %v6086 = vlaneseq
  %v6087 = vshrl.u32 %v6086, 7
  %v6088 = vsub.s32 %v6085, %v6087
  %v6089 = vrot.slane %v6075, %v6088
  %v6090 = vcombine.high %v6067, 0.0
  %v6091 = vcombine.high %v6074, 0.0
  %v6092 = vcombine.high %v6082, 0.0
  %v6093 = vcombine.high %v6089, 0.0
  %v6095 = vunpack.c.l.s4 1983009808
  %v6096 = vunpack.c.0.s8 %v6095
  %v6097 = vlaneseq
  %v6098 = vshrl.u32 %v6097, 7
  %v6099 = vsub.s32 %v6096, %v6098
  %v6100 = vrot.slane %v6042, %v6099
  %v6101 = vcombine.high %v6100, 0.0
  %v6103 = vunpack.c.l.s4 1934713408
  %v6104 = vunpack.c.0.s8 %v6103
  %v6105 = vlaneseq
  %v6106 = vshrl.u32 %v6105, 7
  %v6107 = vsub.s32 %v6104, %v6106
  %v6108 = vrot.slane %v6100, %v6107
  %v6110 = vunpack.c.l.s4 1934713408
  %v6111 = vunpack.c.0.s8 %v6110
  %v6112 = vlaneseq
  %v6113 = vshrl.u32 %v6112, 7
  %v6114 = vsub.s32 %v6111, %v6113
  %v6115 = vrot.slane %v6101, %v6114
  %v6116 = vcombine.high %v6042, 0.0
  %v6118 = vunpack.c.l.s4 1934713408
  %v6119 = vunpack.c.0.s8 %v6118
  %v6120 = vlaneseq
  %v6121 = vshrl.u32 %v6120, 7
  %v6122 = vsub.s32 %v6119, %v6121
  %v6123 = vrot.slane %v6116, %v6122
  %v6124 = vcombine.high %v6108, 0.0
  %v6125 = vcombine.high %v6115, 0.0
  %v6126 = vcombine.high %v6123, 0.0
  %6128 = vrot.lane.b32.xlu0 %v6090, 14
  %v6129 = vpop.permute.xlu0 %6128
  %6132 = vrot.lane.b32.xlu0 %v6074, 28
  %v6133 = vpop.permute.xlu0 %6132
  %6136 = vrot.lane.b32.xlu0 %v6091, 42
  %v6137 = vpop.permute.xlu0 %6136
  %6140 = vrot.lane.b32.xlu0 %v6082, 56
  %v6141 = vpop.permute.xlu0 %6140
  %6144 = vrot.lane.b32.xlu0 %v6092, 70
  %v6145 = vpop.permute.xlu0 %6144
  %6148 = vrot.lane.b32.xlu0 %v6089, 84
  %v6149 = vpop.permute.xlu0 %6148
  %6152 = vrot.lane.b32.xlu0 %v6093, 98
  %v6153 = vpop.permute.xlu0 %6152
  %6156 = vrot.lane.b32.xlu0 %v6108, 112
  %v6157 = vpop.permute.xlu0 %6156
  %6160 = vrot.lane.b32.xlu0 %v6124, 126
  %v6161 = vpop.permute.xlu0 %6160
  %6164 = vrot.lane.b32.xlu0 %v6115, 12
  %v6165 = vpop.permute.xlu0 %6164
  %6168 = vrot.lane.b32.xlu0 %v6125, 26
  %v6169 = vpop.permute.xlu0 %6168
  %6172 = vrot.lane.b32.xlu0 %v6123, 40
  %v6173 = vpop.permute.xlu0 %6172
  %6176 = vrot.lane.b32.xlu0 %v6126, 54
  %v6177 = vpop.permute.xlu0 %6176
  %v6179 = vsel %vm156, %v6067, %v6129
  %v6180 = vsel %vm158, %v6179, %v6133
  %v6181 = vsel %vm160, %v6180, %v6137
  %v6182 = vsel %vm162, %v6181, %v6141
  %v6183 = vsel %vm164, %v6182, %v6145
  %v6184 = vsel %vm166, %v6183, %v6149
  %v6185 = vsel %vm168, %v6184, %v6153
  %v6186 = vsel %vm170, %v6185, %v6157
  %v6187 = vsel %vm172, %v6186, %v6161
  %v6188 = vsel %vm174, %v6161, %v6165
  %v6189 = vsel %vm176, %v6188, %v6169
  %v6190 = vsel %vm178, %v6189, %v6173
  %v6191 = vsel %vm180, %v6190, %v6177
  %6192 = vrot.lane.b32.xlu0 %v5882, 126
  %v6193 = vpop.permute.xlu0 %6192
  %6194 = vrot.lane.b32.xlu0 %v5883, 126
  %v6195 = vpop.permute.xlu0 %6194
  %v6198 = vcombine.high %v6193, 0.0
  %v6200 = vunpack.c.l.s4 1983009808
  %v6201 = vunpack.c.0.s8 %v6200
  %v6202 = vlaneseq
  %v6203 = vshrl.u32 %v6202, 7
  %v6204 = vsub.s32 %v6201, %v6203
  %v6205 = vrot.slane %v6193, %v6204
  %v6207 = vunpack.c.l.s4 1983009808
  %v6208 = vunpack.c.0.s8 %v6207
  %v6209 = vlaneseq
  %v6210 = vshrl.u32 %v6209, 7
  %v6211 = vsub.s32 %v6208, %v6210
  %v6212 = vrot.slane %v6198, %v6211
  %v6213 = vcombine.high %v6205, 0.0
  %v6215 = vunpack.c.l.s4 1934713408
  %v6216 = vunpack.c.0.s8 %v6215
  %v6217 = vlaneseq
  %v6218 = vshrl.u32 %v6217, 7
  %v6219 = vsub.s32 %v6216, %v6218
  %v6220 = vrot.slane %v6205, %v6219
  %v6222 = vunpack.c.l.s4 1934713408
  %v6223 = vunpack.c.0.s8 %v6222
  %v6224 = vlaneseq
  %v6225 = vshrl.u32 %v6224, 7
  %v6226 = vsub.s32 %v6223, %v6225
  %v6227 = vrot.slane %v6213, %v6226
  %v6228 = vcombine.high %v6212, 0.0
  %v6230 = vunpack.c.l.s4 1934713408
  %v6231 = vunpack.c.0.s8 %v6230
  %v6232 = vlaneseq
  %v6233 = vshrl.u32 %v6232, 7
  %v6234 = vsub.s32 %v6231, %v6233
  %v6235 = vrot.slane %v6212, %v6234
  %v6237 = vunpack.c.l.s4 1934713408
  %v6238 = vunpack.c.0.s8 %v6237
  %v6239 = vlaneseq
  %v6240 = vshrl.u32 %v6239, 7
  %v6241 = vsub.s32 %v6238, %v6240
  %v6242 = vrot.slane %v6228, %v6241
  %v6243 = vcombine.high %v6220, 0.0
  %v6244 = vcombine.high %v6227, 0.0
  %v6245 = vcombine.high %v6235, 0.0
  %v6246 = vcombine.high %v6242, 0.0
  %v6248 = vunpack.c.l.s4 1983009808
  %v6249 = vunpack.c.0.s8 %v6248
  %v6250 = vlaneseq
  %v6251 = vshrl.u32 %v6250, 7
  %v6252 = vsub.s32 %v6249, %v6251
  %v6253 = vrot.slane %v6195, %v6252
  %v6254 = vcombine.high %v6253, 0.0
  %v6256 = vunpack.c.l.s4 1934713408
  %v6257 = vunpack.c.0.s8 %v6256
  %v6258 = vlaneseq
  %v6259 = vshrl.u32 %v6258, 7
  %v6260 = vsub.s32 %v6257, %v6259
  %v6261 = vrot.slane %v6253, %v6260
  %v6263 = vunpack.c.l.s4 1934713408
  %v6264 = vunpack.c.0.s8 %v6263
  %v6265 = vlaneseq
  %v6266 = vshrl.u32 %v6265, 7
  %v6267 = vsub.s32 %v6264, %v6266
  %v6268 = vrot.slane %v6254, %v6267
  %v6269 = vcombine.high %v6195, 0.0
  %v6271 = vunpack.c.l.s4 1934713408
  %v6272 = vunpack.c.0.s8 %v6271
  %v6273 = vlaneseq
  %v6274 = vshrl.u32 %v6273, 7
  %v6275 = vsub.s32 %v6272, %v6274
  %v6276 = vrot.slane %v6269, %v6275
  %v6277 = vcombine.high %v6261, 0.0
  %v6278 = vcombine.high %v6268, 0.0
  %v6279 = vcombine.high %v6276, 0.0
  %6281 = vrot.lane.b32.xlu0 %v6243, 14
  %v6282 = vpop.permute.xlu0 %6281
  %6285 = vrot.lane.b32.xlu0 %v6227, 28
  %v6286 = vpop.permute.xlu0 %6285
  %6289 = vrot.lane.b32.xlu0 %v6244, 42
  %v6290 = vpop.permute.xlu0 %6289
  %6293 = vrot.lane.b32.xlu0 %v6235, 56
  %v6294 = vpop.permute.xlu0 %6293
  %6297 = vrot.lane.b32.xlu0 %v6245, 70
  %v6298 = vpop.permute.xlu0 %6297
  %6301 = vrot.lane.b32.xlu0 %v6242, 84
  %v6302 = vpop.permute.xlu0 %6301
  %6305 = vrot.lane.b32.xlu0 %v6246, 98
  %v6306 = vpop.permute.xlu0 %6305
  %6309 = vrot.lane.b32.xlu0 %v6261, 112
  %v6310 = vpop.permute.xlu0 %6309
  %6313 = vrot.lane.b32.xlu0 %v6277, 126
  %v6314 = vpop.permute.xlu0 %6313
  %6317 = vrot.lane.b32.xlu0 %v6268, 12
  %v6318 = vpop.permute.xlu0 %6317
  %6321 = vrot.lane.b32.xlu0 %v6278, 26
  %v6322 = vpop.permute.xlu0 %6321
  %6325 = vrot.lane.b32.xlu0 %v6276, 40
  %v6326 = vpop.permute.xlu0 %6325
  %6329 = vrot.lane.b32.xlu0 %v6279, 54
  %v6330 = vpop.permute.xlu0 %6329
  %v6332 = vsel %vm156, %v6220, %v6282
  %v6333 = vsel %vm158, %v6332, %v6286
  %v6334 = vsel %vm160, %v6333, %v6290
  %v6335 = vsel %vm162, %v6334, %v6294
  %v6336 = vsel %vm164, %v6335, %v6298
  %v6337 = vsel %vm166, %v6336, %v6302
  %v6338 = vsel %vm168, %v6337, %v6306
  %v6339 = vsel %vm170, %v6338, %v6310
  %v6340 = vsel %vm172, %v6339, %v6314
  %v6341 = vsel %vm174, %v6314, %v6318
  %v6342 = vsel %vm176, %v6341, %v6322
  %v6343 = vsel %vm178, %v6342, %v6326
  %v6344 = vsel %vm180, %v6343, %v6330
  %v6345 = vrot.slane %v5882, 1
  %v6346 = vrot.slane %v5883, 1
  %v6347 = vsel %vm490, %v6345, %v6346
  %v6350 = vcombine.high %v6347, 0.0
  %v6352 = vunpack.c.l.s4 1983009808
  %v6353 = vunpack.c.0.s8 %v6352
  %v6354 = vlaneseq
  %v6355 = vshrl.u32 %v6354, 7
  %v6356 = vsub.s32 %v6353, %v6355
  %v6357 = vrot.slane %v6347, %v6356
  %v6359 = vunpack.c.l.s4 1983009808
  %v6360 = vunpack.c.0.s8 %v6359
  %v6361 = vlaneseq
  %v6362 = vshrl.u32 %v6361, 7
  %v6363 = vsub.s32 %v6360, %v6362
  %v6364 = vrot.slane %v6350, %v6363
  %v6365 = vcombine.high %v6357, 0.0
  %v6367 = vunpack.c.l.s4 1934713408
  %v6368 = vunpack.c.0.s8 %v6367
  %v6369 = vlaneseq
  %v6370 = vshrl.u32 %v6369, 7
  %v6371 = vsub.s32 %v6368, %v6370
  %v6372 = vrot.slane %v6357, %v6371
  %v6374 = vunpack.c.l.s4 1934713408
  %v6375 = vunpack.c.0.s8 %v6374
  %v6376 = vlaneseq
  %v6377 = vshrl.u32 %v6376, 7
  %v6378 = vsub.s32 %v6375, %v6377
  %v6379 = vrot.slane %v6365, %v6378
  %v6380 = vcombine.high %v6364, 0.0
  %v6382 = vunpack.c.l.s4 1934713408
  %v6383 = vunpack.c.0.s8 %v6382
  %v6384 = vlaneseq
  %v6385 = vshrl.u32 %v6384, 7
  %v6386 = vsub.s32 %v6383, %v6385
  %v6387 = vrot.slane %v6364, %v6386
  %v6389 = vunpack.c.l.s4 1934713408
  %v6390 = vunpack.c.0.s8 %v6389
  %v6391 = vlaneseq
  %v6392 = vshrl.u32 %v6391, 7
  %v6393 = vsub.s32 %v6390, %v6392
  %v6394 = vrot.slane %v6380, %v6393
  %v6395 = vcombine.high %v6372, 0.0
  %v6396 = vcombine.high %v6379, 0.0
  %v6397 = vcombine.high %v6387, 0.0
  %v6398 = vcombine.high %v6394, 0.0
  %v6400 = vunpack.c.l.s4 1983009808
  %v6401 = vunpack.c.0.s8 %v6400
  %v6402 = vlaneseq
  %v6403 = vshrl.u32 %v6402, 7
  %v6404 = vsub.s32 %v6401, %v6403
  %v6405 = vrot.slane %v6346, %v6404
  %v6406 = vcombine.high %v6405, 0.0
  %v6408 = vunpack.c.l.s4 1934713408
  %v6409 = vunpack.c.0.s8 %v6408
  %v6410 = vlaneseq
  %v6411 = vshrl.u32 %v6410, 7
  %v6412 = vsub.s32 %v6409, %v6411
  %v6413 = vrot.slane %v6405, %v6412
  %v6415 = vunpack.c.l.s4 1934713408
  %v6416 = vunpack.c.0.s8 %v6415
  %v6417 = vlaneseq
  %v6418 = vshrl.u32 %v6417, 7
  %v6419 = vsub.s32 %v6416, %v6418
  %v6420 = vrot.slane %v6406, %v6419
  %v6421 = vcombine.high %v6346, 0.0
  %v6423 = vunpack.c.l.s4 1934713408
  %v6424 = vunpack.c.0.s8 %v6423
  %v6425 = vlaneseq
  %v6426 = vshrl.u32 %v6425, 7
  %v6427 = vsub.s32 %v6424, %v6426
  %v6428 = vrot.slane %v6421, %v6427
  %v6429 = vcombine.high %v6413, 0.0
  %v6430 = vcombine.high %v6420, 0.0
  %v6431 = vcombine.high %v6428, 0.0
  %6433 = vrot.lane.b32.xlu0 %v6395, 14
  %v6434 = vpop.permute.xlu0 %6433
  %6437 = vrot.lane.b32.xlu0 %v6379, 28
  %v6438 = vpop.permute.xlu0 %6437
  %6441 = vrot.lane.b32.xlu0 %v6396, 42
  %v6442 = vpop.permute.xlu0 %6441
  %6445 = vrot.lane.b32.xlu0 %v6387, 56
  %v6446 = vpop.permute.xlu0 %6445
  %6449 = vrot.lane.b32.xlu0 %v6397, 70
  %v6450 = vpop.permute.xlu0 %6449
  %6453 = vrot.lane.b32.xlu0 %v6394, 84
  %v6454 = vpop.permute.xlu0 %6453
  %6457 = vrot.lane.b32.xlu0 %v6398, 98
  %v6458 = vpop.permute.xlu0 %6457
  %6461 = vrot.lane.b32.xlu0 %v6413, 112
  %v6462 = vpop.permute.xlu0 %6461
  %6465 = vrot.lane.b32.xlu0 %v6429, 126
  %v6466 = vpop.permute.xlu0 %6465
  %6469 = vrot.lane.b32.xlu0 %v6420, 12
  %v6470 = vpop.permute.xlu0 %6469
  %6473 = vrot.lane.b32.xlu0 %v6430, 26
  %v6474 = vpop.permute.xlu0 %6473
  %6477 = vrot.lane.b32.xlu0 %v6428, 40
  %v6478 = vpop.permute.xlu0 %6477
  %6481 = vrot.lane.b32.xlu0 %v6431, 54
  %v6482 = vpop.permute.xlu0 %6481
  %v6484 = vsel %vm156, %v6372, %v6434
  %v6485 = vsel %vm158, %v6484, %v6438
  %v6486 = vsel %vm160, %v6485, %v6442
  %v6487 = vsel %vm162, %v6486, %v6446
  %v6488 = vsel %vm164, %v6487, %v6450
  %v6489 = vsel %vm166, %v6488, %v6454
  %v6490 = vsel %vm168, %v6489, %v6458
  %v6491 = vsel %vm170, %v6490, %v6462
  %v6492 = vsel %vm172, %v6491, %v6466
  %v6493 = vsel %vm174, %v6466, %v6470
  %v6494 = vsel %vm176, %v6493, %v6474
  %v6495 = vsel %vm178, %v6494, %v6478
  %v6496 = vsel %vm180, %v6495, %v6482
  %6497 = vrot.lane.b32.xlu0 %v6347, 127
  %v6498 = vpop.permute.xlu0 %6497
  %6499 = vrot.lane.b32.xlu0 %v6346, 127
  %v6500 = vpop.permute.xlu0 %6499
  %v6503 = vcombine.high %v6498, 0.0
  %v6505 = vunpack.c.l.s4 1983009808
  %v6506 = vunpack.c.0.s8 %v6505
  %v6507 = vlaneseq
  %v6508 = vshrl.u32 %v6507, 7
  %v6509 = vsub.s32 %v6506, %v6508
  %v6510 = vrot.slane %v6498, %v6509
  %v6512 = vunpack.c.l.s4 1983009808
  %v6513 = vunpack.c.0.s8 %v6512
  %v6514 = vlaneseq
  %v6515 = vshrl.u32 %v6514, 7
  %v6516 = vsub.s32 %v6513, %v6515
  %v6517 = vrot.slane %v6503, %v6516
  %v6518 = vcombine.high %v6510, 0.0
  %v6520 = vunpack.c.l.s4 1934713408
  %v6521 = vunpack.c.0.s8 %v6520
  %v6522 = vlaneseq
  %v6523 = vshrl.u32 %v6522, 7
  %v6524 = vsub.s32 %v6521, %v6523
  %v6525 = vrot.slane %v6510, %v6524
  %v6527 = vunpack.c.l.s4 1934713408
  %v6528 = vunpack.c.0.s8 %v6527
  %v6529 = vlaneseq
  %v6530 = vshrl.u32 %v6529, 7
  %v6531 = vsub.s32 %v6528, %v6530
  %v6532 = vrot.slane %v6518, %v6531
  %v6533 = vcombine.high %v6517, 0.0
  %v6535 = vunpack.c.l.s4 1934713408
  %v6536 = vunpack.c.0.s8 %v6535
  %v6537 = vlaneseq
  %v6538 = vshrl.u32 %v6537, 7
  %v6539 = vsub.s32 %v6536, %v6538
  %v6540 = vrot.slane %v6517, %v6539
  %v6542 = vunpack.c.l.s4 1934713408
  %v6543 = vunpack.c.0.s8 %v6542
  %v6544 = vlaneseq
  %v6545 = vshrl.u32 %v6544, 7
  %v6546 = vsub.s32 %v6543, %v6545
  %v6547 = vrot.slane %v6533, %v6546
  %v6548 = vcombine.high %v6525, 0.0
  %v6549 = vcombine.high %v6532, 0.0
  %v6550 = vcombine.high %v6540, 0.0
  %v6551 = vcombine.high %v6547, 0.0
  %v6553 = vunpack.c.l.s4 1983009808
  %v6554 = vunpack.c.0.s8 %v6553
  %v6555 = vlaneseq
  %v6556 = vshrl.u32 %v6555, 7
  %v6557 = vsub.s32 %v6554, %v6556
  %v6558 = vrot.slane %v6500, %v6557
  %v6559 = vcombine.high %v6558, 0.0
  %v6561 = vunpack.c.l.s4 1934713408
  %v6562 = vunpack.c.0.s8 %v6561
  %v6563 = vlaneseq
  %v6564 = vshrl.u32 %v6563, 7
  %v6565 = vsub.s32 %v6562, %v6564
  %v6566 = vrot.slane %v6558, %v6565
  %v6568 = vunpack.c.l.s4 1934713408
  %v6569 = vunpack.c.0.s8 %v6568
  %v6570 = vlaneseq
  %v6571 = vshrl.u32 %v6570, 7
  %v6572 = vsub.s32 %v6569, %v6571
  %v6573 = vrot.slane %v6559, %v6572
  %v6574 = vcombine.high %v6500, 0.0
  %v6576 = vunpack.c.l.s4 1934713408
  %v6577 = vunpack.c.0.s8 %v6576
  %v6578 = vlaneseq
  %v6579 = vshrl.u32 %v6578, 7
  %v6580 = vsub.s32 %v6577, %v6579
  %v6581 = vrot.slane %v6574, %v6580
  %v6582 = vcombine.high %v6566, 0.0
  %v6583 = vcombine.high %v6573, 0.0
  %v6584 = vcombine.high %v6581, 0.0
  %6586 = vrot.lane.b32.xlu0 %v6548, 14
  %v6587 = vpop.permute.xlu0 %6586
  %6590 = vrot.lane.b32.xlu0 %v6532, 28
  %v6591 = vpop.permute.xlu0 %6590
  %6594 = vrot.lane.b32.xlu0 %v6549, 42
  %v6595 = vpop.permute.xlu0 %6594
  %6598 = vrot.lane.b32.xlu0 %v6540, 56
  %v6599 = vpop.permute.xlu0 %6598
  %6602 = vrot.lane.b32.xlu0 %v6550, 70
  %v6603 = vpop.permute.xlu0 %6602
  %6606 = vrot.lane.b32.xlu0 %v6547, 84
  %v6607 = vpop.permute.xlu0 %6606
  %6610 = vrot.lane.b32.xlu0 %v6551, 98
  %v6611 = vpop.permute.xlu0 %6610
  %6614 = vrot.lane.b32.xlu0 %v6566, 112
  %v6615 = vpop.permute.xlu0 %6614
  %6618 = vrot.lane.b32.xlu0 %v6582, 126
  %v6619 = vpop.permute.xlu0 %6618
  %6622 = vrot.lane.b32.xlu0 %v6573, 12
  %v6623 = vpop.permute.xlu0 %6622
  %6626 = vrot.lane.b32.xlu0 %v6583, 26
  %v6627 = vpop.permute.xlu0 %6626
  %6630 = vrot.lane.b32.xlu0 %v6581, 40
  %v6631 = vpop.permute.xlu0 %6630
  %6634 = vrot.lane.b32.xlu0 %v6584, 54
  %v6635 = vpop.permute.xlu0 %6634
  %v6637 = vsel %vm156, %v6525, %v6587
  %v6638 = vsel %vm158, %v6637, %v6591
  %v6639 = vsel %vm160, %v6638, %v6595
  %v6640 = vsel %vm162, %v6639, %v6599
  %v6641 = vsel %vm164, %v6640, %v6603
  %v6642 = vsel %vm166, %v6641, %v6607
  %v6643 = vsel %vm168, %v6642, %v6611
  %v6644 = vsel %vm170, %v6643, %v6615
  %v6645 = vsel %vm172, %v6644, %v6619
  %v6646 = vsel %vm174, %v6619, %v6623
  %v6647 = vsel %vm176, %v6646, %v6627
  %v6648 = vsel %vm178, %v6647, %v6631
  %v6649 = vsel %vm180, %v6648, %v6635
  %6650 = vrot.lane.b32.xlu0 %v6347, 126
  %v6651 = vpop.permute.xlu0 %6650
  %6652 = vrot.lane.b32.xlu0 %v6346, 126
  %v6653 = vpop.permute.xlu0 %6652
  %v6656 = vcombine.high %v6651, 0.0
  %v6658 = vunpack.c.l.s4 1983009808
  %v6659 = vunpack.c.0.s8 %v6658
  %v6660 = vlaneseq
  %v6661 = vshrl.u32 %v6660, 7
  %v6662 = vsub.s32 %v6659, %v6661
  %v6663 = vrot.slane %v6651, %v6662
  %v6665 = vunpack.c.l.s4 1983009808
  %v6666 = vunpack.c.0.s8 %v6665
  %v6667 = vlaneseq
  %v6668 = vshrl.u32 %v6667, 7
  %v6669 = vsub.s32 %v6666, %v6668
  %v6670 = vrot.slane %v6656, %v6669
  %v6671 = vcombine.high %v6663, 0.0
  %v6673 = vunpack.c.l.s4 1934713408
  %v6674 = vunpack.c.0.s8 %v6673
  %v6675 = vlaneseq
  %v6676 = vshrl.u32 %v6675, 7
  %v6677 = vsub.s32 %v6674, %v6676
  %v6678 = vrot.slane %v6663, %v6677
  %v6680 = vunpack.c.l.s4 1934713408
  %v6681 = vunpack.c.0.s8 %v6680
  %v6682 = vlaneseq
  %v6683 = vshrl.u32 %v6682, 7
  %v6684 = vsub.s32 %v6681, %v6683
  %v6685 = vrot.slane %v6671, %v6684
  %v6686 = vcombine.high %v6670, 0.0
  %v6688 = vunpack.c.l.s4 1934713408
  %v6689 = vunpack.c.0.s8 %v6688
  %v6690 = vlaneseq
  %v6691 = vshrl.u32 %v6690, 7
  %v6692 = vsub.s32 %v6689, %v6691
  %v6693 = vrot.slane %v6670, %v6692
  %v6695 = vunpack.c.l.s4 1934713408
  %v6696 = vunpack.c.0.s8 %v6695
  %v6697 = vlaneseq
  %v6698 = vshrl.u32 %v6697, 7
  %v6699 = vsub.s32 %v6696, %v6698
  %v6700 = vrot.slane %v6686, %v6699
  %v6701 = vcombine.high %v6678, 0.0
  %v6702 = vcombine.high %v6685, 0.0
  %v6703 = vcombine.high %v6693, 0.0
  %v6704 = vcombine.high %v6700, 0.0
  %v6706 = vunpack.c.l.s4 1983009808
  %v6707 = vunpack.c.0.s8 %v6706
  %v6708 = vlaneseq
  %v6709 = vshrl.u32 %v6708, 7
  %v6710 = vsub.s32 %v6707, %v6709
  %v6711 = vrot.slane %v6653, %v6710
  %v6712 = vcombine.high %v6711, 0.0
  %v6714 = vunpack.c.l.s4 1934713408
  %v6715 = vunpack.c.0.s8 %v6714
  %v6716 = vlaneseq
  %v6717 = vshrl.u32 %v6716, 7
  %v6718 = vsub.s32 %v6715, %v6717
  %v6719 = vrot.slane %v6711, %v6718
  %v6721 = vunpack.c.l.s4 1934713408
  %v6722 = vunpack.c.0.s8 %v6721
  %v6723 = vlaneseq
  %v6724 = vshrl.u32 %v6723, 7
  %v6725 = vsub.s32 %v6722, %v6724
  %v6726 = vrot.slane %v6712, %v6725
  %v6727 = vcombine.high %v6653, 0.0
  %v6729 = vunpack.c.l.s4 1934713408
  %v6730 = vunpack.c.0.s8 %v6729
  %v6731 = vlaneseq
  %v6732 = vshrl.u32 %v6731, 7
  %v6733 = vsub.s32 %v6730, %v6732
  %v6734 = vrot.slane %v6727, %v6733
  %v6735 = vcombine.high %v6719, 0.0
  %v6736 = vcombine.high %v6726, 0.0
  %v6737 = vcombine.high %v6734, 0.0
  %6739 = vrot.lane.b32.xlu0 %v6701, 14
  %v6740 = vpop.permute.xlu0 %6739
  %6743 = vrot.lane.b32.xlu0 %v6685, 28
  %v6744 = vpop.permute.xlu0 %6743
  %6747 = vrot.lane.b32.xlu0 %v6702, 42
  %v6748 = vpop.permute.xlu0 %6747
  %6751 = vrot.lane.b32.xlu0 %v6693, 56
  %v6752 = vpop.permute.xlu0 %6751
  %6755 = vrot.lane.b32.xlu0 %v6703, 70
  %v6756 = vpop.permute.xlu0 %6755
  %6759 = vrot.lane.b32.xlu0 %v6700, 84
  %v6760 = vpop.permute.xlu0 %6759
  %6763 = vrot.lane.b32.xlu0 %v6704, 98
  %v6764 = vpop.permute.xlu0 %6763
  %6767 = vrot.lane.b32.xlu0 %v6719, 112
  %v6768 = vpop.permute.xlu0 %6767
  %6771 = vrot.lane.b32.xlu0 %v6735, 126
  %v6772 = vpop.permute.xlu0 %6771
  %6775 = vrot.lane.b32.xlu0 %v6726, 12
  %v6776 = vpop.permute.xlu0 %6775
  %6779 = vrot.lane.b32.xlu0 %v6736, 26
  %v6780 = vpop.permute.xlu0 %6779
  %6783 = vrot.lane.b32.xlu0 %v6734, 40
  %v6784 = vpop.permute.xlu0 %6783
  %6787 = vrot.lane.b32.xlu0 %v6737, 54
  %v6788 = vpop.permute.xlu0 %6787
  %v6790 = vsel %vm156, %v6678, %v6740
  %v6791 = vsel %vm158, %v6790, %v6744
  %v6792 = vsel %vm160, %v6791, %v6748
  %v6793 = vsel %vm162, %v6792, %v6752
  %v6794 = vsel %vm164, %v6793, %v6756
  %v6795 = vsel %vm166, %v6794, %v6760
  %v6796 = vsel %vm168, %v6795, %v6764
  %v6797 = vsel %vm170, %v6796, %v6768
  %v6798 = vsel %vm172, %v6797, %v6772
  %v6799 = vsel %vm174, %v6772, %v6776
  %v6800 = vsel %vm176, %v6799, %v6780
  %v6801 = vsel %vm178, %v6800, %v6784
  %v6802 = vsel %vm180, %v6801, %v6788
  %v6803 = vrot.slane %v5882, 2
  %v6804 = vrot.slane %v5883, 2
  %v6805 = vsel %vm949, %v6803, %v6804
  %v6808 = vcombine.high %v6805, 0.0
  %v6810 = vunpack.c.l.s4 1983009808
  %v6811 = vunpack.c.0.s8 %v6810
  %v6812 = vlaneseq
  %v6813 = vshrl.u32 %v6812, 7
  %v6814 = vsub.s32 %v6811, %v6813
  %v6815 = vrot.slane %v6805, %v6814
  %v6817 = vunpack.c.l.s4 1983009808
  %v6818 = vunpack.c.0.s8 %v6817
  %v6819 = vlaneseq
  %v6820 = vshrl.u32 %v6819, 7
  %v6821 = vsub.s32 %v6818, %v6820
  %v6822 = vrot.slane %v6808, %v6821
  %v6823 = vcombine.high %v6815, 0.0
  %v6825 = vunpack.c.l.s4 1934713408
  %v6826 = vunpack.c.0.s8 %v6825
  %v6827 = vlaneseq
  %v6828 = vshrl.u32 %v6827, 7
  %v6829 = vsub.s32 %v6826, %v6828
  %v6830 = vrot.slane %v6815, %v6829
  %v6832 = vunpack.c.l.s4 1934713408
  %v6833 = vunpack.c.0.s8 %v6832
  %v6834 = vlaneseq
  %v6835 = vshrl.u32 %v6834, 7
  %v6836 = vsub.s32 %v6833, %v6835
  %v6837 = vrot.slane %v6823, %v6836
  %v6838 = vcombine.high %v6822, 0.0
  %v6840 = vunpack.c.l.s4 1934713408
  %v6841 = vunpack.c.0.s8 %v6840
  %v6842 = vlaneseq
  %v6843 = vshrl.u32 %v6842, 7
  %v6844 = vsub.s32 %v6841, %v6843
  %v6845 = vrot.slane %v6822, %v6844
  %v6847 = vunpack.c.l.s4 1934713408
  %v6848 = vunpack.c.0.s8 %v6847
  %v6849 = vlaneseq
  %v6850 = vshrl.u32 %v6849, 7
  %v6851 = vsub.s32 %v6848, %v6850
  %v6852 = vrot.slane %v6838, %v6851
  %v6853 = vcombine.high %v6830, 0.0
  %v6854 = vcombine.high %v6837, 0.0
  %v6855 = vcombine.high %v6845, 0.0
  %v6856 = vcombine.high %v6852, 0.0
  %v6858 = vunpack.c.l.s4 1983009808
  %v6859 = vunpack.c.0.s8 %v6858
  %v6860 = vlaneseq
  %v6861 = vshrl.u32 %v6860, 7
  %v6862 = vsub.s32 %v6859, %v6861
  %v6863 = vrot.slane %v6804, %v6862
  %v6864 = vcombine.high %v6863, 0.0
  %v6866 = vunpack.c.l.s4 1934713408
  %v6867 = vunpack.c.0.s8 %v6866
  %v6868 = vlaneseq
  %v6869 = vshrl.u32 %v6868, 7
  %v6870 = vsub.s32 %v6867, %v6869
  %v6871 = vrot.slane %v6863, %v6870
  %v6873 = vunpack.c.l.s4 1934713408
  %v6874 = vunpack.c.0.s8 %v6873
  %v6875 = vlaneseq
  %v6876 = vshrl.u32 %v6875, 7
  %v6877 = vsub.s32 %v6874, %v6876
  %v6878 = vrot.slane %v6864, %v6877
  %v6879 = vcombine.high %v6804, 0.0
  %v6881 = vunpack.c.l.s4 1934713408
  %v6882 = vunpack.c.0.s8 %v6881
  %v6883 = vlaneseq
  %v6884 = vshrl.u32 %v6883, 7
  %v6885 = vsub.s32 %v6882, %v6884
  %v6886 = vrot.slane %v6879, %v6885
  %v6887 = vcombine.high %v6871, 0.0
  %v6888 = vcombine.high %v6878, 0.0
  %v6889 = vcombine.high %v6886, 0.0
  %6891 = vrot.lane.b32.xlu0 %v6853, 14
  %v6892 = vpop.permute.xlu0 %6891
  %6895 = vrot.lane.b32.xlu0 %v6837, 28
  %v6896 = vpop.permute.xlu0 %6895
  %6899 = vrot.lane.b32.xlu0 %v6854, 42
  %v6900 = vpop.permute.xlu0 %6899
  %6903 = vrot.lane.b32.xlu0 %v6845, 56
  %v6904 = vpop.permute.xlu0 %6903
  %6907 = vrot.lane.b32.xlu0 %v6855, 70
  %v6908 = vpop.permute.xlu0 %6907
  %6911 = vrot.lane.b32.xlu0 %v6852, 84
  %v6912 = vpop.permute.xlu0 %6911
  %6915 = vrot.lane.b32.xlu0 %v6856, 98
  %v6916 = vpop.permute.xlu0 %6915
  %6919 = vrot.lane.b32.xlu0 %v6871, 112
  %v6920 = vpop.permute.xlu0 %6919
  %6923 = vrot.lane.b32.xlu0 %v6887, 126
  %v6924 = vpop.permute.xlu0 %6923
  %6927 = vrot.lane.b32.xlu0 %v6878, 12
  %v6928 = vpop.permute.xlu0 %6927
  %6931 = vrot.lane.b32.xlu0 %v6888, 26
  %v6932 = vpop.permute.xlu0 %6931
  %6935 = vrot.lane.b32.xlu0 %v6886, 40
  %v6936 = vpop.permute.xlu0 %6935
  %6939 = vrot.lane.b32.xlu0 %v6889, 54
  %v6940 = vpop.permute.xlu0 %6939
  %v6942 = vsel %vm156, %v6830, %v6892
  %v6943 = vsel %vm158, %v6942, %v6896
  %v6944 = vsel %vm160, %v6943, %v6900
  %v6945 = vsel %vm162, %v6944, %v6904
  %v6946 = vsel %vm164, %v6945, %v6908
  %v6947 = vsel %vm166, %v6946, %v6912
  %v6948 = vsel %vm168, %v6947, %v6916
  %v6949 = vsel %vm170, %v6948, %v6920
  %v6950 = vsel %vm172, %v6949, %v6924
  %v6951 = vsel %vm174, %v6924, %v6928
  %v6952 = vsel %vm176, %v6951, %v6932
  %v6953 = vsel %vm178, %v6952, %v6936
  %v6954 = vsel %vm180, %v6953, %v6940
  %6955 = vrot.lane.b32.xlu0 %v6805, 127
  %v6956 = vpop.permute.xlu0 %6955
  %6957 = vrot.lane.b32.xlu0 %v6804, 127
  %v6958 = vpop.permute.xlu0 %6957
  %v6961 = vcombine.high %v6956, 0.0
  %v6963 = vunpack.c.l.s4 1983009808
  %v6964 = vunpack.c.0.s8 %v6963
  %v6965 = vlaneseq
  %v6966 = vshrl.u32 %v6965, 7
  %v6967 = vsub.s32 %v6964, %v6966
  %v6968 = vrot.slane %v6956, %v6967
  %v6970 = vunpack.c.l.s4 1983009808
  %v6971 = vunpack.c.0.s8 %v6970
  %v6972 = vlaneseq
  %v6973 = vshrl.u32 %v6972, 7
  %v6974 = vsub.s32 %v6971, %v6973
  %v6975 = vrot.slane %v6961, %v6974
  %v6976 = vcombine.high %v6968, 0.0
  %v6978 = vunpack.c.l.s4 1934713408
  %v6979 = vunpack.c.0.s8 %v6978
  %v6980 = vlaneseq
  %v6981 = vshrl.u32 %v6980, 7
  %v6982 = vsub.s32 %v6979, %v6981
  %v6983 = vrot.slane %v6968, %v6982
  %v6985 = vunpack.c.l.s4 1934713408
  %v6986 = vunpack.c.0.s8 %v6985
  %v6987 = vlaneseq
  %v6988 = vshrl.u32 %v6987, 7
  %v6989 = vsub.s32 %v6986, %v6988
  %v6990 = vrot.slane %v6976, %v6989
  %v6991 = vcombine.high %v6975, 0.0
  %v6993 = vunpack.c.l.s4 1934713408
  %v6994 = vunpack.c.0.s8 %v6993
  %v6995 = vlaneseq
  %v6996 = vshrl.u32 %v6995, 7
  %v6997 = vsub.s32 %v6994, %v6996
  %v6998 = vrot.slane %v6975, %v6997
  %v7000 = vunpack.c.l.s4 1934713408
  %v7001 = vunpack.c.0.s8 %v7000
  %v7002 = vlaneseq
  %v7003 = vshrl.u32 %v7002, 7
  %v7004 = vsub.s32 %v7001, %v7003
  %v7005 = vrot.slane %v6991, %v7004
  %v7006 = vcombine.high %v6983, 0.0
  %v7007 = vcombine.high %v6990, 0.0
  %v7008 = vcombine.high %v6998, 0.0
  %v7009 = vcombine.high %v7005, 0.0
  %v7011 = vunpack.c.l.s4 1983009808
  %v7012 = vunpack.c.0.s8 %v7011
  %v7013 = vlaneseq
  %v7014 = vshrl.u32 %v7013, 7
  %v7015 = vsub.s32 %v7012, %v7014
  %v7016 = vrot.slane %v6958, %v7015
  %v7017 = vcombine.high %v7016, 0.0
  %v7019 = vunpack.c.l.s4 1934713408
  %v7020 = vunpack.c.0.s8 %v7019
  %v7021 = vlaneseq
  %v7022 = vshrl.u32 %v7021, 7
  %v7023 = vsub.s32 %v7020, %v7022
  %v7024 = vrot.slane %v7016, %v7023
  %v7026 = vunpack.c.l.s4 1934713408
  %v7027 = vunpack.c.0.s8 %v7026
  %v7028 = vlaneseq
  %v7029 = vshrl.u32 %v7028, 7
  %v7030 = vsub.s32 %v7027, %v7029
  %v7031 = vrot.slane %v7017, %v7030
  %v7032 = vcombine.high %v6958, 0.0
  %v7034 = vunpack.c.l.s4 1934713408
  %v7035 = vunpack.c.0.s8 %v7034
  %v7036 = vlaneseq
  %v7037 = vshrl.u32 %v7036, 7
  %v7038 = vsub.s32 %v7035, %v7037
  %v7039 = vrot.slane %v7032, %v7038
  %v7040 = vcombine.high %v7024, 0.0
  %v7041 = vcombine.high %v7031, 0.0
  %v7042 = vcombine.high %v7039, 0.0
  %7044 = vrot.lane.b32.xlu0 %v7006, 14
  %v7045 = vpop.permute.xlu0 %7044
  %7048 = vrot.lane.b32.xlu0 %v6990, 28
  %v7049 = vpop.permute.xlu0 %7048
  %7052 = vrot.lane.b32.xlu0 %v7007, 42
  %v7053 = vpop.permute.xlu0 %7052
  %7056 = vrot.lane.b32.xlu0 %v6998, 56
  %v7057 = vpop.permute.xlu0 %7056
  %7060 = vrot.lane.b32.xlu0 %v7008, 70
  %v7061 = vpop.permute.xlu0 %7060
  %7064 = vrot.lane.b32.xlu0 %v7005, 84
  %v7065 = vpop.permute.xlu0 %7064
  %7068 = vrot.lane.b32.xlu0 %v7009, 98
  %v7069 = vpop.permute.xlu0 %7068
  %7072 = vrot.lane.b32.xlu0 %v7024, 112
  %v7073 = vpop.permute.xlu0 %7072
  %7076 = vrot.lane.b32.xlu0 %v7040, 126
  %v7077 = vpop.permute.xlu0 %7076
  %7080 = vrot.lane.b32.xlu0 %v7031, 12
  %v7081 = vpop.permute.xlu0 %7080
  %7084 = vrot.lane.b32.xlu0 %v7041, 26
  %v7085 = vpop.permute.xlu0 %7084
  %7088 = vrot.lane.b32.xlu0 %v7039, 40
  %v7089 = vpop.permute.xlu0 %7088
  %7092 = vrot.lane.b32.xlu0 %v7042, 54
  %v7093 = vpop.permute.xlu0 %7092
  %v7095 = vsel %vm156, %v6983, %v7045
  %v7096 = vsel %vm158, %v7095, %v7049
  %v7097 = vsel %vm160, %v7096, %v7053
  %v7098 = vsel %vm162, %v7097, %v7057
  %v7099 = vsel %vm164, %v7098, %v7061
  %v7100 = vsel %vm166, %v7099, %v7065
  %v7101 = vsel %vm168, %v7100, %v7069
  %v7102 = vsel %vm170, %v7101, %v7073
  %v7103 = vsel %vm172, %v7102, %v7077
  %v7104 = vsel %vm174, %v7077, %v7081
  %v7105 = vsel %vm176, %v7104, %v7085
  %v7106 = vsel %vm178, %v7105, %v7089
  %v7107 = vsel %vm180, %v7106, %v7093
  %7108 = vrot.lane.b32.xlu0 %v6805, 126
  %v7109 = vpop.permute.xlu0 %7108
  %7110 = vrot.lane.b32.xlu0 %v6804, 126
  %v7111 = vpop.permute.xlu0 %7110
  %v7114 = vcombine.high %v7109, 0.0
  %v7116 = vunpack.c.l.s4 1983009808
  %v7117 = vunpack.c.0.s8 %v7116
  %v7118 = vlaneseq
  %v7119 = vshrl.u32 %v7118, 7
  %v7120 = vsub.s32 %v7117, %v7119
  %v7121 = vrot.slane %v7109, %v7120
  %v7123 = vunpack.c.l.s4 1983009808
  %v7124 = vunpack.c.0.s8 %v7123
  %v7125 = vlaneseq
  %v7126 = vshrl.u32 %v7125, 7
  %v7127 = vsub.s32 %v7124, %v7126
  %v7128 = vrot.slane %v7114, %v7127
  %v7129 = vcombine.high %v7121, 0.0
  %v7131 = vunpack.c.l.s4 1934713408
  %v7132 = vunpack.c.0.s8 %v7131
  %v7133 = vlaneseq
  %v7134 = vshrl.u32 %v7133, 7
  %v7135 = vsub.s32 %v7132, %v7134
  %v7136 = vrot.slane %v7121, %v7135
  %v7138 = vunpack.c.l.s4 1934713408
  %v7139 = vunpack.c.0.s8 %v7138
  %v7140 = vlaneseq
  %v7141 = vshrl.u32 %v7140, 7
  %v7142 = vsub.s32 %v7139, %v7141
  %v7143 = vrot.slane %v7129, %v7142
  %v7144 = vcombine.high %v7128, 0.0
  %v7146 = vunpack.c.l.s4 1934713408
  %v7147 = vunpack.c.0.s8 %v7146
  %v7148 = vlaneseq
  %v7149 = vshrl.u32 %v7148, 7
  %v7150 = vsub.s32 %v7147, %v7149
  %v7151 = vrot.slane %v7128, %v7150
  %v7153 = vunpack.c.l.s4 1934713408
  %v7154 = vunpack.c.0.s8 %v7153
  %v7155 = vlaneseq
  %v7156 = vshrl.u32 %v7155, 7
  %v7157 = vsub.s32 %v7154, %v7156
  %v7158 = vrot.slane %v7144, %v7157
  %v7159 = vcombine.high %v7136, 0.0
  %v7160 = vcombine.high %v7143, 0.0
  %v7161 = vcombine.high %v7151, 0.0
  %v7162 = vcombine.high %v7158, 0.0
  %v7164 = vunpack.c.l.s4 1983009808
  %v7165 = vunpack.c.0.s8 %v7164
  %v7166 = vlaneseq
  %v7167 = vshrl.u32 %v7166, 7
  %v7168 = vsub.s32 %v7165, %v7167
  %v7169 = vrot.slane %v7111, %v7168
  %v7170 = vcombine.high %v7169, 0.0
  %v7172 = vunpack.c.l.s4 1934713408
  %v7173 = vunpack.c.0.s8 %v7172
  %v7174 = vlaneseq
  %v7175 = vshrl.u32 %v7174, 7
  %v7176 = vsub.s32 %v7173, %v7175
  %v7177 = vrot.slane %v7169, %v7176
  %v7179 = vunpack.c.l.s4 1934713408
  %v7180 = vunpack.c.0.s8 %v7179
  %v7181 = vlaneseq
  %v7182 = vshrl.u32 %v7181, 7
  %v7183 = vsub.s32 %v7180, %v7182
  %v7184 = vrot.slane %v7170, %v7183
  %v7185 = vcombine.high %v7111, 0.0
  %v7187 = vunpack.c.l.s4 1934713408
  %v7188 = vunpack.c.0.s8 %v7187
  %v7189 = vlaneseq
  %v7190 = vshrl.u32 %v7189, 7
  %v7191 = vsub.s32 %v7188, %v7190
  %v7192 = vrot.slane %v7185, %v7191
  %v7193 = vcombine.high %v7177, 0.0
  %v7194 = vcombine.high %v7184, 0.0
  %v7195 = vcombine.high %v7192, 0.0
  %7197 = vrot.lane.b32.xlu0 %v7159, 14
  %v7198 = vpop.permute.xlu0 %7197
  %7201 = vrot.lane.b32.xlu0 %v7143, 28
  %v7202 = vpop.permute.xlu0 %7201
  %7205 = vrot.lane.b32.xlu0 %v7160, 42
  %v7206 = vpop.permute.xlu0 %7205
  %7209 = vrot.lane.b32.xlu0 %v7151, 56
  %v7210 = vpop.permute.xlu0 %7209
  %7213 = vrot.lane.b32.xlu0 %v7161, 70
  %v7214 = vpop.permute.xlu0 %7213
  %7217 = vrot.lane.b32.xlu0 %v7158, 84
  %v7218 = vpop.permute.xlu0 %7217
  %7221 = vrot.lane.b32.xlu0 %v7162, 98
  %v7222 = vpop.permute.xlu0 %7221
  %7225 = vrot.lane.b32.xlu0 %v7177, 112
  %v7226 = vpop.permute.xlu0 %7225
  %7229 = vrot.lane.b32.xlu0 %v7193, 126
  %v7230 = vpop.permute.xlu0 %7229
  %7233 = vrot.lane.b32.xlu0 %v7184, 12
  %v7234 = vpop.permute.xlu0 %7233
  %7237 = vrot.lane.b32.xlu0 %v7194, 26
  %v7238 = vpop.permute.xlu0 %7237
  %7241 = vrot.lane.b32.xlu0 %v7192, 40
  %v7242 = vpop.permute.xlu0 %7241
  %7245 = vrot.lane.b32.xlu0 %v7195, 54
  %v7246 = vpop.permute.xlu0 %7245
  %v7248 = vsel %vm156, %v7136, %v7198
  %v7249 = vsel %vm158, %v7248, %v7202
  %v7250 = vsel %vm160, %v7249, %v7206
  %v7251 = vsel %vm162, %v7250, %v7210
  %v7252 = vsel %vm164, %v7251, %v7214
  %v7253 = vsel %vm166, %v7252, %v7218
  %v7254 = vsel %vm168, %v7253, %v7222
  %v7255 = vsel %vm170, %v7254, %v7226
  %v7256 = vsel %vm172, %v7255, %v7230
  %v7257 = vsel %vm174, %v7230, %v7234
  %v7258 = vsel %vm176, %v7257, %v7238
  %v7259 = vsel %vm178, %v7258, %v7242
  %v7260 = vsel %vm180, %v7259, %v7246
  %v7261 = vcombine.high %v5884, 0.0
  %v7263 = vunpack.c.l.s4 1983009808
  %v7264 = vunpack.c.0.s8 %v7263
  %v7265 = vlaneseq
  %v7266 = vshrl.u32 %v7265, 7
  %v7267 = vsub.s32 %v7264, %v7266
  %v7268 = vrot.slane %v5884, %v7267
  %v7270 = vunpack.c.l.s4 1983009808
  %v7271 = vunpack.c.0.s8 %v7270
  %v7272 = vlaneseq
  %v7273 = vshrl.u32 %v7272, 7
  %v7274 = vsub.s32 %v7271, %v7273
  %v7275 = vrot.slane %v7261, %v7274
  %v7276 = vcombine.high %v7268, 0.0
  %v7278 = vunpack.c.l.s4 1934713408
  %v7279 = vunpack.c.0.s8 %v7278
  %v7280 = vlaneseq
  %v7281 = vshrl.u32 %v7280, 7
  %v7282 = vsub.s32 %v7279, %v7281
  %v7283 = vrot.slane %v7268, %v7282
  %v7285 = vunpack.c.l.s4 1934713408
  %v7286 = vunpack.c.0.s8 %v7285
  %v7287 = vlaneseq
  %v7288 = vshrl.u32 %v7287, 7
  %v7289 = vsub.s32 %v7286, %v7288
  %v7290 = vrot.slane %v7276, %v7289
  %v7291 = vcombine.high %v7275, 0.0
  %v7293 = vunpack.c.l.s4 1934713408
  %v7294 = vunpack.c.0.s8 %v7293
  %v7295 = vlaneseq
  %v7296 = vshrl.u32 %v7295, 7
  %v7297 = vsub.s32 %v7294, %v7296
  %v7298 = vrot.slane %v7275, %v7297
  %v7300 = vunpack.c.l.s4 1934713408
  %v7301 = vunpack.c.0.s8 %v7300
  %v7302 = vlaneseq
  %v7303 = vshrl.u32 %v7302, 7
  %v7304 = vsub.s32 %v7301, %v7303
  %v7305 = vrot.slane %v7291, %v7304
  %v7306 = vcombine.high %v7283, 0.0
  %v7307 = vcombine.high %v7290, 0.0
  %v7308 = vcombine.high %v7298, 0.0
  %v7309 = vcombine.high %v7305, 0.0
  %v7311 = vunpack.c.l.s4 1983009808
  %v7312 = vunpack.c.0.s8 %v7311
  %v7313 = vlaneseq
  %v7314 = vshrl.u32 %v7313, 7
  %v7315 = vsub.s32 %v7312, %v7314
  %v7316 = vrot.slane %v5885, %v7315
  %v7317 = vcombine.high %v7316, 0.0
  %v7319 = vunpack.c.l.s4 1934713408
  %v7320 = vunpack.c.0.s8 %v7319
  %v7321 = vlaneseq
  %v7322 = vshrl.u32 %v7321, 7
  %v7323 = vsub.s32 %v7320, %v7322
  %v7324 = vrot.slane %v7316, %v7323
  %v7326 = vunpack.c.l.s4 1934713408
  %v7327 = vunpack.c.0.s8 %v7326
  %v7328 = vlaneseq
  %v7329 = vshrl.u32 %v7328, 7
  %v7330 = vsub.s32 %v7327, %v7329
  %v7331 = vrot.slane %v7317, %v7330
  %v7332 = vcombine.high %v5885, 0.0
  %v7334 = vunpack.c.l.s4 1934713408
  %v7335 = vunpack.c.0.s8 %v7334
  %v7336 = vlaneseq
  %v7337 = vshrl.u32 %v7336, 7
  %v7338 = vsub.s32 %v7335, %v7337
  %v7339 = vrot.slane %v7332, %v7338
  %v7340 = vcombine.high %v7324, 0.0
  %v7341 = vcombine.high %v7331, 0.0
  %v7342 = vcombine.high %v7339, 0.0
  %7344 = vrot.lane.b32.xlu0 %v7306, 14
  %v7345 = vpop.permute.xlu0 %7344
  %7348 = vrot.lane.b32.xlu0 %v7290, 28
  %v7349 = vpop.permute.xlu0 %7348
  %7352 = vrot.lane.b32.xlu0 %v7307, 42
  %v7353 = vpop.permute.xlu0 %7352
  %7356 = vrot.lane.b32.xlu0 %v7298, 56
  %v7357 = vpop.permute.xlu0 %7356
  %7360 = vrot.lane.b32.xlu0 %v7308, 70
  %v7361 = vpop.permute.xlu0 %7360
  %7364 = vrot.lane.b32.xlu0 %v7305, 84
  %v7365 = vpop.permute.xlu0 %7364
  %7368 = vrot.lane.b32.xlu0 %v7309, 98
  %v7369 = vpop.permute.xlu0 %7368
  %7372 = vrot.lane.b32.xlu0 %v7324, 112
  %v7373 = vpop.permute.xlu0 %7372
  %7376 = vrot.lane.b32.xlu0 %v7340, 126
  %v7377 = vpop.permute.xlu0 %7376
  %7380 = vrot.lane.b32.xlu0 %v7331, 12
  %v7381 = vpop.permute.xlu0 %7380
  %7384 = vrot.lane.b32.xlu0 %v7341, 26
  %v7385 = vpop.permute.xlu0 %7384
  %7388 = vrot.lane.b32.xlu0 %v7339, 40
  %v7389 = vpop.permute.xlu0 %7388
  %7392 = vrot.lane.b32.xlu0 %v7342, 54
  %v7393 = vpop.permute.xlu0 %7392
  %v7395 = vsel %vm156, %v7283, %v7345
  %v7396 = vsel %vm158, %v7395, %v7349
  %v7397 = vsel %vm160, %v7396, %v7353
  %v7398 = vsel %vm162, %v7397, %v7357
  %v7399 = vsel %vm164, %v7398, %v7361
  %v7400 = vsel %vm166, %v7399, %v7365
  %v7401 = vsel %vm168, %v7400, %v7369
  %v7402 = vsel %vm170, %v7401, %v7373
  %v7403 = vsel %vm172, %v7402, %v7377
  %v7404 = vsel %vm174, %v7377, %v7381
  %v7405 = vsel %vm176, %v7404, %v7385
  %v7406 = vsel %vm178, %v7405, %v7389
  %v7407 = vsel %vm180, %v7406, %v7393
  %7410 = vrot.lane.b32.xlu0 %v5884, 127
  %v7411 = vpop.permute.xlu0 %7410
  %7412 = vrot.lane.b32.xlu0 %v5885, 127
  %v7413 = vpop.permute.xlu0 %7412
  %v7416 = vcombine.high %v7411, 0.0
  %v7418 = vunpack.c.l.s4 1983009808
  %v7419 = vunpack.c.0.s8 %v7418
  %v7420 = vlaneseq
  %v7421 = vshrl.u32 %v7420, 7
  %v7422 = vsub.s32 %v7419, %v7421
  %v7423 = vrot.slane %v7411, %v7422
  %v7425 = vunpack.c.l.s4 1983009808
  %v7426 = vunpack.c.0.s8 %v7425
  %v7427 = vlaneseq
  %v7428 = vshrl.u32 %v7427, 7
  %v7429 = vsub.s32 %v7426, %v7428
  %v7430 = vrot.slane %v7416, %v7429
  %v7431 = vcombine.high %v7423, 0.0
  %v7433 = vunpack.c.l.s4 1934713408
  %v7434 = vunpack.c.0.s8 %v7433
  %v7435 = vlaneseq
  %v7436 = vshrl.u32 %v7435, 7
  %v7437 = vsub.s32 %v7434, %v7436
  %v7438 = vrot.slane %v7423, %v7437
  %v7440 = vunpack.c.l.s4 1934713408
  %v7441 = vunpack.c.0.s8 %v7440
  %v7442 = vlaneseq
  %v7443 = vshrl.u32 %v7442, 7
  %v7444 = vsub.s32 %v7441, %v7443
  %v7445 = vrot.slane %v7431, %v7444
  %v7446 = vcombine.high %v7430, 0.0
  %v7448 = vunpack.c.l.s4 1934713408
  %v7449 = vunpack.c.0.s8 %v7448
  %v7450 = vlaneseq
  %v7451 = vshrl.u32 %v7450, 7
  %v7452 = vsub.s32 %v7449, %v7451
  %v7453 = vrot.slane %v7430, %v7452
  %v7455 = vunpack.c.l.s4 1934713408
  %v7456 = vunpack.c.0.s8 %v7455
  %v7457 = vlaneseq
  %v7458 = vshrl.u32 %v7457, 7
  %v7459 = vsub.s32 %v7456, %v7458
  %v7460 = vrot.slane %v7446, %v7459
  %v7461 = vcombine.high %v7438, 0.0
  %v7462 = vcombine.high %v7445, 0.0
  %v7463 = vcombine.high %v7453, 0.0
  %v7464 = vcombine.high %v7460, 0.0
  %v7466 = vunpack.c.l.s4 1983009808
  %v7467 = vunpack.c.0.s8 %v7466
  %v7468 = vlaneseq
  %v7469 = vshrl.u32 %v7468, 7
  %v7470 = vsub.s32 %v7467, %v7469
  %v7471 = vrot.slane %v7413, %v7470
  %v7472 = vcombine.high %v7471, 0.0
  %v7474 = vunpack.c.l.s4 1934713408
  %v7475 = vunpack.c.0.s8 %v7474
  %v7476 = vlaneseq
  %v7477 = vshrl.u32 %v7476, 7
  %v7478 = vsub.s32 %v7475, %v7477
  %v7479 = vrot.slane %v7471, %v7478
  %v7481 = vunpack.c.l.s4 1934713408
  %v7482 = vunpack.c.0.s8 %v7481
  %v7483 = vlaneseq
  %v7484 = vshrl.u32 %v7483, 7
  %v7485 = vsub.s32 %v7482, %v7484
  %v7486 = vrot.slane %v7472, %v7485
  %v7487 = vcombine.high %v7413, 0.0
  %v7489 = vunpack.c.l.s4 1934713408
  %v7490 = vunpack.c.0.s8 %v7489
  %v7491 = vlaneseq
  %v7492 = vshrl.u32 %v7491, 7
  %v7493 = vsub.s32 %v7490, %v7492
  %v7494 = vrot.slane %v7487, %v7493
  %v7495 = vcombine.high %v7479, 0.0
  %v7496 = vcombine.high %v7486, 0.0
  %v7497 = vcombine.high %v7494, 0.0
  %7499 = vrot.lane.b32.xlu0 %v7461, 14
  %v7500 = vpop.permute.xlu0 %7499
  %7503 = vrot.lane.b32.xlu0 %v7445, 28
  %v7504 = vpop.permute.xlu0 %7503
  %7507 = vrot.lane.b32.xlu0 %v7462, 42
  %v7508 = vpop.permute.xlu0 %7507
  %7511 = vrot.lane.b32.xlu0 %v7453, 56
  %v7512 = vpop.permute.xlu0 %7511
  %7515 = vrot.lane.b32.xlu0 %v7463, 70
  %v7516 = vpop.permute.xlu0 %7515
  %7519 = vrot.lane.b32.xlu0 %v7460, 84
  %v7520 = vpop.permute.xlu0 %7519
  %7523 = vrot.lane.b32.xlu0 %v7464, 98
  %v7524 = vpop.permute.xlu0 %7523
  %7527 = vrot.lane.b32.xlu0 %v7479, 112
  %v7528 = vpop.permute.xlu0 %7527
  %7531 = vrot.lane.b32.xlu0 %v7495, 126
  %v7532 = vpop.permute.xlu0 %7531
  %7535 = vrot.lane.b32.xlu0 %v7486, 12
  %v7536 = vpop.permute.xlu0 %7535
  %7539 = vrot.lane.b32.xlu0 %v7496, 26
  %v7540 = vpop.permute.xlu0 %7539
  %7543 = vrot.lane.b32.xlu0 %v7494, 40
  %v7544 = vpop.permute.xlu0 %7543
  %7547 = vrot.lane.b32.xlu0 %v7497, 54
  %v7548 = vpop.permute.xlu0 %7547
  %v7550 = vsel %vm156, %v7438, %v7500
  %v7551 = vsel %vm158, %v7550, %v7504
  %v7552 = vsel %vm160, %v7551, %v7508
  %v7553 = vsel %vm162, %v7552, %v7512
  %v7554 = vsel %vm164, %v7553, %v7516
  %v7555 = vsel %vm166, %v7554, %v7520
  %v7556 = vsel %vm168, %v7555, %v7524
  %v7557 = vsel %vm170, %v7556, %v7528
  %v7558 = vsel %vm172, %v7557, %v7532
  %v7559 = vsel %vm174, %v7532, %v7536
  %v7560 = vsel %vm176, %v7559, %v7540
  %v7561 = vsel %vm178, %v7560, %v7544
  %v7562 = vsel %vm180, %v7561, %v7548
  %7563 = vrot.lane.b32.xlu0 %v5884, 126
  %v7564 = vpop.permute.xlu0 %7563
  %7565 = vrot.lane.b32.xlu0 %v5885, 126
  %v7566 = vpop.permute.xlu0 %7565
  %v7569 = vcombine.high %v7564, 0.0
  %v7571 = vunpack.c.l.s4 1983009808
  %v7572 = vunpack.c.0.s8 %v7571
  %v7573 = vlaneseq
  %v7574 = vshrl.u32 %v7573, 7
  %v7575 = vsub.s32 %v7572, %v7574
  %v7576 = vrot.slane %v7564, %v7575
  %v7578 = vunpack.c.l.s4 1983009808
  %v7579 = vunpack.c.0.s8 %v7578
  %v7580 = vlaneseq
  %v7581 = vshrl.u32 %v7580, 7
  %v7582 = vsub.s32 %v7579, %v7581
  %v7583 = vrot.slane %v7569, %v7582
  %v7584 = vcombine.high %v7576, 0.0
  %v7586 = vunpack.c.l.s4 1934713408
  %v7587 = vunpack.c.0.s8 %v7586
  %v7588 = vlaneseq
  %v7589 = vshrl.u32 %v7588, 7
  %v7590 = vsub.s32 %v7587, %v7589
  %v7591 = vrot.slane %v7576, %v7590
  %v7593 = vunpack.c.l.s4 1934713408
  %v7594 = vunpack.c.0.s8 %v7593
  %v7595 = vlaneseq
  %v7596 = vshrl.u32 %v7595, 7
  %v7597 = vsub.s32 %v7594, %v7596
  %v7598 = vrot.slane %v7584, %v7597
  %v7599 = vcombine.high %v7583, 0.0
  %v7601 = vunpack.c.l.s4 1934713408
  %v7602 = vunpack.c.0.s8 %v7601
  %v7603 = vlaneseq
  %v7604 = vshrl.u32 %v7603, 7
  %v7605 = vsub.s32 %v7602, %v7604
  %v7606 = vrot.slane %v7583, %v7605
  %v7608 = vunpack.c.l.s4 1934713408
  %v7609 = vunpack.c.0.s8 %v7608
  %v7610 = vlaneseq
  %v7611 = vshrl.u32 %v7610, 7
  %v7612 = vsub.s32 %v7609, %v7611
  %v7613 = vrot.slane %v7599, %v7612
  %v7614 = vcombine.high %v7591, 0.0
  %v7615 = vcombine.high %v7598, 0.0
  %v7616 = vcombine.high %v7606, 0.0
  %v7617 = vcombine.high %v7613, 0.0
  %v7619 = vunpack.c.l.s4 1983009808
  %v7620 = vunpack.c.0.s8 %v7619
  %v7621 = vlaneseq
  %v7622 = vshrl.u32 %v7621, 7
  %v7623 = vsub.s32 %v7620, %v7622
  %v7624 = vrot.slane %v7566, %v7623
  %v7625 = vcombine.high %v7624, 0.0
  %v7627 = vunpack.c.l.s4 1934713408
  %v7628 = vunpack.c.0.s8 %v7627
  %v7629 = vlaneseq
  %v7630 = vshrl.u32 %v7629, 7
  %v7631 = vsub.s32 %v7628, %v7630
  %v7632 = vrot.slane %v7624, %v7631
  %v7634 = vunpack.c.l.s4 1934713408
  %v7635 = vunpack.c.0.s8 %v7634
  %v7636 = vlaneseq
  %v7637 = vshrl.u32 %v7636, 7
  %v7638 = vsub.s32 %v7635, %v7637
  %v7639 = vrot.slane %v7625, %v7638
  %v7640 = vcombine.high %v7566, 0.0
  %v7642 = vunpack.c.l.s4 1934713408
  %v7643 = vunpack.c.0.s8 %v7642
  %v7644 = vlaneseq
  %v7645 = vshrl.u32 %v7644, 7
  %v7646 = vsub.s32 %v7643, %v7645
  %v7647 = vrot.slane %v7640, %v7646
  %v7648 = vcombine.high %v7632, 0.0
  %v7649 = vcombine.high %v7639, 0.0
  %v7650 = vcombine.high %v7647, 0.0
  %7652 = vrot.lane.b32.xlu0 %v7614, 14
  %v7653 = vpop.permute.xlu0 %7652
  %7656 = vrot.lane.b32.xlu0 %v7598, 28
  %v7657 = vpop.permute.xlu0 %7656
  %7660 = vrot.lane.b32.xlu0 %v7615, 42
  %v7661 = vpop.permute.xlu0 %7660
  %7664 = vrot.lane.b32.xlu0 %v7606, 56
  %v7665 = vpop.permute.xlu0 %7664
  %7668 = vrot.lane.b32.xlu0 %v7616, 70
  %v7669 = vpop.permute.xlu0 %7668
  %7672 = vrot.lane.b32.xlu0 %v7613, 84
  %v7673 = vpop.permute.xlu0 %7672
  %7676 = vrot.lane.b32.xlu0 %v7617, 98
  %v7677 = vpop.permute.xlu0 %7676
  %7680 = vrot.lane.b32.xlu0 %v7632, 112
  %v7681 = vpop.permute.xlu0 %7680
  %7684 = vrot.lane.b32.xlu0 %v7648, 126
  %v7685 = vpop.permute.xlu0 %7684
  %7688 = vrot.lane.b32.xlu0 %v7639, 12
  %v7689 = vpop.permute.xlu0 %7688
  %7692 = vrot.lane.b32.xlu0 %v7649, 26
  %v7693 = vpop.permute.xlu0 %7692
  %7696 = vrot.lane.b32.xlu0 %v7647, 40
  %v7697 = vpop.permute.xlu0 %7696
  %7700 = vrot.lane.b32.xlu0 %v7650, 54
  %v7701 = vpop.permute.xlu0 %7700
  %v7703 = vsel %vm156, %v7591, %v7653
  %v7704 = vsel %vm158, %v7703, %v7657
  %v7705 = vsel %vm160, %v7704, %v7661
  %v7706 = vsel %vm162, %v7705, %v7665
  %v7707 = vsel %vm164, %v7706, %v7669
  %v7708 = vsel %vm166, %v7707, %v7673
  %v7709 = vsel %vm168, %v7708, %v7677
  %v7710 = vsel %vm170, %v7709, %v7681
  %v7711 = vsel %vm172, %v7710, %v7685
  %v7712 = vsel %vm174, %v7685, %v7689
  %v7713 = vsel %vm176, %v7712, %v7693
  %v7714 = vsel %vm178, %v7713, %v7697
  %v7715 = vsel %vm180, %v7714, %v7701
  %v7716 = vrot.slane %v5884, 1
  %v7717 = vrot.slane %v5885, 1
  %v7718 = vsel %vm490, %v7716, %v7717
  %v7721 = vcombine.high %v7718, 0.0
  %v7723 = vunpack.c.l.s4 1983009808
  %v7724 = vunpack.c.0.s8 %v7723
  %v7725 = vlaneseq
  %v7726 = vshrl.u32 %v7725, 7
  %v7727 = vsub.s32 %v7724, %v7726
  %v7728 = vrot.slane %v7718, %v7727
  %v7730 = vunpack.c.l.s4 1983009808
  %v7731 = vunpack.c.0.s8 %v7730
  %v7732 = vlaneseq
  %v7733 = vshrl.u32 %v7732, 7
  %v7734 = vsub.s32 %v7731, %v7733
  %v7735 = vrot.slane %v7721, %v7734
  %v7736 = vcombine.high %v7728, 0.0
  %v7738 = vunpack.c.l.s4 1934713408
  %v7739 = vunpack.c.0.s8 %v7738
  %v7740 = vlaneseq
  %v7741 = vshrl.u32 %v7740, 7
  %v7742 = vsub.s32 %v7739, %v7741
  %v7743 = vrot.slane %v7728, %v7742
  %v7745 = vunpack.c.l.s4 1934713408
  %v7746 = vunpack.c.0.s8 %v7745
  %v7747 = vlaneseq
  %v7748 = vshrl.u32 %v7747, 7
  %v7749 = vsub.s32 %v7746, %v7748
  %v7750 = vrot.slane %v7736, %v7749
  %v7751 = vcombine.high %v7735, 0.0
  %v7753 = vunpack.c.l.s4 1934713408
  %v7754 = vunpack.c.0.s8 %v7753
  %v7755 = vlaneseq
  %v7756 = vshrl.u32 %v7755, 7
  %v7757 = vsub.s32 %v7754, %v7756
  %v7758 = vrot.slane %v7735, %v7757
  %v7760 = vunpack.c.l.s4 1934713408
  %v7761 = vunpack.c.0.s8 %v7760
  %v7762 = vlaneseq
  %v7763 = vshrl.u32 %v7762, 7
  %v7764 = vsub.s32 %v7761, %v7763
  %v7765 = vrot.slane %v7751, %v7764
  %v7766 = vcombine.high %v7743, 0.0
  %v7767 = vcombine.high %v7750, 0.0
  %v7768 = vcombine.high %v7758, 0.0
  %v7769 = vcombine.high %v7765, 0.0
  %v7771 = vunpack.c.l.s4 1983009808
  %v7772 = vunpack.c.0.s8 %v7771
  %v7773 = vlaneseq
  %v7774 = vshrl.u32 %v7773, 7
  %v7775 = vsub.s32 %v7772, %v7774
  %v7776 = vrot.slane %v7717, %v7775
  %v7777 = vcombine.high %v7776, 0.0
  %v7779 = vunpack.c.l.s4 1934713408
  %v7780 = vunpack.c.0.s8 %v7779
  %v7781 = vlaneseq
  %v7782 = vshrl.u32 %v7781, 7
  %v7783 = vsub.s32 %v7780, %v7782
  %v7784 = vrot.slane %v7776, %v7783
  %v7786 = vunpack.c.l.s4 1934713408
  %v7787 = vunpack.c.0.s8 %v7786
  %v7788 = vlaneseq
  %v7789 = vshrl.u32 %v7788, 7
  %v7790 = vsub.s32 %v7787, %v7789
  %v7791 = vrot.slane %v7777, %v7790
  %v7792 = vcombine.high %v7717, 0.0
  %v7794 = vunpack.c.l.s4 1934713408
  %v7795 = vunpack.c.0.s8 %v7794
  %v7796 = vlaneseq
  %v7797 = vshrl.u32 %v7796, 7
  %v7798 = vsub.s32 %v7795, %v7797
  %v7799 = vrot.slane %v7792, %v7798
  %v7800 = vcombine.high %v7784, 0.0
  %v7801 = vcombine.high %v7791, 0.0
  %v7802 = vcombine.high %v7799, 0.0
  %7804 = vrot.lane.b32.xlu0 %v7766, 14
  %v7805 = vpop.permute.xlu0 %7804
  %7808 = vrot.lane.b32.xlu0 %v7750, 28
  %v7809 = vpop.permute.xlu0 %7808
  %7812 = vrot.lane.b32.xlu0 %v7767, 42
  %v7813 = vpop.permute.xlu0 %7812
  %7816 = vrot.lane.b32.xlu0 %v7758, 56
  %v7817 = vpop.permute.xlu0 %7816
  %7820 = vrot.lane.b32.xlu0 %v7768, 70
  %v7821 = vpop.permute.xlu0 %7820
  %7824 = vrot.lane.b32.xlu0 %v7765, 84
  %v7825 = vpop.permute.xlu0 %7824
  %7828 = vrot.lane.b32.xlu0 %v7769, 98
  %v7829 = vpop.permute.xlu0 %7828
  %7832 = vrot.lane.b32.xlu0 %v7784, 112
  %v7833 = vpop.permute.xlu0 %7832
  %7836 = vrot.lane.b32.xlu0 %v7800, 126
  %v7837 = vpop.permute.xlu0 %7836
  %7840 = vrot.lane.b32.xlu0 %v7791, 12
  %v7841 = vpop.permute.xlu0 %7840
  %7844 = vrot.lane.b32.xlu0 %v7801, 26
  %v7845 = vpop.permute.xlu0 %7844
  %7848 = vrot.lane.b32.xlu0 %v7799, 40
  %v7849 = vpop.permute.xlu0 %7848
  %7852 = vrot.lane.b32.xlu0 %v7802, 54
  %v7853 = vpop.permute.xlu0 %7852
  %v7855 = vsel %vm156, %v7743, %v7805
  %v7856 = vsel %vm158, %v7855, %v7809
  %v7857 = vsel %vm160, %v7856, %v7813
  %v7858 = vsel %vm162, %v7857, %v7817
  %v7859 = vsel %vm164, %v7858, %v7821
  %v7860 = vsel %vm166, %v7859, %v7825
  %v7861 = vsel %vm168, %v7860, %v7829
  %v7862 = vsel %vm170, %v7861, %v7833
  %v7863 = vsel %vm172, %v7862, %v7837
  %v7864 = vsel %vm174, %v7837, %v7841
  %v7865 = vsel %vm176, %v7864, %v7845
  %v7866 = vsel %vm178, %v7865, %v7849
  %v7867 = vsel %vm180, %v7866, %v7853
  %7868 = vrot.lane.b32.xlu0 %v7718, 127
  %v7869 = vpop.permute.xlu0 %7868
  %7870 = vrot.lane.b32.xlu0 %v7717, 127
  %v7871 = vpop.permute.xlu0 %7870
  %v7874 = vcombine.high %v7869, 0.0
  %v7876 = vunpack.c.l.s4 1983009808
  %v7877 = vunpack.c.0.s8 %v7876
  %v7878 = vlaneseq
  %v7879 = vshrl.u32 %v7878, 7
  %v7880 = vsub.s32 %v7877, %v7879
  %v7881 = vrot.slane %v7869, %v7880
  %v7883 = vunpack.c.l.s4 1983009808
  %v7884 = vunpack.c.0.s8 %v7883
  %v7885 = vlaneseq
  %v7886 = vshrl.u32 %v7885, 7
  %v7887 = vsub.s32 %v7884, %v7886
  %v7888 = vrot.slane %v7874, %v7887
  %v7889 = vcombine.high %v7881, 0.0
  %v7891 = vunpack.c.l.s4 1934713408
  %v7892 = vunpack.c.0.s8 %v7891
  %v7893 = vlaneseq
  %v7894 = vshrl.u32 %v7893, 7
  %v7895 = vsub.s32 %v7892, %v7894
  %v7896 = vrot.slane %v7881, %v7895
  %v7898 = vunpack.c.l.s4 1934713408
  %v7899 = vunpack.c.0.s8 %v7898
  %v7900 = vlaneseq
  %v7901 = vshrl.u32 %v7900, 7
  %v7902 = vsub.s32 %v7899, %v7901
  %v7903 = vrot.slane %v7889, %v7902
  %v7904 = vcombine.high %v7888, 0.0
  %v7906 = vunpack.c.l.s4 1934713408
  %v7907 = vunpack.c.0.s8 %v7906
  %v7908 = vlaneseq
  %v7909 = vshrl.u32 %v7908, 7
  %v7910 = vsub.s32 %v7907, %v7909
  %v7911 = vrot.slane %v7888, %v7910
  %v7913 = vunpack.c.l.s4 1934713408
  %v7914 = vunpack.c.0.s8 %v7913
  %v7915 = vlaneseq
  %v7916 = vshrl.u32 %v7915, 7
  %v7917 = vsub.s32 %v7914, %v7916
  %v7918 = vrot.slane %v7904, %v7917
  %v7919 = vcombine.high %v7896, 0.0
  %v7920 = vcombine.high %v7903, 0.0
  %v7921 = vcombine.high %v7911, 0.0
  %v7922 = vcombine.high %v7918, 0.0
  %v7924 = vunpack.c.l.s4 1983009808
  %v7925 = vunpack.c.0.s8 %v7924
  %v7926 = vlaneseq
  %v7927 = vshrl.u32 %v7926, 7
  %v7928 = vsub.s32 %v7925, %v7927
  %v7929 = vrot.slane %v7871, %v7928
  %v7930 = vcombine.high %v7929, 0.0
  %v7932 = vunpack.c.l.s4 1934713408
  %v7933 = vunpack.c.0.s8 %v7932
  %v7934 = vlaneseq
  %v7935 = vshrl.u32 %v7934, 7
  %v7936 = vsub.s32 %v7933, %v7935
  %v7937 = vrot.slane %v7929, %v7936
  %v7939 = vunpack.c.l.s4 1934713408
  %v7940 = vunpack.c.0.s8 %v7939
  %v7941 = vlaneseq
  %v7942 = vshrl.u32 %v7941, 7
  %v7943 = vsub.s32 %v7940, %v7942
  %v7944 = vrot.slane %v7930, %v7943
  %v7945 = vcombine.high %v7871, 0.0
  %v7947 = vunpack.c.l.s4 1934713408
  %v7948 = vunpack.c.0.s8 %v7947
  %v7949 = vlaneseq
  %v7950 = vshrl.u32 %v7949, 7
  %v7951 = vsub.s32 %v7948, %v7950
  %v7952 = vrot.slane %v7945, %v7951
  %v7953 = vcombine.high %v7937, 0.0
  %v7954 = vcombine.high %v7944, 0.0
  %v7955 = vcombine.high %v7952, 0.0
  %7957 = vrot.lane.b32.xlu0 %v7919, 14
  %v7958 = vpop.permute.xlu0 %7957
  %7961 = vrot.lane.b32.xlu0 %v7903, 28
  %v7962 = vpop.permute.xlu0 %7961
  %7965 = vrot.lane.b32.xlu0 %v7920, 42
  %v7966 = vpop.permute.xlu0 %7965
  %7969 = vrot.lane.b32.xlu0 %v7911, 56
  %v7970 = vpop.permute.xlu0 %7969
  %7973 = vrot.lane.b32.xlu0 %v7921, 70
  %v7974 = vpop.permute.xlu0 %7973
  %7977 = vrot.lane.b32.xlu0 %v7918, 84
  %v7978 = vpop.permute.xlu0 %7977
  %7981 = vrot.lane.b32.xlu0 %v7922, 98
  %v7982 = vpop.permute.xlu0 %7981
  %7985 = vrot.lane.b32.xlu0 %v7937, 112
  %v7986 = vpop.permute.xlu0 %7985
  %7989 = vrot.lane.b32.xlu0 %v7953, 126
  %v7990 = vpop.permute.xlu0 %7989
  %7993 = vrot.lane.b32.xlu0 %v7944, 12
  %v7994 = vpop.permute.xlu0 %7993
  %7997 = vrot.lane.b32.xlu0 %v7954, 26
  %v7998 = vpop.permute.xlu0 %7997
  %8001 = vrot.lane.b32.xlu0 %v7952, 40
  %v8002 = vpop.permute.xlu0 %8001
  %8005 = vrot.lane.b32.xlu0 %v7955, 54
  %v8006 = vpop.permute.xlu0 %8005
  %v8008 = vsel %vm156, %v7896, %v7958
  %v8009 = vsel %vm158, %v8008, %v7962
  %v8010 = vsel %vm160, %v8009, %v7966
  %v8011 = vsel %vm162, %v8010, %v7970
  %v8012 = vsel %vm164, %v8011, %v7974
  %v8013 = vsel %vm166, %v8012, %v7978
  %v8014 = vsel %vm168, %v8013, %v7982
  %v8015 = vsel %vm170, %v8014, %v7986
  %v8016 = vsel %vm172, %v8015, %v7990
  %v8017 = vsel %vm174, %v7990, %v7994
  %v8018 = vsel %vm176, %v8017, %v7998
  %v8019 = vsel %vm178, %v8018, %v8002
  %v8020 = vsel %vm180, %v8019, %v8006
  %8021 = vrot.lane.b32.xlu0 %v7718, 126
  %v8022 = vpop.permute.xlu0 %8021
  %8023 = vrot.lane.b32.xlu0 %v7717, 126
  %v8024 = vpop.permute.xlu0 %8023
  %v8027 = vcombine.high %v8022, 0.0
  %v8029 = vunpack.c.l.s4 1983009808
  %v8030 = vunpack.c.0.s8 %v8029
  %v8031 = vlaneseq
  %v8032 = vshrl.u32 %v8031, 7
  %v8033 = vsub.s32 %v8030, %v8032
  %v8034 = vrot.slane %v8022, %v8033
  %v8036 = vunpack.c.l.s4 1983009808
  %v8037 = vunpack.c.0.s8 %v8036
  %v8038 = vlaneseq
  %v8039 = vshrl.u32 %v8038, 7
  %v8040 = vsub.s32 %v8037, %v8039
  %v8041 = vrot.slane %v8027, %v8040
  %v8042 = vcombine.high %v8034, 0.0
  %v8044 = vunpack.c.l.s4 1934713408
  %v8045 = vunpack.c.0.s8 %v8044
  %v8046 = vlaneseq
  %v8047 = vshrl.u32 %v8046, 7
  %v8048 = vsub.s32 %v8045, %v8047
  %v8049 = vrot.slane %v8034, %v8048
  %v8051 = vunpack.c.l.s4 1934713408
  %v8052 = vunpack.c.0.s8 %v8051
  %v8053 = vlaneseq
  %v8054 = vshrl.u32 %v8053, 7
  %v8055 = vsub.s32 %v8052, %v8054
  %v8056 = vrot.slane %v8042, %v8055
  %v8057 = vcombine.high %v8041, 0.0
  %v8059 = vunpack.c.l.s4 1934713408
  %v8060 = vunpack.c.0.s8 %v8059
  %v8061 = vlaneseq
  %v8062 = vshrl.u32 %v8061, 7
  %v8063 = vsub.s32 %v8060, %v8062
  %v8064 = vrot.slane %v8041, %v8063
  %v8066 = vunpack.c.l.s4 1934713408
  %v8067 = vunpack.c.0.s8 %v8066
  %v8068 = vlaneseq
  %v8069 = vshrl.u32 %v8068, 7
  %v8070 = vsub.s32 %v8067, %v8069
  %v8071 = vrot.slane %v8057, %v8070
  %v8072 = vcombine.high %v8049, 0.0
  %v8073 = vcombine.high %v8056, 0.0
  %v8074 = vcombine.high %v8064, 0.0
  %v8075 = vcombine.high %v8071, 0.0
  %v8077 = vunpack.c.l.s4 1983009808
  %v8078 = vunpack.c.0.s8 %v8077
  %v8079 = vlaneseq
  %v8080 = vshrl.u32 %v8079, 7
  %v8081 = vsub.s32 %v8078, %v8080
  %v8082 = vrot.slane %v8024, %v8081
  %v8083 = vcombine.high %v8082, 0.0
  %v8085 = vunpack.c.l.s4 1934713408
  %v8086 = vunpack.c.0.s8 %v8085
  %v8087 = vlaneseq
  %v8088 = vshrl.u32 %v8087, 7
  %v8089 = vsub.s32 %v8086, %v8088
  %v8090 = vrot.slane %v8082, %v8089
  %v8092 = vunpack.c.l.s4 1934713408
  %v8093 = vunpack.c.0.s8 %v8092
  %v8094 = vlaneseq
  %v8095 = vshrl.u32 %v8094, 7
  %v8096 = vsub.s32 %v8093, %v8095
  %v8097 = vrot.slane %v8083, %v8096
  %v8098 = vcombine.high %v8024, 0.0
  %v8100 = vunpack.c.l.s4 1934713408
  %v8101 = vunpack.c.0.s8 %v8100
  %v8102 = vlaneseq
  %v8103 = vshrl.u32 %v8102, 7
  %v8104 = vsub.s32 %v8101, %v8103
  %v8105 = vrot.slane %v8098, %v8104
  %v8106 = vcombine.high %v8090, 0.0
  %v8107 = vcombine.high %v8097, 0.0
  %v8108 = vcombine.high %v8105, 0.0
  %8110 = vrot.lane.b32.xlu0 %v8072, 14
  %v8111 = vpop.permute.xlu0 %8110
  %8114 = vrot.lane.b32.xlu0 %v8056, 28
  %v8115 = vpop.permute.xlu0 %8114
  %8118 = vrot.lane.b32.xlu0 %v8073, 42
  %v8119 = vpop.permute.xlu0 %8118
  %8122 = vrot.lane.b32.xlu0 %v8064, 56
  %v8123 = vpop.permute.xlu0 %8122
  %8126 = vrot.lane.b32.xlu0 %v8074, 70
  %v8127 = vpop.permute.xlu0 %8126
  %8130 = vrot.lane.b32.xlu0 %v8071, 84
  %v8131 = vpop.permute.xlu0 %8130
  %8134 = vrot.lane.b32.xlu0 %v8075, 98
  %v8135 = vpop.permute.xlu0 %8134
  %8138 = vrot.lane.b32.xlu0 %v8090, 112
  %v8139 = vpop.permute.xlu0 %8138
  %8142 = vrot.lane.b32.xlu0 %v8106, 126
  %v8143 = vpop.permute.xlu0 %8142
  %8146 = vrot.lane.b32.xlu0 %v8097, 12
  %v8147 = vpop.permute.xlu0 %8146
  %8150 = vrot.lane.b32.xlu0 %v8107, 26
  %v8151 = vpop.permute.xlu0 %8150
  %8154 = vrot.lane.b32.xlu0 %v8105, 40
  %v8155 = vpop.permute.xlu0 %8154
  %8158 = vrot.lane.b32.xlu0 %v8108, 54
  %v8159 = vpop.permute.xlu0 %8158
  %v8161 = vsel %vm156, %v8049, %v8111
  %v8162 = vsel %vm158, %v8161, %v8115
  %v8163 = vsel %vm160, %v8162, %v8119
  %v8164 = vsel %vm162, %v8163, %v8123
  %v8165 = vsel %vm164, %v8164, %v8127
  %v8166 = vsel %vm166, %v8165, %v8131
  %v8167 = vsel %vm168, %v8166, %v8135
  %v8168 = vsel %vm170, %v8167, %v8139
  %v8169 = vsel %vm172, %v8168, %v8143
  %v8170 = vsel %vm174, %v8143, %v8147
  %v8171 = vsel %vm176, %v8170, %v8151
  %v8172 = vsel %vm178, %v8171, %v8155
  %v8173 = vsel %vm180, %v8172, %v8159
  %v8174 = vrot.slane %v5884, 2
  %v8175 = vrot.slane %v5885, 2
  %v8176 = vsel %vm949, %v8174, %v8175
  %v8179 = vcombine.high %v8176, 0.0
  %v8181 = vunpack.c.l.s4 1983009808
  %v8182 = vunpack.c.0.s8 %v8181
  %v8183 = vlaneseq
  %v8184 = vshrl.u32 %v8183, 7
  %v8185 = vsub.s32 %v8182, %v8184
  %v8186 = vrot.slane %v8176, %v8185
  %v8188 = vunpack.c.l.s4 1983009808
  %v8189 = vunpack.c.0.s8 %v8188
  %v8190 = vlaneseq
  %v8191 = vshrl.u32 %v8190, 7
  %v8192 = vsub.s32 %v8189, %v8191
  %v8193 = vrot.slane %v8179, %v8192
  %v8194 = vcombine.high %v8186, 0.0
  %v8196 = vunpack.c.l.s4 1934713408
  %v8197 = vunpack.c.0.s8 %v8196
  %v8198 = vlaneseq
  %v8199 = vshrl.u32 %v8198, 7
  %v8200 = vsub.s32 %v8197, %v8199
  %v8201 = vrot.slane %v8186, %v8200
  %v8203 = vunpack.c.l.s4 1934713408
  %v8204 = vunpack.c.0.s8 %v8203
  %v8205 = vlaneseq
  %v8206 = vshrl.u32 %v8205, 7
  %v8207 = vsub.s32 %v8204, %v8206
  %v8208 = vrot.slane %v8194, %v8207
  %v8209 = vcombine.high %v8193, 0.0
  %v8211 = vunpack.c.l.s4 1934713408
  %v8212 = vunpack.c.0.s8 %v8211
  %v8213 = vlaneseq
  %v8214 = vshrl.u32 %v8213, 7
  %v8215 = vsub.s32 %v8212, %v8214
  %v8216 = vrot.slane %v8193, %v8215
  %v8218 = vunpack.c.l.s4 1934713408
  %v8219 = vunpack.c.0.s8 %v8218
  %v8220 = vlaneseq
  %v8221 = vshrl.u32 %v8220, 7
  %v8222 = vsub.s32 %v8219, %v8221
  %v8223 = vrot.slane %v8209, %v8222
  %v8224 = vcombine.high %v8201, 0.0
  %v8225 = vcombine.high %v8208, 0.0
  %v8226 = vcombine.high %v8216, 0.0
  %v8227 = vcombine.high %v8223, 0.0
  %v8229 = vunpack.c.l.s4 1983009808
  %v8230 = vunpack.c.0.s8 %v8229
  %v8231 = vlaneseq
  %v8232 = vshrl.u32 %v8231, 7
  %v8233 = vsub.s32 %v8230, %v8232
  %v8234 = vrot.slane %v8175, %v8233
  %v8235 = vcombine.high %v8234, 0.0
  %v8237 = vunpack.c.l.s4 1934713408
  %v8238 = vunpack.c.0.s8 %v8237
  %v8239 = vlaneseq
  %v8240 = vshrl.u32 %v8239, 7
  %v8241 = vsub.s32 %v8238, %v8240
  %v8242 = vrot.slane %v8234, %v8241
  %v8244 = vunpack.c.l.s4 1934713408
  %v8245 = vunpack.c.0.s8 %v8244
  %v8246 = vlaneseq
  %v8247 = vshrl.u32 %v8246, 7
  %v8248 = vsub.s32 %v8245, %v8247
  %v8249 = vrot.slane %v8235, %v8248
  %v8250 = vcombine.high %v8175, 0.0
  %v8252 = vunpack.c.l.s4 1934713408
  %v8253 = vunpack.c.0.s8 %v8252
  %v8254 = vlaneseq
  %v8255 = vshrl.u32 %v8254, 7
  %v8256 = vsub.s32 %v8253, %v8255
  %v8257 = vrot.slane %v8250, %v8256
  %v8258 = vcombine.high %v8242, 0.0
  %v8259 = vcombine.high %v8249, 0.0
  %v8260 = vcombine.high %v8257, 0.0
  %8262 = vrot.lane.b32.xlu0 %v8224, 14
  %v8263 = vpop.permute.xlu0 %8262
  %8266 = vrot.lane.b32.xlu0 %v8208, 28
  %v8267 = vpop.permute.xlu0 %8266
  %8270 = vrot.lane.b32.xlu0 %v8225, 42
  %v8271 = vpop.permute.xlu0 %8270
  %8274 = vrot.lane.b32.xlu0 %v8216, 56
  %v8275 = vpop.permute.xlu0 %8274
  %8278 = vrot.lane.b32.xlu0 %v8226, 70
  %v8279 = vpop.permute.xlu0 %8278
  %8282 = vrot.lane.b32.xlu0 %v8223, 84
  %v8283 = vpop.permute.xlu0 %8282
  %8286 = vrot.lane.b32.xlu0 %v8227, 98
  %v8287 = vpop.permute.xlu0 %8286
  %8290 = vrot.lane.b32.xlu0 %v8242, 112
  %v8291 = vpop.permute.xlu0 %8290
  %8294 = vrot.lane.b32.xlu0 %v8258, 126
  %v8295 = vpop.permute.xlu0 %8294
  %8298 = vrot.lane.b32.xlu0 %v8249, 12
  %v8299 = vpop.permute.xlu0 %8298
  %8302 = vrot.lane.b32.xlu0 %v8259, 26
  %v8303 = vpop.permute.xlu0 %8302
  %8306 = vrot.lane.b32.xlu0 %v8257, 40
  %v8307 = vpop.permute.xlu0 %8306
  %8310 = vrot.lane.b32.xlu0 %v8260, 54
  %v8311 = vpop.permute.xlu0 %8310
  %v8313 = vsel %vm156, %v8201, %v8263
  %v8314 = vsel %vm158, %v8313, %v8267
  %v8315 = vsel %vm160, %v8314, %v8271
  %v8316 = vsel %vm162, %v8315, %v8275
  %v8317 = vsel %vm164, %v8316, %v8279
  %v8318 = vsel %vm166, %v8317, %v8283
  %v8319 = vsel %vm168, %v8318, %v8287
  %v8320 = vsel %vm170, %v8319, %v8291
  %v8321 = vsel %vm172, %v8320, %v8295
  %v8322 = vsel %vm174, %v8295, %v8299
  %v8323 = vsel %vm176, %v8322, %v8303
  %v8324 = vsel %vm178, %v8323, %v8307
  %v8325 = vsel %vm180, %v8324, %v8311
  %8326 = vrot.lane.b32.xlu0 %v8176, 127
  %v8327 = vpop.permute.xlu0 %8326
  %8328 = vrot.lane.b32.xlu0 %v8175, 127
  %v8329 = vpop.permute.xlu0 %8328
  %v8332 = vcombine.high %v8327, 0.0
  %v8334 = vunpack.c.l.s4 1983009808
  %v8335 = vunpack.c.0.s8 %v8334
  %v8336 = vlaneseq
  %v8337 = vshrl.u32 %v8336, 7
  %v8338 = vsub.s32 %v8335, %v8337
  %v8339 = vrot.slane %v8327, %v8338
  %v8341 = vunpack.c.l.s4 1983009808
  %v8342 = vunpack.c.0.s8 %v8341
  %v8343 = vlaneseq
  %v8344 = vshrl.u32 %v8343, 7
  %v8345 = vsub.s32 %v8342, %v8344
  %v8346 = vrot.slane %v8332, %v8345
  %v8347 = vcombine.high %v8339, 0.0
  %v8349 = vunpack.c.l.s4 1934713408
  %v8350 = vunpack.c.0.s8 %v8349
  %v8351 = vlaneseq
  %v8352 = vshrl.u32 %v8351, 7
  %v8353 = vsub.s32 %v8350, %v8352
  %v8354 = vrot.slane %v8339, %v8353
  %v8356 = vunpack.c.l.s4 1934713408
  %v8357 = vunpack.c.0.s8 %v8356
  %v8358 = vlaneseq
  %v8359 = vshrl.u32 %v8358, 7
  %v8360 = vsub.s32 %v8357, %v8359
  %v8361 = vrot.slane %v8347, %v8360
  %v8362 = vcombine.high %v8346, 0.0
  %v8364 = vunpack.c.l.s4 1934713408
  %v8365 = vunpack.c.0.s8 %v8364
  %v8366 = vlaneseq
  %v8367 = vshrl.u32 %v8366, 7
  %v8368 = vsub.s32 %v8365, %v8367
  %v8369 = vrot.slane %v8346, %v8368
  %v8371 = vunpack.c.l.s4 1934713408
  %v8372 = vunpack.c.0.s8 %v8371
  %v8373 = vlaneseq
  %v8374 = vshrl.u32 %v8373, 7
  %v8375 = vsub.s32 %v8372, %v8374
  %v8376 = vrot.slane %v8362, %v8375
  %v8377 = vcombine.high %v8354, 0.0
  %v8378 = vcombine.high %v8361, 0.0
  %v8379 = vcombine.high %v8369, 0.0
  %v8380 = vcombine.high %v8376, 0.0
  %v8382 = vunpack.c.l.s4 1983009808
  %v8383 = vunpack.c.0.s8 %v8382
  %v8384 = vlaneseq
  %v8385 = vshrl.u32 %v8384, 7
  %v8386 = vsub.s32 %v8383, %v8385
  %v8387 = vrot.slane %v8329, %v8386
  %v8388 = vcombine.high %v8387, 0.0
  %v8390 = vunpack.c.l.s4 1934713408
  %v8391 = vunpack.c.0.s8 %v8390
  %v8392 = vlaneseq
  %v8393 = vshrl.u32 %v8392, 7
  %v8394 = vsub.s32 %v8391, %v8393
  %v8395 = vrot.slane %v8387, %v8394
  %v8397 = vunpack.c.l.s4 1934713408
  %v8398 = vunpack.c.0.s8 %v8397
  %v8399 = vlaneseq
  %v8400 = vshrl.u32 %v8399, 7
  %v8401 = vsub.s32 %v8398, %v8400
  %v8402 = vrot.slane %v8388, %v8401
  %v8403 = vcombine.high %v8329, 0.0
  %v8405 = vunpack.c.l.s4 1934713408
  %v8406 = vunpack.c.0.s8 %v8405
  %v8407 = vlaneseq
  %v8408 = vshrl.u32 %v8407, 7
  %v8409 = vsub.s32 %v8406, %v8408
  %v8410 = vrot.slane %v8403, %v8409
  %v8411 = vcombine.high %v8395, 0.0
  %v8412 = vcombine.high %v8402, 0.0
  %v8413 = vcombine.high %v8410, 0.0
  %8415 = vrot.lane.b32.xlu0 %v8377, 14
  %v8416 = vpop.permute.xlu0 %8415
  %8419 = vrot.lane.b32.xlu0 %v8361, 28
  %v8420 = vpop.permute.xlu0 %8419
  %8423 = vrot.lane.b32.xlu0 %v8378, 42
  %v8424 = vpop.permute.xlu0 %8423
  %8427 = vrot.lane.b32.xlu0 %v8369, 56
  %v8428 = vpop.permute.xlu0 %8427
  %8431 = vrot.lane.b32.xlu0 %v8379, 70
  %v8432 = vpop.permute.xlu0 %8431
  %8435 = vrot.lane.b32.xlu0 %v8376, 84
  %v8436 = vpop.permute.xlu0 %8435
  %8439 = vrot.lane.b32.xlu0 %v8380, 98
  %v8440 = vpop.permute.xlu0 %8439
  %8443 = vrot.lane.b32.xlu0 %v8395, 112
  %v8444 = vpop.permute.xlu0 %8443
  %8447 = vrot.lane.b32.xlu0 %v8411, 126
  %v8448 = vpop.permute.xlu0 %8447
  %8451 = vrot.lane.b32.xlu0 %v8402, 12
  %v8452 = vpop.permute.xlu0 %8451
  %8455 = vrot.lane.b32.xlu0 %v8412, 26
  %v8456 = vpop.permute.xlu0 %8455
  %8459 = vrot.lane.b32.xlu0 %v8410, 40
  %v8460 = vpop.permute.xlu0 %8459
  %8463 = vrot.lane.b32.xlu0 %v8413, 54
  %v8464 = vpop.permute.xlu0 %8463
  %v8466 = vsel %vm156, %v8354, %v8416
  %v8467 = vsel %vm158, %v8466, %v8420
  %v8468 = vsel %vm160, %v8467, %v8424
  %v8469 = vsel %vm162, %v8468, %v8428
  %v8470 = vsel %vm164, %v8469, %v8432
  %v8471 = vsel %vm166, %v8470, %v8436
  %v8472 = vsel %vm168, %v8471, %v8440
  %v8473 = vsel %vm170, %v8472, %v8444
  %v8474 = vsel %vm172, %v8473, %v8448
  %v8475 = vsel %vm174, %v8448, %v8452
  %v8476 = vsel %vm176, %v8475, %v8456
  %v8477 = vsel %vm178, %v8476, %v8460
  %v8478 = vsel %vm180, %v8477, %v8464
  %8479 = vrot.lane.b32.xlu0 %v8176, 126
  %v8480 = vpop.permute.xlu0 %8479
  %8481 = vrot.lane.b32.xlu0 %v8175, 126
  %v8482 = vpop.permute.xlu0 %8481
  %v8485 = vcombine.high %v8480, 0.0
  %v8487 = vunpack.c.l.s4 1983009808
  %v8488 = vunpack.c.0.s8 %v8487
  %v8489 = vlaneseq
  %v8490 = vshrl.u32 %v8489, 7
  %v8491 = vsub.s32 %v8488, %v8490
  %v8492 = vrot.slane %v8480, %v8491
  %v8494 = vunpack.c.l.s4 1983009808
  %v8495 = vunpack.c.0.s8 %v8494
  %v8496 = vlaneseq
  %v8497 = vshrl.u32 %v8496, 7
  %v8498 = vsub.s32 %v8495, %v8497
  %v8499 = vrot.slane %v8485, %v8498
  %v8500 = vcombine.high %v8492, 0.0
  %v8502 = vunpack.c.l.s4 1934713408
  %v8503 = vunpack.c.0.s8 %v8502
  %v8504 = vlaneseq
  %v8505 = vshrl.u32 %v8504, 7
  %v8506 = vsub.s32 %v8503, %v8505
  %v8507 = vrot.slane %v8492, %v8506
  %v8509 = vunpack.c.l.s4 1934713408
  %v8510 = vunpack.c.0.s8 %v8509
  %v8511 = vlaneseq
  %v8512 = vshrl.u32 %v8511, 7
  %v8513 = vsub.s32 %v8510, %v8512
  %v8514 = vrot.slane %v8500, %v8513
  %v8515 = vcombine.high %v8499, 0.0
  %v8517 = vunpack.c.l.s4 1934713408
  %v8518 = vunpack.c.0.s8 %v8517
  %v8519 = vlaneseq
  %v8520 = vshrl.u32 %v8519, 7
  %v8521 = vsub.s32 %v8518, %v8520
  %v8522 = vrot.slane %v8499, %v8521
  %v8524 = vunpack.c.l.s4 1934713408
  %v8525 = vunpack.c.0.s8 %v8524
  %v8526 = vlaneseq
  %v8527 = vshrl.u32 %v8526, 7
  %v8528 = vsub.s32 %v8525, %v8527
  %v8529 = vrot.slane %v8515, %v8528
  %v8530 = vcombine.high %v8507, 0.0
  %v8531 = vcombine.high %v8514, 0.0
  %v8532 = vcombine.high %v8522, 0.0
  %v8533 = vcombine.high %v8529, 0.0
  %v8535 = vunpack.c.l.s4 1983009808
  %v8536 = vunpack.c.0.s8 %v8535
  %v8537 = vlaneseq
  %v8538 = vshrl.u32 %v8537, 7
  %v8539 = vsub.s32 %v8536, %v8538
  %v8540 = vrot.slane %v8482, %v8539
  %v8541 = vcombine.high %v8540, 0.0
  %v8543 = vunpack.c.l.s4 1934713408
  %v8544 = vunpack.c.0.s8 %v8543
  %v8545 = vlaneseq
  %v8546 = vshrl.u32 %v8545, 7
  %v8547 = vsub.s32 %v8544, %v8546
  %v8548 = vrot.slane %v8540, %v8547
  %v8550 = vunpack.c.l.s4 1934713408
  %v8551 = vunpack.c.0.s8 %v8550
  %v8552 = vlaneseq
  %v8553 = vshrl.u32 %v8552, 7
  %v8554 = vsub.s32 %v8551, %v8553
  %v8555 = vrot.slane %v8541, %v8554
  %v8556 = vcombine.high %v8482, 0.0
  %v8558 = vunpack.c.l.s4 1934713408
  %v8559 = vunpack.c.0.s8 %v8558
  %v8560 = vlaneseq
  %v8561 = vshrl.u32 %v8560, 7
  %v8562 = vsub.s32 %v8559, %v8561
  %v8563 = vrot.slane %v8556, %v8562
  %v8564 = vcombine.high %v8548, 0.0
  %v8565 = vcombine.high %v8555, 0.0
  %v8566 = vcombine.high %v8563, 0.0
  %8568 = vrot.lane.b32.xlu0 %v8530, 14
  %v8569 = vpop.permute.xlu0 %8568
  %8572 = vrot.lane.b32.xlu0 %v8514, 28
  %v8573 = vpop.permute.xlu0 %8572
  %8576 = vrot.lane.b32.xlu0 %v8531, 42
  %v8577 = vpop.permute.xlu0 %8576
  %8580 = vrot.lane.b32.xlu0 %v8522, 56
  %v8581 = vpop.permute.xlu0 %8580
  %8584 = vrot.lane.b32.xlu0 %v8532, 70
  %v8585 = vpop.permute.xlu0 %8584
  %8588 = vrot.lane.b32.xlu0 %v8529, 84
  %v8589 = vpop.permute.xlu0 %8588
  %8592 = vrot.lane.b32.xlu0 %v8533, 98
  %v8593 = vpop.permute.xlu0 %8592
  %8596 = vrot.lane.b32.xlu0 %v8548, 112
  %v8597 = vpop.permute.xlu0 %8596
  %8600 = vrot.lane.b32.xlu0 %v8564, 126
  %v8601 = vpop.permute.xlu0 %8600
  %8604 = vrot.lane.b32.xlu0 %v8555, 12
  %v8605 = vpop.permute.xlu0 %8604
  %8608 = vrot.lane.b32.xlu0 %v8565, 26
  %v8609 = vpop.permute.xlu0 %8608
  %8612 = vrot.lane.b32.xlu0 %v8563, 40
  %v8613 = vpop.permute.xlu0 %8612
  %8616 = vrot.lane.b32.xlu0 %v8566, 54
  %v8617 = vpop.permute.xlu0 %8616
  %v8619 = vsel %vm156, %v8507, %v8569
  %v8620 = vsel %vm158, %v8619, %v8573
  %v8621 = vsel %vm160, %v8620, %v8577
  %v8622 = vsel %vm162, %v8621, %v8581
  %v8623 = vsel %vm164, %v8622, %v8585
  %v8624 = vsel %vm166, %v8623, %v8589
  %v8625 = vsel %vm168, %v8624, %v8593
  %v8626 = vsel %vm170, %v8625, %v8597
  %v8627 = vsel %vm172, %v8626, %v8601
  %v8628 = vsel %vm174, %v8601, %v8605
  %v8629 = vsel %vm176, %v8628, %v8609
  %v8630 = vsel %vm178, %v8629, %v8613
  %v8631 = vsel %vm180, %v8630, %v8617
  %v8632 = vcombine.high %v5886, 0.0
  %v8634 = vunpack.c.l.s4 1983009808
  %v8635 = vunpack.c.0.s8 %v8634
  %v8636 = vlaneseq
  %v8637 = vshrl.u32 %v8636, 7
  %v8638 = vsub.s32 %v8635, %v8637
  %v8639 = vrot.slane %v5886, %v8638
  %v8641 = vunpack.c.l.s4 1983009808
  %v8642 = vunpack.c.0.s8 %v8641
  %v8643 = vlaneseq
  %v8644 = vshrl.u32 %v8643, 7
  %v8645 = vsub.s32 %v8642, %v8644
  %v8646 = vrot.slane %v8632, %v8645
  %v8647 = vcombine.high %v8639, 0.0
  %v8649 = vunpack.c.l.s4 1934713408
  %v8650 = vunpack.c.0.s8 %v8649
  %v8651 = vlaneseq
  %v8652 = vshrl.u32 %v8651, 7
  %v8653 = vsub.s32 %v8650, %v8652
  %v8654 = vrot.slane %v8639, %v8653
  %v8656 = vunpack.c.l.s4 1934713408
  %v8657 = vunpack.c.0.s8 %v8656
  %v8658 = vlaneseq
  %v8659 = vshrl.u32 %v8658, 7
  %v8660 = vsub.s32 %v8657, %v8659
  %v8661 = vrot.slane %v8647, %v8660
  %v8662 = vcombine.high %v8646, 0.0
  %v8664 = vunpack.c.l.s4 1934713408
  %v8665 = vunpack.c.0.s8 %v8664
  %v8666 = vlaneseq
  %v8667 = vshrl.u32 %v8666, 7
  %v8668 = vsub.s32 %v8665, %v8667
  %v8669 = vrot.slane %v8646, %v8668
  %v8671 = vunpack.c.l.s4 1934713408
  %v8672 = vunpack.c.0.s8 %v8671
  %v8673 = vlaneseq
  %v8674 = vshrl.u32 %v8673, 7
  %v8675 = vsub.s32 %v8672, %v8674
  %v8676 = vrot.slane %v8662, %v8675
  %v8677 = vcombine.high %v8654, 0.0
  %v8678 = vcombine.high %v8661, 0.0
  %v8679 = vcombine.high %v8669, 0.0
  %v8680 = vcombine.high %v8676, 0.0
  %v8682 = vunpack.c.l.s4 1983009808
  %v8683 = vunpack.c.0.s8 %v8682
  %v8684 = vlaneseq
  %v8685 = vshrl.u32 %v8684, 7
  %v8686 = vsub.s32 %v8683, %v8685
  %v8687 = vrot.slane %v5887, %v8686
  %v8688 = vcombine.high %v8687, 0.0
  %v8690 = vunpack.c.l.s4 1934713408
  %v8691 = vunpack.c.0.s8 %v8690
  %v8692 = vlaneseq
  %v8693 = vshrl.u32 %v8692, 7
  %v8694 = vsub.s32 %v8691, %v8693
  %v8695 = vrot.slane %v8687, %v8694
  %v8697 = vunpack.c.l.s4 1934713408
  %v8698 = vunpack.c.0.s8 %v8697
  %v8699 = vlaneseq
  %v8700 = vshrl.u32 %v8699, 7
  %v8701 = vsub.s32 %v8698, %v8700
  %v8702 = vrot.slane %v8688, %v8701
  %v8703 = vcombine.high %v5887, 0.0
  %v8705 = vunpack.c.l.s4 1934713408
  %v8706 = vunpack.c.0.s8 %v8705
  %v8707 = vlaneseq
  %v8708 = vshrl.u32 %v8707, 7
  %v8709 = vsub.s32 %v8706, %v8708
  %v8710 = vrot.slane %v8703, %v8709
  %v8711 = vcombine.high %v8695, 0.0
  %v8712 = vcombine.high %v8702, 0.0
  %v8713 = vcombine.high %v8710, 0.0
  %8715 = vrot.lane.b32.xlu0 %v8677, 14
  %v8716 = vpop.permute.xlu0 %8715
  %8719 = vrot.lane.b32.xlu0 %v8661, 28
  %v8720 = vpop.permute.xlu0 %8719
  %8723 = vrot.lane.b32.xlu0 %v8678, 42
  %v8724 = vpop.permute.xlu0 %8723
  %8727 = vrot.lane.b32.xlu0 %v8669, 56
  %v8728 = vpop.permute.xlu0 %8727
  %8731 = vrot.lane.b32.xlu0 %v8679, 70
  %v8732 = vpop.permute.xlu0 %8731
  %8735 = vrot.lane.b32.xlu0 %v8676, 84
  %v8736 = vpop.permute.xlu0 %8735
  %8739 = vrot.lane.b32.xlu0 %v8680, 98
  %v8740 = vpop.permute.xlu0 %8739
  %8743 = vrot.lane.b32.xlu0 %v8695, 112
  %v8744 = vpop.permute.xlu0 %8743
  %8747 = vrot.lane.b32.xlu0 %v8711, 126
  %v8748 = vpop.permute.xlu0 %8747
  %8751 = vrot.lane.b32.xlu0 %v8702, 12
  %v8752 = vpop.permute.xlu0 %8751
  %8755 = vrot.lane.b32.xlu0 %v8712, 26
  %v8756 = vpop.permute.xlu0 %8755
  %8759 = vrot.lane.b32.xlu0 %v8710, 40
  %v8760 = vpop.permute.xlu0 %8759
  %8763 = vrot.lane.b32.xlu0 %v8713, 54
  %v8764 = vpop.permute.xlu0 %8763
  %v8766 = vsel %vm156, %v8654, %v8716
  %v8767 = vsel %vm158, %v8766, %v8720
  %v8768 = vsel %vm160, %v8767, %v8724
  %v8769 = vsel %vm162, %v8768, %v8728
  %v8770 = vsel %vm164, %v8769, %v8732
  %v8771 = vsel %vm166, %v8770, %v8736
  %v8772 = vsel %vm168, %v8771, %v8740
  %v8773 = vsel %vm170, %v8772, %v8744
  %v8774 = vsel %vm172, %v8773, %v8748
  %v8775 = vsel %vm174, %v8748, %v8752
  %v8776 = vsel %vm176, %v8775, %v8756
  %v8777 = vsel %vm178, %v8776, %v8760
  %v8778 = vsel %vm180, %v8777, %v8764
  %8781 = vrot.lane.b32.xlu0 %v5886, 127
  %v8782 = vpop.permute.xlu0 %8781
  %8783 = vrot.lane.b32.xlu0 %v5887, 127
  %v8784 = vpop.permute.xlu0 %8783
  %v8787 = vcombine.high %v8782, 0.0
  %v8789 = vunpack.c.l.s4 1983009808
  %v8790 = vunpack.c.0.s8 %v8789
  %v8791 = vlaneseq
  %v8792 = vshrl.u32 %v8791, 7
  %v8793 = vsub.s32 %v8790, %v8792
  %v8794 = vrot.slane %v8782, %v8793
  %v8796 = vunpack.c.l.s4 1983009808
  %v8797 = vunpack.c.0.s8 %v8796
  %v8798 = vlaneseq
  %v8799 = vshrl.u32 %v8798, 7
  %v8800 = vsub.s32 %v8797, %v8799
  %v8801 = vrot.slane %v8787, %v8800
  %v8802 = vcombine.high %v8794, 0.0
  %v8804 = vunpack.c.l.s4 1934713408
  %v8805 = vunpack.c.0.s8 %v8804
  %v8806 = vlaneseq
  %v8807 = vshrl.u32 %v8806, 7
  %v8808 = vsub.s32 %v8805, %v8807
  %v8809 = vrot.slane %v8794, %v8808
  %v8811 = vunpack.c.l.s4 1934713408
  %v8812 = vunpack.c.0.s8 %v8811
  %v8813 = vlaneseq
  %v8814 = vshrl.u32 %v8813, 7
  %v8815 = vsub.s32 %v8812, %v8814
  %v8816 = vrot.slane %v8802, %v8815
  %v8817 = vcombine.high %v8801, 0.0
  %v8819 = vunpack.c.l.s4 1934713408
  %v8820 = vunpack.c.0.s8 %v8819
  %v8821 = vlaneseq
  %v8822 = vshrl.u32 %v8821, 7
  %v8823 = vsub.s32 %v8820, %v8822
  %v8824 = vrot.slane %v8801, %v8823
  %v8826 = vunpack.c.l.s4 1934713408
  %v8827 = vunpack.c.0.s8 %v8826
  %v8828 = vlaneseq
  %v8829 = vshrl.u32 %v8828, 7
  %v8830 = vsub.s32 %v8827, %v8829
  %v8831 = vrot.slane %v8817, %v8830
  %v8832 = vcombine.high %v8809, 0.0
  %v8833 = vcombine.high %v8816, 0.0
  %v8834 = vcombine.high %v8824, 0.0
  %v8835 = vcombine.high %v8831, 0.0
  %v8837 = vunpack.c.l.s4 1983009808
  %v8838 = vunpack.c.0.s8 %v8837
  %v8839 = vlaneseq
  %v8840 = vshrl.u32 %v8839, 7
  %v8841 = vsub.s32 %v8838, %v8840
  %v8842 = vrot.slane %v8784, %v8841
  %v8843 = vcombine.high %v8842, 0.0
  %v8845 = vunpack.c.l.s4 1934713408
  %v8846 = vunpack.c.0.s8 %v8845
  %v8847 = vlaneseq
  %v8848 = vshrl.u32 %v8847, 7
  %v8849 = vsub.s32 %v8846, %v8848
  %v8850 = vrot.slane %v8842, %v8849
  %v8852 = vunpack.c.l.s4 1934713408
  %v8853 = vunpack.c.0.s8 %v8852
  %v8854 = vlaneseq
  %v8855 = vshrl.u32 %v8854, 7
  %v8856 = vsub.s32 %v8853, %v8855
  %v8857 = vrot.slane %v8843, %v8856
  %v8858 = vcombine.high %v8784, 0.0
  %v8860 = vunpack.c.l.s4 1934713408
  %v8861 = vunpack.c.0.s8 %v8860
  %v8862 = vlaneseq
  %v8863 = vshrl.u32 %v8862, 7
  %v8864 = vsub.s32 %v8861, %v8863
  %v8865 = vrot.slane %v8858, %v8864
  %v8866 = vcombine.high %v8850, 0.0
  %v8867 = vcombine.high %v8857, 0.0
  %v8868 = vcombine.high %v8865, 0.0
  %8870 = vrot.lane.b32.xlu0 %v8832, 14
  %v8871 = vpop.permute.xlu0 %8870
  %8874 = vrot.lane.b32.xlu0 %v8816, 28
  %v8875 = vpop.permute.xlu0 %8874
  %8878 = vrot.lane.b32.xlu0 %v8833, 42
  %v8879 = vpop.permute.xlu0 %8878
  %8882 = vrot.lane.b32.xlu0 %v8824, 56
  %v8883 = vpop.permute.xlu0 %8882
  %8886 = vrot.lane.b32.xlu0 %v8834, 70
  %v8887 = vpop.permute.xlu0 %8886
  %8890 = vrot.lane.b32.xlu0 %v8831, 84
  %v8891 = vpop.permute.xlu0 %8890
  %8894 = vrot.lane.b32.xlu0 %v8835, 98
  %v8895 = vpop.permute.xlu0 %8894
  %8898 = vrot.lane.b32.xlu0 %v8850, 112
  %v8899 = vpop.permute.xlu0 %8898
  %8902 = vrot.lane.b32.xlu0 %v8866, 126
  %v8903 = vpop.permute.xlu0 %8902
  %8906 = vrot.lane.b32.xlu0 %v8857, 12
  %v8907 = vpop.permute.xlu0 %8906
  %8910 = vrot.lane.b32.xlu0 %v8867, 26
  %v8911 = vpop.permute.xlu0 %8910
  %8914 = vrot.lane.b32.xlu0 %v8865, 40
  %v8915 = vpop.permute.xlu0 %8914
  %8918 = vrot.lane.b32.xlu0 %v8868, 54
  %v8919 = vpop.permute.xlu0 %8918
  %v8921 = vsel %vm156, %v8809, %v8871
  %v8922 = vsel %vm158, %v8921, %v8875
  %v8923 = vsel %vm160, %v8922, %v8879
  %v8924 = vsel %vm162, %v8923, %v8883
  %v8925 = vsel %vm164, %v8924, %v8887
  %v8926 = vsel %vm166, %v8925, %v8891
  %v8927 = vsel %vm168, %v8926, %v8895
  %v8928 = vsel %vm170, %v8927, %v8899
  %v8929 = vsel %vm172, %v8928, %v8903
  %v8930 = vsel %vm174, %v8903, %v8907
  %v8931 = vsel %vm176, %v8930, %v8911
  %v8932 = vsel %vm178, %v8931, %v8915
  %v8933 = vsel %vm180, %v8932, %v8919
  %8934 = vrot.lane.b32.xlu0 %v5886, 126
  %v8935 = vpop.permute.xlu0 %8934
  %8936 = vrot.lane.b32.xlu0 %v5887, 126
  %v8937 = vpop.permute.xlu0 %8936
  %v8940 = vcombine.high %v8935, 0.0
  %v8942 = vunpack.c.l.s4 1983009808
  %v8943 = vunpack.c.0.s8 %v8942
  %v8944 = vlaneseq
  %v8945 = vshrl.u32 %v8944, 7
  %v8946 = vsub.s32 %v8943, %v8945
  %v8947 = vrot.slane %v8935, %v8946
  %v8949 = vunpack.c.l.s4 1983009808
  %v8950 = vunpack.c.0.s8 %v8949
  %v8951 = vlaneseq
  %v8952 = vshrl.u32 %v8951, 7
  %v8953 = vsub.s32 %v8950, %v8952
  %v8954 = vrot.slane %v8940, %v8953
  %v8955 = vcombine.high %v8947, 0.0
  %v8957 = vunpack.c.l.s4 1934713408
  %v8958 = vunpack.c.0.s8 %v8957
  %v8959 = vlaneseq
  %v8960 = vshrl.u32 %v8959, 7
  %v8961 = vsub.s32 %v8958, %v8960
  %v8962 = vrot.slane %v8947, %v8961
  %v8964 = vunpack.c.l.s4 1934713408
  %v8965 = vunpack.c.0.s8 %v8964
  %v8966 = vlaneseq
  %v8967 = vshrl.u32 %v8966, 7
  %v8968 = vsub.s32 %v8965, %v8967
  %v8969 = vrot.slane %v8955, %v8968
  %v8970 = vcombine.high %v8954, 0.0
  %v8972 = vunpack.c.l.s4 1934713408
  %v8973 = vunpack.c.0.s8 %v8972
  %v8974 = vlaneseq
  %v8975 = vshrl.u32 %v8974, 7
  %v8976 = vsub.s32 %v8973, %v8975
  %v8977 = vrot.slane %v8954, %v8976
  %v8979 = vunpack.c.l.s4 1934713408
  %v8980 = vunpack.c.0.s8 %v8979
  %v8981 = vlaneseq
  %v8982 = vshrl.u32 %v8981, 7
  %v8983 = vsub.s32 %v8980, %v8982
  %v8984 = vrot.slane %v8970, %v8983
  %v8985 = vcombine.high %v8962, 0.0
  %v8986 = vcombine.high %v8969, 0.0
  %v8987 = vcombine.high %v8977, 0.0
  %v8988 = vcombine.high %v8984, 0.0
  %v8990 = vunpack.c.l.s4 1983009808
  %v8991 = vunpack.c.0.s8 %v8990
  %v8992 = vlaneseq
  %v8993 = vshrl.u32 %v8992, 7
  %v8994 = vsub.s32 %v8991, %v8993
  %v8995 = vrot.slane %v8937, %v8994
  %v8996 = vcombine.high %v8995, 0.0
  %v8998 = vunpack.c.l.s4 1934713408
  %v8999 = vunpack.c.0.s8 %v8998
  %v9000 = vlaneseq
  %v9001 = vshrl.u32 %v9000, 7
  %v9002 = vsub.s32 %v8999, %v9001
  %v9003 = vrot.slane %v8995, %v9002
  %v9005 = vunpack.c.l.s4 1934713408
  %v9006 = vunpack.c.0.s8 %v9005
  %v9007 = vlaneseq
  %v9008 = vshrl.u32 %v9007, 7
  %v9009 = vsub.s32 %v9006, %v9008
  %v9010 = vrot.slane %v8996, %v9009
  %v9011 = vcombine.high %v8937, 0.0
  %v9013 = vunpack.c.l.s4 1934713408
  %v9014 = vunpack.c.0.s8 %v9013
  %v9015 = vlaneseq
  %v9016 = vshrl.u32 %v9015, 7
  %v9017 = vsub.s32 %v9014, %v9016
  %v9018 = vrot.slane %v9011, %v9017
  %v9019 = vcombine.high %v9003, 0.0
  %v9020 = vcombine.high %v9010, 0.0
  %v9021 = vcombine.high %v9018, 0.0
  %9023 = vrot.lane.b32.xlu0 %v8985, 14
  %v9024 = vpop.permute.xlu0 %9023
  %9027 = vrot.lane.b32.xlu0 %v8969, 28
  %v9028 = vpop.permute.xlu0 %9027
  %9031 = vrot.lane.b32.xlu0 %v8986, 42
  %v9032 = vpop.permute.xlu0 %9031
  %9035 = vrot.lane.b32.xlu0 %v8977, 56
  %v9036 = vpop.permute.xlu0 %9035
  %9039 = vrot.lane.b32.xlu0 %v8987, 70
  %v9040 = vpop.permute.xlu0 %9039
  %9043 = vrot.lane.b32.xlu0 %v8984, 84
  %v9044 = vpop.permute.xlu0 %9043
  %9047 = vrot.lane.b32.xlu0 %v8988, 98
  %v9048 = vpop.permute.xlu0 %9047
  %9051 = vrot.lane.b32.xlu0 %v9003, 112
  %v9052 = vpop.permute.xlu0 %9051
  %9055 = vrot.lane.b32.xlu0 %v9019, 126
  %v9056 = vpop.permute.xlu0 %9055
  %9059 = vrot.lane.b32.xlu0 %v9010, 12
  %v9060 = vpop.permute.xlu0 %9059
  %9063 = vrot.lane.b32.xlu0 %v9020, 26
  %v9064 = vpop.permute.xlu0 %9063
  %9067 = vrot.lane.b32.xlu0 %v9018, 40
  %v9068 = vpop.permute.xlu0 %9067
  %9071 = vrot.lane.b32.xlu0 %v9021, 54
  %v9072 = vpop.permute.xlu0 %9071
  %v9074 = vsel %vm156, %v8962, %v9024
  %v9075 = vsel %vm158, %v9074, %v9028
  %v9076 = vsel %vm160, %v9075, %v9032
  %v9077 = vsel %vm162, %v9076, %v9036
  %v9078 = vsel %vm164, %v9077, %v9040
  %v9079 = vsel %vm166, %v9078, %v9044
  %v9080 = vsel %vm168, %v9079, %v9048
  %v9081 = vsel %vm170, %v9080, %v9052
  %v9082 = vsel %vm172, %v9081, %v9056
  %v9083 = vsel %vm174, %v9056, %v9060
  %v9084 = vsel %vm176, %v9083, %v9064
  %v9085 = vsel %vm178, %v9084, %v9068
  %v9086 = vsel %vm180, %v9085, %v9072
  %v9087 = vrot.slane %v5886, 1
  %v9088 = vrot.slane %v5887, 1
  %v9089 = vsel %vm490, %v9087, %v9088
  %v9092 = vcombine.high %v9089, 0.0
  %v9094 = vunpack.c.l.s4 1983009808
  %v9095 = vunpack.c.0.s8 %v9094
  %v9096 = vlaneseq
  %v9097 = vshrl.u32 %v9096, 7
  %v9098 = vsub.s32 %v9095, %v9097
  %v9099 = vrot.slane %v9089, %v9098
  %v9101 = vunpack.c.l.s4 1983009808
  %v9102 = vunpack.c.0.s8 %v9101
  %v9103 = vlaneseq
  %v9104 = vshrl.u32 %v9103, 7
  %v9105 = vsub.s32 %v9102, %v9104
  %v9106 = vrot.slane %v9092, %v9105
  %v9107 = vcombine.high %v9099, 0.0
  %v9109 = vunpack.c.l.s4 1934713408
  %v9110 = vunpack.c.0.s8 %v9109
  %v9111 = vlaneseq
  %v9112 = vshrl.u32 %v9111, 7
  %v9113 = vsub.s32 %v9110, %v9112
  %v9114 = vrot.slane %v9099, %v9113
  %v9116 = vunpack.c.l.s4 1934713408
  %v9117 = vunpack.c.0.s8 %v9116
  %v9118 = vlaneseq
  %v9119 = vshrl.u32 %v9118, 7
  %v9120 = vsub.s32 %v9117, %v9119
  %v9121 = vrot.slane %v9107, %v9120
  %v9122 = vcombine.high %v9106, 0.0
  %v9124 = vunpack.c.l.s4 1934713408
  %v9125 = vunpack.c.0.s8 %v9124
  %v9126 = vlaneseq
  %v9127 = vshrl.u32 %v9126, 7
  %v9128 = vsub.s32 %v9125, %v9127
  %v9129 = vrot.slane %v9106, %v9128
  %v9131 = vunpack.c.l.s4 1934713408
  %v9132 = vunpack.c.0.s8 %v9131
  %v9133 = vlaneseq
  %v9134 = vshrl.u32 %v9133, 7
  %v9135 = vsub.s32 %v9132, %v9134
  %v9136 = vrot.slane %v9122, %v9135
  %v9137 = vcombine.high %v9114, 0.0
  %v9138 = vcombine.high %v9121, 0.0
  %v9139 = vcombine.high %v9129, 0.0
  %v9140 = vcombine.high %v9136, 0.0
  %v9142 = vunpack.c.l.s4 1983009808
  %v9143 = vunpack.c.0.s8 %v9142
  %v9144 = vlaneseq
  %v9145 = vshrl.u32 %v9144, 7
  %v9146 = vsub.s32 %v9143, %v9145
  %v9147 = vrot.slane %v9088, %v9146
  %v9148 = vcombine.high %v9147, 0.0
  %v9150 = vunpack.c.l.s4 1934713408
  %v9151 = vunpack.c.0.s8 %v9150
  %v9152 = vlaneseq
  %v9153 = vshrl.u32 %v9152, 7
  %v9154 = vsub.s32 %v9151, %v9153
  %v9155 = vrot.slane %v9147, %v9154
  %v9157 = vunpack.c.l.s4 1934713408
  %v9158 = vunpack.c.0.s8 %v9157
  %v9159 = vlaneseq
  %v9160 = vshrl.u32 %v9159, 7
  %v9161 = vsub.s32 %v9158, %v9160
  %v9162 = vrot.slane %v9148, %v9161
  %v9163 = vcombine.high %v9088, 0.0
  %v9165 = vunpack.c.l.s4 1934713408
  %v9166 = vunpack.c.0.s8 %v9165
  %v9167 = vlaneseq
  %v9168 = vshrl.u32 %v9167, 7
  %v9169 = vsub.s32 %v9166, %v9168
  %v9170 = vrot.slane %v9163, %v9169
  %v9171 = vcombine.high %v9155, 0.0
  %v9172 = vcombine.high %v9162, 0.0
  %v9173 = vcombine.high %v9170, 0.0
  %9175 = vrot.lane.b32.xlu0 %v9137, 14
  %v9176 = vpop.permute.xlu0 %9175
  %9179 = vrot.lane.b32.xlu0 %v9121, 28
  %v9180 = vpop.permute.xlu0 %9179
  %9183 = vrot.lane.b32.xlu0 %v9138, 42
  %v9184 = vpop.permute.xlu0 %9183
  %9187 = vrot.lane.b32.xlu0 %v9129, 56
  %v9188 = vpop.permute.xlu0 %9187
  %9191 = vrot.lane.b32.xlu0 %v9139, 70
  %v9192 = vpop.permute.xlu0 %9191
  %9195 = vrot.lane.b32.xlu0 %v9136, 84
  %v9196 = vpop.permute.xlu0 %9195
  %9199 = vrot.lane.b32.xlu0 %v9140, 98
  %v9200 = vpop.permute.xlu0 %9199
  %9203 = vrot.lane.b32.xlu0 %v9155, 112
  %v9204 = vpop.permute.xlu0 %9203
  %9207 = vrot.lane.b32.xlu0 %v9171, 126
  %v9208 = vpop.permute.xlu0 %9207
  %9211 = vrot.lane.b32.xlu0 %v9162, 12
  %v9212 = vpop.permute.xlu0 %9211
  %9215 = vrot.lane.b32.xlu0 %v9172, 26
  %v9216 = vpop.permute.xlu0 %9215
  %9219 = vrot.lane.b32.xlu0 %v9170, 40
  %v9220 = vpop.permute.xlu0 %9219
  %9223 = vrot.lane.b32.xlu0 %v9173, 54
  %v9224 = vpop.permute.xlu0 %9223
  %v9226 = vsel %vm156, %v9114, %v9176
  %v9227 = vsel %vm158, %v9226, %v9180
  %v9228 = vsel %vm160, %v9227, %v9184
  %v9229 = vsel %vm162, %v9228, %v9188
  %v9230 = vsel %vm164, %v9229, %v9192
  %v9231 = vsel %vm166, %v9230, %v9196
  %v9232 = vsel %vm168, %v9231, %v9200
  %v9233 = vsel %vm170, %v9232, %v9204
  %v9234 = vsel %vm172, %v9233, %v9208
  %v9235 = vsel %vm174, %v9208, %v9212
  %v9236 = vsel %vm176, %v9235, %v9216
  %v9237 = vsel %vm178, %v9236, %v9220
  %v9238 = vsel %vm180, %v9237, %v9224
  %9239 = vrot.lane.b32.xlu0 %v9089, 127
  %v9240 = vpop.permute.xlu0 %9239
  %9241 = vrot.lane.b32.xlu0 %v9088, 127
  %v9242 = vpop.permute.xlu0 %9241
  %v9245 = vcombine.high %v9240, 0.0
  %v9247 = vunpack.c.l.s4 1983009808
  %v9248 = vunpack.c.0.s8 %v9247
  %v9249 = vlaneseq
  %v9250 = vshrl.u32 %v9249, 7
  %v9251 = vsub.s32 %v9248, %v9250
  %v9252 = vrot.slane %v9240, %v9251
  %v9254 = vunpack.c.l.s4 1983009808
  %v9255 = vunpack.c.0.s8 %v9254
  %v9256 = vlaneseq
  %v9257 = vshrl.u32 %v9256, 7
  %v9258 = vsub.s32 %v9255, %v9257
  %v9259 = vrot.slane %v9245, %v9258
  %v9260 = vcombine.high %v9252, 0.0
  %v9262 = vunpack.c.l.s4 1934713408
  %v9263 = vunpack.c.0.s8 %v9262
  %v9264 = vlaneseq
  %v9265 = vshrl.u32 %v9264, 7
  %v9266 = vsub.s32 %v9263, %v9265
  %v9267 = vrot.slane %v9252, %v9266
  %v9269 = vunpack.c.l.s4 1934713408
  %v9270 = vunpack.c.0.s8 %v9269
  %v9271 = vlaneseq
  %v9272 = vshrl.u32 %v9271, 7
  %v9273 = vsub.s32 %v9270, %v9272
  %v9274 = vrot.slane %v9260, %v9273
  %v9275 = vcombine.high %v9259, 0.0
  %v9277 = vunpack.c.l.s4 1934713408
  %v9278 = vunpack.c.0.s8 %v9277
  %v9279 = vlaneseq
  %v9280 = vshrl.u32 %v9279, 7
  %v9281 = vsub.s32 %v9278, %v9280
  %v9282 = vrot.slane %v9259, %v9281
  %v9284 = vunpack.c.l.s4 1934713408
  %v9285 = vunpack.c.0.s8 %v9284
  %v9286 = vlaneseq
  %v9287 = vshrl.u32 %v9286, 7
  %v9288 = vsub.s32 %v9285, %v9287
  %v9289 = vrot.slane %v9275, %v9288
  %v9290 = vcombine.high %v9267, 0.0
  %v9291 = vcombine.high %v9274, 0.0
  %v9292 = vcombine.high %v9282, 0.0
  %v9293 = vcombine.high %v9289, 0.0
  %v9295 = vunpack.c.l.s4 1983009808
  %v9296 = vunpack.c.0.s8 %v9295
  %v9297 = vlaneseq
  %v9298 = vshrl.u32 %v9297, 7
  %v9299 = vsub.s32 %v9296, %v9298
  %v9300 = vrot.slane %v9242, %v9299
  %v9301 = vcombine.high %v9300, 0.0
  %v9303 = vunpack.c.l.s4 1934713408
  %v9304 = vunpack.c.0.s8 %v9303
  %v9305 = vlaneseq
  %v9306 = vshrl.u32 %v9305, 7
  %v9307 = vsub.s32 %v9304, %v9306
  %v9308 = vrot.slane %v9300, %v9307
  %v9310 = vunpack.c.l.s4 1934713408
  %v9311 = vunpack.c.0.s8 %v9310
  %v9312 = vlaneseq
  %v9313 = vshrl.u32 %v9312, 7
  %v9314 = vsub.s32 %v9311, %v9313
  %v9315 = vrot.slane %v9301, %v9314
  %v9316 = vcombine.high %v9242, 0.0
  %v9318 = vunpack.c.l.s4 1934713408
  %v9319 = vunpack.c.0.s8 %v9318
  %v9320 = vlaneseq
  %v9321 = vshrl.u32 %v9320, 7
  %v9322 = vsub.s32 %v9319, %v9321
  %v9323 = vrot.slane %v9316, %v9322
  %v9324 = vcombine.high %v9308, 0.0
  %v9325 = vcombine.high %v9315, 0.0
  %v9326 = vcombine.high %v9323, 0.0
  %9328 = vrot.lane.b32.xlu0 %v9290, 14
  %v9329 = vpop.permute.xlu0 %9328
  %9332 = vrot.lane.b32.xlu0 %v9274, 28
  %v9333 = vpop.permute.xlu0 %9332
  %9336 = vrot.lane.b32.xlu0 %v9291, 42
  %v9337 = vpop.permute.xlu0 %9336
  %9340 = vrot.lane.b32.xlu0 %v9282, 56
  %v9341 = vpop.permute.xlu0 %9340
  %9344 = vrot.lane.b32.xlu0 %v9292, 70
  %v9345 = vpop.permute.xlu0 %9344
  %9348 = vrot.lane.b32.xlu0 %v9289, 84
  %v9349 = vpop.permute.xlu0 %9348
  %9352 = vrot.lane.b32.xlu0 %v9293, 98
  %v9353 = vpop.permute.xlu0 %9352
  %9356 = vrot.lane.b32.xlu0 %v9308, 112
  %v9357 = vpop.permute.xlu0 %9356
  %9360 = vrot.lane.b32.xlu0 %v9324, 126
  %v9361 = vpop.permute.xlu0 %9360
  %9364 = vrot.lane.b32.xlu0 %v9315, 12
  %v9365 = vpop.permute.xlu0 %9364
  %9368 = vrot.lane.b32.xlu0 %v9325, 26
  %v9369 = vpop.permute.xlu0 %9368
  %9372 = vrot.lane.b32.xlu0 %v9323, 40
  %v9373 = vpop.permute.xlu0 %9372
  %9376 = vrot.lane.b32.xlu0 %v9326, 54
  %v9377 = vpop.permute.xlu0 %9376
  %v9379 = vsel %vm156, %v9267, %v9329
  %v9380 = vsel %vm158, %v9379, %v9333
  %v9381 = vsel %vm160, %v9380, %v9337
  %v9382 = vsel %vm162, %v9381, %v9341
  %v9383 = vsel %vm164, %v9382, %v9345
  %v9384 = vsel %vm166, %v9383, %v9349
  %v9385 = vsel %vm168, %v9384, %v9353
  %v9386 = vsel %vm170, %v9385, %v9357
  %v9387 = vsel %vm172, %v9386, %v9361
  %v9388 = vsel %vm174, %v9361, %v9365
  %v9389 = vsel %vm176, %v9388, %v9369
  %v9390 = vsel %vm178, %v9389, %v9373
  %v9391 = vsel %vm180, %v9390, %v9377
  %9392 = vrot.lane.b32.xlu0 %v9089, 126
  %v9393 = vpop.permute.xlu0 %9392
  %9394 = vrot.lane.b32.xlu0 %v9088, 126
  %v9395 = vpop.permute.xlu0 %9394
  %v9398 = vcombine.high %v9393, 0.0
  %v9400 = vunpack.c.l.s4 1983009808
  %v9401 = vunpack.c.0.s8 %v9400
  %v9402 = vlaneseq
  %v9403 = vshrl.u32 %v9402, 7
  %v9404 = vsub.s32 %v9401, %v9403
  %v9405 = vrot.slane %v9393, %v9404
  %v9407 = vunpack.c.l.s4 1983009808
  %v9408 = vunpack.c.0.s8 %v9407
  %v9409 = vlaneseq
  %v9410 = vshrl.u32 %v9409, 7
  %v9411 = vsub.s32 %v9408, %v9410
  %v9412 = vrot.slane %v9398, %v9411
  %v9413 = vcombine.high %v9405, 0.0
  %v9415 = vunpack.c.l.s4 1934713408
  %v9416 = vunpack.c.0.s8 %v9415
  %v9417 = vlaneseq
  %v9418 = vshrl.u32 %v9417, 7
  %v9419 = vsub.s32 %v9416, %v9418
  %v9420 = vrot.slane %v9405, %v9419
  %v9422 = vunpack.c.l.s4 1934713408
  %v9423 = vunpack.c.0.s8 %v9422
  %v9424 = vlaneseq
  %v9425 = vshrl.u32 %v9424, 7
  %v9426 = vsub.s32 %v9423, %v9425
  %v9427 = vrot.slane %v9413, %v9426
  %v9428 = vcombine.high %v9412, 0.0
  %v9430 = vunpack.c.l.s4 1934713408
  %v9431 = vunpack.c.0.s8 %v9430
  %v9432 = vlaneseq
  %v9433 = vshrl.u32 %v9432, 7
  %v9434 = vsub.s32 %v9431, %v9433
  %v9435 = vrot.slane %v9412, %v9434
  %v9437 = vunpack.c.l.s4 1934713408
  %v9438 = vunpack.c.0.s8 %v9437
  %v9439 = vlaneseq
  %v9440 = vshrl.u32 %v9439, 7
  %v9441 = vsub.s32 %v9438, %v9440
  %v9442 = vrot.slane %v9428, %v9441
  %v9443 = vcombine.high %v9420, 0.0
  %v9444 = vcombine.high %v9427, 0.0
  %v9445 = vcombine.high %v9435, 0.0
  %v9446 = vcombine.high %v9442, 0.0
  %v9448 = vunpack.c.l.s4 1983009808
  %v9449 = vunpack.c.0.s8 %v9448
  %v9450 = vlaneseq
  %v9451 = vshrl.u32 %v9450, 7
  %v9452 = vsub.s32 %v9449, %v9451
  %v9453 = vrot.slane %v9395, %v9452
  %v9454 = vcombine.high %v9453, 0.0
  %v9456 = vunpack.c.l.s4 1934713408
  %v9457 = vunpack.c.0.s8 %v9456
  %v9458 = vlaneseq
  %v9459 = vshrl.u32 %v9458, 7
  %v9460 = vsub.s32 %v9457, %v9459
  %v9461 = vrot.slane %v9453, %v9460
  %v9463 = vunpack.c.l.s4 1934713408
  %v9464 = vunpack.c.0.s8 %v9463
  %v9465 = vlaneseq
  %v9466 = vshrl.u32 %v9465, 7
  %v9467 = vsub.s32 %v9464, %v9466
  %v9468 = vrot.slane %v9454, %v9467
  %v9469 = vcombine.high %v9395, 0.0
  %v9471 = vunpack.c.l.s4 1934713408
  %v9472 = vunpack.c.0.s8 %v9471
  %v9473 = vlaneseq
  %v9474 = vshrl.u32 %v9473, 7
  %v9475 = vsub.s32 %v9472, %v9474
  %v9476 = vrot.slane %v9469, %v9475
  %v9477 = vcombine.high %v9461, 0.0
  %v9478 = vcombine.high %v9468, 0.0
  %v9479 = vcombine.high %v9476, 0.0
  %9481 = vrot.lane.b32.xlu0 %v9443, 14
  %v9482 = vpop.permute.xlu0 %9481
  %9485 = vrot.lane.b32.xlu0 %v9427, 28
  %v9486 = vpop.permute.xlu0 %9485
  %9489 = vrot.lane.b32.xlu0 %v9444, 42
  %v9490 = vpop.permute.xlu0 %9489
  %9493 = vrot.lane.b32.xlu0 %v9435, 56
  %v9494 = vpop.permute.xlu0 %9493
  %9497 = vrot.lane.b32.xlu0 %v9445, 70
  %v9498 = vpop.permute.xlu0 %9497
  %9501 = vrot.lane.b32.xlu0 %v9442, 84
  %v9502 = vpop.permute.xlu0 %9501
  %9505 = vrot.lane.b32.xlu0 %v9446, 98
  %v9506 = vpop.permute.xlu0 %9505
  %9509 = vrot.lane.b32.xlu0 %v9461, 112
  %v9510 = vpop.permute.xlu0 %9509
  %9513 = vrot.lane.b32.xlu0 %v9477, 126
  %v9514 = vpop.permute.xlu0 %9513
  %9517 = vrot.lane.b32.xlu0 %v9468, 12
  %v9518 = vpop.permute.xlu0 %9517
  %9521 = vrot.lane.b32.xlu0 %v9478, 26
  %v9522 = vpop.permute.xlu0 %9521
  %9525 = vrot.lane.b32.xlu0 %v9476, 40
  %v9526 = vpop.permute.xlu0 %9525
  %9529 = vrot.lane.b32.xlu0 %v9479, 54
  %v9530 = vpop.permute.xlu0 %9529
  %v9532 = vsel %vm156, %v9420, %v9482
  %v9533 = vsel %vm158, %v9532, %v9486
  %v9534 = vsel %vm160, %v9533, %v9490
  %v9535 = vsel %vm162, %v9534, %v9494
  %v9536 = vsel %vm164, %v9535, %v9498
  %v9537 = vsel %vm166, %v9536, %v9502
  %v9538 = vsel %vm168, %v9537, %v9506
  %v9539 = vsel %vm170, %v9538, %v9510
  %v9540 = vsel %vm172, %v9539, %v9514
  %v9541 = vsel %vm174, %v9514, %v9518
  %v9542 = vsel %vm176, %v9541, %v9522
  %v9543 = vsel %vm178, %v9542, %v9526
  %v9544 = vsel %vm180, %v9543, %v9530
  %v9545 = vrot.slane %v5886, 2
  %v9546 = vrot.slane %v5887, 2
  %v9547 = vsel %vm949, %v9545, %v9546
  %v9550 = vcombine.high %v9547, 0.0
  %v9552 = vunpack.c.l.s4 1983009808
  %v9553 = vunpack.c.0.s8 %v9552
  %v9554 = vlaneseq
  %v9555 = vshrl.u32 %v9554, 7
  %v9556 = vsub.s32 %v9553, %v9555
  %v9557 = vrot.slane %v9547, %v9556
  %v9559 = vunpack.c.l.s4 1983009808
  %v9560 = vunpack.c.0.s8 %v9559
  %v9561 = vlaneseq
  %v9562 = vshrl.u32 %v9561, 7
  %v9563 = vsub.s32 %v9560, %v9562
  %v9564 = vrot.slane %v9550, %v9563
  %v9565 = vcombine.high %v9557, 0.0
  %v9567 = vunpack.c.l.s4 1934713408
  %v9568 = vunpack.c.0.s8 %v9567
  %v9569 = vlaneseq
  %v9570 = vshrl.u32 %v9569, 7
  %v9571 = vsub.s32 %v9568, %v9570
  %v9572 = vrot.slane %v9557, %v9571
  %v9574 = vunpack.c.l.s4 1934713408
  %v9575 = vunpack.c.0.s8 %v9574
  %v9576 = vlaneseq
  %v9577 = vshrl.u32 %v9576, 7
  %v9578 = vsub.s32 %v9575, %v9577
  %v9579 = vrot.slane %v9565, %v9578
  %v9580 = vcombine.high %v9564, 0.0
  %v9582 = vunpack.c.l.s4 1934713408
  %v9583 = vunpack.c.0.s8 %v9582
  %v9584 = vlaneseq
  %v9585 = vshrl.u32 %v9584, 7
  %v9586 = vsub.s32 %v9583, %v9585
  %v9587 = vrot.slane %v9564, %v9586
  %v9589 = vunpack.c.l.s4 1934713408
  %v9590 = vunpack.c.0.s8 %v9589
  %v9591 = vlaneseq
  %v9592 = vshrl.u32 %v9591, 7
  %v9593 = vsub.s32 %v9590, %v9592
  %v9594 = vrot.slane %v9580, %v9593
  %v9595 = vcombine.high %v9572, 0.0
  %v9596 = vcombine.high %v9579, 0.0
  %v9597 = vcombine.high %v9587, 0.0
  %v9598 = vcombine.high %v9594, 0.0
  %v9600 = vunpack.c.l.s4 1983009808
  %v9601 = vunpack.c.0.s8 %v9600
  %v9602 = vlaneseq
  %v9603 = vshrl.u32 %v9602, 7
  %v9604 = vsub.s32 %v9601, %v9603
  %v9605 = vrot.slane %v9546, %v9604
  %v9606 = vcombine.high %v9605, 0.0
  %v9608 = vunpack.c.l.s4 1934713408
  %v9609 = vunpack.c.0.s8 %v9608
  %v9610 = vlaneseq
  %v9611 = vshrl.u32 %v9610, 7
  %v9612 = vsub.s32 %v9609, %v9611
  %v9613 = vrot.slane %v9605, %v9612
  %v9615 = vunpack.c.l.s4 1934713408
  %v9616 = vunpack.c.0.s8 %v9615
  %v9617 = vlaneseq
  %v9618 = vshrl.u32 %v9617, 7
  %v9619 = vsub.s32 %v9616, %v9618
  %v9620 = vrot.slane %v9606, %v9619
  %v9621 = vcombine.high %v9546, 0.0
  %v9623 = vunpack.c.l.s4 1934713408
  %v9624 = vunpack.c.0.s8 %v9623
  %v9625 = vlaneseq
  %v9626 = vshrl.u32 %v9625, 7
  %v9627 = vsub.s32 %v9624, %v9626
  %v9628 = vrot.slane %v9621, %v9627
  %v9629 = vcombine.high %v9613, 0.0
  %v9630 = vcombine.high %v9620, 0.0
  %v9631 = vcombine.high %v9628, 0.0
  %9633 = vrot.lane.b32.xlu0 %v9595, 14
  %v9634 = vpop.permute.xlu0 %9633
  %9637 = vrot.lane.b32.xlu0 %v9579, 28
  %v9638 = vpop.permute.xlu0 %9637
  %9641 = vrot.lane.b32.xlu0 %v9596, 42
  %v9642 = vpop.permute.xlu0 %9641
  %9645 = vrot.lane.b32.xlu0 %v9587, 56
  %v9646 = vpop.permute.xlu0 %9645
  %9649 = vrot.lane.b32.xlu0 %v9597, 70
  %v9650 = vpop.permute.xlu0 %9649
  %9653 = vrot.lane.b32.xlu0 %v9594, 84
  %v9654 = vpop.permute.xlu0 %9653
  %9657 = vrot.lane.b32.xlu0 %v9598, 98
  %v9658 = vpop.permute.xlu0 %9657
  %9661 = vrot.lane.b32.xlu0 %v9613, 112
  %v9662 = vpop.permute.xlu0 %9661
  %9665 = vrot.lane.b32.xlu0 %v9629, 126
  %v9666 = vpop.permute.xlu0 %9665
  %9669 = vrot.lane.b32.xlu0 %v9620, 12
  %v9670 = vpop.permute.xlu0 %9669
  %9673 = vrot.lane.b32.xlu0 %v9630, 26
  %v9674 = vpop.permute.xlu0 %9673
  %9677 = vrot.lane.b32.xlu0 %v9628, 40
  %v9678 = vpop.permute.xlu0 %9677
  %9681 = vrot.lane.b32.xlu0 %v9631, 54
  %v9682 = vpop.permute.xlu0 %9681
  %v9684 = vsel %vm156, %v9572, %v9634
  %v9685 = vsel %vm158, %v9684, %v9638
  %v9686 = vsel %vm160, %v9685, %v9642
  %v9687 = vsel %vm162, %v9686, %v9646
  %v9688 = vsel %vm164, %v9687, %v9650
  %v9689 = vsel %vm166, %v9688, %v9654
  %v9690 = vsel %vm168, %v9689, %v9658
  %v9691 = vsel %vm170, %v9690, %v9662
  %v9692 = vsel %vm172, %v9691, %v9666
  %v9693 = vsel %vm174, %v9666, %v9670
  %v9694 = vsel %vm176, %v9693, %v9674
  %v9695 = vsel %vm178, %v9694, %v9678
  %v9696 = vsel %vm180, %v9695, %v9682
  %9697 = vrot.lane.b32.xlu0 %v9547, 127
  %v9698 = vpop.permute.xlu0 %9697
  %9699 = vrot.lane.b32.xlu0 %v9546, 127
  %v9700 = vpop.permute.xlu0 %9699
  %v9703 = vcombine.high %v9698, 0.0
  %v9705 = vunpack.c.l.s4 1983009808
  %v9706 = vunpack.c.0.s8 %v9705
  %v9707 = vlaneseq
  %v9708 = vshrl.u32 %v9707, 7
  %v9709 = vsub.s32 %v9706, %v9708
  %v9710 = vrot.slane %v9698, %v9709
  %v9712 = vunpack.c.l.s4 1983009808
  %v9713 = vunpack.c.0.s8 %v9712
  %v9714 = vlaneseq
  %v9715 = vshrl.u32 %v9714, 7
  %v9716 = vsub.s32 %v9713, %v9715
  %v9717 = vrot.slane %v9703, %v9716
  %v9718 = vcombine.high %v9710, 0.0
  %v9720 = vunpack.c.l.s4 1934713408
  %v9721 = vunpack.c.0.s8 %v9720
  %v9722 = vlaneseq
  %v9723 = vshrl.u32 %v9722, 7
  %v9724 = vsub.s32 %v9721, %v9723
  %v9725 = vrot.slane %v9710, %v9724
  %v9727 = vunpack.c.l.s4 1934713408
  %v9728 = vunpack.c.0.s8 %v9727
  %v9729 = vlaneseq
  %v9730 = vshrl.u32 %v9729, 7
  %v9731 = vsub.s32 %v9728, %v9730
  %v9732 = vrot.slane %v9718, %v9731
  %v9733 = vcombine.high %v9717, 0.0
  %v9735 = vunpack.c.l.s4 1934713408
  %v9736 = vunpack.c.0.s8 %v9735
  %v9737 = vlaneseq
  %v9738 = vshrl.u32 %v9737, 7
  %v9739 = vsub.s32 %v9736, %v9738
  %v9740 = vrot.slane %v9717, %v9739
  %v9742 = vunpack.c.l.s4 1934713408
  %v9743 = vunpack.c.0.s8 %v9742
  %v9744 = vlaneseq
  %v9745 = vshrl.u32 %v9744, 7
  %v9746 = vsub.s32 %v9743, %v9745
  %v9747 = vrot.slane %v9733, %v9746
  %v9748 = vcombine.high %v9725, 0.0
  %v9749 = vcombine.high %v9732, 0.0
  %v9750 = vcombine.high %v9740, 0.0
  %v9751 = vcombine.high %v9747, 0.0
  %v9753 = vunpack.c.l.s4 1983009808
  %v9754 = vunpack.c.0.s8 %v9753
  %v9755 = vlaneseq
  %v9756 = vshrl.u32 %v9755, 7
  %v9757 = vsub.s32 %v9754, %v9756
  %v9758 = vrot.slane %v9700, %v9757
  %v9759 = vcombine.high %v9758, 0.0
  %v9761 = vunpack.c.l.s4 1934713408
  %v9762 = vunpack.c.0.s8 %v9761
  %v9763 = vlaneseq
  %v9764 = vshrl.u32 %v9763, 7
  %v9765 = vsub.s32 %v9762, %v9764
  %v9766 = vrot.slane %v9758, %v9765
  %v9768 = vunpack.c.l.s4 1934713408
  %v9769 = vunpack.c.0.s8 %v9768
  %v9770 = vlaneseq
  %v9771 = vshrl.u32 %v9770, 7
  %v9772 = vsub.s32 %v9769, %v9771
  %v9773 = vrot.slane %v9759, %v9772
  %v9774 = vcombine.high %v9700, 0.0
  %v9776 = vunpack.c.l.s4 1934713408
  %v9777 = vunpack.c.0.s8 %v9776
  %v9778 = vlaneseq
  %v9779 = vshrl.u32 %v9778, 7
  %v9780 = vsub.s32 %v9777, %v9779
  %v9781 = vrot.slane %v9774, %v9780
  %v9782 = vcombine.high %v9766, 0.0
  %v9783 = vcombine.high %v9773, 0.0
  %v9784 = vcombine.high %v9781, 0.0
  %9786 = vrot.lane.b32.xlu0 %v9748, 14
  %v9787 = vpop.permute.xlu0 %9786
  %9790 = vrot.lane.b32.xlu0 %v9732, 28
  %v9791 = vpop.permute.xlu0 %9790
  %9794 = vrot.lane.b32.xlu0 %v9749, 42
  %v9795 = vpop.permute.xlu0 %9794
  %9798 = vrot.lane.b32.xlu0 %v9740, 56
  %v9799 = vpop.permute.xlu0 %9798
  %9802 = vrot.lane.b32.xlu0 %v9750, 70
  %v9803 = vpop.permute.xlu0 %9802
  %9806 = vrot.lane.b32.xlu0 %v9747, 84
  %v9807 = vpop.permute.xlu0 %9806
  %9810 = vrot.lane.b32.xlu0 %v9751, 98
  %v9811 = vpop.permute.xlu0 %9810
  %9814 = vrot.lane.b32.xlu0 %v9766, 112
  %v9815 = vpop.permute.xlu0 %9814
  %9818 = vrot.lane.b32.xlu0 %v9782, 126
  %v9819 = vpop.permute.xlu0 %9818
  %9822 = vrot.lane.b32.xlu0 %v9773, 12
  %v9823 = vpop.permute.xlu0 %9822
  %9826 = vrot.lane.b32.xlu0 %v9783, 26
  %v9827 = vpop.permute.xlu0 %9826
  %9830 = vrot.lane.b32.xlu0 %v9781, 40
  %v9831 = vpop.permute.xlu0 %9830
  %9834 = vrot.lane.b32.xlu0 %v9784, 54
  %v9835 = vpop.permute.xlu0 %9834
  %v9837 = vsel %vm156, %v9725, %v9787
  %v9838 = vsel %vm158, %v9837, %v9791
  %v9839 = vsel %vm160, %v9838, %v9795
  %v9840 = vsel %vm162, %v9839, %v9799
  %v9841 = vsel %vm164, %v9840, %v9803
  %v9842 = vsel %vm166, %v9841, %v9807
  %v9843 = vsel %vm168, %v9842, %v9811
  %v9844 = vsel %vm170, %v9843, %v9815
  %v9845 = vsel %vm172, %v9844, %v9819
  %v9846 = vsel %vm174, %v9819, %v9823
  %v9847 = vsel %vm176, %v9846, %v9827
  %v9848 = vsel %vm178, %v9847, %v9831
  %v9849 = vsel %vm180, %v9848, %v9835
  %9850 = vrot.lane.b32.xlu0 %v9547, 126
  %v9851 = vpop.permute.xlu0 %9850
  %9852 = vrot.lane.b32.xlu0 %v9546, 126
  %v9853 = vpop.permute.xlu0 %9852
  %v9856 = vcombine.high %v9851, 0.0
  %v9858 = vunpack.c.l.s4 1983009808
  %v9859 = vunpack.c.0.s8 %v9858
  %v9860 = vlaneseq
  %v9861 = vshrl.u32 %v9860, 7
  %v9862 = vsub.s32 %v9859, %v9861
  %v9863 = vrot.slane %v9851, %v9862
  %v9865 = vunpack.c.l.s4 1983009808
  %v9866 = vunpack.c.0.s8 %v9865
  %v9867 = vlaneseq
  %v9868 = vshrl.u32 %v9867, 7
  %v9869 = vsub.s32 %v9866, %v9868
  %v9870 = vrot.slane %v9856, %v9869
  %v9871 = vcombine.high %v9863, 0.0
  %v9873 = vunpack.c.l.s4 1934713408
  %v9874 = vunpack.c.0.s8 %v9873
  %v9875 = vlaneseq
  %v9876 = vshrl.u32 %v9875, 7
  %v9877 = vsub.s32 %v9874, %v9876
  %v9878 = vrot.slane %v9863, %v9877
  %v9880 = vunpack.c.l.s4 1934713408
  %v9881 = vunpack.c.0.s8 %v9880
  %v9882 = vlaneseq
  %v9883 = vshrl.u32 %v9882, 7
  %v9884 = vsub.s32 %v9881, %v9883
  %v9885 = vrot.slane %v9871, %v9884
  %v9886 = vcombine.high %v9870, 0.0
  %v9888 = vunpack.c.l.s4 1934713408
  %v9889 = vunpack.c.0.s8 %v9888
  %v9890 = vlaneseq
  %v9891 = vshrl.u32 %v9890, 7
  %v9892 = vsub.s32 %v9889, %v9891
  %v9893 = vrot.slane %v9870, %v9892
  %v9895 = vunpack.c.l.s4 1934713408
  %v9896 = vunpack.c.0.s8 %v9895
  %v9897 = vlaneseq
  %v9898 = vshrl.u32 %v9897, 7
  %v9899 = vsub.s32 %v9896, %v9898
  %v9900 = vrot.slane %v9886, %v9899
  %v9901 = vcombine.high %v9878, 0.0
  %v9902 = vcombine.high %v9885, 0.0
  %v9903 = vcombine.high %v9893, 0.0
  %v9904 = vcombine.high %v9900, 0.0
  %v9906 = vunpack.c.l.s4 1983009808
  %v9907 = vunpack.c.0.s8 %v9906
  %v9908 = vlaneseq
  %v9909 = vshrl.u32 %v9908, 7
  %v9910 = vsub.s32 %v9907, %v9909
  %v9911 = vrot.slane %v9853, %v9910
  %v9912 = vcombine.high %v9911, 0.0
  %v9914 = vunpack.c.l.s4 1934713408
  %v9915 = vunpack.c.0.s8 %v9914
  %v9916 = vlaneseq
  %v9917 = vshrl.u32 %v9916, 7
  %v9918 = vsub.s32 %v9915, %v9917
  %v9919 = vrot.slane %v9911, %v9918
  %v9921 = vunpack.c.l.s4 1934713408
  %v9922 = vunpack.c.0.s8 %v9921
  %v9923 = vlaneseq
  %v9924 = vshrl.u32 %v9923, 7
  %v9925 = vsub.s32 %v9922, %v9924
  %v9926 = vrot.slane %v9912, %v9925
  %v9927 = vcombine.high %v9853, 0.0
  %v9929 = vunpack.c.l.s4 1934713408
  %v9930 = vunpack.c.0.s8 %v9929
  %v9931 = vlaneseq
  %v9932 = vshrl.u32 %v9931, 7
  %v9933 = vsub.s32 %v9930, %v9932
  %v9934 = vrot.slane %v9927, %v9933
  %v9935 = vcombine.high %v9919, 0.0
  %v9936 = vcombine.high %v9926, 0.0
  %v9937 = vcombine.high %v9934, 0.0
  %9939 = vrot.lane.b32.xlu0 %v9901, 14
  %v9940 = vpop.permute.xlu0 %9939
  %9943 = vrot.lane.b32.xlu0 %v9885, 28
  %v9944 = vpop.permute.xlu0 %9943
  %9947 = vrot.lane.b32.xlu0 %v9902, 42
  %v9948 = vpop.permute.xlu0 %9947
  %9951 = vrot.lane.b32.xlu0 %v9893, 56
  %v9952 = vpop.permute.xlu0 %9951
  %9955 = vrot.lane.b32.xlu0 %v9903, 70
  %v9956 = vpop.permute.xlu0 %9955
  %9959 = vrot.lane.b32.xlu0 %v9900, 84
  %v9960 = vpop.permute.xlu0 %9959
  %9963 = vrot.lane.b32.xlu0 %v9904, 98
  %v9964 = vpop.permute.xlu0 %9963
  %9967 = vrot.lane.b32.xlu0 %v9919, 112
  %v9968 = vpop.permute.xlu0 %9967
  %9971 = vrot.lane.b32.xlu0 %v9935, 126
  %v9972 = vpop.permute.xlu0 %9971
  %9975 = vrot.lane.b32.xlu0 %v9926, 12
  %v9976 = vpop.permute.xlu0 %9975
  %9979 = vrot.lane.b32.xlu0 %v9936, 26
  %v9980 = vpop.permute.xlu0 %9979
  %9983 = vrot.lane.b32.xlu0 %v9934, 40
  %v9984 = vpop.permute.xlu0 %9983
  %9987 = vrot.lane.b32.xlu0 %v9937, 54
  %v9988 = vpop.permute.xlu0 %9987
  %v9990 = vsel %vm156, %v9878, %v9940
  %v9991 = vsel %vm158, %v9990, %v9944
  %v9992 = vsel %vm160, %v9991, %v9948
  %v9993 = vsel %vm162, %v9992, %v9952
  %v9994 = vsel %vm164, %v9993, %v9956
  %v9995 = vsel %vm166, %v9994, %v9960
  %v9996 = vsel %vm168, %v9995, %v9964
  %v9997 = vsel %vm170, %v9996, %v9968
  %v9998 = vsel %vm172, %v9997, %v9972
  %v9999 = vsel %vm174, %v9972, %v9976
  %v10000 = vsel %vm176, %v9999, %v9980
  %v10001 = vsel %vm178, %v10000, %v9984
  %v10002 = vsel %vm180, %v10001, %v9988
  %v10003 = vcombine.high %v5888, 0.0
  %v10005 = vunpack.c.l.s4 1983009808
  %v10006 = vunpack.c.0.s8 %v10005
  %v10007 = vlaneseq
  %v10008 = vshrl.u32 %v10007, 7
  %v10009 = vsub.s32 %v10006, %v10008
  %v10010 = vrot.slane %v5888, %v10009
  %v10012 = vunpack.c.l.s4 1983009808
  %v10013 = vunpack.c.0.s8 %v10012
  %v10014 = vlaneseq
  %v10015 = vshrl.u32 %v10014, 7
  %v10016 = vsub.s32 %v10013, %v10015
  %v10017 = vrot.slane %v10003, %v10016
  %v10018 = vcombine.high %v10010, 0.0
  %v10020 = vunpack.c.l.s4 1934713408
  %v10021 = vunpack.c.0.s8 %v10020
  %v10022 = vlaneseq
  %v10023 = vshrl.u32 %v10022, 7
  %v10024 = vsub.s32 %v10021, %v10023
  %v10025 = vrot.slane %v10010, %v10024
  %v10027 = vunpack.c.l.s4 1934713408
  %v10028 = vunpack.c.0.s8 %v10027
  %v10029 = vlaneseq
  %v10030 = vshrl.u32 %v10029, 7
  %v10031 = vsub.s32 %v10028, %v10030
  %v10032 = vrot.slane %v10018, %v10031
  %v10033 = vcombine.high %v10017, 0.0
  %v10035 = vunpack.c.l.s4 1934713408
  %v10036 = vunpack.c.0.s8 %v10035
  %v10037 = vlaneseq
  %v10038 = vshrl.u32 %v10037, 7
  %v10039 = vsub.s32 %v10036, %v10038
  %v10040 = vrot.slane %v10017, %v10039
  %v10042 = vunpack.c.l.s4 1934713408
  %v10043 = vunpack.c.0.s8 %v10042
  %v10044 = vlaneseq
  %v10045 = vshrl.u32 %v10044, 7
  %v10046 = vsub.s32 %v10043, %v10045
  %v10047 = vrot.slane %v10033, %v10046
  %v10048 = vcombine.high %v10025, 0.0
  %v10049 = vcombine.high %v10032, 0.0
  %v10050 = vcombine.high %v10040, 0.0
  %v10051 = vcombine.high %v10047, 0.0
  %v10053 = vunpack.c.l.s4 1983009808
  %v10054 = vunpack.c.0.s8 %v10053
  %v10055 = vlaneseq
  %v10056 = vshrl.u32 %v10055, 7
  %v10057 = vsub.s32 %v10054, %v10056
  %v10058 = vrot.slane %v5889, %v10057
  %v10059 = vcombine.high %v10058, 0.0
  %v10061 = vunpack.c.l.s4 1934713408
  %v10062 = vunpack.c.0.s8 %v10061
  %v10063 = vlaneseq
  %v10064 = vshrl.u32 %v10063, 7
  %v10065 = vsub.s32 %v10062, %v10064
  %v10066 = vrot.slane %v10058, %v10065
  %v10068 = vunpack.c.l.s4 1934713408
  %v10069 = vunpack.c.0.s8 %v10068
  %v10070 = vlaneseq
  %v10071 = vshrl.u32 %v10070, 7
  %v10072 = vsub.s32 %v10069, %v10071
  %v10073 = vrot.slane %v10059, %v10072
  %v10074 = vcombine.high %v5889, 0.0
  %v10076 = vunpack.c.l.s4 1934713408
  %v10077 = vunpack.c.0.s8 %v10076
  %v10078 = vlaneseq
  %v10079 = vshrl.u32 %v10078, 7
  %v10080 = vsub.s32 %v10077, %v10079
  %v10081 = vrot.slane %v10074, %v10080
  %v10082 = vcombine.high %v10066, 0.0
  %v10083 = vcombine.high %v10073, 0.0
  %v10084 = vcombine.high %v10081, 0.0
  %10086 = vrot.lane.b32.xlu0 %v10048, 14
  %v10087 = vpop.permute.xlu0 %10086
  %10090 = vrot.lane.b32.xlu0 %v10032, 28
  %v10091 = vpop.permute.xlu0 %10090
  %10094 = vrot.lane.b32.xlu0 %v10049, 42
  %v10095 = vpop.permute.xlu0 %10094
  %10098 = vrot.lane.b32.xlu0 %v10040, 56
  %v10099 = vpop.permute.xlu0 %10098
  %10102 = vrot.lane.b32.xlu0 %v10050, 70
  %v10103 = vpop.permute.xlu0 %10102
  %10106 = vrot.lane.b32.xlu0 %v10047, 84
  %v10107 = vpop.permute.xlu0 %10106
  %10110 = vrot.lane.b32.xlu0 %v10051, 98
  %v10111 = vpop.permute.xlu0 %10110
  %10114 = vrot.lane.b32.xlu0 %v10066, 112
  %v10115 = vpop.permute.xlu0 %10114
  %10118 = vrot.lane.b32.xlu0 %v10082, 126
  %v10119 = vpop.permute.xlu0 %10118
  %10122 = vrot.lane.b32.xlu0 %v10073, 12
  %v10123 = vpop.permute.xlu0 %10122
  %10126 = vrot.lane.b32.xlu0 %v10083, 26
  %v10127 = vpop.permute.xlu0 %10126
  %10130 = vrot.lane.b32.xlu0 %v10081, 40
  %v10131 = vpop.permute.xlu0 %10130
  %10134 = vrot.lane.b32.xlu0 %v10084, 54
  %v10135 = vpop.permute.xlu0 %10134
  %v10137 = vsel %vm156, %v10025, %v10087
  %v10138 = vsel %vm158, %v10137, %v10091
  %v10139 = vsel %vm160, %v10138, %v10095
  %v10140 = vsel %vm162, %v10139, %v10099
  %v10141 = vsel %vm164, %v10140, %v10103
  %v10142 = vsel %vm166, %v10141, %v10107
  %v10143 = vsel %vm168, %v10142, %v10111
  %v10144 = vsel %vm170, %v10143, %v10115
  %v10145 = vsel %vm172, %v10144, %v10119
  %v10146 = vsel %vm174, %v10119, %v10123
  %v10147 = vsel %vm176, %v10146, %v10127
  %v10148 = vsel %vm178, %v10147, %v10131
  %v10149 = vsel %vm180, %v10148, %v10135
  %10152 = vrot.lane.b32.xlu0 %v5888, 127
  %v10153 = vpop.permute.xlu0 %10152
  %10154 = vrot.lane.b32.xlu0 %v5889, 127
  %v10155 = vpop.permute.xlu0 %10154
  %v10158 = vcombine.high %v10153, 0.0
  %v10160 = vunpack.c.l.s4 1983009808
  %v10161 = vunpack.c.0.s8 %v10160
  %v10162 = vlaneseq
  %v10163 = vshrl.u32 %v10162, 7
  %v10164 = vsub.s32 %v10161, %v10163
  %v10165 = vrot.slane %v10153, %v10164
  %v10167 = vunpack.c.l.s4 1983009808
  %v10168 = vunpack.c.0.s8 %v10167
  %v10169 = vlaneseq
  %v10170 = vshrl.u32 %v10169, 7
  %v10171 = vsub.s32 %v10168, %v10170
  %v10172 = vrot.slane %v10158, %v10171
  %v10173 = vcombine.high %v10165, 0.0
  %v10175 = vunpack.c.l.s4 1934713408
  %v10176 = vunpack.c.0.s8 %v10175
  %v10177 = vlaneseq
  %v10178 = vshrl.u32 %v10177, 7
  %v10179 = vsub.s32 %v10176, %v10178
  %v10180 = vrot.slane %v10165, %v10179
  %v10182 = vunpack.c.l.s4 1934713408
  %v10183 = vunpack.c.0.s8 %v10182
  %v10184 = vlaneseq
  %v10185 = vshrl.u32 %v10184, 7
  %v10186 = vsub.s32 %v10183, %v10185
  %v10187 = vrot.slane %v10173, %v10186
  %v10188 = vcombine.high %v10172, 0.0
  %v10190 = vunpack.c.l.s4 1934713408
  %v10191 = vunpack.c.0.s8 %v10190
  %v10192 = vlaneseq
  %v10193 = vshrl.u32 %v10192, 7
  %v10194 = vsub.s32 %v10191, %v10193
  %v10195 = vrot.slane %v10172, %v10194
  %v10197 = vunpack.c.l.s4 1934713408
  %v10198 = vunpack.c.0.s8 %v10197
  %v10199 = vlaneseq
  %v10200 = vshrl.u32 %v10199, 7
  %v10201 = vsub.s32 %v10198, %v10200
  %v10202 = vrot.slane %v10188, %v10201
  %v10203 = vcombine.high %v10180, 0.0
  %v10204 = vcombine.high %v10187, 0.0
  %v10205 = vcombine.high %v10195, 0.0
  %v10206 = vcombine.high %v10202, 0.0
  %v10208 = vunpack.c.l.s4 1983009808
  %v10209 = vunpack.c.0.s8 %v10208
  %v10210 = vlaneseq
  %v10211 = vshrl.u32 %v10210, 7
  %v10212 = vsub.s32 %v10209, %v10211
  %v10213 = vrot.slane %v10155, %v10212
  %v10214 = vcombine.high %v10213, 0.0
  %v10216 = vunpack.c.l.s4 1934713408
  %v10217 = vunpack.c.0.s8 %v10216
  %v10218 = vlaneseq
  %v10219 = vshrl.u32 %v10218, 7
  %v10220 = vsub.s32 %v10217, %v10219
  %v10221 = vrot.slane %v10213, %v10220
  %v10223 = vunpack.c.l.s4 1934713408
  %v10224 = vunpack.c.0.s8 %v10223
  %v10225 = vlaneseq
  %v10226 = vshrl.u32 %v10225, 7
  %v10227 = vsub.s32 %v10224, %v10226
  %v10228 = vrot.slane %v10214, %v10227
  %v10229 = vcombine.high %v10155, 0.0
  %v10231 = vunpack.c.l.s4 1934713408
  %v10232 = vunpack.c.0.s8 %v10231
  %v10233 = vlaneseq
  %v10234 = vshrl.u32 %v10233, 7
  %v10235 = vsub.s32 %v10232, %v10234
  %v10236 = vrot.slane %v10229, %v10235
  %v10237 = vcombine.high %v10221, 0.0
  %v10238 = vcombine.high %v10228, 0.0
  %v10239 = vcombine.high %v10236, 0.0
  %10241 = vrot.lane.b32.xlu0 %v10203, 14
  %v10242 = vpop.permute.xlu0 %10241
  %10245 = vrot.lane.b32.xlu0 %v10187, 28
  %v10246 = vpop.permute.xlu0 %10245
  %10249 = vrot.lane.b32.xlu0 %v10204, 42
  %v10250 = vpop.permute.xlu0 %10249
  %10253 = vrot.lane.b32.xlu0 %v10195, 56
  %v10254 = vpop.permute.xlu0 %10253
  %10257 = vrot.lane.b32.xlu0 %v10205, 70
  %v10258 = vpop.permute.xlu0 %10257
  %10261 = vrot.lane.b32.xlu0 %v10202, 84
  %v10262 = vpop.permute.xlu0 %10261
  %10265 = vrot.lane.b32.xlu0 %v10206, 98
  %v10266 = vpop.permute.xlu0 %10265
  %10269 = vrot.lane.b32.xlu0 %v10221, 112
  %v10270 = vpop.permute.xlu0 %10269
  %10273 = vrot.lane.b32.xlu0 %v10237, 126
  %v10274 = vpop.permute.xlu0 %10273
  %10277 = vrot.lane.b32.xlu0 %v10228, 12
  %v10278 = vpop.permute.xlu0 %10277
  %10281 = vrot.lane.b32.xlu0 %v10238, 26
  %v10282 = vpop.permute.xlu0 %10281
  %10285 = vrot.lane.b32.xlu0 %v10236, 40
  %v10286 = vpop.permute.xlu0 %10285
  %10289 = vrot.lane.b32.xlu0 %v10239, 54
  %v10290 = vpop.permute.xlu0 %10289
  %v10292 = vsel %vm156, %v10180, %v10242
  %v10293 = vsel %vm158, %v10292, %v10246
  %v10294 = vsel %vm160, %v10293, %v10250
  %v10295 = vsel %vm162, %v10294, %v10254
  %v10296 = vsel %vm164, %v10295, %v10258
  %v10297 = vsel %vm166, %v10296, %v10262
  %v10298 = vsel %vm168, %v10297, %v10266
  %v10299 = vsel %vm170, %v10298, %v10270
  %v10300 = vsel %vm172, %v10299, %v10274
  %v10301 = vsel %vm174, %v10274, %v10278
  %v10302 = vsel %vm176, %v10301, %v10282
  %v10303 = vsel %vm178, %v10302, %v10286
  %v10304 = vsel %vm180, %v10303, %v10290
  %10305 = vrot.lane.b32.xlu0 %v5888, 126
  %v10306 = vpop.permute.xlu0 %10305
  %10307 = vrot.lane.b32.xlu0 %v5889, 126
  %v10308 = vpop.permute.xlu0 %10307
  %v10311 = vcombine.high %v10306, 0.0
  %v10313 = vunpack.c.l.s4 1983009808
  %v10314 = vunpack.c.0.s8 %v10313
  %v10315 = vlaneseq
  %v10316 = vshrl.u32 %v10315, 7
  %v10317 = vsub.s32 %v10314, %v10316
  %v10318 = vrot.slane %v10306, %v10317
  %v10320 = vunpack.c.l.s4 1983009808
  %v10321 = vunpack.c.0.s8 %v10320
  %v10322 = vlaneseq
  %v10323 = vshrl.u32 %v10322, 7
  %v10324 = vsub.s32 %v10321, %v10323
  %v10325 = vrot.slane %v10311, %v10324
  %v10326 = vcombine.high %v10318, 0.0
  %v10328 = vunpack.c.l.s4 1934713408
  %v10329 = vunpack.c.0.s8 %v10328
  %v10330 = vlaneseq
  %v10331 = vshrl.u32 %v10330, 7
  %v10332 = vsub.s32 %v10329, %v10331
  %v10333 = vrot.slane %v10318, %v10332
  %v10335 = vunpack.c.l.s4 1934713408
  %v10336 = vunpack.c.0.s8 %v10335
  %v10337 = vlaneseq
  %v10338 = vshrl.u32 %v10337, 7
  %v10339 = vsub.s32 %v10336, %v10338
  %v10340 = vrot.slane %v10326, %v10339
  %v10341 = vcombine.high %v10325, 0.0
  %v10343 = vunpack.c.l.s4 1934713408
  %v10344 = vunpack.c.0.s8 %v10343
  %v10345 = vlaneseq
  %v10346 = vshrl.u32 %v10345, 7
  %v10347 = vsub.s32 %v10344, %v10346
  %v10348 = vrot.slane %v10325, %v10347
  %v10350 = vunpack.c.l.s4 1934713408
  %v10351 = vunpack.c.0.s8 %v10350
  %v10352 = vlaneseq
  %v10353 = vshrl.u32 %v10352, 7
  %v10354 = vsub.s32 %v10351, %v10353
  %v10355 = vrot.slane %v10341, %v10354
  %v10356 = vcombine.high %v10333, 0.0
  %v10357 = vcombine.high %v10340, 0.0
  %v10358 = vcombine.high %v10348, 0.0
  %v10359 = vcombine.high %v10355, 0.0
  %v10361 = vunpack.c.l.s4 1983009808
  %v10362 = vunpack.c.0.s8 %v10361
  %v10363 = vlaneseq
  %v10364 = vshrl.u32 %v10363, 7
  %v10365 = vsub.s32 %v10362, %v10364
  %v10366 = vrot.slane %v10308, %v10365
  %v10367 = vcombine.high %v10366, 0.0
  %v10369 = vunpack.c.l.s4 1934713408
  %v10370 = vunpack.c.0.s8 %v10369
  %v10371 = vlaneseq
  %v10372 = vshrl.u32 %v10371, 7
  %v10373 = vsub.s32 %v10370, %v10372
  %v10374 = vrot.slane %v10366, %v10373
  %v10376 = vunpack.c.l.s4 1934713408
  %v10377 = vunpack.c.0.s8 %v10376
  %v10378 = vlaneseq
  %v10379 = vshrl.u32 %v10378, 7
  %v10380 = vsub.s32 %v10377, %v10379
  %v10381 = vrot.slane %v10367, %v10380
  %v10382 = vcombine.high %v10308, 0.0
  %v10384 = vunpack.c.l.s4 1934713408
  %v10385 = vunpack.c.0.s8 %v10384
  %v10386 = vlaneseq
  %v10387 = vshrl.u32 %v10386, 7
  %v10388 = vsub.s32 %v10385, %v10387
  %v10389 = vrot.slane %v10382, %v10388
  %v10390 = vcombine.high %v10374, 0.0
  %v10391 = vcombine.high %v10381, 0.0
  %v10392 = vcombine.high %v10389, 0.0
  %10394 = vrot.lane.b32.xlu0 %v10356, 14
  %v10395 = vpop.permute.xlu0 %10394
  %10398 = vrot.lane.b32.xlu0 %v10340, 28
  %v10399 = vpop.permute.xlu0 %10398
  %10402 = vrot.lane.b32.xlu0 %v10357, 42
  %v10403 = vpop.permute.xlu0 %10402
  %10406 = vrot.lane.b32.xlu0 %v10348, 56
  %v10407 = vpop.permute.xlu0 %10406
  %10410 = vrot.lane.b32.xlu0 %v10358, 70
  %v10411 = vpop.permute.xlu0 %10410
  %10414 = vrot.lane.b32.xlu0 %v10355, 84
  %v10415 = vpop.permute.xlu0 %10414
  %10418 = vrot.lane.b32.xlu0 %v10359, 98
  %v10419 = vpop.permute.xlu0 %10418
  %10422 = vrot.lane.b32.xlu0 %v10374, 112
  %v10423 = vpop.permute.xlu0 %10422
  %10426 = vrot.lane.b32.xlu0 %v10390, 126
  %v10427 = vpop.permute.xlu0 %10426
  %10430 = vrot.lane.b32.xlu0 %v10381, 12
  %v10431 = vpop.permute.xlu0 %10430
  %10434 = vrot.lane.b32.xlu0 %v10391, 26
  %v10435 = vpop.permute.xlu0 %10434
  %10438 = vrot.lane.b32.xlu0 %v10389, 40
  %v10439 = vpop.permute.xlu0 %10438
  %10442 = vrot.lane.b32.xlu0 %v10392, 54
  %v10443 = vpop.permute.xlu0 %10442
  %v10445 = vsel %vm156, %v10333, %v10395
  %v10446 = vsel %vm158, %v10445, %v10399
  %v10447 = vsel %vm160, %v10446, %v10403
  %v10448 = vsel %vm162, %v10447, %v10407
  %v10449 = vsel %vm164, %v10448, %v10411
  %v10450 = vsel %vm166, %v10449, %v10415
  %v10451 = vsel %vm168, %v10450, %v10419
  %v10452 = vsel %vm170, %v10451, %v10423
  %v10453 = vsel %vm172, %v10452, %v10427
  %v10454 = vsel %vm174, %v10427, %v10431
  %v10455 = vsel %vm176, %v10454, %v10435
  %v10456 = vsel %vm178, %v10455, %v10439
  %v10457 = vsel %vm180, %v10456, %v10443
  %v10458 = vrot.slane %v5888, 1
  %v10459 = vrot.slane %v5889, 1
  %v10460 = vsel %vm490, %v10458, %v10459
  %v10463 = vcombine.high %v10460, 0.0
  %v10465 = vunpack.c.l.s4 1983009808
  %v10466 = vunpack.c.0.s8 %v10465
  %v10467 = vlaneseq
  %v10468 = vshrl.u32 %v10467, 7
  %v10469 = vsub.s32 %v10466, %v10468
  %v10470 = vrot.slane %v10460, %v10469
  %v10472 = vunpack.c.l.s4 1983009808
  %v10473 = vunpack.c.0.s8 %v10472
  %v10474 = vlaneseq
  %v10475 = vshrl.u32 %v10474, 7
  %v10476 = vsub.s32 %v10473, %v10475
  %v10477 = vrot.slane %v10463, %v10476
  %v10478 = vcombine.high %v10470, 0.0
  %v10480 = vunpack.c.l.s4 1934713408
  %v10481 = vunpack.c.0.s8 %v10480
  %v10482 = vlaneseq
  %v10483 = vshrl.u32 %v10482, 7
  %v10484 = vsub.s32 %v10481, %v10483
  %v10485 = vrot.slane %v10470, %v10484
  %v10487 = vunpack.c.l.s4 1934713408
  %v10488 = vunpack.c.0.s8 %v10487
  %v10489 = vlaneseq
  %v10490 = vshrl.u32 %v10489, 7
  %v10491 = vsub.s32 %v10488, %v10490
  %v10492 = vrot.slane %v10478, %v10491
  %v10493 = vcombine.high %v10477, 0.0
  %v10495 = vunpack.c.l.s4 1934713408
  %v10496 = vunpack.c.0.s8 %v10495
  %v10497 = vlaneseq
  %v10498 = vshrl.u32 %v10497, 7
  %v10499 = vsub.s32 %v10496, %v10498
  %v10500 = vrot.slane %v10477, %v10499
  %v10502 = vunpack.c.l.s4 1934713408
  %v10503 = vunpack.c.0.s8 %v10502
  %v10504 = vlaneseq
  %v10505 = vshrl.u32 %v10504, 7
  %v10506 = vsub.s32 %v10503, %v10505
  %v10507 = vrot.slane %v10493, %v10506
  %v10508 = vcombine.high %v10485, 0.0
  %v10509 = vcombine.high %v10492, 0.0
  %v10510 = vcombine.high %v10500, 0.0
  %v10511 = vcombine.high %v10507, 0.0
  %v10513 = vunpack.c.l.s4 1983009808
  %v10514 = vunpack.c.0.s8 %v10513
  %v10515 = vlaneseq
  %v10516 = vshrl.u32 %v10515, 7
  %v10517 = vsub.s32 %v10514, %v10516
  %v10518 = vrot.slane %v10459, %v10517
  %v10519 = vcombine.high %v10518, 0.0
  %v10521 = vunpack.c.l.s4 1934713408
  %v10522 = vunpack.c.0.s8 %v10521
  %v10523 = vlaneseq
  %v10524 = vshrl.u32 %v10523, 7
  %v10525 = vsub.s32 %v10522, %v10524
  %v10526 = vrot.slane %v10518, %v10525
  %v10528 = vunpack.c.l.s4 1934713408
  %v10529 = vunpack.c.0.s8 %v10528
  %v10530 = vlaneseq
  %v10531 = vshrl.u32 %v10530, 7
  %v10532 = vsub.s32 %v10529, %v10531
  %v10533 = vrot.slane %v10519, %v10532
  %v10534 = vcombine.high %v10459, 0.0
  %v10536 = vunpack.c.l.s4 1934713408
  %v10537 = vunpack.c.0.s8 %v10536
  %v10538 = vlaneseq
  %v10539 = vshrl.u32 %v10538, 7
  %v10540 = vsub.s32 %v10537, %v10539
  %v10541 = vrot.slane %v10534, %v10540
  %v10542 = vcombine.high %v10526, 0.0
  %v10543 = vcombine.high %v10533, 0.0
  %v10544 = vcombine.high %v10541, 0.0
  %10546 = vrot.lane.b32.xlu0 %v10508, 14
  %v10547 = vpop.permute.xlu0 %10546
  %10550 = vrot.lane.b32.xlu0 %v10492, 28
  %v10551 = vpop.permute.xlu0 %10550
  %10554 = vrot.lane.b32.xlu0 %v10509, 42
  %v10555 = vpop.permute.xlu0 %10554
  %10558 = vrot.lane.b32.xlu0 %v10500, 56
  %v10559 = vpop.permute.xlu0 %10558
  %10562 = vrot.lane.b32.xlu0 %v10510, 70
  %v10563 = vpop.permute.xlu0 %10562
  %10566 = vrot.lane.b32.xlu0 %v10507, 84
  %v10567 = vpop.permute.xlu0 %10566
  %10570 = vrot.lane.b32.xlu0 %v10511, 98
  %v10571 = vpop.permute.xlu0 %10570
  %10574 = vrot.lane.b32.xlu0 %v10526, 112
  %v10575 = vpop.permute.xlu0 %10574
  %10578 = vrot.lane.b32.xlu0 %v10542, 126
  %v10579 = vpop.permute.xlu0 %10578
  %10582 = vrot.lane.b32.xlu0 %v10533, 12
  %v10583 = vpop.permute.xlu0 %10582
  %10586 = vrot.lane.b32.xlu0 %v10543, 26
  %v10587 = vpop.permute.xlu0 %10586
  %10590 = vrot.lane.b32.xlu0 %v10541, 40
  %v10591 = vpop.permute.xlu0 %10590
  %10594 = vrot.lane.b32.xlu0 %v10544, 54
  %v10595 = vpop.permute.xlu0 %10594
  %v10597 = vsel %vm156, %v10485, %v10547
  %v10598 = vsel %vm158, %v10597, %v10551
  %v10599 = vsel %vm160, %v10598, %v10555
  %v10600 = vsel %vm162, %v10599, %v10559
  %v10601 = vsel %vm164, %v10600, %v10563
  %v10602 = vsel %vm166, %v10601, %v10567
  %v10603 = vsel %vm168, %v10602, %v10571
  %v10604 = vsel %vm170, %v10603, %v10575
  %v10605 = vsel %vm172, %v10604, %v10579
  %v10606 = vsel %vm174, %v10579, %v10583
  %v10607 = vsel %vm176, %v10606, %v10587
  %v10608 = vsel %vm178, %v10607, %v10591
  %v10609 = vsel %vm180, %v10608, %v10595
  %10610 = vrot.lane.b32.xlu0 %v10460, 127
  %v10611 = vpop.permute.xlu0 %10610
  %10612 = vrot.lane.b32.xlu0 %v10459, 127
  %v10613 = vpop.permute.xlu0 %10612
  %v10616 = vcombine.high %v10611, 0.0
  %v10618 = vunpack.c.l.s4 1983009808
  %v10619 = vunpack.c.0.s8 %v10618
  %v10620 = vlaneseq
  %v10621 = vshrl.u32 %v10620, 7
  %v10622 = vsub.s32 %v10619, %v10621
  %v10623 = vrot.slane %v10611, %v10622
  %v10625 = vunpack.c.l.s4 1983009808
  %v10626 = vunpack.c.0.s8 %v10625
  %v10627 = vlaneseq
  %v10628 = vshrl.u32 %v10627, 7
  %v10629 = vsub.s32 %v10626, %v10628
  %v10630 = vrot.slane %v10616, %v10629
  %v10631 = vcombine.high %v10623, 0.0
  %v10633 = vunpack.c.l.s4 1934713408
  %v10634 = vunpack.c.0.s8 %v10633
  %v10635 = vlaneseq
  %v10636 = vshrl.u32 %v10635, 7
  %v10637 = vsub.s32 %v10634, %v10636
  %v10638 = vrot.slane %v10623, %v10637
  %v10640 = vunpack.c.l.s4 1934713408
  %v10641 = vunpack.c.0.s8 %v10640
  %v10642 = vlaneseq
  %v10643 = vshrl.u32 %v10642, 7
  %v10644 = vsub.s32 %v10641, %v10643
  %v10645 = vrot.slane %v10631, %v10644
  %v10646 = vcombine.high %v10630, 0.0
  %v10648 = vunpack.c.l.s4 1934713408
  %v10649 = vunpack.c.0.s8 %v10648
  %v10650 = vlaneseq
  %v10651 = vshrl.u32 %v10650, 7
  %v10652 = vsub.s32 %v10649, %v10651
  %v10653 = vrot.slane %v10630, %v10652
  %v10655 = vunpack.c.l.s4 1934713408
  %v10656 = vunpack.c.0.s8 %v10655
  %v10657 = vlaneseq
  %v10658 = vshrl.u32 %v10657, 7
  %v10659 = vsub.s32 %v10656, %v10658
  %v10660 = vrot.slane %v10646, %v10659
  %v10661 = vcombine.high %v10638, 0.0
  %v10662 = vcombine.high %v10645, 0.0
  %v10663 = vcombine.high %v10653, 0.0
  %v10664 = vcombine.high %v10660, 0.0
  %v10666 = vunpack.c.l.s4 1983009808
  %v10667 = vunpack.c.0.s8 %v10666
  %v10668 = vlaneseq
  %v10669 = vshrl.u32 %v10668, 7
  %v10670 = vsub.s32 %v10667, %v10669
  %v10671 = vrot.slane %v10613, %v10670
  %v10672 = vcombine.high %v10671, 0.0
  %v10674 = vunpack.c.l.s4 1934713408
  %v10675 = vunpack.c.0.s8 %v10674
  %v10676 = vlaneseq
  %v10677 = vshrl.u32 %v10676, 7
  %v10678 = vsub.s32 %v10675, %v10677
  %v10679 = vrot.slane %v10671, %v10678
  %v10681 = vunpack.c.l.s4 1934713408
  %v10682 = vunpack.c.0.s8 %v10681
  %v10683 = vlaneseq
  %v10684 = vshrl.u32 %v10683, 7
  %v10685 = vsub.s32 %v10682, %v10684
  %v10686 = vrot.slane %v10672, %v10685
  %v10687 = vcombine.high %v10613, 0.0
  %v10689 = vunpack.c.l.s4 1934713408
  %v10690 = vunpack.c.0.s8 %v10689
  %v10691 = vlaneseq
  %v10692 = vshrl.u32 %v10691, 7
  %v10693 = vsub.s32 %v10690, %v10692
  %v10694 = vrot.slane %v10687, %v10693
  %v10695 = vcombine.high %v10679, 0.0
  %v10696 = vcombine.high %v10686, 0.0
  %v10697 = vcombine.high %v10694, 0.0
  %10699 = vrot.lane.b32.xlu0 %v10661, 14
  %v10700 = vpop.permute.xlu0 %10699
  %10703 = vrot.lane.b32.xlu0 %v10645, 28
  %v10704 = vpop.permute.xlu0 %10703
  %10707 = vrot.lane.b32.xlu0 %v10662, 42
  %v10708 = vpop.permute.xlu0 %10707
  %10711 = vrot.lane.b32.xlu0 %v10653, 56
  %v10712 = vpop.permute.xlu0 %10711
  %10715 = vrot.lane.b32.xlu0 %v10663, 70
  %v10716 = vpop.permute.xlu0 %10715
  %10719 = vrot.lane.b32.xlu0 %v10660, 84
  %v10720 = vpop.permute.xlu0 %10719
  %10723 = vrot.lane.b32.xlu0 %v10664, 98
  %v10724 = vpop.permute.xlu0 %10723
  %10727 = vrot.lane.b32.xlu0 %v10679, 112
  %v10728 = vpop.permute.xlu0 %10727
  %10731 = vrot.lane.b32.xlu0 %v10695, 126
  %v10732 = vpop.permute.xlu0 %10731
  %10735 = vrot.lane.b32.xlu0 %v10686, 12
  %v10736 = vpop.permute.xlu0 %10735
  %10739 = vrot.lane.b32.xlu0 %v10696, 26
  %v10740 = vpop.permute.xlu0 %10739
  %10743 = vrot.lane.b32.xlu0 %v10694, 40
  %v10744 = vpop.permute.xlu0 %10743
  %10747 = vrot.lane.b32.xlu0 %v10697, 54
  %v10748 = vpop.permute.xlu0 %10747
  %v10750 = vsel %vm156, %v10638, %v10700
  %v10751 = vsel %vm158, %v10750, %v10704
  %v10752 = vsel %vm160, %v10751, %v10708
  %v10753 = vsel %vm162, %v10752, %v10712
  %v10754 = vsel %vm164, %v10753, %v10716
  %v10755 = vsel %vm166, %v10754, %v10720
  %v10756 = vsel %vm168, %v10755, %v10724
  %v10757 = vsel %vm170, %v10756, %v10728
  %v10758 = vsel %vm172, %v10757, %v10732
  %v10759 = vsel %vm174, %v10732, %v10736
  %v10760 = vsel %vm176, %v10759, %v10740
  %v10761 = vsel %vm178, %v10760, %v10744
  %v10762 = vsel %vm180, %v10761, %v10748
  %10763 = vrot.lane.b32.xlu0 %v10460, 126
  %v10764 = vpop.permute.xlu0 %10763
  %10765 = vrot.lane.b32.xlu0 %v10459, 126
  %v10766 = vpop.permute.xlu0 %10765
  %v10769 = vcombine.high %v10764, 0.0
  %v10771 = vunpack.c.l.s4 1983009808
  %v10772 = vunpack.c.0.s8 %v10771
  %v10773 = vlaneseq
  %v10774 = vshrl.u32 %v10773, 7
  %v10775 = vsub.s32 %v10772, %v10774
  %v10776 = vrot.slane %v10764, %v10775
  %v10778 = vunpack.c.l.s4 1983009808
  %v10779 = vunpack.c.0.s8 %v10778
  %v10780 = vlaneseq
  %v10781 = vshrl.u32 %v10780, 7
  %v10782 = vsub.s32 %v10779, %v10781
  %v10783 = vrot.slane %v10769, %v10782
  %v10784 = vcombine.high %v10776, 0.0
  %v10786 = vunpack.c.l.s4 1934713408
  %v10787 = vunpack.c.0.s8 %v10786
  %v10788 = vlaneseq
  %v10789 = vshrl.u32 %v10788, 7
  %v10790 = vsub.s32 %v10787, %v10789
  %v10791 = vrot.slane %v10776, %v10790
  %v10793 = vunpack.c.l.s4 1934713408
  %v10794 = vunpack.c.0.s8 %v10793
  %v10795 = vlaneseq
  %v10796 = vshrl.u32 %v10795, 7
  %v10797 = vsub.s32 %v10794, %v10796
  %v10798 = vrot.slane %v10784, %v10797
  %v10799 = vcombine.high %v10783, 0.0
  %v10801 = vunpack.c.l.s4 1934713408
  %v10802 = vunpack.c.0.s8 %v10801
  %v10803 = vlaneseq
  %v10804 = vshrl.u32 %v10803, 7
  %v10805 = vsub.s32 %v10802, %v10804
  %v10806 = vrot.slane %v10783, %v10805
  %v10808 = vunpack.c.l.s4 1934713408
  %v10809 = vunpack.c.0.s8 %v10808
  %v10810 = vlaneseq
  %v10811 = vshrl.u32 %v10810, 7
  %v10812 = vsub.s32 %v10809, %v10811
  %v10813 = vrot.slane %v10799, %v10812
  %v10814 = vcombine.high %v10791, 0.0
  %v10815 = vcombine.high %v10798, 0.0
  %v10816 = vcombine.high %v10806, 0.0
  %v10817 = vcombine.high %v10813, 0.0
  %v10819 = vunpack.c.l.s4 1983009808
  %v10820 = vunpack.c.0.s8 %v10819
  %v10821 = vlaneseq
  %v10822 = vshrl.u32 %v10821, 7
  %v10823 = vsub.s32 %v10820, %v10822
  %v10824 = vrot.slane %v10766, %v10823
  %v10825 = vcombine.high %v10824, 0.0
  %v10827 = vunpack.c.l.s4 1934713408
  %v10828 = vunpack.c.0.s8 %v10827
  %v10829 = vlaneseq
  %v10830 = vshrl.u32 %v10829, 7
  %v10831 = vsub.s32 %v10828, %v10830
  %v10832 = vrot.slane %v10824, %v10831
  %v10834 = vunpack.c.l.s4 1934713408
  %v10835 = vunpack.c.0.s8 %v10834
  %v10836 = vlaneseq
  %v10837 = vshrl.u32 %v10836, 7
  %v10838 = vsub.s32 %v10835, %v10837
  %v10839 = vrot.slane %v10825, %v10838
  %v10840 = vcombine.high %v10766, 0.0
  %v10842 = vunpack.c.l.s4 1934713408
  %v10843 = vunpack.c.0.s8 %v10842
  %v10844 = vlaneseq
  %v10845 = vshrl.u32 %v10844, 7
  %v10846 = vsub.s32 %v10843, %v10845
  %v10847 = vrot.slane %v10840, %v10846
  %v10848 = vcombine.high %v10832, 0.0
  %v10849 = vcombine.high %v10839, 0.0
  %v10850 = vcombine.high %v10847, 0.0
  %10852 = vrot.lane.b32.xlu0 %v10814, 14
  %v10853 = vpop.permute.xlu0 %10852
  %10856 = vrot.lane.b32.xlu0 %v10798, 28
  %v10857 = vpop.permute.xlu0 %10856
  %10860 = vrot.lane.b32.xlu0 %v10815, 42
  %v10861 = vpop.permute.xlu0 %10860
  %10864 = vrot.lane.b32.xlu0 %v10806, 56
  %v10865 = vpop.permute.xlu0 %10864
  %10868 = vrot.lane.b32.xlu0 %v10816, 70
  %v10869 = vpop.permute.xlu0 %10868
  %10872 = vrot.lane.b32.xlu0 %v10813, 84
  %v10873 = vpop.permute.xlu0 %10872
  %10876 = vrot.lane.b32.xlu0 %v10817, 98
  %v10877 = vpop.permute.xlu0 %10876
  %10880 = vrot.lane.b32.xlu0 %v10832, 112
  %v10881 = vpop.permute.xlu0 %10880
  %10884 = vrot.lane.b32.xlu0 %v10848, 126
  %v10885 = vpop.permute.xlu0 %10884
  %10888 = vrot.lane.b32.xlu0 %v10839, 12
  %v10889 = vpop.permute.xlu0 %10888
  %10892 = vrot.lane.b32.xlu0 %v10849, 26
  %v10893 = vpop.permute.xlu0 %10892
  %10896 = vrot.lane.b32.xlu0 %v10847, 40
  %v10897 = vpop.permute.xlu0 %10896
  %10900 = vrot.lane.b32.xlu0 %v10850, 54
  %v10901 = vpop.permute.xlu0 %10900
  %v10903 = vsel %vm156, %v10791, %v10853
  %v10904 = vsel %vm158, %v10903, %v10857
  %v10905 = vsel %vm160, %v10904, %v10861
  %v10906 = vsel %vm162, %v10905, %v10865
  %v10907 = vsel %vm164, %v10906, %v10869
  %v10908 = vsel %vm166, %v10907, %v10873
  %v10909 = vsel %vm168, %v10908, %v10877
  %v10910 = vsel %vm170, %v10909, %v10881
  %v10911 = vsel %vm172, %v10910, %v10885
  %v10912 = vsel %vm174, %v10885, %v10889
  %v10913 = vsel %vm176, %v10912, %v10893
  %v10914 = vsel %vm178, %v10913, %v10897
  %v10915 = vsel %vm180, %v10914, %v10901
  %v10916 = vrot.slane %v5888, 2
  %v10917 = vrot.slane %v5889, 2
  %v10918 = vsel %vm949, %v10916, %v10917
  %v10921 = vcombine.high %v10918, 0.0
  %v10923 = vunpack.c.l.s4 1983009808
  %v10924 = vunpack.c.0.s8 %v10923
  %v10925 = vlaneseq
  %v10926 = vshrl.u32 %v10925, 7
  %v10927 = vsub.s32 %v10924, %v10926
  %v10928 = vrot.slane %v10918, %v10927
  %v10930 = vunpack.c.l.s4 1983009808
  %v10931 = vunpack.c.0.s8 %v10930
  %v10932 = vlaneseq
  %v10933 = vshrl.u32 %v10932, 7
  %v10934 = vsub.s32 %v10931, %v10933
  %v10935 = vrot.slane %v10921, %v10934
  %v10936 = vcombine.high %v10928, 0.0
  %v10938 = vunpack.c.l.s4 1934713408
  %v10939 = vunpack.c.0.s8 %v10938
  %v10940 = vlaneseq
  %v10941 = vshrl.u32 %v10940, 7
  %v10942 = vsub.s32 %v10939, %v10941
  %v10943 = vrot.slane %v10928, %v10942
  %v10945 = vunpack.c.l.s4 1934713408
  %v10946 = vunpack.c.0.s8 %v10945
  %v10947 = vlaneseq
  %v10948 = vshrl.u32 %v10947, 7
  %v10949 = vsub.s32 %v10946, %v10948
  %v10950 = vrot.slane %v10936, %v10949
  %v10951 = vcombine.high %v10935, 0.0
  %v10953 = vunpack.c.l.s4 1934713408
  %v10954 = vunpack.c.0.s8 %v10953
  %v10955 = vlaneseq
  %v10956 = vshrl.u32 %v10955, 7
  %v10957 = vsub.s32 %v10954, %v10956
  %v10958 = vrot.slane %v10935, %v10957
  %v10960 = vunpack.c.l.s4 1934713408
  %v10961 = vunpack.c.0.s8 %v10960
  %v10962 = vlaneseq
  %v10963 = vshrl.u32 %v10962, 7
  %v10964 = vsub.s32 %v10961, %v10963
  %v10965 = vrot.slane %v10951, %v10964
  %v10966 = vcombine.high %v10943, 0.0
  %v10967 = vcombine.high %v10950, 0.0
  %v10968 = vcombine.high %v10958, 0.0
  %v10969 = vcombine.high %v10965, 0.0
  %v10971 = vunpack.c.l.s4 1983009808
  %v10972 = vunpack.c.0.s8 %v10971
  %v10973 = vlaneseq
  %v10974 = vshrl.u32 %v10973, 7
  %v10975 = vsub.s32 %v10972, %v10974
  %v10976 = vrot.slane %v10917, %v10975
  %v10977 = vcombine.high %v10976, 0.0
  %v10979 = vunpack.c.l.s4 1934713408
  %v10980 = vunpack.c.0.s8 %v10979
  %v10981 = vlaneseq
  %v10982 = vshrl.u32 %v10981, 7
  %v10983 = vsub.s32 %v10980, %v10982
  %v10984 = vrot.slane %v10976, %v10983
  %v10986 = vunpack.c.l.s4 1934713408
  %v10987 = vunpack.c.0.s8 %v10986
  %v10988 = vlaneseq
  %v10989 = vshrl.u32 %v10988, 7
  %v10990 = vsub.s32 %v10987, %v10989
  %v10991 = vrot.slane %v10977, %v10990
  %v10992 = vcombine.high %v10917, 0.0
  %v10994 = vunpack.c.l.s4 1934713408
  %v10995 = vunpack.c.0.s8 %v10994
  %v10996 = vlaneseq
  %v10997 = vshrl.u32 %v10996, 7
  %v10998 = vsub.s32 %v10995, %v10997
  %v10999 = vrot.slane %v10992, %v10998
  %v11000 = vcombine.high %v10984, 0.0
  %v11001 = vcombine.high %v10991, 0.0
  %v11002 = vcombine.high %v10999, 0.0
  %11004 = vrot.lane.b32.xlu0 %v10966, 14
  %v11005 = vpop.permute.xlu0 %11004
  %11008 = vrot.lane.b32.xlu0 %v10950, 28
  %v11009 = vpop.permute.xlu0 %11008
  %11012 = vrot.lane.b32.xlu0 %v10967, 42
  %v11013 = vpop.permute.xlu0 %11012
  %11016 = vrot.lane.b32.xlu0 %v10958, 56
  %v11017 = vpop.permute.xlu0 %11016
  %11020 = vrot.lane.b32.xlu0 %v10968, 70
  %v11021 = vpop.permute.xlu0 %11020
  %11024 = vrot.lane.b32.xlu0 %v10965, 84
  %v11025 = vpop.permute.xlu0 %11024
  %11028 = vrot.lane.b32.xlu0 %v10969, 98
  %v11029 = vpop.permute.xlu0 %11028
  %11032 = vrot.lane.b32.xlu0 %v10984, 112
  %v11033 = vpop.permute.xlu0 %11032
  %11036 = vrot.lane.b32.xlu0 %v11000, 126
  %v11037 = vpop.permute.xlu0 %11036
  %11040 = vrot.lane.b32.xlu0 %v10991, 12
  %v11041 = vpop.permute.xlu0 %11040
  %11044 = vrot.lane.b32.xlu0 %v11001, 26
  %v11045 = vpop.permute.xlu0 %11044
  %11048 = vrot.lane.b32.xlu0 %v10999, 40
  %v11049 = vpop.permute.xlu0 %11048
  %11052 = vrot.lane.b32.xlu0 %v11002, 54
  %v11053 = vpop.permute.xlu0 %11052
  %v11055 = vsel %vm156, %v10943, %v11005
  %v11056 = vsel %vm158, %v11055, %v11009
  %v11057 = vsel %vm160, %v11056, %v11013
  %v11058 = vsel %vm162, %v11057, %v11017
  %v11059 = vsel %vm164, %v11058, %v11021
  %v11060 = vsel %vm166, %v11059, %v11025
  %v11061 = vsel %vm168, %v11060, %v11029
  %v11062 = vsel %vm170, %v11061, %v11033
  %v11063 = vsel %vm172, %v11062, %v11037
  %v11064 = vsel %vm174, %v11037, %v11041
  %v11065 = vsel %vm176, %v11064, %v11045
  %v11066 = vsel %vm178, %v11065, %v11049
  %v11067 = vsel %vm180, %v11066, %v11053
  %11068 = vrot.lane.b32.xlu0 %v10918, 127
  %v11069 = vpop.permute.xlu0 %11068
  %11070 = vrot.lane.b32.xlu0 %v10917, 127
  %v11071 = vpop.permute.xlu0 %11070
  %v11074 = vcombine.high %v11069, 0.0
  %v11076 = vunpack.c.l.s4 1983009808
  %v11077 = vunpack.c.0.s8 %v11076
  %v11078 = vlaneseq
  %v11079 = vshrl.u32 %v11078, 7
  %v11080 = vsub.s32 %v11077, %v11079
  %v11081 = vrot.slane %v11069, %v11080
  %v11083 = vunpack.c.l.s4 1983009808
  %v11084 = vunpack.c.0.s8 %v11083
  %v11085 = vlaneseq
  %v11086 = vshrl.u32 %v11085, 7
  %v11087 = vsub.s32 %v11084, %v11086
  %v11088 = vrot.slane %v11074, %v11087
  %v11089 = vcombine.high %v11081, 0.0
  %v11091 = vunpack.c.l.s4 1934713408
  %v11092 = vunpack.c.0.s8 %v11091
  %v11093 = vlaneseq
  %v11094 = vshrl.u32 %v11093, 7
  %v11095 = vsub.s32 %v11092, %v11094
  %v11096 = vrot.slane %v11081, %v11095
  %v11098 = vunpack.c.l.s4 1934713408
  %v11099 = vunpack.c.0.s8 %v11098
  %v11100 = vlaneseq
  %v11101 = vshrl.u32 %v11100, 7
  %v11102 = vsub.s32 %v11099, %v11101
  %v11103 = vrot.slane %v11089, %v11102
  %v11104 = vcombine.high %v11088, 0.0
  %v11106 = vunpack.c.l.s4 1934713408
  %v11107 = vunpack.c.0.s8 %v11106
  %v11108 = vlaneseq
  %v11109 = vshrl.u32 %v11108, 7
  %v11110 = vsub.s32 %v11107, %v11109
  %v11111 = vrot.slane %v11088, %v11110
  %v11113 = vunpack.c.l.s4 1934713408
  %v11114 = vunpack.c.0.s8 %v11113
  %v11115 = vlaneseq
  %v11116 = vshrl.u32 %v11115, 7
  %v11117 = vsub.s32 %v11114, %v11116
  %v11118 = vrot.slane %v11104, %v11117
  %v11119 = vcombine.high %v11096, 0.0
  %v11120 = vcombine.high %v11103, 0.0
  %v11121 = vcombine.high %v11111, 0.0
  %v11122 = vcombine.high %v11118, 0.0
  %v11124 = vunpack.c.l.s4 1983009808
  %v11125 = vunpack.c.0.s8 %v11124
  %v11126 = vlaneseq
  %v11127 = vshrl.u32 %v11126, 7
  %v11128 = vsub.s32 %v11125, %v11127
  %v11129 = vrot.slane %v11071, %v11128
  %v11130 = vcombine.high %v11129, 0.0
  %v11132 = vunpack.c.l.s4 1934713408
  %v11133 = vunpack.c.0.s8 %v11132
  %v11134 = vlaneseq
  %v11135 = vshrl.u32 %v11134, 7
  %v11136 = vsub.s32 %v11133, %v11135
  %v11137 = vrot.slane %v11129, %v11136
  %v11139 = vunpack.c.l.s4 1934713408
  %v11140 = vunpack.c.0.s8 %v11139
  %v11141 = vlaneseq
  %v11142 = vshrl.u32 %v11141, 7
  %v11143 = vsub.s32 %v11140, %v11142
  %v11144 = vrot.slane %v11130, %v11143
  %v11145 = vcombine.high %v11071, 0.0
  %v11147 = vunpack.c.l.s4 1934713408
  %v11148 = vunpack.c.0.s8 %v11147
  %v11149 = vlaneseq
  %v11150 = vshrl.u32 %v11149, 7
  %v11151 = vsub.s32 %v11148, %v11150
  %v11152 = vrot.slane %v11145, %v11151
  %v11153 = vcombine.high %v11137, 0.0
  %v11154 = vcombine.high %v11144, 0.0
  %v11155 = vcombine.high %v11152, 0.0
  %11157 = vrot.lane.b32.xlu0 %v11119, 14
  %v11158 = vpop.permute.xlu0 %11157
  %11161 = vrot.lane.b32.xlu0 %v11103, 28
  %v11162 = vpop.permute.xlu0 %11161
  %11165 = vrot.lane.b32.xlu0 %v11120, 42
  %v11166 = vpop.permute.xlu0 %11165
  %11169 = vrot.lane.b32.xlu0 %v11111, 56
  %v11170 = vpop.permute.xlu0 %11169
  %11173 = vrot.lane.b32.xlu0 %v11121, 70
  %v11174 = vpop.permute.xlu0 %11173
  %11177 = vrot.lane.b32.xlu0 %v11118, 84
  %v11178 = vpop.permute.xlu0 %11177
  %11181 = vrot.lane.b32.xlu0 %v11122, 98
  %v11182 = vpop.permute.xlu0 %11181
  %11185 = vrot.lane.b32.xlu0 %v11137, 112
  %v11186 = vpop.permute.xlu0 %11185
  %11189 = vrot.lane.b32.xlu0 %v11153, 126
  %v11190 = vpop.permute.xlu0 %11189
  %11193 = vrot.lane.b32.xlu0 %v11144, 12
  %v11194 = vpop.permute.xlu0 %11193
  %11197 = vrot.lane.b32.xlu0 %v11154, 26
  %v11198 = vpop.permute.xlu0 %11197
  %11201 = vrot.lane.b32.xlu0 %v11152, 40
  %v11202 = vpop.permute.xlu0 %11201
  %11205 = vrot.lane.b32.xlu0 %v11155, 54
  %v11206 = vpop.permute.xlu0 %11205
  %v11208 = vsel %vm156, %v11096, %v11158
  %v11209 = vsel %vm158, %v11208, %v11162
  %v11210 = vsel %vm160, %v11209, %v11166
  %v11211 = vsel %vm162, %v11210, %v11170
  %v11212 = vsel %vm164, %v11211, %v11174
  %v11213 = vsel %vm166, %v11212, %v11178
  %v11214 = vsel %vm168, %v11213, %v11182
  %v11215 = vsel %vm170, %v11214, %v11186
  %v11216 = vsel %vm172, %v11215, %v11190
  %v11217 = vsel %vm174, %v11190, %v11194
  %v11218 = vsel %vm176, %v11217, %v11198
  %v11219 = vsel %vm178, %v11218, %v11202
  %v11220 = vsel %vm180, %v11219, %v11206
  %11221 = vrot.lane.b32.xlu0 %v10918, 126
  %v11222 = vpop.permute.xlu0 %11221
  %11223 = vrot.lane.b32.xlu0 %v10917, 126
  %v11224 = vpop.permute.xlu0 %11223
  %v11227 = vcombine.high %v11222, 0.0
  %v11229 = vunpack.c.l.s4 1983009808
  %v11230 = vunpack.c.0.s8 %v11229
  %v11231 = vlaneseq
  %v11232 = vshrl.u32 %v11231, 7
  %v11233 = vsub.s32 %v11230, %v11232
  %v11234 = vrot.slane %v11222, %v11233
  %v11236 = vunpack.c.l.s4 1983009808
  %v11237 = vunpack.c.0.s8 %v11236
  %v11238 = vlaneseq
  %v11239 = vshrl.u32 %v11238, 7
  %v11240 = vsub.s32 %v11237, %v11239
  %v11241 = vrot.slane %v11227, %v11240
  %v11242 = vcombine.high %v11234, 0.0
  %v11244 = vunpack.c.l.s4 1934713408
  %v11245 = vunpack.c.0.s8 %v11244
  %v11246 = vlaneseq
  %v11247 = vshrl.u32 %v11246, 7
  %v11248 = vsub.s32 %v11245, %v11247
  %v11249 = vrot.slane %v11234, %v11248
  %v11251 = vunpack.c.l.s4 1934713408
  %v11252 = vunpack.c.0.s8 %v11251
  %v11253 = vlaneseq
  %v11254 = vshrl.u32 %v11253, 7
  %v11255 = vsub.s32 %v11252, %v11254
  %v11256 = vrot.slane %v11242, %v11255
  %v11257 = vcombine.high %v11241, 0.0
  %v11259 = vunpack.c.l.s4 1934713408
  %v11260 = vunpack.c.0.s8 %v11259
  %v11261 = vlaneseq
  %v11262 = vshrl.u32 %v11261, 7
  %v11263 = vsub.s32 %v11260, %v11262
  %v11264 = vrot.slane %v11241, %v11263
  %v11266 = vunpack.c.l.s4 1934713408
  %v11267 = vunpack.c.0.s8 %v11266
  %v11268 = vlaneseq
  %v11269 = vshrl.u32 %v11268, 7
  %v11270 = vsub.s32 %v11267, %v11269
  %v11271 = vrot.slane %v11257, %v11270
  %v11272 = vcombine.high %v11249, 0.0
  %v11273 = vcombine.high %v11256, 0.0
  %v11274 = vcombine.high %v11264, 0.0
  %v11275 = vcombine.high %v11271, 0.0
  %v11277 = vunpack.c.l.s4 1983009808
  %v11278 = vunpack.c.0.s8 %v11277
  %v11279 = vlaneseq
  %v11280 = vshrl.u32 %v11279, 7
  %v11281 = vsub.s32 %v11278, %v11280
  %v11282 = vrot.slane %v11224, %v11281
  %v11283 = vcombine.high %v11282, 0.0
  %v11285 = vunpack.c.l.s4 1934713408
  %v11286 = vunpack.c.0.s8 %v11285
  %v11287 = vlaneseq
  %v11288 = vshrl.u32 %v11287, 7
  %v11289 = vsub.s32 %v11286, %v11288
  %v11290 = vrot.slane %v11282, %v11289
  %v11292 = vunpack.c.l.s4 1934713408
  %v11293 = vunpack.c.0.s8 %v11292
  %v11294 = vlaneseq
  %v11295 = vshrl.u32 %v11294, 7
  %v11296 = vsub.s32 %v11293, %v11295
  %v11297 = vrot.slane %v11283, %v11296
  %v11298 = vcombine.high %v11224, 0.0
  %v11300 = vunpack.c.l.s4 1934713408
  %v11301 = vunpack.c.0.s8 %v11300
  %v11302 = vlaneseq
  %v11303 = vshrl.u32 %v11302, 7
  %v11304 = vsub.s32 %v11301, %v11303
  %v11305 = vrot.slane %v11298, %v11304
  %v11306 = vcombine.high %v11290, 0.0
  %v11307 = vcombine.high %v11297, 0.0
  %v11308 = vcombine.high %v11305, 0.0
  %11310 = vrot.lane.b32.xlu0 %v11272, 14
  %v11311 = vpop.permute.xlu0 %11310
  %11314 = vrot.lane.b32.xlu0 %v11256, 28
  %v11315 = vpop.permute.xlu0 %11314
  %11318 = vrot.lane.b32.xlu0 %v11273, 42
  %v11319 = vpop.permute.xlu0 %11318
  %11322 = vrot.lane.b32.xlu0 %v11264, 56
  %v11323 = vpop.permute.xlu0 %11322
  %11326 = vrot.lane.b32.xlu0 %v11274, 70
  %v11327 = vpop.permute.xlu0 %11326
  %11330 = vrot.lane.b32.xlu0 %v11271, 84
  %v11331 = vpop.permute.xlu0 %11330
  %11334 = vrot.lane.b32.xlu0 %v11275, 98
  %v11335 = vpop.permute.xlu0 %11334
  %11338 = vrot.lane.b32.xlu0 %v11290, 112
  %v11339 = vpop.permute.xlu0 %11338
  %11342 = vrot.lane.b32.xlu0 %v11306, 126
  %v11343 = vpop.permute.xlu0 %11342
  %11346 = vrot.lane.b32.xlu0 %v11297, 12
  %v11347 = vpop.permute.xlu0 %11346
  %11350 = vrot.lane.b32.xlu0 %v11307, 26
  %v11351 = vpop.permute.xlu0 %11350
  %11354 = vrot.lane.b32.xlu0 %v11305, 40
  %v11355 = vpop.permute.xlu0 %11354
  %11358 = vrot.lane.b32.xlu0 %v11308, 54
  %v11359 = vpop.permute.xlu0 %11358
  %v11361 = vsel %vm156, %v11249, %v11311
  %v11362 = vsel %vm158, %v11361, %v11315
  %v11363 = vsel %vm160, %v11362, %v11319
  %v11364 = vsel %vm162, %v11363, %v11323
  %v11365 = vsel %vm164, %v11364, %v11327
  %v11366 = vsel %vm166, %v11365, %v11331
  %v11367 = vsel %vm168, %v11366, %v11335
  %v11368 = vsel %vm170, %v11367, %v11339
  %v11369 = vsel %vm172, %v11368, %v11343
  %v11370 = vsel %vm174, %v11343, %v11347
  %v11371 = vsel %vm176, %v11370, %v11351
  %v11372 = vsel %vm178, %v11371, %v11355
  %v11373 = vsel %vm180, %v11372, %v11359
  %v11376 = vrot.slane %v6187, 7
  %v11377 = vrot.slane %v6191, 7
  %v11382 = vrot.slane %v6340, 6
  %v11383 = vrot.slane %v6344, 6
  %v11388 = vrot.slane %v6492, 5
  %v11389 = vrot.slane %v6496, 5
  %v11394 = vrot.slane %v6645, 4
  %v11395 = vrot.slane %v6649, 4
  %v11400 = vrot.slane %v6798, 3
  %v11401 = vrot.slane %v6802, 3
  %v11406 = vrot.slane %v6950, 2
  %v11407 = vrot.slane %v6954, 2
  %v11412 = vrot.slane %v7103, 1
  %v11413 = vrot.slane %v7107, 1
  %v11418 = vrot.slane %v7403, 7
  %v11419 = vrot.slane %v7407, 7
  %v11424 = vrot.slane %v7558, 6
  %v11425 = vrot.slane %v7562, 6
  %v11430 = vrot.slane %v7711, 5
  %v11431 = vrot.slane %v7715, 5
  %v11436 = vrot.slane %v7863, 4
  %v11437 = vrot.slane %v7867, 4
  %v11442 = vrot.slane %v8016, 3
  %v11443 = vrot.slane %v8020, 3
  %v11448 = vrot.slane %v8169, 2
  %v11449 = vrot.slane %v8173, 2
  %v11454 = vrot.slane %v8321, 1
  %v11455 = vrot.slane %v8325, 1
  %v11458 = vsel %vm5605, %v6032, %v11376
  %v11459 = vsel %vm5605, %v6036, %v11377
  %v11460 = vsel %vm5608, %v11458, %v11382
  %v11461 = vsel %vm5608, %v11459, %v11383
  %v11462 = vsel %vm5611, %v11460, %v11388
  %v11463 = vsel %vm5611, %v11461, %v11389
  %v11464 = vsel %vm5614, %v11462, %v11394
  %v11465 = vsel %vm5614, %v11463, %v11395
  %v11466 = vsel %vm5617, %v11464, %v11400
  %v11467 = vsel %vm5617, %v11465, %v11401
  %v11468 = vsel %vm949, %v11466, %v11406
  %v11469 = vsel %vm949, %v11467, %v11407
  %v11470 = vsel %vm490, %v11468, %v11412
  %v11471 = vsel %vm490, %v11469, %v11413
  %v11472 = vsel %vm5605, %v7256, %v11418
  %v11473 = vsel %vm5605, %v7260, %v11419
  %v11474 = vsel %vm5608, %v11472, %v11424
  %v11475 = vsel %vm5608, %v11473, %v11425
  %v11476 = vsel %vm5611, %v11474, %v11430
  %v11477 = vsel %vm5611, %v11475, %v11431
  %v11478 = vsel %vm5614, %v11476, %v11436
  %v11479 = vsel %vm5614, %v11477, %v11437
  %v11480 = vsel %vm5617, %v11478, %v11442
  %v11481 = vsel %vm5617, %v11479, %v11443
  %v11482 = vsel %vm949, %v11480, %v11448
  %v11483 = vsel %vm949, %v11481, %v11449
  %v11484 = vsel %vm490, %v11482, %v11454
  %v11485 = vsel %vm490, %v11483, %v11455
  %v11488 = vrot.slane %v8627, 7
  %v11489 = vrot.slane %v8631, 7
  %v11494 = vrot.slane %v8774, 6
  %v11495 = vrot.slane %v8778, 6
  %v11500 = vrot.slane %v8929, 5
  %v11501 = vrot.slane %v8933, 5
  %v11506 = vrot.slane %v9082, 4
  %v11507 = vrot.slane %v9086, 4
  %v11512 = vrot.slane %v9234, 3
  %v11513 = vrot.slane %v9238, 3
  %v11518 = vrot.slane %v9387, 2
  %v11519 = vrot.slane %v9391, 2
  %v11524 = vrot.slane %v9540, 1
  %v11525 = vrot.slane %v9544, 1
  %v11530 = vrot.slane %v9845, 7
  %v11531 = vrot.slane %v9849, 7
  %v11536 = vrot.slane %v9998, 6
  %v11537 = vrot.slane %v10002, 6
  %v11542 = vrot.slane %v10145, 5
  %v11543 = vrot.slane %v10149, 5
  %v11548 = vrot.slane %v10300, 4
  %v11549 = vrot.slane %v10304, 4
  %v11554 = vrot.slane %v10453, 3
  %v11555 = vrot.slane %v10457, 3
  %v11560 = vrot.slane %v10605, 2
  %v11561 = vrot.slane %v10609, 2
  %v11566 = vrot.slane %v10758, 1
  %v11567 = vrot.slane %v10762, 1
  %v11570 = vsel %vm5605, %v8474, %v11488
  %v11571 = vsel %vm5605, %v8478, %v11489
  %v11572 = vsel %vm5608, %v11570, %v11494
  %v11573 = vsel %vm5608, %v11571, %v11495
  %v11574 = vsel %vm5611, %v11572, %v11500
  %v11575 = vsel %vm5611, %v11573, %v11501
  %v11576 = vsel %vm5614, %v11574, %v11506
  %v11577 = vsel %vm5614, %v11575, %v11507
  %v11578 = vsel %vm5617, %v11576, %v11512
  %v11579 = vsel %vm5617, %v11577, %v11513
  %v11580 = vsel %vm949, %v11578, %v11518
  %v11581 = vsel %vm949, %v11579, %v11519
  %v11582 = vsel %vm490, %v11580, %v11524
  %v11583 = vsel %vm490, %v11581, %v11525
  %v11584 = vsel %vm5605, %v9692, %v11530
  %v11585 = vsel %vm5605, %v9696, %v11531
  %v11586 = vsel %vm5608, %v11584, %v11536
  %v11587 = vsel %vm5608, %v11585, %v11537
  %v11588 = vsel %vm5611, %v11586, %v11542
  %v11589 = vsel %vm5611, %v11587, %v11543
  %v11590 = vsel %vm5614, %v11588, %v11548
  %v11591 = vsel %vm5614, %v11589, %v11549
  %v11592 = vsel %vm5617, %v11590, %v11554
  %v11593 = vsel %vm5617, %v11591, %v11555
  %v11594 = vsel %vm949, %v11592, %v11560
  %v11595 = vsel %vm949, %v11593, %v11561
  %v11596 = vsel %vm490, %v11594, %v11566
  %v11597 = vsel %vm490, %v11595, %v11567
  %v11600 = vrot.slane %v11063, 7
  %v11601 = vrot.slane %v11067, 7
  %v11606 = vrot.slane %v11216, 6
  %v11607 = vrot.slane %v11220, 6
  %v11612 = vrot.slane %v11369, 5
  %v11613 = vrot.slane %v11373, 5
  %v11616 = vsel %vm5605, %v10911, %v11600
  %v11617 = vsel %vm5605, %v10915, %v11601
  %v11618 = vsel %vm5608, %v11616, %v11606
  %v11619 = vsel %vm5608, %v11617, %v11607
  %v11620 = vsel %vm5611, %v11618, %v11612
  %v11621 = vsel %vm5611, %v11619, %v11613
  %v11623 = vsel %vm5614, %v11620, 0
  %v11626 = vsel %vm5614, %v11621, 0
  %11628 = vmatprep.subr.mxu0 %v11471
  %11629 = vmatpush1.msra.mxu0 %v11470
  %11630 = vmatprep.subr.mxu0 %v11485
  %11631 = vmatpush1.msra.mxu0 %v11484
  %11632 = vmatprep.subr.mxu0 %v11583
  %11633 = vmatpush1.msra.mxu0 %v11582
  %11634 = vmatprep.subr.mxu0 %v11597
  %11635 = vmatpush1.msra.mxu0 %v11596
  %11636 = vmatprep.subr.mxu0 %v11626
  %11637 = vmatpush1.msra.mxu0 %v11623
  %11638 = vmatprep.subr.mxu0 0.0
  %11639 = vmatpush1.msra.mxu0 0.0
  %11640 = vmatprep.subr.mxu0 0.0
  %11641 = vmatpush1.msra.mxu0 0.0
  %11642 = vmatprep.subr.mxu0 0.0
  %11643 = vmatpush1.msra.mxu0 0.0
  %11644 = vmatprep.subr.mxu0 0.0
  %11645 = vmatpush1.msra.mxu0 0.0
  %11646 = vmatprep.subr.mxu0 0.0
  %11647 = vmatpush1.msra.mxu0 0.0
  %11648 = vmatprep.subr.mxu0 0.0
  %11649 = vmatpush1.msra.mxu0 0.0
  %11650 = vmatprep.subr.mxu0 0.0
  %11651 = vmatpush1.msra.mxu0 0.0
  %11652 = vmatprep.subr.mxu0 0.0
  %11653 = vmatpush1.msra.mxu0 0.0
  %11654 = vmatprep.subr.mxu0 0.0
  %11655 = vmatpush1.msra.mxu0 0.0
  %11656 = vmatprep.subr.mxu0 0.0
  %11657 = vmatpush1.msra.mxu0 0.0
  %11658 = vmatprep.subr.mxu0 0.0
  %11659 = vmatpush1.msra.mxu0 0.0
  %11660 = vmatprep.subr.mxu0 0.0
  %11661 = vmatpush1.msra.mxu0 0.0
  %11662 = vmatprep.subr.mxu0 0.0
  %11663 = vmatpush1.msra.mxu0 0.0
  %11664 = vmatprep.subr.mxu0 0.0
  %11665 = vmatpush1.msra.mxu0 0.0
  %11666 = vmatprep.subr.mxu0 0.0
  %11667 = vmatpush1.msra.mxu0 0.0
  %11668 = vmatprep.subr.mxu0 0.0
  %11669 = vmatpush1.msra.mxu0 0.0
  %11670 = vmatprep.subr.mxu0 0.0
  %11671 = vmatpush1.msra.mxu0 0.0
  %11672 = vmatprep.subr.mxu0 0.0
  %11673 = vmatpush1.msra.mxu0 0.0
  %11674 = vmatprep.subr.mxu0 0.0
  %11675 = vmatpush1.msra.mxu0 0.0
  %11676 = vmatprep.subr.mxu0 0.0
  %11677 = vmatpush1.msra.mxu0 0.0
  %11678 = vmatprep.subr.mxu0 0.0
  %11679 = vmatpush1.msra.mxu0 0.0
  %11680 = vmatprep.subr.mxu0 0.0
  %11681 = vmatpush1.msra.mxu0 0.0
  %11682 = vmatprep.subr.mxu0 0.0
  %11683 = vmatpush1.msra.mxu0 0.0
  %11684 = vmatprep.subr.mxu0 0.0
  %11685 = vmatpush1.msra.mxu0 0.0
  %11686 = vmatprep.subr.mxu0 0.0
  %11687 = vmatpush1.msra.mxu0 0.0
  %11688 = vmatprep.subr.mxu0 0.0
  %11689 = vmatpush1.msra.mxu0 0.0
  %11690 = vmatprep.subr.mxu0 0.0
  %11691 = vmatpush1.msra.mxu0 0.0
  %11692 = vmatprep.mubr.f32.mxu0 0.0
  %11693 = vmatmul.mubr.f32.gmra.mrb[0].mxu0 %v5776
  %v11694 = vpop.f32.mrb[0].mxu0
  %v11695 = vadd.f32 0.0, %v11694
  %v11696 = vpop.f32.mrb[0].mxu0
  %v11697 = vadd.f32 0.0, %v11696
  %11698 = vmatprep.mubr.f32.mxu0 0.0
  %11699 = vmatmul.mubr.f32.gmra.mrb[0].mxu0 %v5779
  %v11700 = vpop.f32.mrb[0].mxu0
  %v11701 = vadd.f32 0.0, %v11700
  %v11702 = vpop.f32.mrb[0].mxu0
  %v11703 = vadd.f32 0.0, %v11702
  %11704 = vmatprep.mubr.f32.mxu0 0.0
  %11705 = vmatmul.mubr.f32.gmra.mrb[0].mxu0 %v5782
  %v11706 = vpop.f32.mrb[0].mxu0
  %v11707 = vadd.f32 0.0, %v11706
  %v11708 = vpop.f32.mrb[0].mxu0
  %v11709 = vadd.f32 0.0, %v11708
  %11710 = vdwg.mxu0
  %s11711 = scalar_lea.vmem %s2, 48
  %11712 = vst [vmem:[%s11711] sm:$0xff] %v11695
  %11713 = vst.msk [vmem:[%s11711 + $0x8] sm:$0xff] %vm5874, %v11697
  %11714 = vst [vmem:[%s11711 + $0x10] sm:$0xff] %v11701
  %11715 = vst.msk [vmem:[%s11711 + $0x18] sm:$0xff] %vm5874, %v11703
  %11716 = vst [vmem:[%s11711 + $0x20] sm:$0xf] %v11707
  %11717 = vst.msk [vmem:[%s11711 + $0x28] sm:$0xf] %vm5879, %v11709
  // Predicated region
  $region10: #{net_v2_forward.1} parent=0 // pred_check
    _
  $region11: #{net_v2_forward.1} parent=0 // pred_check_branch
    %11719 = sbr.rel (0) target = $region13
  $region12: #{net_v2_forward.1} parent=0 // pred_region
    _
  $region13: #{net_v2_forward.1} parent=0 // pred_fallthru
    _
  // Predicated region
  $region14: #{net_v2_forward.1} parent=0 // pred_check
    _
  $region15: #{net_v2_forward.1} parent=0 // pred_check_branch
    %11721 = sbr.rel (0) target = $region17
  $region16: #{net_v2_forward.1} parent=0 // pred_region
    _
  $region17: #{net_v2_forward.1} parent=0 // pred_fallthru
    _

</llo_original>
